<compile_context>
chip_gen: v5e
topology: v5e:2x2
jax: 0.10.0
libtpu: 0.0.40
codegen_flags: <defaults>
</compile_context>

<pallas_src>
import functools

import jax
import jax.numpy as jnp
from jax.experimental import pallas as pl
from jax.experimental.pallas import tpu as pltpu


def _srcnn_fused_kernel(x_ref, w1_ref, b1_ref, w2_ref, b2_ref, w3_ref, b3_ref,
                        o_ref, t2_ref, *, W, TH):
    """x_ref : (1, TH+12, W+8, 3)  halo'd, replicate-padded input slab
    w*_ref: im2col-flattened weights (K, Cout); b*_ref: (1, Cout)
    o_ref : (1, TH*W, 3) flattened-HW output tile
    t2_ref: (TH+4, W+4, 32) VMEM scratch = conv2 output + replicate halo."""
    TE = TH + 4                      # conv2 rows needed by this tile (+/-2 halo)
    i = pl.program_id(1)
    last = pl.num_programs(1) - 1

    # ---- layer 1: 9x9, 3 -> 64, single im2col matmul (K = 243) -------------
    xs = x_ref[0]                                         # (TH+12, W+8, 3)
    p1 = jnp.concatenate(
        [xs[kh:kh + TE, kw:kw + W, :] for kh in range(9) for kw in range(9)],
        axis=-1).reshape(TE * W, 9 * 9 * 3)               # (TE*W, 243)
    t1 = jnp.dot(p1, w1_ref[...], preferred_element_type=jnp.float32)
    t1 = jnp.maximum(t1 + b1_ref[...], 0.0)               # (TE*W, 64)

    # ---- layer 2: 1x1, 64 -> 32 --------------------------------------------
    t2 = jnp.dot(t1, w2_ref[...], preferred_element_type=jnp.float32)
    t2 = jnp.maximum(t2 + b2_ref[...], 0.0)               # (TE*W, 32)

    # ---- replicate-pad conv2 output in VMEM (PyTorch conv3 'replicate') ----
    t2_ref[:, 2:W + 2, :] = t2.reshape(TE, W, 32)
    # left/right image edges (every tile spans the full width)
    t2_ref[:, 0:1, :] = t2_ref[:, 2:3, :]
    t2_ref[:, 1:2, :] = t2_ref[:, 2:3, :]
    t2_ref[:, W + 2:W + 3, :] = t2_ref[:, W + 1:W + 2, :]
    t2_ref[:, W + 3:W + 4, :] = t2_ref[:, W + 1:W + 2, :]

    # top/bottom only at the true image borders (interior halo rows are real)
    @pl.when(i == 0)
    def _():
        t2_ref[0:1, :, :] = t2_ref[2:3, :, :]
        t2_ref[1:2, :, :] = t2_ref[2:3, :, :]

    @pl.when(i == last)
    def _():
        t2_ref[TE - 2:TE - 1, :, :] = t2_ref[TE - 3:TE - 2, :, :]
        t2_ref[TE - 1:TE, :, :] = t2_ref[TE - 3:TE - 2, :, :]

    # ---- layer 3: 5x5, 32 -> 3, single im2col matmul (K = 800) -------------
    p3 = jnp.concatenate(
        [t2_ref[kh:kh + TH, kw:kw + W, :]
         for kh in range(5) for kw in range(5)],
        axis=-1).reshape(TH * W, 5 * 5 * 32)              # (TH*W, 800)
    out = jnp.dot(p3, w3_ref[...], preferred_element_type=jnp.float32)
    o_ref[0] = jnp.maximum(out + b3_ref[...], 0.0).astype(o_ref.dtype)


def _pick_row_tile(H, W, requested=None):
    """Row tile: divides H, bounds im2col VMEM, satisfies TPU tiling rules."""
    if requested is None:
        requested = max(1, 2048 // max(W, 1))   # cap ~TH*W rows of patches
    th = max(1, min(int(requested), H))
    while H % th != 0:
        th -= 1
    if th != H and (th * W) % 8 != 0:           # output-block sublane rule
        th = H
    return th


@functools.partial(jax.jit, static_argnames=("row_tile",))
def srcnn_forward(x_nchw, params, row_tile=None):
    """SRCNN forward pass. x_nchw: (N, 3, H, W) float32 -> (N, 3, H, W)."""
    (w1, b1), (w2, b2), (w3, b3) = params
    N, C, H, W = x_nchw.shape
    assert C == 3
    TH = _pick_row_tile(H, W, row_tile)
    T = H // TH
    S = TH + 12                       # slab rows per tile: 4 (conv1) + 2 (conv3) halo/side
    TE = TH + 4

    # NCHW -> NHWC; replicate-pad the tiny 3-channel input only.
    x = jnp.transpose(x_nchw, (0, 2, 3, 1))
    xpad = jnp.pad(x, ((0, 0), (6, 6), (4, 4), (0, 0)), mode="edge")
    # Halo-overlapped row slabs -> plain (auto-pipelined) BlockSpec per tile.
    row_idx = (jnp.arange(T) * TH)[:, None] + jnp.arange(S)[None, :]
    slabs = xpad[:, row_idx].reshape(N * T, S, W + 8, 3)

    # im2col-flattened weights / 2-D biases, prepared once outside the kernel.
    w1m = w1.reshape(9 * 9 * 3, 64)
    w2m = w2.reshape(64, 32)
    w3m = w3.reshape(5 * 5 * 32, 3)
    b1r, b2r, b3r = b1.reshape(1, 64), b2.reshape(1, 32), b3.reshape(1, 3)

    kernel = functools.partial(_srcnn_fused_kernel, W=W, TH=TH)
    out_flat = pl.pallas_call(
        kernel,
        out_shape=jax.ShapeDtypeStruct((N, H * W, 3), x.dtype),
        grid=(N, T),
        in_specs=[
            pl.BlockSpec((1, S, W + 8, 3), lambda n, i: (n * T + i, 0, 0, 0)),
            pl.BlockSpec((9 * 9 * 3, 64), lambda n, i: (0, 0)),
            pl.BlockSpec((1, 64), lambda n, i: (0, 0)),
            pl.BlockSpec((64, 32), lambda n, i: (0, 0)),
            pl.BlockSpec((1, 32), lambda n, i: (0, 0)),
            pl.BlockSpec((5 * 5 * 32, 3), lambda n, i: (0, 0)),
            pl.BlockSpec((1, 3), lambda n, i: (0, 0)),
        ],
        out_specs=pl.BlockSpec((1, TH * W, 3), lambda n, i: (n, i, 0)),
        scratch_shapes=[pltpu.VMEM((TE, W + 4, 32), jnp.float32)],
        compiler_params=pltpu.CompilerParams(
            dimension_semantics=("parallel", "parallel"),
            vmem_limit_bytes=64 * 1024 * 1024),
    )(slabs, w1m, b1r, w2m, b2r, w3m, b3r)

    return jnp.transpose(out_flat.reshape(N, H, W, 3), (0, 3, 1, 2))


def init_srcnn_params(key):
    """Deterministic synthetic params, stored as (KH, KW, Cin, Cout)."""
    ks = jax.random.split(key, 6)

    def conv_init(kw_key, kb_key, cin, cout, k):
        fan_in = cin * k * k
        bound = 1.0 / jnp.sqrt(fan_in)
        w = jax.random.uniform(kw_key, (k, k, cin, cout), jnp.float32,
                               -bound, bound)
        b = jax.random.uniform(kb_key, (cout,), jnp.float32, -bound, bound)
        return w, b

    w1, b1 = conv_init(ks[0], ks[1], 3, 64, 9)
    w2, b2 = conv_init(ks[2], ks[3], 64, 32, 1)
    w3, b3 = conv_init(ks[4], ks[5], 32, 3, 5)
    return (w1, b1), (w2, b2), (w3, b3)


def _reference_forward(x_nchw, params):
    """Pure-JAX reference (lax conv) mirroring the PyTorch module."""
    x = jnp.transpose(x_nchw, (0, 2, 3, 1))
    for (w, b), pad in zip(params, (4, 0, 2)):
        if pad > 0:
            x = jnp.pad(x, ((0, 0), (pad, pad), (pad, pad), (0, 0)),
                        mode="edge")
        x = jax.lax.conv_general_dilated(
            x, w, window_strides=(1, 1), padding="VALID",
            dimension_numbers=("NHWC", "HWIO", "NHWC"))
        x = jax.nn.relu(x + b)
    return jnp.transpose(x, (0, 3, 1, 2))


if __name__ == "__main__":
    key = jax.random.PRNGKey(0)
    k_params, k_x = jax.random.split(key)
    params = init_srcnn_params(k_params)

    # Small NCHW input like the PyTorch module: (N=2, C=3, H=16, W=16)
    x = jax.random.normal(k_x, (2, 3, 16, 16), jnp.float32)

    ref = jax.block_until_ready(_reference_forward(x, params))

    # Multi-tile path (2 row tiles per image -> exercises halo + border logic).
    out = jax.block_until_ready(srcnn_forward(x, params, row_tile=8))
    assert out.shape == (2, 3, 16, 16), out.shape
    assert jnp.allclose(out, ref, rtol=1e-4, atol=1e-4), \
        float(jnp.max(jnp.abs(out - ref)))

    # Default (single-tile) path.
    out1 = jax.block_until_ready(srcnn_forward(x, params))
    assert jnp.allclose(out1, ref, rtol=1e-4, atol=1e-4), \
        float(jnp.max(jnp.abs(out1 - ref)))

    print("KERNEL_OK")
</pallas_src>

<mosaic_0001>
module attributes {stable_mosaic.version = 11 : i64} {
  func.func @_srcnn_fused_kernel(%arg0: i32, %arg1: i32, %arg2: memref<1x20x24x3xf32, #tpu.memory_space<vmem>>, %arg3: memref<243x64xf32, #tpu.memory_space<vmem>>, %arg4: memref<1x64xf32, #tpu.memory_space<vmem>>, %arg5: memref<64x32xf32, #tpu.memory_space<vmem>>, %arg6: memref<1x32xf32, #tpu.memory_space<vmem>>, %arg7: memref<800x3xf32, #tpu.memory_space<vmem>>, %arg8: memref<1x3xf32, #tpu.memory_space<vmem>>, %arg9: memref<1x128x3xf32, #tpu.memory_space<vmem>>, %arg10: memref<12x20x32xf32, #tpu.memory_space<vmem>>) attributes {dimension_semantics = [#tpu.dimension_semantics<parallel>, #tpu.dimension_semantics<parallel>], iteration_bounds = array<i64: 2, 2>, scalar_prefetch = 0 : i64, scratch_operands = 1 : i64, tpu.core_type = #tpu.core_type<tc>, window_params = [{transform_indices = @transform_0, window_bounds = array<i64: 1, 20, 24, 3>}, {pipeline_mode = #tpu.pipeline_mode<synchronous>, transform_indices = @transform_1, window_bounds = array<i64: 243, 64>}, {pipeline_mode = #tpu.pipeline_mode<synchronous>, transform_indices = @transform_2, window_bounds = array<i64: 1, 64>}, {pipeline_mode = #tpu.pipeline_mode<synchronous>, transform_indices = @transform_3, window_bounds = array<i64: 64, 32>}, {pipeline_mode = #tpu.pipeline_mode<synchronous>, transform_indices = @transform_4, window_bounds = array<i64: 1, 32>}, {pipeline_mode = #tpu.pipeline_mode<synchronous>, transform_indices = @transform_5, window_bounds = array<i64: 800, 3>}, {pipeline_mode = #tpu.pipeline_mode<synchronous>, transform_indices = @transform_6, window_bounds = array<i64: 1, 3>}, {transform_indices = @transform_7, window_bounds = array<i64: 1, 128, 3>}]} {
    %c0 = arith.constant 0 : index
    %c0_0 = arith.constant 0 : index
    %c0_1 = arith.constant 0 : index
    %c0_2 = arith.constant 0 : index
    %0 = vector.load %arg2[%c0, %c0_0, %c0_1, %c0_2] : memref<1x20x24x3xf32, #tpu.memory_space<vmem>>, vector<1x20x24x3xf32>
    %1 = vector.shape_cast %0 : vector<1x20x24x3xf32> to vector<20x24x3xf32>
    %2 = vector.extract_strided_slice %1 {offsets = [0, 0, 0], sizes = [12, 16, 3], strides = [1, 1, 1]} : vector<20x24x3xf32> to vector<12x16x3xf32>
    %3 = vector.extract_strided_slice %1 {offsets = [0, 1, 0], sizes = [12, 16, 3], strides = [1, 1, 1]} : vector<20x24x3xf32> to vector<12x16x3xf32>
    %4 = vector.extract_strided_slice %1 {offsets = [0, 2, 0], sizes = [12, 16, 3], strides = [1, 1, 1]} : vector<20x24x3xf32> to vector<12x16x3xf32>
    %5 = vector.extract_strided_slice %1 {offsets = [0, 3, 0], sizes = [12, 16, 3], strides = [1, 1, 1]} : vector<20x24x3xf32> to vector<12x16x3xf32>
    %6 = vector.extract_strided_slice %1 {offsets = [0, 4, 0], sizes = [12, 16, 3], strides = [1, 1, 1]} : vector<20x24x3xf32> to vector<12x16x3xf32>
    %7 = vector.extract_strided_slice %1 {offsets = [0, 5, 0], sizes = [12, 16, 3], strides = [1, 1, 1]} : vector<20x24x3xf32> to vector<12x16x3xf32>
    %8 = vector.extract_strided_slice %1 {offsets = [0, 6, 0], sizes = [12, 16, 3], strides = [1, 1, 1]} : vector<20x24x3xf32> to vector<12x16x3xf32>
    %9 = vector.extract_strided_slice %1 {offsets = [0, 7, 0], sizes = [12, 16, 3], strides = [1, 1, 1]} : vector<20x24x3xf32> to vector<12x16x3xf32>
    %10 = vector.extract_strided_slice %1 {offsets = [0, 8, 0], sizes = [12, 16, 3], strides = [1, 1, 1]} : vector<20x24x3xf32> to vector<12x16x3xf32>
    %11 = vector.extract_strided_slice %1 {offsets = [1, 0, 0], sizes = [12, 16, 3], strides = [1, 1, 1]} : vector<20x24x3xf32> to vector<12x16x3xf32>
    %12 = vector.extract_strided_slice %1 {offsets = [1, 1, 0], sizes = [12, 16, 3], strides = [1, 1, 1]} : vector<20x24x3xf32> to vector<12x16x3xf32>
    %13 = vector.extract_strided_slice %1 {offsets = [1, 2, 0], sizes = [12, 16, 3], strides = [1, 1, 1]} : vector<20x24x3xf32> to vector<12x16x3xf32>
    %14 = vector.extract_strided_slice %1 {offsets = [1, 3, 0], sizes = [12, 16, 3], strides = [1, 1, 1]} : vector<20x24x3xf32> to vector<12x16x3xf32>
    %15 = vector.extract_strided_slice %1 {offsets = [1, 4, 0], sizes = [12, 16, 3], strides = [1, 1, 1]} : vector<20x24x3xf32> to vector<12x16x3xf32>
    %16 = vector.extract_strided_slice %1 {offsets = [1, 5, 0], sizes = [12, 16, 3], strides = [1, 1, 1]} : vector<20x24x3xf32> to vector<12x16x3xf32>
    %17 = vector.extract_strided_slice %1 {offsets = [1, 6, 0], sizes = [12, 16, 3], strides = [1, 1, 1]} : vector<20x24x3xf32> to vector<12x16x3xf32>
    %18 = vector.extract_strided_slice %1 {offsets = [1, 7, 0], sizes = [12, 16, 3], strides = [1, 1, 1]} : vector<20x24x3xf32> to vector<12x16x3xf32>
    %19 = vector.extract_strided_slice %1 {offsets = [1, 8, 0], sizes = [12, 16, 3], strides = [1, 1, 1]} : vector<20x24x3xf32> to vector<12x16x3xf32>
    %20 = vector.extract_strided_slice %1 {offsets = [2, 0, 0], sizes = [12, 16, 3], strides = [1, 1, 1]} : vector<20x24x3xf32> to vector<12x16x3xf32>
    %21 = vector.extract_strided_slice %1 {offsets = [2, 1, 0], sizes = [12, 16, 3], strides = [1, 1, 1]} : vector<20x24x3xf32> to vector<12x16x3xf32>
    %22 = vector.extract_strided_slice %1 {offsets = [2, 2, 0], sizes = [12, 16, 3], strides = [1, 1, 1]} : vector<20x24x3xf32> to vector<12x16x3xf32>
    %23 = vector.extract_strided_slice %1 {offsets = [2, 3, 0], sizes = [12, 16, 3], strides = [1, 1, 1]} : vector<20x24x3xf32> to vector<12x16x3xf32>
    %24 = vector.extract_strided_slice %1 {offsets = [2, 4, 0], sizes = [12, 16, 3], strides = [1, 1, 1]} : vector<20x24x3xf32> to vector<12x16x3xf32>
    %25 = vector.extract_strided_slice %1 {offsets = [2, 5, 0], sizes = [12, 16, 3], strides = [1, 1, 1]} : vector<20x24x3xf32> to vector<12x16x3xf32>
    %26 = vector.extract_strided_slice %1 {offsets = [2, 6, 0], sizes = [12, 16, 3], strides = [1, 1, 1]} : vector<20x24x3xf32> to vector<12x16x3xf32>
    %27 = vector.extract_strided_slice %1 {offsets = [2, 7, 0], sizes = [12, 16, 3], strides = [1, 1, 1]} : vector<20x24x3xf32> to vector<12x16x3xf32>
    %28 = vector.extract_strided_slice %1 {offsets = [2, 8, 0], sizes = [12, 16, 3], strides = [1, 1, 1]} : vector<20x24x3xf32> to vector<12x16x3xf32>
    %29 = vector.extract_strided_slice %1 {offsets = [3, 0, 0], sizes = [12, 16, 3], strides = [1, 1, 1]} : vector<20x24x3xf32> to vector<12x16x3xf32>
    %30 = vector.extract_strided_slice %1 {offsets = [3, 1, 0], sizes = [12, 16, 3], strides = [1, 1, 1]} : vector<20x24x3xf32> to vector<12x16x3xf32>
    %31 = vector.extract_strided_slice %1 {offsets = [3, 2, 0], sizes = [12, 16, 3], strides = [1, 1, 1]} : vector<20x24x3xf32> to vector<12x16x3xf32>
    %32 = vector.extract_strided_slice %1 {offsets = [3, 3, 0], sizes = [12, 16, 3], strides = [1, 1, 1]} : vector<20x24x3xf32> to vector<12x16x3xf32>
    %33 = vector.extract_strided_slice %1 {offsets = [3, 4, 0], sizes = [12, 16, 3], strides = [1, 1, 1]} : vector<20x24x3xf32> to vector<12x16x3xf32>
    %34 = vector.extract_strided_slice %1 {offsets = [3, 5, 0], sizes = [12, 16, 3], strides = [1, 1, 1]} : vector<20x24x3xf32> to vector<12x16x3xf32>
    %35 = vector.extract_strided_slice %1 {offsets = [3, 6, 0], sizes = [12, 16, 3], strides = [1, 1, 1]} : vector<20x24x3xf32> to vector<12x16x3xf32>
    %36 = vector.extract_strided_slice %1 {offsets = [3, 7, 0], sizes = [12, 16, 3], strides = [1, 1, 1]} : vector<20x24x3xf32> to vector<12x16x3xf32>
    %37 = vector.extract_strided_slice %1 {offsets = [3, 8, 0], sizes = [12, 16, 3], strides = [1, 1, 1]} : vector<20x24x3xf32> to vector<12x16x3xf32>
    %38 = vector.extract_strided_slice %1 {offsets = [4, 0, 0], sizes = [12, 16, 3], strides = [1, 1, 1]} : vector<20x24x3xf32> to vector<12x16x3xf32>
    %39 = vector.extract_strided_slice %1 {offsets = [4, 1, 0], sizes = [12, 16, 3], strides = [1, 1, 1]} : vector<20x24x3xf32> to vector<12x16x3xf32>
    %40 = vector.extract_strided_slice %1 {offsets = [4, 2, 0], sizes = [12, 16, 3], strides = [1, 1, 1]} : vector<20x24x3xf32> to vector<12x16x3xf32>
    %41 = vector.extract_strided_slice %1 {offsets = [4, 3, 0], sizes = [12, 16, 3], strides = [1, 1, 1]} : vector<20x24x3xf32> to vector<12x16x3xf32>
    %42 = vector.extract_strided_slice %1 {offsets = [4, 4, 0], sizes = [12, 16, 3], strides = [1, 1, 1]} : vector<20x24x3xf32> to vector<12x16x3xf32>
    %43 = vector.extract_strided_slice %1 {offsets = [4, 5, 0], sizes = [12, 16, 3], strides = [1, 1, 1]} : vector<20x24x3xf32> to vector<12x16x3xf32>
    %44 = vector.extract_strided_slice %1 {offsets = [4, 6, 0], sizes = [12, 16, 3], strides = [1, 1, 1]} : vector<20x24x3xf32> to vector<12x16x3xf32>
    %45 = vector.extract_strided_slice %1 {offsets = [4, 7, 0], sizes = [12, 16, 3], strides = [1, 1, 1]} : vector<20x24x3xf32> to vector<12x16x3xf32>
    %46 = vector.extract_strided_slice %1 {offsets = [4, 8, 0], sizes = [12, 16, 3], strides = [1, 1, 1]} : vector<20x24x3xf32> to vector<12x16x3xf32>
    %47 = vector.extract_strided_slice %1 {offsets = [5, 0, 0], sizes = [12, 16, 3], strides = [1, 1, 1]} : vector<20x24x3xf32> to vector<12x16x3xf32>
    %48 = vector.extract_strided_slice %1 {offsets = [5, 1, 0], sizes = [12, 16, 3], strides = [1, 1, 1]} : vector<20x24x3xf32> to vector<12x16x3xf32>
    %49 = vector.extract_strided_slice %1 {offsets = [5, 2, 0], sizes = [12, 16, 3], strides = [1, 1, 1]} : vector<20x24x3xf32> to vector<12x16x3xf32>
    %50 = vector.extract_strided_slice %1 {offsets = [5, 3, 0], sizes = [12, 16, 3], strides = [1, 1, 1]} : vector<20x24x3xf32> to vector<12x16x3xf32>
    %51 = vector.extract_strided_slice %1 {offsets = [5, 4, 0], sizes = [12, 16, 3], strides = [1, 1, 1]} : vector<20x24x3xf32> to vector<12x16x3xf32>
    %52 = vector.extract_strided_slice %1 {offsets = [5, 5, 0], sizes = [12, 16, 3], strides = [1, 1, 1]} : vector<20x24x3xf32> to vector<12x16x3xf32>
    %53 = vector.extract_strided_slice %1 {offsets = [5, 6, 0], sizes = [12, 16, 3], strides = [1, 1, 1]} : vector<20x24x3xf32> to vector<12x16x3xf32>
    %54 = vector.extract_strided_slice %1 {offsets = [5, 7, 0], sizes = [12, 16, 3], strides = [1, 1, 1]} : vector<20x24x3xf32> to vector<12x16x3xf32>
    %55 = vector.extract_strided_slice %1 {offsets = [5, 8, 0], sizes = [12, 16, 3], strides = [1, 1, 1]} : vector<20x24x3xf32> to vector<12x16x3xf32>
    %56 = vector.extract_strided_slice %1 {offsets = [6, 0, 0], sizes = [12, 16, 3], strides = [1, 1, 1]} : vector<20x24x3xf32> to vector<12x16x3xf32>
    %57 = vector.extract_strided_slice %1 {offsets = [6, 1, 0], sizes = [12, 16, 3], strides = [1, 1, 1]} : vector<20x24x3xf32> to vector<12x16x3xf32>
    %58 = vector.extract_strided_slice %1 {offsets = [6, 2, 0], sizes = [12, 16, 3], strides = [1, 1, 1]} : vector<20x24x3xf32> to vector<12x16x3xf32>
    %59 = vector.extract_strided_slice %1 {offsets = [6, 3, 0], sizes = [12, 16, 3], strides = [1, 1, 1]} : vector<20x24x3xf32> to vector<12x16x3xf32>
    %60 = vector.extract_strided_slice %1 {offsets = [6, 4, 0], sizes = [12, 16, 3], strides = [1, 1, 1]} : vector<20x24x3xf32> to vector<12x16x3xf32>
    %61 = vector.extract_strided_slice %1 {offsets = [6, 5, 0], sizes = [12, 16, 3], strides = [1, 1, 1]} : vector<20x24x3xf32> to vector<12x16x3xf32>
    %62 = vector.extract_strided_slice %1 {offsets = [6, 6, 0], sizes = [12, 16, 3], strides = [1, 1, 1]} : vector<20x24x3xf32> to vector<12x16x3xf32>
    %63 = vector.extract_strided_slice %1 {offsets = [6, 7, 0], sizes = [12, 16, 3], strides = [1, 1, 1]} : vector<20x24x3xf32> to vector<12x16x3xf32>
    %64 = vector.extract_strided_slice %1 {offsets = [6, 8, 0], sizes = [12, 16, 3], strides = [1, 1, 1]} : vector<20x24x3xf32> to vector<12x16x3xf32>
    %65 = vector.extract_strided_slice %1 {offsets = [7, 0, 0], sizes = [12, 16, 3], strides = [1, 1, 1]} : vector<20x24x3xf32> to vector<12x16x3xf32>
    %66 = vector.extract_strided_slice %1 {offsets = [7, 1, 0], sizes = [12, 16, 3], strides = [1, 1, 1]} : vector<20x24x3xf32> to vector<12x16x3xf32>
    %67 = vector.extract_strided_slice %1 {offsets = [7, 2, 0], sizes = [12, 16, 3], strides = [1, 1, 1]} : vector<20x24x3xf32> to vector<12x16x3xf32>
    %68 = vector.extract_strided_slice %1 {offsets = [7, 3, 0], sizes = [12, 16, 3], strides = [1, 1, 1]} : vector<20x24x3xf32> to vector<12x16x3xf32>
    %69 = vector.extract_strided_slice %1 {offsets = [7, 4, 0], sizes = [12, 16, 3], strides = [1, 1, 1]} : vector<20x24x3xf32> to vector<12x16x3xf32>
    %70 = vector.extract_strided_slice %1 {offsets = [7, 5, 0], sizes = [12, 16, 3], strides = [1, 1, 1]} : vector<20x24x3xf32> to vector<12x16x3xf32>
    %71 = vector.extract_strided_slice %1 {offsets = [7, 6, 0], sizes = [12, 16, 3], strides = [1, 1, 1]} : vector<20x24x3xf32> to vector<12x16x3xf32>
    %72 = vector.extract_strided_slice %1 {offsets = [7, 7, 0], sizes = [12, 16, 3], strides = [1, 1, 1]} : vector<20x24x3xf32> to vector<12x16x3xf32>
    %73 = vector.extract_strided_slice %1 {offsets = [7, 8, 0], sizes = [12, 16, 3], strides = [1, 1, 1]} : vector<20x24x3xf32> to vector<12x16x3xf32>
    %74 = vector.extract_strided_slice %1 {offsets = [8, 0, 0], sizes = [12, 16, 3], strides = [1, 1, 1]} : vector<20x24x3xf32> to vector<12x16x3xf32>
    %75 = vector.extract_strided_slice %1 {offsets = [8, 1, 0], sizes = [12, 16, 3], strides = [1, 1, 1]} : vector<20x24x3xf32> to vector<12x16x3xf32>
    %76 = vector.extract_strided_slice %1 {offsets = [8, 2, 0], sizes = [12, 16, 3], strides = [1, 1, 1]} : vector<20x24x3xf32> to vector<12x16x3xf32>
    %77 = vector.extract_strided_slice %1 {offsets = [8, 3, 0], sizes = [12, 16, 3], strides = [1, 1, 1]} : vector<20x24x3xf32> to vector<12x16x3xf32>
    %78 = vector.extract_strided_slice %1 {offsets = [8, 4, 0], sizes = [12, 16, 3], strides = [1, 1, 1]} : vector<20x24x3xf32> to vector<12x16x3xf32>
    %79 = vector.extract_strided_slice %1 {offsets = [8, 5, 0], sizes = [12, 16, 3], strides = [1, 1, 1]} : vector<20x24x3xf32> to vector<12x16x3xf32>
    %80 = vector.extract_strided_slice %1 {offsets = [8, 6, 0], sizes = [12, 16, 3], strides = [1, 1, 1]} : vector<20x24x3xf32> to vector<12x16x3xf32>
    %81 = vector.extract_strided_slice %1 {offsets = [8, 7, 0], sizes = [12, 16, 3], strides = [1, 1, 1]} : vector<20x24x3xf32> to vector<12x16x3xf32>
    %82 = vector.extract_strided_slice %1 {offsets = [8, 8, 0], sizes = [12, 16, 3], strides = [1, 1, 1]} : vector<20x24x3xf32> to vector<12x16x3xf32>
    %83 = tpu.concatenate %2, %3, %4, %5, %6, %7, %8, %9, %10, %11, %12, %13, %14, %15, %16, %17 in 2 : vector<12x16x3xf32>, vector<12x16x3xf32>, vector<12x16x3xf32>, vector<12x16x3xf32>, vector<12x16x3xf32>, vector<12x16x3xf32>, vector<12x16x3xf32>, vector<12x16x3xf32>, vector<12x16x3xf32>, vector<12x16x3xf32>, vector<12x16x3xf32>, vector<12x16x3xf32>, vector<12x16x3xf32>, vector<12x16x3xf32>, vector<12x16x3xf32>, vector<12x16x3xf32> -> vector<12x16x48xf32>
    %84 = tpu.concatenate %18, %19, %20, %21, %22, %23, %24, %25, %26, %27, %28, %29, %30, %31, %32, %33 in 2 : vector<12x16x3xf32>, vector<12x16x3xf32>, vector<12x16x3xf32>, vector<12x16x3xf32>, vector<12x16x3xf32>, vector<12x16x3xf32>, vector<12x16x3xf32>, vector<12x16x3xf32>, vector<12x16x3xf32>, vector<12x16x3xf32>, vector<12x16x3xf32>, vector<12x16x3xf32>, vector<12x16x3xf32>, vector<12x16x3xf32>, vector<12x16x3xf32>, vector<12x16x3xf32> -> vector<12x16x48xf32>
    %85 = tpu.concatenate %34, %35, %36, %37, %38, %39, %40, %41, %42, %43, %44, %45, %46, %47, %48, %49 in 2 : vector<12x16x3xf32>, vector<12x16x3xf32>, vector<12x16x3xf32>, vector<12x16x3xf32>, vector<12x16x3xf32>, vector<12x16x3xf32>, vector<12x16x3xf32>, vector<12x16x3xf32>, vector<12x16x3xf32>, vector<12x16x3xf32>, vector<12x16x3xf32>, vector<12x16x3xf32>, vector<12x16x3xf32>, vector<12x16x3xf32>, vector<12x16x3xf32>, vector<12x16x3xf32> -> vector<12x16x48xf32>
    %86 = tpu.concatenate %50, %51, %52, %53, %54, %55, %56, %57, %58, %59, %60, %61, %62, %63, %64, %65 in 2 : vector<12x16x3xf32>, vector<12x16x3xf32>, vector<12x16x3xf32>, vector<12x16x3xf32>, vector<12x16x3xf32>, vector<12x16x3xf32>, vector<12x16x3xf32>, vector<12x16x3xf32>, vector<12x16x3xf32>, vector<12x16x3xf32>, vector<12x16x3xf32>, vector<12x16x3xf32>, vector<12x16x3xf32>, vector<12x16x3xf32>, vector<12x16x3xf32>, vector<12x16x3xf32> -> vector<12x16x48xf32>
    %87 = tpu.concatenate %66, %67, %68, %69, %70, %71, %72, %73, %74, %75, %76, %77, %78, %79, %80, %81 in 2 : vector<12x16x3xf32>, vector<12x16x3xf32>, vector<12x16x3xf32>, vector<12x16x3xf32>, vector<12x16x3xf32>, vector<12x16x3xf32>, vector<12x16x3xf32>, vector<12x16x3xf32>, vector<12x16x3xf32>, vector<12x16x3xf32>, vector<12x16x3xf32>, vector<12x16x3xf32>, vector<12x16x3xf32>, vector<12x16x3xf32>, vector<12x16x3xf32>, vector<12x16x3xf32> -> vector<12x16x48xf32>
    %88 = tpu.concatenate %83, %84, %85, %86, %87, %82 in 2 : vector<12x16x48xf32>, vector<12x16x48xf32>, vector<12x16x48xf32>, vector<12x16x48xf32>, vector<12x16x48xf32>, vector<12x16x3xf32> -> vector<12x16x243xf32>
    %89 = vector.shape_cast %88 : vector<12x16x243xf32> to vector<192x243xf32>
    %c0_3 = arith.constant 0 : index
    %c0_4 = arith.constant 0 : index
    %90 = vector.load %arg3[%c0_3, %c0_4] : memref<243x64xf32, #tpu.memory_space<vmem>>, vector<243x64xf32>
    %cst = arith.constant dense<0.000000e+00> : vector<192x64xf32>
    %91 = tpu.matmul %89, %90, %cst {dimension_numbers = #tpu.dot_dimension_numbers<[1], [0], [0], [1], [0, 0, 1, 1], [], []>} : vector<192x243xf32>, vector<243x64xf32>, vector<192x64xf32> -> vector<192x64xf32>
    %c0_5 = arith.constant 0 : index
    %c0_6 = arith.constant 0 : index
    %92 = vector.load %arg4[%c0_5, %c0_6] : memref<1x64xf32, #tpu.memory_space<vmem>>, vector<1x64xf32>
    %93 = vector.broadcast %92 : vector<1x64xf32> to vector<192x64xf32>
    %94 = arith.addf %91, %93 : vector<192x64xf32>
    %cst_7 = arith.constant 0.000000e+00 : f32
    %95 = vector.broadcast %cst_7 : f32 to vector<192x64xf32>
    %96 = arith.maximumf %94, %95 : vector<192x64xf32>
    %c0_8 = arith.constant 0 : index
    %c0_9 = arith.constant 0 : index
    %97 = vector.load %arg5[%c0_8, %c0_9] : memref<64x32xf32, #tpu.memory_space<vmem>>, vector<64x32xf32>
    %cst_10 = arith.constant dense<0.000000e+00> : vector<192x32xf32>
    %98 = tpu.matmul %96, %97, %cst_10 {dimension_numbers = #tpu.dot_dimension_numbers<[1], [0], [0], [1], [0, 0, 1, 1], [], []>} : vector<192x64xf32>, vector<64x32xf32>, vector<192x32xf32> -> vector<192x32xf32>
    %c0_11 = arith.constant 0 : index
    %c0_12 = arith.constant 0 : index
    %99 = vector.load %arg6[%c0_11, %c0_12] : memref<1x32xf32, #tpu.memory_space<vmem>>, vector<1x32xf32>
    %100 = vector.broadcast %99 : vector<1x32xf32> to vector<192x32xf32>
    %101 = arith.addf %98, %100 : vector<192x32xf32>
    %cst_13 = arith.constant 0.000000e+00 : f32
    %102 = vector.broadcast %cst_13 : f32 to vector<192x32xf32>
    %103 = arith.maximumf %101, %102 : vector<192x32xf32>
    %104 = vector.shape_cast %103 : vector<192x32xf32> to vector<12x16x32xf32>
    %c0_14 = arith.constant 0 : index
    %c2 = arith.constant 2 : index
    %c0_15 = arith.constant 0 : index
    %105 = vector.load %arg10[%c0_14, %c2, %c0_15] : memref<12x20x32xf32, #tpu.memory_space<vmem>>, vector<12x16x32xf32>
    tpu.vector_store %arg10[%c0_14, %c2, %c0_15], %104 {strides = array<i32>} : memref<12x20x32xf32, #tpu.memory_space<vmem>>, vector<12x16x32xf32>,
    %c0_16 = arith.constant 0 : index
    %c2_17 = arith.constant 2 : index
    %c0_18 = arith.constant 0 : index
    %106 = vector.load %arg10[%c0_16, %c2_17, %c0_18] : memref<12x20x32xf32, #tpu.memory_space<vmem>>, vector<12x1x32xf32>
    %c0_19 = arith.constant 0 : index
    %c0_20 = arith.constant 0 : index
    %c0_21 = arith.constant 0 : index
    %107 = vector.load %arg10[%c0_19, %c0_20, %c0_21] : memref<12x20x32xf32, #tpu.memory_space<vmem>>, vector<12x1x32xf32>
    tpu.vector_store %arg10[%c0_19, %c0_20, %c0_21], %106 {strides = array<i32>} : memref<12x20x32xf32, #tpu.memory_space<vmem>>, vector<12x1x32xf32>,
    %c0_22 = arith.constant 0 : index
    %c2_23 = arith.constant 2 : index
    %c0_24 = arith.constant 0 : index
    %108 = vector.load %arg10[%c0_22, %c2_23, %c0_24] : memref<12x20x32xf32, #tpu.memory_space<vmem>>, vector<12x1x32xf32>
    %c0_25 = arith.constant 0 : index
    %c1 = arith.constant 1 : index
    %c0_26 = arith.constant 0 : index
    %109 = vector.load %arg10[%c0_25, %c1, %c0_26] : memref<12x20x32xf32, #tpu.memory_space<vmem>>, vector<12x1x32xf32>
    tpu.vector_store %arg10[%c0_25, %c1, %c0_26], %108 {strides = array<i32>} : memref<12x20x32xf32, #tpu.memory_space<vmem>>, vector<12x1x32xf32>,
    %c0_27 = arith.constant 0 : index
    %c17 = arith.constant 17 : index
    %c0_28 = arith.constant 0 : index
    %110 = vector.load %arg10[%c0_27, %c17, %c0_28] : memref<12x20x32xf32, #tpu.memory_space<vmem>>, vector<12x1x32xf32>
    %c0_29 = arith.constant 0 : index
    %c18 = arith.constant 18 : index
    %c0_30 = arith.constant 0 : index
    %111 = vector.load %arg10[%c0_29, %c18, %c0_30] : memref<12x20x32xf32, #tpu.memory_space<vmem>>, vector<12x1x32xf32>
    tpu.vector_store %arg10[%c0_29, %c18, %c0_30], %110 {strides = array<i32>} : memref<12x20x32xf32, #tpu.memory_space<vmem>>, vector<12x1x32xf32>,
    %c0_31 = arith.constant 0 : index
    %c17_32 = arith.constant 17 : index
    %c0_33 = arith.constant 0 : index
    %112 = vector.load %arg10[%c0_31, %c17_32, %c0_33] : memref<12x20x32xf32, #tpu.memory_space<vmem>>, vector<12x1x32xf32>
    %c0_34 = arith.constant 0 : index
    %c19 = arith.constant 19 : index
    %c0_35 = arith.constant 0 : index
    %113 = vector.load %arg10[%c0_34, %c19, %c0_35] : memref<12x20x32xf32, #tpu.memory_space<vmem>>, vector<12x1x32xf32>
    tpu.vector_store %arg10[%c0_34, %c19, %c0_35], %112 {strides = array<i32>} : memref<12x20x32xf32, #tpu.memory_space<vmem>>, vector<12x1x32xf32>,
    %c0_i32 = arith.constant 0 : i32
    %114 = arith.cmpi eq, %arg1, %c0_i32 : i32
    %115 = arith.extui %114 : i1 to i32
    %c0_i32_36 = arith.constant 0 : i32
    %116 = arith.cmpi ne, %115, %c0_i32_36 : i32
    scf.if %116 {
      %c2_120 = arith.constant 2 : index
      %c0_121 = arith.constant 0 : index
      %c0_122 = arith.constant 0 : index
      %159 = vector.load %arg10[%c2_120, %c0_121, %c0_122] : memref<12x20x32xf32, #tpu.memory_space<vmem>>, vector<1x20x32xf32>
      %c0_123 = arith.constant 0 : index
      %c0_124 = arith.constant 0 : index
      %c0_125 = arith.constant 0 : index
      %160 = vector.load %arg10[%c0_123, %c0_124, %c0_125] : memref<12x20x32xf32, #tpu.memory_space<vmem>>, vector<1x20x32xf32>
      tpu.vector_store %arg10[%c0_123, %c0_124, %c0_125], %159 {strides = array<i32>} : memref<12x20x32xf32, #tpu.memory_space<vmem>>, vector<1x20x32xf32>,
      %c2_126 = arith.constant 2 : index
      %c0_127 = arith.constant 0 : index
      %c0_128 = arith.constant 0 : index
      %161 = vector.load %arg10[%c2_126, %c0_127, %c0_128] : memref<12x20x32xf32, #tpu.memory_space<vmem>>, vector<1x20x32xf32>
      %c1_129 = arith.constant 1 : index
      %c0_130 = arith.constant 0 : index
      %c0_131 = arith.constant 0 : index
      %162 = vector.load %arg10[%c1_129, %c0_130, %c0_131] : memref<12x20x32xf32, #tpu.memory_space<vmem>>, vector<1x20x32xf32>
      tpu.vector_store %arg10[%c1_129, %c0_130, %c0_131], %161 {strides = array<i32>} : memref<12x20x32xf32, #tpu.memory_space<vmem>>, vector<1x20x32xf32>,
    } else {
    }
    %c1_i32 = arith.constant 1 : i32
    %117 = arith.cmpi eq, %arg1, %c1_i32 : i32
    %118 = arith.extui %117 : i1 to i32
    %c0_i32_37 = arith.constant 0 : i32
    %119 = arith.cmpi ne, %118, %c0_i32_37 : i32
    scf.if %119 {
      %c9 = arith.constant 9 : index
      %c0_120 = arith.constant 0 : index
      %c0_121 = arith.constant 0 : index
      %159 = vector.load %arg10[%c9, %c0_120, %c0_121] : memref<12x20x32xf32, #tpu.memory_space<vmem>>, vector<1x20x32xf32>
      %c10 = arith.constant 10 : index
      %c0_122 = arith.constant 0 : index
      %c0_123 = arith.constant 0 : index
      %160 = vector.load %arg10[%c10, %c0_122, %c0_123] : memref<12x20x32xf32, #tpu.memory_space<vmem>>, vector<1x20x32xf32>
      tpu.vector_store %arg10[%c10, %c0_122, %c0_123], %159 {strides = array<i32>} : memref<12x20x32xf32, #tpu.memory_space<vmem>>, vector<1x20x32xf32>,
      %c9_124 = arith.constant 9 : index
      %c0_125 = arith.constant 0 : index
      %c0_126 = arith.constant 0 : index
      %161 = vector.load %arg10[%c9_124, %c0_125, %c0_126] : memref<12x20x32xf32, #tpu.memory_space<vmem>>, vector<1x20x32xf32>
      %c11 = arith.constant 11 : index
      %c0_127 = arith.constant 0 : index
      %c0_128 = arith.constant 0 : index
      %162 = vector.load %arg10[%c11, %c0_127, %c0_128] : memref<12x20x32xf32, #tpu.memory_space<vmem>>, vector<1x20x32xf32>
      tpu.vector_store %arg10[%c11, %c0_127, %c0_128], %161 {strides = array<i32>} : memref<12x20x32xf32, #tpu.memory_space<vmem>>, vector<1x20x32xf32>,
    } else {
    }
    %c0_38 = arith.constant 0 : index
    %c0_39 = arith.constant 0 : index
    %c0_40 = arith.constant 0 : index
    %120 = vector.load %arg10[%c0_38, %c0_39, %c0_40] : memref<12x20x32xf32, #tpu.memory_space<vmem>>, vector<8x16x32xf32>
    %c0_41 = arith.constant 0 : index
    %c1_42 = arith.constant 1 : index
    %c0_43 = arith.constant 0 : index
    %121 = vector.load %arg10[%c0_41, %c1_42, %c0_43] : memref<12x20x32xf32, #tpu.memory_space<vmem>>, vector<8x16x32xf32>
    %c0_44 = arith.constant 0 : index
    %c2_45 = arith.constant 2 : index
    %c0_46 = arith.constant 0 : index
    %122 = vector.load %arg10[%c0_44, %c2_45, %c0_46] : memref<12x20x32xf32, #tpu.memory_space<vmem>>, vector<8x16x32xf32>
    %c0_47 = arith.constant 0 : index
    %c3 = arith.constant 3 : index
    %c0_48 = arith.constant 0 : index
    %123 = vector.load %arg10[%c0_47, %c3, %c0_48] : memref<12x20x32xf32, #tpu.memory_space<vmem>>, vector<8x16x32xf32>
    %c0_49 = arith.constant 0 : index
    %c4 = arith.constant 4 : index
    %c0_50 = arith.constant 0 : index
    %124 = vector.load %arg10[%c0_49, %c4, %c0_50] : memref<12x20x32xf32, #tpu.memory_space<vmem>>, vector<8x16x32xf32>
    %c1_51 = arith.constant 1 : index
    %c0_52 = arith.constant 0 : index
    %c0_53 = arith.constant 0 : index
    %125 = vector.load %arg10[%c1_51, %c0_52, %c0_53] : memref<12x20x32xf32, #tpu.memory_space<vmem>>, vector<8x16x32xf32>
    %c1_54 = arith.constant 1 : index
    %c1_55 = arith.constant 1 : index
    %c0_56 = arith.constant 0 : index
    %126 = vector.load %arg10[%c1_54, %c1_55, %c0_56] : memref<12x20x32xf32, #tpu.memory_space<vmem>>, vector<8x16x32xf32>
    %c1_57 = arith.constant 1 : index
    %c2_58 = arith.constant 2 : index
    %c0_59 = arith.constant 0 : index
    %127 = vector.load %arg10[%c1_57, %c2_58, %c0_59] : memref<12x20x32xf32, #tpu.memory_space<vmem>>, vector<8x16x32xf32>
    %c1_60 = arith.constant 1 : index
    %c3_61 = arith.constant 3 : index
    %c0_62 = arith.constant 0 : index
    %128 = vector.load %arg10[%c1_60, %c3_61, %c0_62] : memref<12x20x32xf32, #tpu.memory_space<vmem>>, vector<8x16x32xf32>
    %c1_63 = arith.constant 1 : index
    %c4_64 = arith.constant 4 : index
    %c0_65 = arith.constant 0 : index
    %129 = vector.load %arg10[%c1_63, %c4_64, %c0_65] : memref<12x20x32xf32, #tpu.memory_space<vmem>>, vector<8x16x32xf32>
    %c2_66 = arith.constant 2 : index
    %c0_67 = arith.constant 0 : index
    %c0_68 = arith.constant 0 : index
    %130 = vector.load %arg10[%c2_66, %c0_67, %c0_68] : memref<12x20x32xf32, #tpu.memory_space<vmem>>, vector<8x16x32xf32>
    %c2_69 = arith.constant 2 : index
    %c1_70 = arith.constant 1 : index
    %c0_71 = arith.constant 0 : index
    %131 = vector.load %arg10[%c2_69, %c1_70, %c0_71] : memref<12x20x32xf32, #tpu.memory_space<vmem>>, vector<8x16x32xf32>
    %c2_72 = arith.constant 2 : index
    %c2_73 = arith.constant 2 : index
    %c0_74 = arith.constant 0 : index
    %132 = vector.load %arg10[%c2_72, %c2_73, %c0_74] : memref<12x20x32xf32, #tpu.memory_space<vmem>>, vector<8x16x32xf32>
    %c2_75 = arith.constant 2 : index
    %c3_76 = arith.constant 3 : index
    %c0_77 = arith.constant 0 : index
    %133 = vector.load %arg10[%c2_75, %c3_76, %c0_77] : memref<12x20x32xf32, #tpu.memory_space<vmem>>, vector<8x16x32xf32>
    %c2_78 = arith.constant 2 : index
    %c4_79 = arith.constant 4 : index
    %c0_80 = arith.constant 0 : index
    %134 = vector.load %arg10[%c2_78, %c4_79, %c0_80] : memref<12x20x32xf32, #tpu.memory_space<vmem>>, vector<8x16x32xf32>
    %c3_81 = arith.constant 3 : index
    %c0_82 = arith.constant 0 : index
    %c0_83 = arith.constant 0 : index
    %135 = vector.load %arg10[%c3_81, %c0_82, %c0_83] : memref<12x20x32xf32, #tpu.memory_space<vmem>>, vector<8x16x32xf32>
    %c3_84 = arith.constant 3 : index
    %c1_85 = arith.constant 1 : index
    %c0_86 = arith.constant 0 : index
    %136 = vector.load %arg10[%c3_84, %c1_85, %c0_86] : memref<12x20x32xf32, #tpu.memory_space<vmem>>, vector<8x16x32xf32>
    %c3_87 = arith.constant 3 : index
    %c2_88 = arith.constant 2 : index
    %c0_89 = arith.constant 0 : index
    %137 = vector.load %arg10[%c3_87, %c2_88, %c0_89] : memref<12x20x32xf32, #tpu.memory_space<vmem>>, vector<8x16x32xf32>
    %c3_90 = arith.constant 3 : index
    %c3_91 = arith.constant 3 : index
    %c0_92 = arith.constant 0 : index
    %138 = vector.load %arg10[%c3_90, %c3_91, %c0_92] : memref<12x20x32xf32, #tpu.memory_space<vmem>>, vector<8x16x32xf32>
    %c3_93 = arith.constant 3 : index
    %c4_94 = arith.constant 4 : index
    %c0_95 = arith.constant 0 : index
    %139 = vector.load %arg10[%c3_93, %c4_94, %c0_95] : memref<12x20x32xf32, #tpu.memory_space<vmem>>, vector<8x16x32xf32>
    %c4_96 = arith.constant 4 : index
    %c0_97 = arith.constant 0 : index
    %c0_98 = arith.constant 0 : index
    %140 = vector.load %arg10[%c4_96, %c0_97, %c0_98] : memref<12x20x32xf32, #tpu.memory_space<vmem>>, vector<8x16x32xf32>
    %c4_99 = arith.constant 4 : index
    %c1_100 = arith.constant 1 : index
    %c0_101 = arith.constant 0 : index
    %141 = vector.load %arg10[%c4_99, %c1_100, %c0_101] : memref<12x20x32xf32, #tpu.memory_space<vmem>>, vector<8x16x32xf32>
    %c4_102 = arith.constant 4 : index
    %c2_103 = arith.constant 2 : index
    %c0_104 = arith.constant 0 : index
    %142 = vector.load %arg10[%c4_102, %c2_103, %c0_104] : memref<12x20x32xf32, #tpu.memory_space<vmem>>, vector<8x16x32xf32>
    %c4_105 = arith.constant 4 : index
    %c3_106 = arith.constant 3 : index
    %c0_107 = arith.constant 0 : index
    %143 = vector.load %arg10[%c4_105, %c3_106, %c0_107] : memref<12x20x32xf32, #tpu.memory_space<vmem>>, vector<8x16x32xf32>
    %c4_108 = arith.constant 4 : index
    %c4_109 = arith.constant 4 : index
    %c0_110 = arith.constant 0 : index
    %144 = vector.load %arg10[%c4_108, %c4_109, %c0_110] : memref<12x20x32xf32, #tpu.memory_space<vmem>>, vector<8x16x32xf32>
    %145 = tpu.concatenate %120, %121, %122, %123, %124, %125, %126, %127, %128, %129, %130, %131, %132, %133, %134, %135 in 2 : vector<8x16x32xf32>, vector<8x16x32xf32>, vector<8x16x32xf32>, vector<8x16x32xf32>, vector<8x16x32xf32>, vector<8x16x32xf32>, vector<8x16x32xf32>, vector<8x16x32xf32>, vector<8x16x32xf32>, vector<8x16x32xf32>, vector<8x16x32xf32>, vector<8x16x32xf32>, vector<8x16x32xf32>, vector<8x16x32xf32>, vector<8x16x32xf32>, vector<8x16x32xf32> -> vector<8x16x512xf32>
    %146 = tpu.concatenate %136, %137, %138, %139, %140, %141, %142, %143, %144 in 2 : vector<8x16x32xf32>, vector<8x16x32xf32>, vector<8x16x32xf32>, vector<8x16x32xf32>, vector<8x16x32xf32>, vector<8x16x32xf32>, vector<8x16x32xf32>, vector<8x16x32xf32>, vector<8x16x32xf32> -> vector<8x16x288xf32>
    %147 = tpu.concatenate %145, %146 in 2 : vector<8x16x512xf32>, vector<8x16x288xf32> -> vector<8x16x800xf32>
    %148 = vector.shape_cast %147 : vector<8x16x800xf32> to vector<128x800xf32>
    %c0_111 = arith.constant 0 : index
    %c0_112 = arith.constant 0 : index
    %149 = vector.load %arg7[%c0_111, %c0_112] : memref<800x3xf32, #tpu.memory_space<vmem>>, vector<800x3xf32>
    %cst_113 = arith.constant dense<0.000000e+00> : vector<128x3xf32>
    %150 = tpu.matmul %148, %149, %cst_113 {dimension_numbers = #tpu.dot_dimension_numbers<[1], [0], [0], [1], [0, 0, 1, 1], [], []>} : vector<128x800xf32>, vector<800x3xf32>, vector<128x3xf32> -> vector<128x3xf32>
    %c0_114 = arith.constant 0 : index
    %c0_115 = arith.constant 0 : index
    %151 = vector.load %arg8[%c0_114, %c0_115] : memref<1x3xf32, #tpu.memory_space<vmem>>, vector<1x3xf32>
    %152 = vector.broadcast %151 : vector<1x3xf32> to vector<128x3xf32>
    %153 = arith.addf %150, %152 : vector<128x3xf32>
    %cst_116 = arith.constant 0.000000e+00 : f32
    %154 = vector.broadcast %cst_116 : f32 to vector<128x3xf32>
    %155 = arith.maximumf %153, %154 : vector<128x3xf32>
    %c0_117 = arith.constant 0 : index
    %c0_118 = arith.constant 0 : index
    %c0_119 = arith.constant 0 : index
    %156 = vector.load %arg9[%c0_117, %c0_118, %c0_119] : memref<1x128x3xf32, #tpu.memory_space<vmem>>, vector<1x128x3xf32>
    %157 = vector.shape_cast %156 : vector<1x128x3xf32> to vector<128x3xf32>
    %158 = vector.shape_cast %155 : vector<128x3xf32> to vector<1x128x3xf32>
    tpu.vector_store %arg9[%c0_117, %c0_118, %c0_119], %158 {strides = array<i32>} : memref<1x128x3xf32, #tpu.memory_space<vmem>>, vector<1x128x3xf32>,
    return
  }
  func.func @transform_0(%arg0: i32, %arg1: i32) -> (i32, i32, i32, i32) {
    %c2_i32 = arith.constant 2 : i32
    %0 = arith.muli %arg0, %c2_i32 : i32
    %1 = arith.addi %0, %arg1 : i32
    %c0_i32 = arith.constant 0 : i32
    %c0_i32_0 = arith.constant 0 : i32
    %c0_i32_1 = arith.constant 0 : i32
    %c0_i32_2 = arith.constant 0 : i32
    return %1, %c0_i32, %c0_i32_0, %c0_i32_1 : i32, i32, i32, i32
  }
  func.func @transform_1(%arg0: i32, %arg1: i32) -> (i32, i32) {
    %c0_i32 = arith.constant 0 : i32
    %c0_i32_0 = arith.constant 0 : i32
    %c0_i32_1 = arith.constant 0 : i32
    return %c0_i32, %c0_i32_0 : i32, i32
  }
  func.func @transform_2(%arg0: i32, %arg1: i32) -> (i32, i32) {
    %c0_i32 = arith.constant 0 : i32
    %c0_i32_0 = arith.constant 0 : i32
    %c0_i32_1 = arith.constant 0 : i32
    return %c0_i32, %c0_i32_0 : i32, i32
  }
  func.func @transform_3(%arg0: i32, %arg1: i32) -> (i32, i32) {
    %c0_i32 = arith.constant 0 : i32
    %c0_i32_0 = arith.constant 0 : i32
    %c0_i32_1 = arith.constant 0 : i32
    return %c0_i32, %c0_i32_0 : i32, i32
  }
  func.func @transform_4(%arg0: i32, %arg1: i32) -> (i32, i32) {
    %c0_i32 = arith.constant 0 : i32
    %c0_i32_0 = arith.constant 0 : i32
    %c0_i32_1 = arith.constant 0 : i32
    return %c0_i32, %c0_i32_0 : i32, i32
  }
  func.func @transform_5(%arg0: i32, %arg1: i32) -> (i32, i32) {
    %c0_i32 = arith.constant 0 : i32
    %c0_i32_0 = arith.constant 0 : i32
    %c0_i32_1 = arith.constant 0 : i32
    return %c0_i32, %c0_i32_0 : i32, i32
  }
  func.func @transform_6(%arg0: i32, %arg1: i32) -> (i32, i32) {
    %c0_i32 = arith.constant 0 : i32
    %c0_i32_0 = arith.constant 0 : i32
    %c0_i32_1 = arith.constant 0 : i32
    return %c0_i32, %c0_i32_0 : i32, i32
  }
  func.func @transform_7(%arg0: i32, %arg1: i32) -> (i32, i32, i32) {
    %c0_i32 = arith.constant 0 : i32
    %c0_i32_0 = arith.constant 0 : i32
    return %arg0, %arg1, %c0_i32 : i32, i32, i32
  }
}

</mosaic_0001>

<llo_original>
// kernel: srcnn_forward.1
$region0: #{srcnn_forward.1}
  #allocation0 [shape = 'u32[]', space=smem, size = 0x4, offset = 0x4, fixed_abs, tag = 'smem constant byte address 0x4 - core index']
  #allocation1 [shape = 'u32[72,128]{1,0:T(1,128)}', space=vmem, size = 0x9000, scoped, tag = 'internal scratch']
  #allocation2 [shape = 'f32[12,20,32]{2,1,0:T(8,128)}', space=vmem, size = 0x24000, scoped, tag = 'scratch operand']
  %s0 = inlined_call_operand.vmem [shape: f32[4,20,24,3], index: 0, kind: input, shape index: {}]
  %s1 = inlined_call_operand.vmem [shape: f32[243,64], index: 1, kind: input, shape index: {}]
  %s2 = inlined_call_operand.vmem [shape: f32[1,64], index: 2, kind: input, shape index: {}]
  %s3 = inlined_call_operand.vmem [shape: f32[64,32], index: 3, kind: input, shape index: {}]
  %s4 = inlined_call_operand.vmem [shape: f32[1,32], index: 4, kind: input, shape index: {}]
  %s5 = inlined_call_operand.vmem [shape: f32[800,3], index: 5, kind: input, shape index: {}]
  %s6 = inlined_call_operand.vmem [shape: f32[1,3], index: 6, kind: input, shape index: {}]
  %s7 = inlined_call_operand.vmem [shape: f32[2,256,3], index: 7, kind: output, shape index: {}]
  %s8 = sld [smem:[#allocation0]]
  $region69: #{srcnn_forward.1} parent=0
    _
  %s10 = ssub.s32 1, %s8
  %s11 = scalar_select 0, %s10, %s8
  loop: start=0, step=1, limit=6
  $region2: #{srcnn_forward.1} parent=0 // loop_pre_header
    _
  $region3: #{srcnn_forward.1} parent=0 // loop_header
    %s13 = sphi 0, %s17
    %p14 = scmp.ge.s32.totalorder %s13, 6
    %s20 = sphi 0, %s32
    %s21 = sphi 0, %s28
    %s22 = sphi 0, %s20
    %s23 = sphi 0, %s21
    %s24 = sphi 0, %s22
    %s25 = sphi 0, %s23
    %s39 = sphi 0, %s41
    %s42 = sphi 0, %s39
    %s43 = sphi 0, %s42
    %s59 = sphi 0, %s43
    %s63 = sphi 0, %s63
    %s65 = sphi 0, %s63
    %s66 = sphi 0, %s65
    %s80 = sphi 0, %s66
    %s84 = sphi 0, %s84
    %s86 = sphi 0, %s84
    %s87 = sphi 0, %s86
    %s101 = sphi 0, %s87
    %s105 = sphi 0, %s105
    %s107 = sphi 0, %s105
    %s108 = sphi 0, %s107
    %s122 = sphi 0, %s108
    %s126 = sphi 0, %s126
    %s128 = sphi 0, %s126
    %s129 = sphi 0, %s128
    %s143 = sphi 0, %s129
    %s147 = sphi 0, %s147
    %s149 = sphi 0, %s147
    %s150 = sphi 0, %s149
    %s164 = sphi 0, %s150
    %s168 = sphi 0, %s168
    %s170 = sphi 0, %s168
    %s171 = sphi 0, %s170
    %s185 = sphi 0, %s171
    %s193 = sphi 0, %s195
    %s196 = sphi 0, %s193
    %s197 = sphi 0, %s196
    %s213 = sphi 0, %s197
  $region4: #{srcnn_forward.1} parent=0 // loop_header_branch
    %16 = sbr.rel (%p14) target = $region8
  $region5: #{srcnn_forward.1} parent=0 // loop_body
    %s18 = ssub.s32 %s13, 1
    %s19 = ssub.s32 %s13, 2
    %s26 = sadd.s32 1, %s21
    %p27 = scmp.ge.s32.totalorder %s26, 2
    %s28 = scalar_select %p27, 0, %s26
    %s29 = sadd.s32 1, %s20
    %s30 = scalar_select %p27, %s29, %s20
    %p31 = scmp.ge.s32.totalorder %s30, 2
    %s32 = scalar_select %p31, 0, %s30
    %s33 = smul.u32 %s20, 2
    %s34 = sadd.s32 %s33, %s21
    %s35 = smul.u32 %s32, 2
    %s36 = sadd.s32 %s35, %s28
    %s37 = ssub.s32 %s34, %s36
    %p38 = scmp.eq.s32.totalorder %s37, 0
    %s40 = sadd.s32 %s39, 1
    %s41 = scalar_select %p38, %s39, %s40
    %p44 = pneg %p38
    %p45 = scmp.eq.s32.totalorder %s13, 3
    %p46 = por %p44, %p45
    %p47 = scmp.ne.s32.totalorder %s39, %s42
    %p48 = scmp.eq.s32.totalorder %s13, 0
    %p49 = por %p47, %p48
    %p50 = scmp.ne.s32.totalorder %s39, %s42
    %p51 = scmp.eq.s32.totalorder %s18, 3
    %p52 = por %p50, %p51
    %p53 = scmp.ne.s32.totalorder %s42, %s43
    %p54 = scmp.eq.s32.totalorder %s18, 0
    %p55 = por %p53, %p54
    %p56 = scmp.ne.s32.totalorder %s42, %s43
    %p57 = scmp.eq.s32.totalorder %s19, 3
    %p58 = por %p56, %p57
    %p60 = scmp.ne.s32.totalorder %s43, %s59
    %p61 = scmp.eq.s32.totalorder %s19, 0
    %p62 = por %p60, %p61
    %s64 = sadd.s32 %s63, 1
    %p67 = scmp.eq.s32.totalorder %s13, 3
    %p68 = scmp.ne.s32.totalorder %s63, %s65
    %p69 = scmp.eq.s32.totalorder %s13, 0
    %p70 = por %p68, %p69
    %p71 = scmp.ne.s32.totalorder %s63, %s65
    %p72 = scmp.eq.s32.totalorder %s18, 3
    %p73 = por %p71, %p72
    %p74 = scmp.ne.s32.totalorder %s65, %s66
    %p75 = scmp.eq.s32.totalorder %s18, 0
    %p76 = por %p74, %p75
    %p77 = scmp.ne.s32.totalorder %s65, %s66
    %p78 = scmp.eq.s32.totalorder %s19, 3
    %p79 = por %p77, %p78
    %p81 = scmp.ne.s32.totalorder %s66, %s80
    %p82 = scmp.eq.s32.totalorder %s19, 0
    %p83 = por %p81, %p82
    %s85 = sadd.s32 %s84, 1
    %p88 = scmp.eq.s32.totalorder %s13, 3
    %p89 = scmp.ne.s32.totalorder %s84, %s86
    %p90 = scmp.eq.s32.totalorder %s13, 0
    %p91 = por %p89, %p90
    %p92 = scmp.ne.s32.totalorder %s84, %s86
    %p93 = scmp.eq.s32.totalorder %s18, 3
    %p94 = por %p92, %p93
    %p95 = scmp.ne.s32.totalorder %s86, %s87
    %p96 = scmp.eq.s32.totalorder %s18, 0
    %p97 = por %p95, %p96
    %p98 = scmp.ne.s32.totalorder %s86, %s87
    %p99 = scmp.eq.s32.totalorder %s19, 3
    %p100 = por %p98, %p99
    %p102 = scmp.ne.s32.totalorder %s87, %s101
    %p103 = scmp.eq.s32.totalorder %s19, 0
    %p104 = por %p102, %p103
    %s106 = sadd.s32 %s105, 1
    %p109 = scmp.eq.s32.totalorder %s13, 3
    %p110 = scmp.ne.s32.totalorder %s105, %s107
    %p111 = scmp.eq.s32.totalorder %s13, 0
    %p112 = por %p110, %p111
    %p113 = scmp.ne.s32.totalorder %s105, %s107
    %p114 = scmp.eq.s32.totalorder %s18, 3
    %p115 = por %p113, %p114
    %p116 = scmp.ne.s32.totalorder %s107, %s108
    %p117 = scmp.eq.s32.totalorder %s18, 0
    %p118 = por %p116, %p117
    %p119 = scmp.ne.s32.totalorder %s107, %s108
    %p120 = scmp.eq.s32.totalorder %s19, 3
    %p121 = por %p119, %p120
    %p123 = scmp.ne.s32.totalorder %s108, %s122
    %p124 = scmp.eq.s32.totalorder %s19, 0
    %p125 = por %p123, %p124
    %s127 = sadd.s32 %s126, 1
    %p130 = scmp.eq.s32.totalorder %s13, 3
    %p131 = scmp.ne.s32.totalorder %s126, %s128
    %p132 = scmp.eq.s32.totalorder %s13, 0
    %p133 = por %p131, %p132
    %p134 = scmp.ne.s32.totalorder %s126, %s128
    %p135 = scmp.eq.s32.totalorder %s18, 3
    %p136 = por %p134, %p135
    %p137 = scmp.ne.s32.totalorder %s128, %s129
    %p138 = scmp.eq.s32.totalorder %s18, 0
    %p139 = por %p137, %p138
    %p140 = scmp.ne.s32.totalorder %s128, %s129
    %p141 = scmp.eq.s32.totalorder %s19, 3
    %p142 = por %p140, %p141
    %p144 = scmp.ne.s32.totalorder %s129, %s143
    %p145 = scmp.eq.s32.totalorder %s19, 0
    %p146 = por %p144, %p145
    %s148 = sadd.s32 %s147, 1
    %p151 = scmp.eq.s32.totalorder %s13, 3
    %p152 = scmp.ne.s32.totalorder %s147, %s149
    %p153 = scmp.eq.s32.totalorder %s13, 0
    %p154 = por %p152, %p153
    %p155 = scmp.ne.s32.totalorder %s147, %s149
    %p156 = scmp.eq.s32.totalorder %s18, 3
    %p157 = por %p155, %p156
    %p158 = scmp.ne.s32.totalorder %s149, %s150
    %p159 = scmp.eq.s32.totalorder %s18, 0
    %p160 = por %p158, %p159
    %p161 = scmp.ne.s32.totalorder %s149, %s150
    %p162 = scmp.eq.s32.totalorder %s19, 3
    %p163 = por %p161, %p162
    %p165 = scmp.ne.s32.totalorder %s150, %s164
    %p166 = scmp.eq.s32.totalorder %s19, 0
    %p167 = por %p165, %p166
    %s169 = sadd.s32 %s168, 1
    %p172 = scmp.eq.s32.totalorder %s13, 3
    %p173 = scmp.ne.s32.totalorder %s168, %s170
    %p174 = scmp.eq.s32.totalorder %s13, 0
    %p175 = por %p173, %p174
    %p176 = scmp.ne.s32.totalorder %s168, %s170
    %p177 = scmp.eq.s32.totalorder %s18, 3
    %p178 = por %p176, %p177
    %p179 = scmp.ne.s32.totalorder %s170, %s171
    %p180 = scmp.eq.s32.totalorder %s18, 0
    %p181 = por %p179, %p180
    %p182 = scmp.ne.s32.totalorder %s170, %s171
    %p183 = scmp.eq.s32.totalorder %s19, 3
    %p184 = por %p182, %p183
    %p186 = scmp.ne.s32.totalorder %s171, %s185
    %p187 = scmp.eq.s32.totalorder %s19, 0
    %p188 = por %p186, %p187
    %s189 = ssub.s32 %s20, %s32
    %s190 = ssub.s32 %s21, %s28
    %s191 = sor.u32 %s189, %s190
    %p192 = scmp.eq.s32.totalorder %s191, 0
    %s194 = sadd.s32 %s193, 1
    %s195 = scalar_select %p192, %s193, %s194
    %p198 = pneg %p192
    %p199 = scmp.eq.s32.totalorder %s13, 3
    %p200 = por %p198, %p199
    %p201 = scmp.ne.s32.totalorder %s193, %s196
    %p202 = scmp.eq.s32.totalorder %s13, 0
    %p203 = por %p201, %p202
    %p204 = scmp.ne.s32.totalorder %s193, %s196
    %p205 = scmp.eq.s32.totalorder %s18, 3
    %p206 = por %p204, %p205
    %p207 = scmp.ne.s32.totalorder %s196, %s197
    %p208 = scmp.eq.s32.totalorder %s18, 0
    %p209 = por %p207, %p208
    %p210 = scmp.ne.s32.totalorder %s196, %s197
    %p211 = scmp.eq.s32.totalorder %s19, 3
    %p212 = por %p210, %p211
    %p214 = scmp.ne.s32.totalorder %s197, %s213
    %p215 = scmp.eq.s32.totalorder %s19, 0
    %p216 = por %p214, %p215
    %p217 = scmp.le.s32.totalorder 1, %s13
    %p218 = scmp.lt.s32.totalorder %s13, 5
    %p219 = pnand %p217, %p218
    %p220 = pneg %p219
    // Predicated region
    $region9: #{srcnn_forward.1} parent=5 // pred_check
      _
    $region10: #{srcnn_forward.1} parent=5 // pred_check_branch
      %222 = sbr.rel (%p219) target = $region12
    $region11: #{srcnn_forward.1} parent=5 // pred_region
      %s223 = ssub.s32 %s13, 1
      // Predicated region
      $region13: #{srcnn_forward.1} parent=11 // pred_check
        %p224 = pneg %p76
      $region14: #{srcnn_forward.1} parent=11 // pred_check_branch
        %226 = sbr.rel (%p224) target = $region16
      $region15: #{srcnn_forward.1} parent=11 // pred_region
        _
      $region16: #{srcnn_forward.1} parent=11 // pred_fallthru
        _
      // Predicated region
      $region17: #{srcnn_forward.1} parent=11 // pred_check
        %p227 = pneg %p97
      $region18: #{srcnn_forward.1} parent=11 // pred_check_branch
        %229 = sbr.rel (%p227) target = $region20
      $region19: #{srcnn_forward.1} parent=11 // pred_region
        _
      $region20: #{srcnn_forward.1} parent=11 // pred_fallthru
        _
      // Predicated region
      $region21: #{srcnn_forward.1} parent=11 // pred_check
        %p230 = pneg %p118
      $region22: #{srcnn_forward.1} parent=11 // pred_check_branch
        %232 = sbr.rel (%p230) target = $region24
      $region23: #{srcnn_forward.1} parent=11 // pred_region
        _
      $region24: #{srcnn_forward.1} parent=11 // pred_fallthru
        _
      // Predicated region
      $region25: #{srcnn_forward.1} parent=11 // pred_check
        %p233 = pneg %p139
      $region26: #{srcnn_forward.1} parent=11 // pred_check_branch
        %235 = sbr.rel (%p233) target = $region28
      $region27: #{srcnn_forward.1} parent=11 // pred_region
        _
      $region28: #{srcnn_forward.1} parent=11 // pred_fallthru
        _
      // Predicated region
      $region29: #{srcnn_forward.1} parent=11 // pred_check
        %p236 = pneg %p160
      $region30: #{srcnn_forward.1} parent=11 // pred_check_branch
        %238 = sbr.rel (%p236) target = $region32
      $region31: #{srcnn_forward.1} parent=11 // pred_region
        _
      $region32: #{srcnn_forward.1} parent=11 // pred_fallthru
        _
      // Predicated region
      $region33: #{srcnn_forward.1} parent=11 // pred_check
        %p239 = pneg %p181
      $region34: #{srcnn_forward.1} parent=11 // pred_check_branch
        %241 = sbr.rel (%p239) target = $region36
      $region35: #{srcnn_forward.1} parent=11 // pred_region
        _
      $region36: #{srcnn_forward.1} parent=11 // pred_fallthru
        _
    $region12: #{srcnn_forward.1} parent=5 // pred_fallthru
      _
    %p242 = scmp.lt.s32.totalorder %s13, 4
    // Predicated region
    $region37: #{srcnn_forward.1} parent=5 // pred_check
      %p243 = pneg %p242
    $region38: #{srcnn_forward.1} parent=5 // pred_check_branch
      %245 = sbr.rel (%p243) target = $region40
    $region39: #{srcnn_forward.1} parent=5 // pred_region
      // Predicated region
      $region41: #{srcnn_forward.1} parent=39 // pred_check
        %p246 = pneg %p49
      $region42: #{srcnn_forward.1} parent=39 // pred_check_branch
        %248 = sbr.rel (%p246) target = $region44
      $region43: #{srcnn_forward.1} parent=39 // pred_region
        %s249 = smul.u32 %s20, 2
        %s250 = sadd.s32 %s249, %s21
        %p251 = scmp.lt.s32.totalorder %s250, 3
        %s252 = scalar_select %p251, %s250, 3
        %s253 = smul.addr %s252, 60
        %s254 = smul.addr %s253, 8
        %s255 = scalar_lea.vmem %s0, %s254
        %s256 = smul.u32 %s20, 2
        %s257 = sadd.s32 %s256, %s21
      $region44: #{srcnn_forward.1} parent=39 // pred_fallthru
        _
    $region40: #{srcnn_forward.1} parent=5 // pred_fallthru
      _
    %p258 = scmp.le.s32.totalorder 1, %s13
    %p259 = scmp.lt.s32.totalorder %s13, 5
    %p260 = pnand %p258, %p259
    %p261 = pneg %p260
    // Predicated region
    $region45: #{srcnn_forward.1} parent=5 // pred_check
      _
    $region46: #{srcnn_forward.1} parent=5 // pred_check_branch
      %263 = sbr.rel (%p260) target = $region48
    $region47: #{srcnn_forward.1} parent=5 // pred_region
      %s264 = ssub.s32 %s13, 1
      %s265 = smul.u32 %s22, 2
      %s266 = sadd.s32 %s265, %s23
      %p267 = scmp.lt.s32.totalorder %s266, 3
      %s268 = scalar_select %p267, %s266, 3
      %s269 = smul.addr %s268, 60
      %s270 = smul.addr %s269, 8
      %s271 = scalar_lea.vmem %s0, %s270
      %p272 = pneg %p55
      %p273 = pneg %p52
      %p274 = pneg %p76
      %p275 = pneg %p73
      %p276 = pneg %p97
      %p277 = pneg %p94
      %p278 = pneg %p118
      %p279 = pneg %p115
      %p280 = pneg %p139
      %p281 = pneg %p136
      %p282 = pneg %p160
      %p283 = pneg %p157
      %p284 = pneg %p181
      %p285 = pneg %p178
      %p286 = pneg %p209
      %p287 = pneg %p206
      %s288 = smul.u32 16, %s23
      %p289 = scmp.lt.s32.totalorder %s22, 1
      %s290 = scalar_select %p289, %s22, 1
      %p291 = scmp.lt.s32.totalorder %s288, 31
      %s292 = scalar_select %p291, %s288, 31
      %s293 = smul.addr %s290, 32
      %s294 = sadd.s32 %s292, %s293
      %s295 = smul.addr %s294, 8
      %s296 = scalar_lea.vmem %s7, %s295
      %s297 = smul.u32 %s22, 2
      %s298 = sadd.s32 %s297, %s23
      %p299 = scmp.lt.s32.totalorder %s298, 3
      %s300 = scalar_select %p299, %s298, 3
      %s301 = smul.addr %s300, 60
      %s302 = smul.addr %s301, 8
      %s303 = scalar_lea.vmem %s0, %s302
      %s304 = smul.u32 %s22, 2
      %s305 = sadd.s32 %s304, %s23
      %s306 = smul.u32 16, %s23
      %p307 = scmp.lt.s32.totalorder %s22, 1
      %s308 = scalar_select %p307, %s22, 1
      %p309 = scmp.lt.s32.totalorder %s306, 31
      %s310 = scalar_select %p309, %s306, 31
      %s311 = smul.addr %s308, 32
      %s312 = sadd.s32 %s310, %s311
      %s313 = smul.addr %s312, 8
      %s314 = scalar_lea.vmem %s7, %s313
      %s315 = smul.u32 16, %s23
      %v316 = vld [vmem:[%s303] sm:$0xff]
      %v317 = vld [vmem:[%s303 + $0x8] sm:$0xff]
      %v318 = vld [vmem:[%s303 + $0x10] sm:$0xff]
      %v319 = vld [vmem:[%s303 + $0x18] sm:$0xff]
      %v320 = vld [vmem:[%s303 + $0x20] sm:$0xff]
      %v321 = vld [vmem:[%s303 + $0x28] sm:$0xff]
      %v322 = vld [vmem:[%s303 + $0x30] sm:$0xff]
      %v323 = vld [vmem:[%s303 + $0x38] sm:$0xff]
      %v324 = vld [vmem:[%s303 + $0x40] sm:$0xff]
      %v325 = vld [vmem:[%s303 + $0x48] sm:$0xff]
      %v326 = vld [vmem:[%s303 + $0x50] sm:$0xff]
      %v327 = vld [vmem:[%s303 + $0x58] sm:$0xff]
      %v328 = vld [vmem:[%s303 + $0x60] sm:$0xff]
      %v329 = vld [vmem:[%s303 + $0x68] sm:$0xff]
      %v330 = vld [vmem:[%s303 + $0x70] sm:$0xff]
      %v331 = vld [vmem:[%s303 + $0x78] sm:$0xff]
      %v332 = vld [vmem:[%s303 + $0x80] sm:$0xff]
      %v333 = vld [vmem:[%s303 + $0x88] sm:$0xff]
      %v334 = vld [vmem:[%s303 + $0x90] sm:$0xff]
      %v335 = vld [vmem:[%s303 + $0x98] sm:$0xff]
      %v336 = vld [vmem:[%s303 + $0xa0] sm:$0xff]
      %v337 = vld [vmem:[%s303 + $0xa8] sm:$0xff]
      %v338 = vld [vmem:[%s303 + $0xb0] sm:$0xff]
      %v339 = vld [vmem:[%s303 + $0xb8] sm:$0xff]
      %v340 = vld [vmem:[%s303 + $0xc0] sm:$0xff]
      %v341 = vld [vmem:[%s303 + $0xc8] sm:$0xff]
      %v342 = vld [vmem:[%s303 + $0xd0] sm:$0xff]
      %v343 = vld [vmem:[%s303 + $0xd8] sm:$0xff]
      %v344 = vld [vmem:[%s303 + $0xe0] sm:$0xff]
      %v345 = vld [vmem:[%s303 + $0xe8] sm:$0xff]
      %v346 = vld [vmem:[%s303 + $0xf0] sm:$0xff]
      %v347 = vld [vmem:[%s303 + $0xf8] sm:$0xff]
      %v348 = vld [vmem:[%s303 + $0x100] sm:$0xff]
      %v349 = vld [vmem:[%s303 + $0x108] sm:$0xff]
      %v350 = vld [vmem:[%s303 + $0x110] sm:$0xff]
      %v351 = vld [vmem:[%s303 + $0x118] sm:$0xff]
      %v352 = vld [vmem:[%s303 + $0x120] sm:$0xff]
      %v353 = vld [vmem:[%s303 + $0x128] sm:$0xff]
      %v354 = vld [vmem:[%s303 + $0x130] sm:$0xff]
      %v355 = vld [vmem:[%s303 + $0x138] sm:$0xff]
      %v356 = vld [vmem:[%s303 + $0x140] sm:$0xff]
      %v357 = vld [vmem:[%s303 + $0x148] sm:$0xff]
      %v358 = vld [vmem:[%s303 + $0x150] sm:$0xff]
      %v359 = vld [vmem:[%s303 + $0x158] sm:$0xff]
      %v360 = vld [vmem:[%s303 + $0x160] sm:$0xff]
      %v361 = vld [vmem:[%s303 + $0x168] sm:$0xff]
      %v362 = vld [vmem:[%s303 + $0x170] sm:$0xff]
      %v363 = vld [vmem:[%s303 + $0x178] sm:$0xff]
      %v364 = vld [vmem:[%s303 + $0x180] sm:$0xff]
      %v365 = vld [vmem:[%s303 + $0x188] sm:$0xff]
      %v366 = vld [vmem:[%s303 + $0x190] sm:$0xff]
      %v367 = vld [vmem:[%s303 + $0x198] sm:$0xff]
      %v368 = vld [vmem:[%s303 + $0x1a0] sm:$0xff]
      %v369 = vld [vmem:[%s303 + $0x1a8] sm:$0xff]
      %v370 = vld [vmem:[%s303 + $0x1b0] sm:$0xff]
      %v371 = vld [vmem:[%s303 + $0x1b8] sm:$0xff]
      %v372 = vld [vmem:[%s303 + $0x1c0] sm:$0xff]
      %v373 = vld [vmem:[%s303 + $0x1c8] sm:$0xff]
      %v374 = vld [vmem:[%s303 + $0x1d0] sm:$0xff]
      %v375 = vld [vmem:[%s303 + $0x1d8] sm:$0xff]
      %vm412 = vcmask 1046528
      %v413 = vrot.slane %v316, 1
      %v414 = vrot.slane %v317, 1
      %v415 = vsel %vm412, %v413, %v414
      %v416 = vrot.slane %v318, 1
      %v417 = vsel %vm412, %v414, %v416
      %v418 = vrot.slane %v319, 1
      %v419 = vrot.slane %v320, 1
      %v420 = vsel %vm412, %v418, %v419
      %v421 = vrot.slane %v321, 1
      %v422 = vsel %vm412, %v419, %v421
      %v423 = vrot.slane %v322, 1
      %v424 = vrot.slane %v323, 1
      %v425 = vsel %vm412, %v423, %v424
      %v426 = vrot.slane %v324, 1
      %v427 = vsel %vm412, %v424, %v426
      %v428 = vrot.slane %v325, 1
      %v429 = vrot.slane %v326, 1
      %v430 = vsel %vm412, %v428, %v429
      %v431 = vrot.slane %v327, 1
      %v432 = vsel %vm412, %v429, %v431
      %v433 = vrot.slane %v328, 1
      %v434 = vrot.slane %v329, 1
      %v435 = vsel %vm412, %v433, %v434
      %v436 = vrot.slane %v330, 1
      %v437 = vsel %vm412, %v434, %v436
      %v438 = vrot.slane %v331, 1
      %v439 = vrot.slane %v332, 1
      %v440 = vsel %vm412, %v438, %v439
      %v441 = vrot.slane %v333, 1
      %v442 = vsel %vm412, %v439, %v441
      %v443 = vrot.slane %v334, 1
      %v444 = vrot.slane %v335, 1
      %v445 = vsel %vm412, %v443, %v444
      %v446 = vrot.slane %v336, 1
      %v447 = vsel %vm412, %v444, %v446
      %v448 = vrot.slane %v337, 1
      %v449 = vrot.slane %v338, 1
      %v450 = vsel %vm412, %v448, %v449
      %v451 = vrot.slane %v339, 1
      %v452 = vsel %vm412, %v449, %v451
      %v453 = vrot.slane %v340, 1
      %v454 = vrot.slane %v341, 1
      %v455 = vsel %vm412, %v453, %v454
      %v456 = vrot.slane %v342, 1
      %v457 = vsel %vm412, %v454, %v456
      %v458 = vrot.slane %v343, 1
      %v459 = vrot.slane %v344, 1
      %v460 = vsel %vm412, %v458, %v459
      %v461 = vrot.slane %v345, 1
      %v462 = vsel %vm412, %v459, %v461
      %v463 = vrot.slane %v346, 1
      %v464 = vrot.slane %v347, 1
      %v465 = vsel %vm412, %v463, %v464
      %v466 = vrot.slane %v348, 1
      %v467 = vsel %vm412, %v464, %v466
      %v468 = vrot.slane %v349, 1
      %v469 = vrot.slane %v350, 1
      %v470 = vsel %vm412, %v468, %v469
      %v471 = vrot.slane %v351, 1
      %v472 = vsel %vm412, %v469, %v471
      %473 = vrot.lane.b32.xlu0 %v415, 3
      %v474 = vpop.permute.xlu0 %473
      %475 = vrot.lane.b32.xlu0 %v417, 3
      %v476 = vpop.permute.xlu0 %475
      %477 = vrot.lane.b32.xlu0 %v420, 3
      %v478 = vpop.permute.xlu0 %477
      %479 = vrot.lane.b32.xlu0 %v422, 3
      %v480 = vpop.permute.xlu0 %479
      %481 = vrot.lane.b32.xlu0 %v425, 3
      %v482 = vpop.permute.xlu0 %481
      %483 = vrot.lane.b32.xlu0 %v427, 3
      %v484 = vpop.permute.xlu0 %483
      %485 = vrot.lane.b32.xlu0 %v430, 3
      %v486 = vpop.permute.xlu0 %485
      %487 = vrot.lane.b32.xlu0 %v432, 3
      %v488 = vpop.permute.xlu0 %487
      %489 = vrot.lane.b32.xlu0 %v435, 3
      %v490 = vpop.permute.xlu0 %489
      %491 = vrot.lane.b32.xlu0 %v437, 3
      %v492 = vpop.permute.xlu0 %491
      %493 = vrot.lane.b32.xlu0 %v440, 3
      %v494 = vpop.permute.xlu0 %493
      %495 = vrot.lane.b32.xlu0 %v442, 3
      %v496 = vpop.permute.xlu0 %495
      %497 = vrot.lane.b32.xlu0 %v445, 3
      %v498 = vpop.permute.xlu0 %497
      %499 = vrot.lane.b32.xlu0 %v447, 3
      %v500 = vpop.permute.xlu0 %499
      %501 = vrot.lane.b32.xlu0 %v450, 3
      %v502 = vpop.permute.xlu0 %501
      %503 = vrot.lane.b32.xlu0 %v452, 3
      %v504 = vpop.permute.xlu0 %503
      %505 = vrot.lane.b32.xlu0 %v455, 3
      %v506 = vpop.permute.xlu0 %505
      %507 = vrot.lane.b32.xlu0 %v457, 3
      %v508 = vpop.permute.xlu0 %507
      %509 = vrot.lane.b32.xlu0 %v460, 3
      %v510 = vpop.permute.xlu0 %509
      %511 = vrot.lane.b32.xlu0 %v462, 3
      %v512 = vpop.permute.xlu0 %511
      %513 = vrot.lane.b32.xlu0 %v465, 3
      %v514 = vpop.permute.xlu0 %513
      %515 = vrot.lane.b32.xlu0 %v467, 3
      %v516 = vpop.permute.xlu0 %515
      %517 = vrot.lane.b32.xlu0 %v470, 3
      %v518 = vpop.permute.xlu0 %517
      %519 = vrot.lane.b32.xlu0 %v472, 3
      %v520 = vpop.permute.xlu0 %519
      %vm545 = vcmask 1045504
      %v546 = vrot.slane %v316, 2
      %v547 = vrot.slane %v317, 2
      %v548 = vsel %vm545, %v546, %v547
      %v549 = vrot.slane %v318, 2
      %v550 = vsel %vm545, %v547, %v549
      %v551 = vrot.slane %v319, 2
      %v552 = vrot.slane %v320, 2
      %v553 = vsel %vm545, %v551, %v552
      %v554 = vrot.slane %v321, 2
      %v555 = vsel %vm545, %v552, %v554
      %v556 = vrot.slane %v322, 2
      %v557 = vrot.slane %v323, 2
      %v558 = vsel %vm545, %v556, %v557
      %v559 = vrot.slane %v324, 2
      %v560 = vsel %vm545, %v557, %v559
      %v561 = vrot.slane %v325, 2
      %v562 = vrot.slane %v326, 2
      %v563 = vsel %vm545, %v561, %v562
      %v564 = vrot.slane %v327, 2
      %v565 = vsel %vm545, %v562, %v564
      %v566 = vrot.slane %v328, 2
      %v567 = vrot.slane %v329, 2
      %v568 = vsel %vm545, %v566, %v567
      %v569 = vrot.slane %v330, 2
      %v570 = vsel %vm545, %v567, %v569
      %v571 = vrot.slane %v331, 2
      %v572 = vrot.slane %v332, 2
      %v573 = vsel %vm545, %v571, %v572
      %v574 = vrot.slane %v333, 2
      %v575 = vsel %vm545, %v572, %v574
      %v576 = vrot.slane %v334, 2
      %v577 = vrot.slane %v335, 2
      %v578 = vsel %vm545, %v576, %v577
      %v579 = vrot.slane %v336, 2
      %v580 = vsel %vm545, %v577, %v579
      %v581 = vrot.slane %v337, 2
      %v582 = vrot.slane %v338, 2
      %v583 = vsel %vm545, %v581, %v582
      %v584 = vrot.slane %v339, 2
      %v585 = vsel %vm545, %v582, %v584
      %v586 = vrot.slane %v340, 2
      %v587 = vrot.slane %v341, 2
      %v588 = vsel %vm545, %v586, %v587
      %v589 = vrot.slane %v342, 2
      %v590 = vsel %vm545, %v587, %v589
      %v591 = vrot.slane %v343, 2
      %v592 = vrot.slane %v344, 2
      %v593 = vsel %vm545, %v591, %v592
      %v594 = vrot.slane %v345, 2
      %v595 = vsel %vm545, %v592, %v594
      %v596 = vrot.slane %v346, 2
      %v597 = vrot.slane %v347, 2
      %v598 = vsel %vm545, %v596, %v597
      %v599 = vrot.slane %v348, 2
      %v600 = vsel %vm545, %v597, %v599
      %v601 = vrot.slane %v349, 2
      %v602 = vrot.slane %v350, 2
      %v603 = vsel %vm545, %v601, %v602
      %v604 = vrot.slane %v351, 2
      %v605 = vsel %vm545, %v602, %v604
      %606 = vrot.lane.b32.xlu0 %v548, 6
      %v607 = vpop.permute.xlu0 %606
      %608 = vrot.lane.b32.xlu0 %v550, 6
      %v609 = vpop.permute.xlu0 %608
      %610 = vrot.lane.b32.xlu0 %v553, 6
      %v611 = vpop.permute.xlu0 %610
      %612 = vrot.lane.b32.xlu0 %v555, 6
      %v613 = vpop.permute.xlu0 %612
      %614 = vrot.lane.b32.xlu0 %v558, 6
      %v615 = vpop.permute.xlu0 %614
      %616 = vrot.lane.b32.xlu0 %v560, 6
      %v617 = vpop.permute.xlu0 %616
      %618 = vrot.lane.b32.xlu0 %v563, 6
      %v619 = vpop.permute.xlu0 %618
      %620 = vrot.lane.b32.xlu0 %v565, 6
      %v621 = vpop.permute.xlu0 %620
      %622 = vrot.lane.b32.xlu0 %v568, 6
      %v623 = vpop.permute.xlu0 %622
      %624 = vrot.lane.b32.xlu0 %v570, 6
      %v625 = vpop.permute.xlu0 %624
      %626 = vrot.lane.b32.xlu0 %v573, 6
      %v627 = vpop.permute.xlu0 %626
      %628 = vrot.lane.b32.xlu0 %v575, 6
      %v629 = vpop.permute.xlu0 %628
      %630 = vrot.lane.b32.xlu0 %v578, 6
      %v631 = vpop.permute.xlu0 %630
      %632 = vrot.lane.b32.xlu0 %v580, 6
      %v633 = vpop.permute.xlu0 %632
      %634 = vrot.lane.b32.xlu0 %v583, 6
      %v635 = vpop.permute.xlu0 %634
      %636 = vrot.lane.b32.xlu0 %v585, 6
      %v637 = vpop.permute.xlu0 %636
      %638 = vrot.lane.b32.xlu0 %v588, 6
      %v639 = vpop.permute.xlu0 %638
      %640 = vrot.lane.b32.xlu0 %v590, 6
      %v641 = vpop.permute.xlu0 %640
      %642 = vrot.lane.b32.xlu0 %v593, 6
      %v643 = vpop.permute.xlu0 %642
      %644 = vrot.lane.b32.xlu0 %v595, 6
      %v645 = vpop.permute.xlu0 %644
      %646 = vrot.lane.b32.xlu0 %v598, 6
      %v647 = vpop.permute.xlu0 %646
      %648 = vrot.lane.b32.xlu0 %v600, 6
      %v649 = vpop.permute.xlu0 %648
      %650 = vrot.lane.b32.xlu0 %v603, 6
      %v651 = vpop.permute.xlu0 %650
      %652 = vrot.lane.b32.xlu0 %v605, 6
      %v653 = vpop.permute.xlu0 %652
      %vm678 = vcmask 1044480
      %v679 = vrot.slane %v316, 3
      %v680 = vrot.slane %v317, 3
      %v681 = vsel %vm678, %v679, %v680
      %v682 = vrot.slane %v318, 3
      %v683 = vsel %vm678, %v680, %v682
      %v684 = vrot.slane %v319, 3
      %v685 = vrot.slane %v320, 3
      %v686 = vsel %vm678, %v684, %v685
      %v687 = vrot.slane %v321, 3
      %v688 = vsel %vm678, %v685, %v687
      %v689 = vrot.slane %v322, 3
      %v690 = vrot.slane %v323, 3
      %v691 = vsel %vm678, %v689, %v690
      %v692 = vrot.slane %v324, 3
      %v693 = vsel %vm678, %v690, %v692
      %v694 = vrot.slane %v325, 3
      %v695 = vrot.slane %v326, 3
      %v696 = vsel %vm678, %v694, %v695
      %v697 = vrot.slane %v327, 3
      %v698 = vsel %vm678, %v695, %v697
      %v699 = vrot.slane %v328, 3
      %v700 = vrot.slane %v329, 3
      %v701 = vsel %vm678, %v699, %v700
      %v702 = vrot.slane %v330, 3
      %v703 = vsel %vm678, %v700, %v702
      %v704 = vrot.slane %v331, 3
      %v705 = vrot.slane %v332, 3
      %v706 = vsel %vm678, %v704, %v705
      %v707 = vrot.slane %v333, 3
      %v708 = vsel %vm678, %v705, %v707
      %v709 = vrot.slane %v334, 3
      %v710 = vrot.slane %v335, 3
      %v711 = vsel %vm678, %v709, %v710
      %v712 = vrot.slane %v336, 3
      %v713 = vsel %vm678, %v710, %v712
      %v714 = vrot.slane %v337, 3
      %v715 = vrot.slane %v338, 3
      %v716 = vsel %vm678, %v714, %v715
      %v717 = vrot.slane %v339, 3
      %v718 = vsel %vm678, %v715, %v717
      %v719 = vrot.slane %v340, 3
      %v720 = vrot.slane %v341, 3
      %v721 = vsel %vm678, %v719, %v720
      %v722 = vrot.slane %v342, 3
      %v723 = vsel %vm678, %v720, %v722
      %v724 = vrot.slane %v343, 3
      %v725 = vrot.slane %v344, 3
      %v726 = vsel %vm678, %v724, %v725
      %v727 = vrot.slane %v345, 3
      %v728 = vsel %vm678, %v725, %v727
      %v729 = vrot.slane %v346, 3
      %v730 = vrot.slane %v347, 3
      %v731 = vsel %vm678, %v729, %v730
      %v732 = vrot.slane %v348, 3
      %v733 = vsel %vm678, %v730, %v732
      %v734 = vrot.slane %v349, 3
      %v735 = vrot.slane %v350, 3
      %v736 = vsel %vm678, %v734, %v735
      %v737 = vrot.slane %v351, 3
      %v738 = vsel %vm678, %v735, %v737
      %739 = vrot.lane.b32.xlu0 %v681, 9
      %v740 = vpop.permute.xlu0 %739
      %741 = vrot.lane.b32.xlu0 %v683, 9
      %v742 = vpop.permute.xlu0 %741
      %743 = vrot.lane.b32.xlu0 %v686, 9
      %v744 = vpop.permute.xlu0 %743
      %745 = vrot.lane.b32.xlu0 %v688, 9
      %v746 = vpop.permute.xlu0 %745
      %747 = vrot.lane.b32.xlu0 %v691, 9
      %v748 = vpop.permute.xlu0 %747
      %749 = vrot.lane.b32.xlu0 %v693, 9
      %v750 = vpop.permute.xlu0 %749
      %751 = vrot.lane.b32.xlu0 %v696, 9
      %v752 = vpop.permute.xlu0 %751
      %753 = vrot.lane.b32.xlu0 %v698, 9
      %v754 = vpop.permute.xlu0 %753
      %755 = vrot.lane.b32.xlu0 %v701, 9
      %v756 = vpop.permute.xlu0 %755
      %757 = vrot.lane.b32.xlu0 %v703, 9
      %v758 = vpop.permute.xlu0 %757
      %759 = vrot.lane.b32.xlu0 %v706, 9
      %v760 = vpop.permute.xlu0 %759
      %761 = vrot.lane.b32.xlu0 %v708, 9
      %v762 = vpop.permute.xlu0 %761
      %763 = vrot.lane.b32.xlu0 %v711, 9
      %v764 = vpop.permute.xlu0 %763
      %765 = vrot.lane.b32.xlu0 %v713, 9
      %v766 = vpop.permute.xlu0 %765
      %767 = vrot.lane.b32.xlu0 %v716, 9
      %v768 = vpop.permute.xlu0 %767
      %769 = vrot.lane.b32.xlu0 %v718, 9
      %v770 = vpop.permute.xlu0 %769
      %771 = vrot.lane.b32.xlu0 %v721, 9
      %v772 = vpop.permute.xlu0 %771
      %773 = vrot.lane.b32.xlu0 %v723, 9
      %v774 = vpop.permute.xlu0 %773
      %775 = vrot.lane.b32.xlu0 %v726, 9
      %v776 = vpop.permute.xlu0 %775
      %777 = vrot.lane.b32.xlu0 %v728, 9
      %v778 = vpop.permute.xlu0 %777
      %779 = vrot.lane.b32.xlu0 %v731, 9
      %v780 = vpop.permute.xlu0 %779
      %781 = vrot.lane.b32.xlu0 %v733, 9
      %v782 = vpop.permute.xlu0 %781
      %783 = vrot.lane.b32.xlu0 %v736, 9
      %v784 = vpop.permute.xlu0 %783
      %785 = vrot.lane.b32.xlu0 %v738, 9
      %v786 = vpop.permute.xlu0 %785
      %vm811 = vcmask 1043456
      %v812 = vrot.slane %v316, 4
      %v813 = vrot.slane %v317, 4
      %v814 = vsel %vm811, %v812, %v813
      %v815 = vrot.slane %v318, 4
      %v816 = vsel %vm811, %v813, %v815
      %v817 = vrot.slane %v319, 4
      %v818 = vrot.slane %v320, 4
      %v819 = vsel %vm811, %v817, %v818
      %v820 = vrot.slane %v321, 4
      %v821 = vsel %vm811, %v818, %v820
      %v822 = vrot.slane %v322, 4
      %v823 = vrot.slane %v323, 4
      %v824 = vsel %vm811, %v822, %v823
      %v825 = vrot.slane %v324, 4
      %v826 = vsel %vm811, %v823, %v825
      %v827 = vrot.slane %v325, 4
      %v828 = vrot.slane %v326, 4
      %v829 = vsel %vm811, %v827, %v828
      %v830 = vrot.slane %v327, 4
      %v831 = vsel %vm811, %v828, %v830
      %v832 = vrot.slane %v328, 4
      %v833 = vrot.slane %v329, 4
      %v834 = vsel %vm811, %v832, %v833
      %v835 = vrot.slane %v330, 4
      %v836 = vsel %vm811, %v833, %v835
      %v837 = vrot.slane %v331, 4
      %v838 = vrot.slane %v332, 4
      %v839 = vsel %vm811, %v837, %v838
      %v840 = vrot.slane %v333, 4
      %v841 = vsel %vm811, %v838, %v840
      %v842 = vrot.slane %v334, 4
      %v843 = vrot.slane %v335, 4
      %v844 = vsel %vm811, %v842, %v843
      %v845 = vrot.slane %v336, 4
      %v846 = vsel %vm811, %v843, %v845
      %v847 = vrot.slane %v337, 4
      %v848 = vrot.slane %v338, 4
      %v849 = vsel %vm811, %v847, %v848
      %v850 = vrot.slane %v339, 4
      %v851 = vsel %vm811, %v848, %v850
      %v852 = vrot.slane %v340, 4
      %v853 = vrot.slane %v341, 4
      %v854 = vsel %vm811, %v852, %v853
      %v855 = vrot.slane %v342, 4
      %v856 = vsel %vm811, %v853, %v855
      %v857 = vrot.slane %v343, 4
      %v858 = vrot.slane %v344, 4
      %v859 = vsel %vm811, %v857, %v858
      %v860 = vrot.slane %v345, 4
      %v861 = vsel %vm811, %v858, %v860
      %v862 = vrot.slane %v346, 4
      %v863 = vrot.slane %v347, 4
      %v864 = vsel %vm811, %v862, %v863
      %v865 = vrot.slane %v348, 4
      %v866 = vsel %vm811, %v863, %v865
      %v867 = vrot.slane %v349, 4
      %v868 = vrot.slane %v350, 4
      %v869 = vsel %vm811, %v867, %v868
      %v870 = vrot.slane %v351, 4
      %v871 = vsel %vm811, %v868, %v870
      %872 = vrot.lane.b32.xlu0 %v814, 12
      %v873 = vpop.permute.xlu0 %872
      %874 = vrot.lane.b32.xlu0 %v816, 12
      %v875 = vpop.permute.xlu0 %874
      %876 = vrot.lane.b32.xlu0 %v819, 12
      %v877 = vpop.permute.xlu0 %876
      %878 = vrot.lane.b32.xlu0 %v821, 12
      %v879 = vpop.permute.xlu0 %878
      %880 = vrot.lane.b32.xlu0 %v824, 12
      %v881 = vpop.permute.xlu0 %880
      %882 = vrot.lane.b32.xlu0 %v826, 12
      %v883 = vpop.permute.xlu0 %882
      %884 = vrot.lane.b32.xlu0 %v829, 12
      %v885 = vpop.permute.xlu0 %884
      %886 = vrot.lane.b32.xlu0 %v831, 12
      %v887 = vpop.permute.xlu0 %886
      %888 = vrot.lane.b32.xlu0 %v834, 12
      %v889 = vpop.permute.xlu0 %888
      %890 = vrot.lane.b32.xlu0 %v836, 12
      %v891 = vpop.permute.xlu0 %890
      %892 = vrot.lane.b32.xlu0 %v839, 12
      %v893 = vpop.permute.xlu0 %892
      %894 = vrot.lane.b32.xlu0 %v841, 12
      %v895 = vpop.permute.xlu0 %894
      %896 = vrot.lane.b32.xlu0 %v844, 12
      %v897 = vpop.permute.xlu0 %896
      %898 = vrot.lane.b32.xlu0 %v846, 12
      %v899 = vpop.permute.xlu0 %898
      %900 = vrot.lane.b32.xlu0 %v849, 12
      %v901 = vpop.permute.xlu0 %900
      %902 = vrot.lane.b32.xlu0 %v851, 12
      %v903 = vpop.permute.xlu0 %902
      %904 = vrot.lane.b32.xlu0 %v854, 12
      %v905 = vpop.permute.xlu0 %904
      %906 = vrot.lane.b32.xlu0 %v856, 12
      %v907 = vpop.permute.xlu0 %906
      %908 = vrot.lane.b32.xlu0 %v859, 12
      %v909 = vpop.permute.xlu0 %908
      %910 = vrot.lane.b32.xlu0 %v861, 12
      %v911 = vpop.permute.xlu0 %910
      %912 = vrot.lane.b32.xlu0 %v864, 12
      %v913 = vpop.permute.xlu0 %912
      %914 = vrot.lane.b32.xlu0 %v866, 12
      %v915 = vpop.permute.xlu0 %914
      %916 = vrot.lane.b32.xlu0 %v869, 12
      %v917 = vpop.permute.xlu0 %916
      %918 = vrot.lane.b32.xlu0 %v871, 12
      %v919 = vpop.permute.xlu0 %918
      %vm944 = vcmask 1042432
      %v945 = vrot.slane %v316, 5
      %v946 = vrot.slane %v317, 5
      %v947 = vsel %vm944, %v945, %v946
      %v948 = vrot.slane %v318, 5
      %v949 = vsel %vm944, %v946, %v948
      %v950 = vrot.slane %v319, 5
      %v951 = vrot.slane %v320, 5
      %v952 = vsel %vm944, %v950, %v951
      %v953 = vrot.slane %v321, 5
      %v954 = vsel %vm944, %v951, %v953
      %v955 = vrot.slane %v322, 5
      %v956 = vrot.slane %v323, 5
      %v957 = vsel %vm944, %v955, %v956
      %v958 = vrot.slane %v324, 5
      %v959 = vsel %vm944, %v956, %v958
      %v960 = vrot.slane %v325, 5
      %v961 = vrot.slane %v326, 5
      %v962 = vsel %vm944, %v960, %v961
      %v963 = vrot.slane %v327, 5
      %v964 = vsel %vm944, %v961, %v963
      %v965 = vrot.slane %v328, 5
      %v966 = vrot.slane %v329, 5
      %v967 = vsel %vm944, %v965, %v966
      %v968 = vrot.slane %v330, 5
      %v969 = vsel %vm944, %v966, %v968
      %v970 = vrot.slane %v331, 5
      %v971 = vrot.slane %v332, 5
      %v972 = vsel %vm944, %v970, %v971
      %v973 = vrot.slane %v333, 5
      %v974 = vsel %vm944, %v971, %v973
      %v975 = vrot.slane %v334, 5
      %v976 = vrot.slane %v335, 5
      %v977 = vsel %vm944, %v975, %v976
      %v978 = vrot.slane %v336, 5
      %v979 = vsel %vm944, %v976, %v978
      %v980 = vrot.slane %v337, 5
      %v981 = vrot.slane %v338, 5
      %v982 = vsel %vm944, %v980, %v981
      %v983 = vrot.slane %v339, 5
      %v984 = vsel %vm944, %v981, %v983
      %v985 = vrot.slane %v340, 5
      %v986 = vrot.slane %v341, 5
      %v987 = vsel %vm944, %v985, %v986
      %v988 = vrot.slane %v342, 5
      %v989 = vsel %vm944, %v986, %v988
      %v990 = vrot.slane %v343, 5
      %v991 = vrot.slane %v344, 5
      %v992 = vsel %vm944, %v990, %v991
      %v993 = vrot.slane %v345, 5
      %v994 = vsel %vm944, %v991, %v993
      %v995 = vrot.slane %v346, 5
      %v996 = vrot.slane %v347, 5
      %v997 = vsel %vm944, %v995, %v996
      %v998 = vrot.slane %v348, 5
      %v999 = vsel %vm944, %v996, %v998
      %v1000 = vrot.slane %v349, 5
      %v1001 = vrot.slane %v350, 5
      %v1002 = vsel %vm944, %v1000, %v1001
      %v1003 = vrot.slane %v351, 5
      %v1004 = vsel %vm944, %v1001, %v1003
      %1005 = vrot.lane.b32.xlu0 %v947, 15
      %v1006 = vpop.permute.xlu0 %1005
      %1007 = vrot.lane.b32.xlu0 %v949, 15
      %v1008 = vpop.permute.xlu0 %1007
      %1009 = vrot.lane.b32.xlu0 %v952, 15
      %v1010 = vpop.permute.xlu0 %1009
      %1011 = vrot.lane.b32.xlu0 %v954, 15
      %v1012 = vpop.permute.xlu0 %1011
      %1013 = vrot.lane.b32.xlu0 %v957, 15
      %v1014 = vpop.permute.xlu0 %1013
      %1015 = vrot.lane.b32.xlu0 %v959, 15
      %v1016 = vpop.permute.xlu0 %1015
      %1017 = vrot.lane.b32.xlu0 %v962, 15
      %v1018 = vpop.permute.xlu0 %1017
      %1019 = vrot.lane.b32.xlu0 %v964, 15
      %v1020 = vpop.permute.xlu0 %1019
      %1021 = vrot.lane.b32.xlu0 %v967, 15
      %v1022 = vpop.permute.xlu0 %1021
      %1023 = vrot.lane.b32.xlu0 %v969, 15
      %v1024 = vpop.permute.xlu0 %1023
      %1025 = vrot.lane.b32.xlu0 %v972, 15
      %v1026 = vpop.permute.xlu0 %1025
      %1027 = vrot.lane.b32.xlu0 %v974, 15
      %v1028 = vpop.permute.xlu0 %1027
      %1029 = vrot.lane.b32.xlu0 %v977, 15
      %v1030 = vpop.permute.xlu0 %1029
      %1031 = vrot.lane.b32.xlu0 %v979, 15
      %v1032 = vpop.permute.xlu0 %1031
      %1033 = vrot.lane.b32.xlu0 %v982, 15
      %v1034 = vpop.permute.xlu0 %1033
      %1035 = vrot.lane.b32.xlu0 %v984, 15
      %v1036 = vpop.permute.xlu0 %1035
      %1037 = vrot.lane.b32.xlu0 %v987, 15
      %v1038 = vpop.permute.xlu0 %1037
      %1039 = vrot.lane.b32.xlu0 %v989, 15
      %v1040 = vpop.permute.xlu0 %1039
      %1041 = vrot.lane.b32.xlu0 %v992, 15
      %v1042 = vpop.permute.xlu0 %1041
      %1043 = vrot.lane.b32.xlu0 %v994, 15
      %v1044 = vpop.permute.xlu0 %1043
      %1045 = vrot.lane.b32.xlu0 %v997, 15
      %v1046 = vpop.permute.xlu0 %1045
      %1047 = vrot.lane.b32.xlu0 %v999, 15
      %v1048 = vpop.permute.xlu0 %1047
      %1049 = vrot.lane.b32.xlu0 %v1002, 15
      %v1050 = vpop.permute.xlu0 %1049
      %1051 = vrot.lane.b32.xlu0 %v1004, 15
      %v1052 = vpop.permute.xlu0 %1051
      %vm1077 = vcmask 1041408
      %v1078 = vrot.slane %v316, 6
      %v1079 = vrot.slane %v317, 6
      %v1080 = vsel %vm1077, %v1078, %v1079
      %v1081 = vrot.slane %v318, 6
      %v1082 = vsel %vm1077, %v1079, %v1081
      %v1083 = vrot.slane %v319, 6
      %v1084 = vrot.slane %v320, 6
      %v1085 = vsel %vm1077, %v1083, %v1084
      %v1086 = vrot.slane %v321, 6
      %v1087 = vsel %vm1077, %v1084, %v1086
      %v1088 = vrot.slane %v322, 6
      %v1089 = vrot.slane %v323, 6
      %v1090 = vsel %vm1077, %v1088, %v1089
      %v1091 = vrot.slane %v324, 6
      %v1092 = vsel %vm1077, %v1089, %v1091
      %v1093 = vrot.slane %v325, 6
      %v1094 = vrot.slane %v326, 6
      %v1095 = vsel %vm1077, %v1093, %v1094
      %v1096 = vrot.slane %v327, 6
      %v1097 = vsel %vm1077, %v1094, %v1096
      %v1098 = vrot.slane %v328, 6
      %v1099 = vrot.slane %v329, 6
      %v1100 = vsel %vm1077, %v1098, %v1099
      %v1101 = vrot.slane %v330, 6
      %v1102 = vsel %vm1077, %v1099, %v1101
      %v1103 = vrot.slane %v331, 6
      %v1104 = vrot.slane %v332, 6
      %v1105 = vsel %vm1077, %v1103, %v1104
      %v1106 = vrot.slane %v333, 6
      %v1107 = vsel %vm1077, %v1104, %v1106
      %v1108 = vrot.slane %v334, 6
      %v1109 = vrot.slane %v335, 6
      %v1110 = vsel %vm1077, %v1108, %v1109
      %v1111 = vrot.slane %v336, 6
      %v1112 = vsel %vm1077, %v1109, %v1111
      %v1113 = vrot.slane %v337, 6
      %v1114 = vrot.slane %v338, 6
      %v1115 = vsel %vm1077, %v1113, %v1114
      %v1116 = vrot.slane %v339, 6
      %v1117 = vsel %vm1077, %v1114, %v1116
      %v1118 = vrot.slane %v340, 6
      %v1119 = vrot.slane %v341, 6
      %v1120 = vsel %vm1077, %v1118, %v1119
      %v1121 = vrot.slane %v342, 6
      %v1122 = vsel %vm1077, %v1119, %v1121
      %v1123 = vrot.slane %v343, 6
      %v1124 = vrot.slane %v344, 6
      %v1125 = vsel %vm1077, %v1123, %v1124
      %v1126 = vrot.slane %v345, 6
      %v1127 = vsel %vm1077, %v1124, %v1126
      %v1128 = vrot.slane %v346, 6
      %v1129 = vrot.slane %v347, 6
      %v1130 = vsel %vm1077, %v1128, %v1129
      %v1131 = vrot.slane %v348, 6
      %v1132 = vsel %vm1077, %v1129, %v1131
      %v1133 = vrot.slane %v349, 6
      %v1134 = vrot.slane %v350, 6
      %v1135 = vsel %vm1077, %v1133, %v1134
      %v1136 = vrot.slane %v351, 6
      %v1137 = vsel %vm1077, %v1134, %v1136
      %1138 = vrot.lane.b32.xlu0 %v1080, 18
      %v1139 = vpop.permute.xlu0 %1138
      %1140 = vrot.lane.b32.xlu0 %v1082, 18
      %v1141 = vpop.permute.xlu0 %1140
      %1142 = vrot.lane.b32.xlu0 %v1085, 18
      %v1143 = vpop.permute.xlu0 %1142
      %1144 = vrot.lane.b32.xlu0 %v1087, 18
      %v1145 = vpop.permute.xlu0 %1144
      %1146 = vrot.lane.b32.xlu0 %v1090, 18
      %v1147 = vpop.permute.xlu0 %1146
      %1148 = vrot.lane.b32.xlu0 %v1092, 18
      %v1149 = vpop.permute.xlu0 %1148
      %1150 = vrot.lane.b32.xlu0 %v1095, 18
      %v1151 = vpop.permute.xlu0 %1150
      %1152 = vrot.lane.b32.xlu0 %v1097, 18
      %v1153 = vpop.permute.xlu0 %1152
      %1154 = vrot.lane.b32.xlu0 %v1100, 18
      %v1155 = vpop.permute.xlu0 %1154
      %1156 = vrot.lane.b32.xlu0 %v1102, 18
      %v1157 = vpop.permute.xlu0 %1156
      %1158 = vrot.lane.b32.xlu0 %v1105, 18
      %v1159 = vpop.permute.xlu0 %1158
      %1160 = vrot.lane.b32.xlu0 %v1107, 18
      %v1161 = vpop.permute.xlu0 %1160
      %1162 = vrot.lane.b32.xlu0 %v1110, 18
      %v1163 = vpop.permute.xlu0 %1162
      %1164 = vrot.lane.b32.xlu0 %v1112, 18
      %v1165 = vpop.permute.xlu0 %1164
      %1166 = vrot.lane.b32.xlu0 %v1115, 18
      %v1167 = vpop.permute.xlu0 %1166
      %1168 = vrot.lane.b32.xlu0 %v1117, 18
      %v1169 = vpop.permute.xlu0 %1168
      %1170 = vrot.lane.b32.xlu0 %v1120, 18
      %v1171 = vpop.permute.xlu0 %1170
      %1172 = vrot.lane.b32.xlu0 %v1122, 18
      %v1173 = vpop.permute.xlu0 %1172
      %1174 = vrot.lane.b32.xlu0 %v1125, 18
      %v1175 = vpop.permute.xlu0 %1174
      %1176 = vrot.lane.b32.xlu0 %v1127, 18
      %v1177 = vpop.permute.xlu0 %1176
      %1178 = vrot.lane.b32.xlu0 %v1130, 18
      %v1179 = vpop.permute.xlu0 %1178
      %1180 = vrot.lane.b32.xlu0 %v1132, 18
      %v1181 = vpop.permute.xlu0 %1180
      %1182 = vrot.lane.b32.xlu0 %v1135, 18
      %v1183 = vpop.permute.xlu0 %1182
      %1184 = vrot.lane.b32.xlu0 %v1137, 18
      %v1185 = vpop.permute.xlu0 %1184
      %vm1210 = vcmask 1040384
      %v1211 = vrot.slane %v316, 7
      %v1212 = vrot.slane %v317, 7
      %v1213 = vsel %vm1210, %v1211, %v1212
      %v1214 = vrot.slane %v318, 7
      %v1215 = vsel %vm1210, %v1212, %v1214
      %v1216 = vrot.slane %v319, 7
      %v1217 = vrot.slane %v320, 7
      %v1218 = vsel %vm1210, %v1216, %v1217
      %v1219 = vrot.slane %v321, 7
      %v1220 = vsel %vm1210, %v1217, %v1219
      %v1221 = vrot.slane %v322, 7
      %v1222 = vrot.slane %v323, 7
      %v1223 = vsel %vm1210, %v1221, %v1222
      %v1224 = vrot.slane %v324, 7
      %v1225 = vsel %vm1210, %v1222, %v1224
      %v1226 = vrot.slane %v325, 7
      %v1227 = vrot.slane %v326, 7
      %v1228 = vsel %vm1210, %v1226, %v1227
      %v1229 = vrot.slane %v327, 7
      %v1230 = vsel %vm1210, %v1227, %v1229
      %v1231 = vrot.slane %v328, 7
      %v1232 = vrot.slane %v329, 7
      %v1233 = vsel %vm1210, %v1231, %v1232
      %v1234 = vrot.slane %v330, 7
      %v1235 = vsel %vm1210, %v1232, %v1234
      %v1236 = vrot.slane %v331, 7
      %v1237 = vrot.slane %v332, 7
      %v1238 = vsel %vm1210, %v1236, %v1237
      %v1239 = vrot.slane %v333, 7
      %v1240 = vsel %vm1210, %v1237, %v1239
      %v1241 = vrot.slane %v334, 7
      %v1242 = vrot.slane %v335, 7
      %v1243 = vsel %vm1210, %v1241, %v1242
      %v1244 = vrot.slane %v336, 7
      %v1245 = vsel %vm1210, %v1242, %v1244
      %v1246 = vrot.slane %v337, 7
      %v1247 = vrot.slane %v338, 7
      %v1248 = vsel %vm1210, %v1246, %v1247
      %v1249 = vrot.slane %v339, 7
      %v1250 = vsel %vm1210, %v1247, %v1249
      %v1251 = vrot.slane %v340, 7
      %v1252 = vrot.slane %v341, 7
      %v1253 = vsel %vm1210, %v1251, %v1252
      %v1254 = vrot.slane %v342, 7
      %v1255 = vsel %vm1210, %v1252, %v1254
      %v1256 = vrot.slane %v343, 7
      %v1257 = vrot.slane %v344, 7
      %v1258 = vsel %vm1210, %v1256, %v1257
      %v1259 = vrot.slane %v345, 7
      %v1260 = vsel %vm1210, %v1257, %v1259
      %v1261 = vrot.slane %v346, 7
      %v1262 = vrot.slane %v347, 7
      %v1263 = vsel %vm1210, %v1261, %v1262
      %v1264 = vrot.slane %v348, 7
      %v1265 = vsel %vm1210, %v1262, %v1264
      %v1266 = vrot.slane %v349, 7
      %v1267 = vrot.slane %v350, 7
      %v1268 = vsel %vm1210, %v1266, %v1267
      %v1269 = vrot.slane %v351, 7
      %v1270 = vsel %vm1210, %v1267, %v1269
      %1271 = vrot.lane.b32.xlu0 %v1213, 21
      %v1272 = vpop.permute.xlu0 %1271
      %1273 = vrot.lane.b32.xlu0 %v1215, 21
      %v1274 = vpop.permute.xlu0 %1273
      %1275 = vrot.lane.b32.xlu0 %v1218, 21
      %v1276 = vpop.permute.xlu0 %1275
      %1277 = vrot.lane.b32.xlu0 %v1220, 21
      %v1278 = vpop.permute.xlu0 %1277
      %1279 = vrot.lane.b32.xlu0 %v1223, 21
      %v1280 = vpop.permute.xlu0 %1279
      %1281 = vrot.lane.b32.xlu0 %v1225, 21
      %v1282 = vpop.permute.xlu0 %1281
      %1283 = vrot.lane.b32.xlu0 %v1228, 21
      %v1284 = vpop.permute.xlu0 %1283
      %1285 = vrot.lane.b32.xlu0 %v1230, 21
      %v1286 = vpop.permute.xlu0 %1285
      %1287 = vrot.lane.b32.xlu0 %v1233, 21
      %v1288 = vpop.permute.xlu0 %1287
      %1289 = vrot.lane.b32.xlu0 %v1235, 21
      %v1290 = vpop.permute.xlu0 %1289
      %1291 = vrot.lane.b32.xlu0 %v1238, 21
      %v1292 = vpop.permute.xlu0 %1291
      %1293 = vrot.lane.b32.xlu0 %v1240, 21
      %v1294 = vpop.permute.xlu0 %1293
      %1295 = vrot.lane.b32.xlu0 %v1243, 21
      %v1296 = vpop.permute.xlu0 %1295
      %1297 = vrot.lane.b32.xlu0 %v1245, 21
      %v1298 = vpop.permute.xlu0 %1297
      %1299 = vrot.lane.b32.xlu0 %v1248, 21
      %v1300 = vpop.permute.xlu0 %1299
      %1301 = vrot.lane.b32.xlu0 %v1250, 21
      %v1302 = vpop.permute.xlu0 %1301
      %1303 = vrot.lane.b32.xlu0 %v1253, 21
      %v1304 = vpop.permute.xlu0 %1303
      %1305 = vrot.lane.b32.xlu0 %v1255, 21
      %v1306 = vpop.permute.xlu0 %1305
      %1307 = vrot.lane.b32.xlu0 %v1258, 21
      %v1308 = vpop.permute.xlu0 %1307
      %1309 = vrot.lane.b32.xlu0 %v1260, 21
      %v1310 = vpop.permute.xlu0 %1309
      %1311 = vrot.lane.b32.xlu0 %v1263, 21
      %v1312 = vpop.permute.xlu0 %1311
      %1313 = vrot.lane.b32.xlu0 %v1265, 21
      %v1314 = vpop.permute.xlu0 %1313
      %1315 = vrot.lane.b32.xlu0 %v1268, 21
      %v1316 = vpop.permute.xlu0 %1315
      %1317 = vrot.lane.b32.xlu0 %v1270, 21
      %v1318 = vpop.permute.xlu0 %1317
      %1343 = vrot.lane.b32.xlu0 %v317, 24
      %v1344 = vpop.permute.xlu0 %1343
      %1345 = vrot.lane.b32.xlu0 %v318, 24
      %v1346 = vpop.permute.xlu0 %1345
      %1347 = vrot.lane.b32.xlu0 %v320, 24
      %v1348 = vpop.permute.xlu0 %1347
      %1349 = vrot.lane.b32.xlu0 %v321, 24
      %v1350 = vpop.permute.xlu0 %1349
      %1351 = vrot.lane.b32.xlu0 %v323, 24
      %v1352 = vpop.permute.xlu0 %1351
      %1353 = vrot.lane.b32.xlu0 %v324, 24
      %v1354 = vpop.permute.xlu0 %1353
      %1355 = vrot.lane.b32.xlu0 %v326, 24
      %v1356 = vpop.permute.xlu0 %1355
      %1357 = vrot.lane.b32.xlu0 %v327, 24
      %v1358 = vpop.permute.xlu0 %1357
      %1359 = vrot.lane.b32.xlu0 %v329, 24
      %v1360 = vpop.permute.xlu0 %1359
      %1361 = vrot.lane.b32.xlu0 %v330, 24
      %v1362 = vpop.permute.xlu0 %1361
      %1363 = vrot.lane.b32.xlu0 %v332, 24
      %v1364 = vpop.permute.xlu0 %1363
      %1365 = vrot.lane.b32.xlu0 %v333, 24
      %v1366 = vpop.permute.xlu0 %1365
      %1367 = vrot.lane.b32.xlu0 %v335, 24
      %v1368 = vpop.permute.xlu0 %1367
      %1369 = vrot.lane.b32.xlu0 %v336, 24
      %v1370 = vpop.permute.xlu0 %1369
      %1371 = vrot.lane.b32.xlu0 %v338, 24
      %v1372 = vpop.permute.xlu0 %1371
      %1373 = vrot.lane.b32.xlu0 %v339, 24
      %v1374 = vpop.permute.xlu0 %1373
      %1375 = vrot.lane.b32.xlu0 %v341, 24
      %v1376 = vpop.permute.xlu0 %1375
      %1377 = vrot.lane.b32.xlu0 %v342, 24
      %v1378 = vpop.permute.xlu0 %1377
      %1379 = vrot.lane.b32.xlu0 %v344, 24
      %v1380 = vpop.permute.xlu0 %1379
      %1381 = vrot.lane.b32.xlu0 %v345, 24
      %v1382 = vpop.permute.xlu0 %1381
      %1383 = vrot.lane.b32.xlu0 %v347, 24
      %v1384 = vpop.permute.xlu0 %1383
      %1385 = vrot.lane.b32.xlu0 %v348, 24
      %v1386 = vpop.permute.xlu0 %1385
      %1387 = vrot.lane.b32.xlu0 %v350, 24
      %v1388 = vpop.permute.xlu0 %1387
      %1389 = vrot.lane.b32.xlu0 %v351, 24
      %v1390 = vpop.permute.xlu0 %1389
      %1417 = vrot.lane.b32.xlu0 %v319, 27
      %v1418 = vpop.permute.xlu0 %1417
      %1419 = vrot.lane.b32.xlu0 %v320, 27
      %v1420 = vpop.permute.xlu0 %1419
      %1421 = vrot.lane.b32.xlu0 %v322, 27
      %v1422 = vpop.permute.xlu0 %1421
      %1423 = vrot.lane.b32.xlu0 %v323, 27
      %v1424 = vpop.permute.xlu0 %1423
      %1425 = vrot.lane.b32.xlu0 %v325, 27
      %v1426 = vpop.permute.xlu0 %1425
      %1427 = vrot.lane.b32.xlu0 %v326, 27
      %v1428 = vpop.permute.xlu0 %1427
      %1429 = vrot.lane.b32.xlu0 %v328, 27
      %v1430 = vpop.permute.xlu0 %1429
      %1431 = vrot.lane.b32.xlu0 %v329, 27
      %v1432 = vpop.permute.xlu0 %1431
      %1433 = vrot.lane.b32.xlu0 %v331, 27
      %v1434 = vpop.permute.xlu0 %1433
      %1435 = vrot.lane.b32.xlu0 %v332, 27
      %v1436 = vpop.permute.xlu0 %1435
      %1437 = vrot.lane.b32.xlu0 %v334, 27
      %v1438 = vpop.permute.xlu0 %1437
      %1439 = vrot.lane.b32.xlu0 %v335, 27
      %v1440 = vpop.permute.xlu0 %1439
      %1441 = vrot.lane.b32.xlu0 %v337, 27
      %v1442 = vpop.permute.xlu0 %1441
      %1443 = vrot.lane.b32.xlu0 %v338, 27
      %v1444 = vpop.permute.xlu0 %1443
      %1445 = vrot.lane.b32.xlu0 %v340, 27
      %v1446 = vpop.permute.xlu0 %1445
      %1447 = vrot.lane.b32.xlu0 %v341, 27
      %v1448 = vpop.permute.xlu0 %1447
      %1449 = vrot.lane.b32.xlu0 %v343, 27
      %v1450 = vpop.permute.xlu0 %1449
      %1451 = vrot.lane.b32.xlu0 %v344, 27
      %v1452 = vpop.permute.xlu0 %1451
      %1453 = vrot.lane.b32.xlu0 %v346, 27
      %v1454 = vpop.permute.xlu0 %1453
      %1455 = vrot.lane.b32.xlu0 %v347, 27
      %v1456 = vpop.permute.xlu0 %1455
      %1457 = vrot.lane.b32.xlu0 %v349, 27
      %v1458 = vpop.permute.xlu0 %1457
      %1459 = vrot.lane.b32.xlu0 %v350, 27
      %v1460 = vpop.permute.xlu0 %1459
      %1461 = vrot.lane.b32.xlu0 %v352, 27
      %v1462 = vpop.permute.xlu0 %1461
      %1463 = vrot.lane.b32.xlu0 %v353, 27
      %v1464 = vpop.permute.xlu0 %1463
      %v1490 = vrot.slane %v352, 1
      %v1491 = vrot.slane %v353, 1
      %v1492 = vsel %vm412, %v1490, %v1491
      %v1493 = vrot.slane %v354, 1
      %v1494 = vsel %vm412, %v1491, %v1493
      %1495 = vrot.lane.b32.xlu0 %v420, 30
      %v1496 = vpop.permute.xlu0 %1495
      %1497 = vrot.lane.b32.xlu0 %v422, 30
      %v1498 = vpop.permute.xlu0 %1497
      %1499 = vrot.lane.b32.xlu0 %v425, 30
      %v1500 = vpop.permute.xlu0 %1499
      %1501 = vrot.lane.b32.xlu0 %v427, 30
      %v1502 = vpop.permute.xlu0 %1501
      %1503 = vrot.lane.b32.xlu0 %v430, 30
      %v1504 = vpop.permute.xlu0 %1503
      %1505 = vrot.lane.b32.xlu0 %v432, 30
      %v1506 = vpop.permute.xlu0 %1505
      %1507 = vrot.lane.b32.xlu0 %v435, 30
      %v1508 = vpop.permute.xlu0 %1507
      %1509 = vrot.lane.b32.xlu0 %v437, 30
      %v1510 = vpop.permute.xlu0 %1509
      %1511 = vrot.lane.b32.xlu0 %v440, 30
      %v1512 = vpop.permute.xlu0 %1511
      %1513 = vrot.lane.b32.xlu0 %v442, 30
      %v1514 = vpop.permute.xlu0 %1513
      %1515 = vrot.lane.b32.xlu0 %v445, 30
      %v1516 = vpop.permute.xlu0 %1515
      %1517 = vrot.lane.b32.xlu0 %v447, 30
      %v1518 = vpop.permute.xlu0 %1517
      %1519 = vrot.lane.b32.xlu0 %v450, 30
      %v1520 = vpop.permute.xlu0 %1519
      %1521 = vrot.lane.b32.xlu0 %v452, 30
      %v1522 = vpop.permute.xlu0 %1521
      %1523 = vrot.lane.b32.xlu0 %v455, 30
      %v1524 = vpop.permute.xlu0 %1523
      %1525 = vrot.lane.b32.xlu0 %v457, 30
      %v1526 = vpop.permute.xlu0 %1525
      %1527 = vrot.lane.b32.xlu0 %v460, 30
      %v1528 = vpop.permute.xlu0 %1527
      %1529 = vrot.lane.b32.xlu0 %v462, 30
      %v1530 = vpop.permute.xlu0 %1529
      %1531 = vrot.lane.b32.xlu0 %v465, 30
      %v1532 = vpop.permute.xlu0 %1531
      %1533 = vrot.lane.b32.xlu0 %v467, 30
      %v1534 = vpop.permute.xlu0 %1533
      %1535 = vrot.lane.b32.xlu0 %v470, 30
      %v1536 = vpop.permute.xlu0 %1535
      %1537 = vrot.lane.b32.xlu0 %v472, 30
      %v1538 = vpop.permute.xlu0 %1537
      %1539 = vrot.lane.b32.xlu0 %v1492, 30
      %v1540 = vpop.permute.xlu0 %1539
      %1541 = vrot.lane.b32.xlu0 %v1494, 30
      %v1542 = vpop.permute.xlu0 %1541
      %v1567 = vrot.slane %v352, 2
      %v1568 = vrot.slane %v353, 2
      %v1569 = vsel %vm545, %v1567, %v1568
      %v1570 = vrot.slane %v354, 2
      %v1571 = vsel %vm545, %v1568, %v1570
      %1572 = vrot.lane.b32.xlu0 %v553, 33
      %v1573 = vpop.permute.xlu0 %1572
      %1574 = vrot.lane.b32.xlu0 %v555, 33
      %v1575 = vpop.permute.xlu0 %1574
      %1576 = vrot.lane.b32.xlu0 %v558, 33
      %v1577 = vpop.permute.xlu0 %1576
      %1578 = vrot.lane.b32.xlu0 %v560, 33
      %v1579 = vpop.permute.xlu0 %1578
      %1580 = vrot.lane.b32.xlu0 %v563, 33
      %v1581 = vpop.permute.xlu0 %1580
      %1582 = vrot.lane.b32.xlu0 %v565, 33
      %v1583 = vpop.permute.xlu0 %1582
      %1584 = vrot.lane.b32.xlu0 %v568, 33
      %v1585 = vpop.permute.xlu0 %1584
      %1586 = vrot.lane.b32.xlu0 %v570, 33
      %v1587 = vpop.permute.xlu0 %1586
      %1588 = vrot.lane.b32.xlu0 %v573, 33
      %v1589 = vpop.permute.xlu0 %1588
      %1590 = vrot.lane.b32.xlu0 %v575, 33
      %v1591 = vpop.permute.xlu0 %1590
      %1592 = vrot.lane.b32.xlu0 %v578, 33
      %v1593 = vpop.permute.xlu0 %1592
      %1594 = vrot.lane.b32.xlu0 %v580, 33
      %v1595 = vpop.permute.xlu0 %1594
      %1596 = vrot.lane.b32.xlu0 %v583, 33
      %v1597 = vpop.permute.xlu0 %1596
      %1598 = vrot.lane.b32.xlu0 %v585, 33
      %v1599 = vpop.permute.xlu0 %1598
      %1600 = vrot.lane.b32.xlu0 %v588, 33
      %v1601 = vpop.permute.xlu0 %1600
      %1602 = vrot.lane.b32.xlu0 %v590, 33
      %v1603 = vpop.permute.xlu0 %1602
      %1604 = vrot.lane.b32.xlu0 %v593, 33
      %v1605 = vpop.permute.xlu0 %1604
      %1606 = vrot.lane.b32.xlu0 %v595, 33
      %v1607 = vpop.permute.xlu0 %1606
      %1608 = vrot.lane.b32.xlu0 %v598, 33
      %v1609 = vpop.permute.xlu0 %1608
      %1610 = vrot.lane.b32.xlu0 %v600, 33
      %v1611 = vpop.permute.xlu0 %1610
      %1612 = vrot.lane.b32.xlu0 %v603, 33
      %v1613 = vpop.permute.xlu0 %1612
      %1614 = vrot.lane.b32.xlu0 %v605, 33
      %v1615 = vpop.permute.xlu0 %1614
      %1616 = vrot.lane.b32.xlu0 %v1569, 33
      %v1617 = vpop.permute.xlu0 %1616
      %1618 = vrot.lane.b32.xlu0 %v1571, 33
      %v1619 = vpop.permute.xlu0 %1618
      %v1644 = vrot.slane %v352, 3
      %v1645 = vrot.slane %v353, 3
      %v1646 = vsel %vm678, %v1644, %v1645
      %v1647 = vrot.slane %v354, 3
      %v1648 = vsel %vm678, %v1645, %v1647
      %1649 = vrot.lane.b32.xlu0 %v686, 36
      %v1650 = vpop.permute.xlu0 %1649
      %1651 = vrot.lane.b32.xlu0 %v688, 36
      %v1652 = vpop.permute.xlu0 %1651
      %1653 = vrot.lane.b32.xlu0 %v691, 36
      %v1654 = vpop.permute.xlu0 %1653
      %1655 = vrot.lane.b32.xlu0 %v693, 36
      %v1656 = vpop.permute.xlu0 %1655
      %1657 = vrot.lane.b32.xlu0 %v696, 36
      %v1658 = vpop.permute.xlu0 %1657
      %1659 = vrot.lane.b32.xlu0 %v698, 36
      %v1660 = vpop.permute.xlu0 %1659
      %1661 = vrot.lane.b32.xlu0 %v701, 36
      %v1662 = vpop.permute.xlu0 %1661
      %1663 = vrot.lane.b32.xlu0 %v703, 36
      %v1664 = vpop.permute.xlu0 %1663
      %1665 = vrot.lane.b32.xlu0 %v706, 36
      %v1666 = vpop.permute.xlu0 %1665
      %1667 = vrot.lane.b32.xlu0 %v708, 36
      %v1668 = vpop.permute.xlu0 %1667
      %1669 = vrot.lane.b32.xlu0 %v711, 36
      %v1670 = vpop.permute.xlu0 %1669
      %1671 = vrot.lane.b32.xlu0 %v713, 36
      %v1672 = vpop.permute.xlu0 %1671
      %1673 = vrot.lane.b32.xlu0 %v716, 36
      %v1674 = vpop.permute.xlu0 %1673
      %1675 = vrot.lane.b32.xlu0 %v718, 36
      %v1676 = vpop.permute.xlu0 %1675
      %1677 = vrot.lane.b32.xlu0 %v721, 36
      %v1678 = vpop.permute.xlu0 %1677
      %1679 = vrot.lane.b32.xlu0 %v723, 36
      %v1680 = vpop.permute.xlu0 %1679
      %1681 = vrot.lane.b32.xlu0 %v726, 36
      %v1682 = vpop.permute.xlu0 %1681
      %1683 = vrot.lane.b32.xlu0 %v728, 36
      %v1684 = vpop.permute.xlu0 %1683
      %1685 = vrot.lane.b32.xlu0 %v731, 36
      %v1686 = vpop.permute.xlu0 %1685
      %1687 = vrot.lane.b32.xlu0 %v733, 36
      %v1688 = vpop.permute.xlu0 %1687
      %1689 = vrot.lane.b32.xlu0 %v736, 36
      %v1690 = vpop.permute.xlu0 %1689
      %1691 = vrot.lane.b32.xlu0 %v738, 36
      %v1692 = vpop.permute.xlu0 %1691
      %1693 = vrot.lane.b32.xlu0 %v1646, 36
      %v1694 = vpop.permute.xlu0 %1693
      %1695 = vrot.lane.b32.xlu0 %v1648, 36
      %v1696 = vpop.permute.xlu0 %1695
      %v1721 = vrot.slane %v352, 4
      %v1722 = vrot.slane %v353, 4
      %v1723 = vsel %vm811, %v1721, %v1722
      %v1724 = vrot.slane %v354, 4
      %v1725 = vsel %vm811, %v1722, %v1724
      %1726 = vrot.lane.b32.xlu0 %v819, 39
      %v1727 = vpop.permute.xlu0 %1726
      %1728 = vrot.lane.b32.xlu0 %v821, 39
      %v1729 = vpop.permute.xlu0 %1728
      %1730 = vrot.lane.b32.xlu0 %v824, 39
      %v1731 = vpop.permute.xlu0 %1730
      %1732 = vrot.lane.b32.xlu0 %v826, 39
      %v1733 = vpop.permute.xlu0 %1732
      %1734 = vrot.lane.b32.xlu0 %v829, 39
      %v1735 = vpop.permute.xlu0 %1734
      %1736 = vrot.lane.b32.xlu0 %v831, 39
      %v1737 = vpop.permute.xlu0 %1736
      %1738 = vrot.lane.b32.xlu0 %v834, 39
      %v1739 = vpop.permute.xlu0 %1738
      %1740 = vrot.lane.b32.xlu0 %v836, 39
      %v1741 = vpop.permute.xlu0 %1740
      %1742 = vrot.lane.b32.xlu0 %v839, 39
      %v1743 = vpop.permute.xlu0 %1742
      %1744 = vrot.lane.b32.xlu0 %v841, 39
      %v1745 = vpop.permute.xlu0 %1744
      %1746 = vrot.lane.b32.xlu0 %v844, 39
      %v1747 = vpop.permute.xlu0 %1746
      %1748 = vrot.lane.b32.xlu0 %v846, 39
      %v1749 = vpop.permute.xlu0 %1748
      %1750 = vrot.lane.b32.xlu0 %v849, 39
      %v1751 = vpop.permute.xlu0 %1750
      %1752 = vrot.lane.b32.xlu0 %v851, 39
      %v1753 = vpop.permute.xlu0 %1752
      %1754 = vrot.lane.b32.xlu0 %v854, 39
      %v1755 = vpop.permute.xlu0 %1754
      %1756 = vrot.lane.b32.xlu0 %v856, 39
      %v1757 = vpop.permute.xlu0 %1756
      %1758 = vrot.lane.b32.xlu0 %v859, 39
      %v1759 = vpop.permute.xlu0 %1758
      %1760 = vrot.lane.b32.xlu0 %v861, 39
      %v1761 = vpop.permute.xlu0 %1760
      %1762 = vrot.lane.b32.xlu0 %v864, 39
      %v1763 = vpop.permute.xlu0 %1762
      %1764 = vrot.lane.b32.xlu0 %v866, 39
      %v1765 = vpop.permute.xlu0 %1764
      %1766 = vrot.lane.b32.xlu0 %v869, 39
      %v1767 = vpop.permute.xlu0 %1766
      %1768 = vrot.lane.b32.xlu0 %v871, 39
      %v1769 = vpop.permute.xlu0 %1768
      %1770 = vrot.lane.b32.xlu0 %v1723, 39
      %v1771 = vpop.permute.xlu0 %1770
      %1772 = vrot.lane.b32.xlu0 %v1725, 39
      %v1773 = vpop.permute.xlu0 %1772
      %v1798 = vrot.slane %v352, 5
      %v1799 = vrot.slane %v353, 5
      %v1800 = vsel %vm944, %v1798, %v1799
      %v1801 = vrot.slane %v354, 5
      %v1802 = vsel %vm944, %v1799, %v1801
      %1803 = vrot.lane.b32.xlu0 %v952, 42
      %v1804 = vpop.permute.xlu0 %1803
      %1805 = vrot.lane.b32.xlu0 %v954, 42
      %v1806 = vpop.permute.xlu0 %1805
      %1807 = vrot.lane.b32.xlu0 %v957, 42
      %v1808 = vpop.permute.xlu0 %1807
      %1809 = vrot.lane.b32.xlu0 %v959, 42
      %v1810 = vpop.permute.xlu0 %1809
      %1811 = vrot.lane.b32.xlu0 %v962, 42
      %v1812 = vpop.permute.xlu0 %1811
      %1813 = vrot.lane.b32.xlu0 %v964, 42
      %v1814 = vpop.permute.xlu0 %1813
      %1815 = vrot.lane.b32.xlu0 %v967, 42
      %v1816 = vpop.permute.xlu0 %1815
      %1817 = vrot.lane.b32.xlu0 %v969, 42
      %v1818 = vpop.permute.xlu0 %1817
      %1819 = vrot.lane.b32.xlu0 %v972, 42
      %v1820 = vpop.permute.xlu0 %1819
      %1821 = vrot.lane.b32.xlu0 %v974, 42
      %v1822 = vpop.permute.xlu0 %1821
      %1823 = vrot.lane.b32.xlu0 %v977, 42
      %v1824 = vpop.permute.xlu0 %1823
      %1825 = vrot.lane.b32.xlu0 %v979, 42
      %v1826 = vpop.permute.xlu0 %1825
      %1827 = vrot.lane.b32.xlu0 %v982, 42
      %v1828 = vpop.permute.xlu0 %1827
      %1829 = vrot.lane.b32.xlu0 %v984, 42
      %v1830 = vpop.permute.xlu0 %1829
      %1831 = vrot.lane.b32.xlu0 %v987, 42
      %v1832 = vpop.permute.xlu0 %1831
      %1833 = vrot.lane.b32.xlu0 %v989, 42
      %v1834 = vpop.permute.xlu0 %1833
      %1835 = vrot.lane.b32.xlu0 %v992, 42
      %v1836 = vpop.permute.xlu0 %1835
      %1837 = vrot.lane.b32.xlu0 %v994, 42
      %v1838 = vpop.permute.xlu0 %1837
      %1839 = vrot.lane.b32.xlu0 %v997, 42
      %v1840 = vpop.permute.xlu0 %1839
      %1841 = vrot.lane.b32.xlu0 %v999, 42
      %v1842 = vpop.permute.xlu0 %1841
      %1843 = vrot.lane.b32.xlu0 %v1002, 42
      %v1844 = vpop.permute.xlu0 %1843
      %1845 = vrot.lane.b32.xlu0 %v1004, 42
      %v1846 = vpop.permute.xlu0 %1845
      %1847 = vrot.lane.b32.xlu0 %v1800, 42
      %v1848 = vpop.permute.xlu0 %1847
      %1849 = vrot.lane.b32.xlu0 %v1802, 42
      %v1850 = vpop.permute.xlu0 %1849
      %v1875 = vrot.slane %v352, 6
      %v1876 = vrot.slane %v353, 6
      %v1877 = vsel %vm1077, %v1875, %v1876
      %v1878 = vrot.slane %v354, 6
      %v1879 = vsel %vm1077, %v1876, %v1878
      %1880 = vrot.lane.b32.xlu0 %v1085, 45
      %v1881 = vpop.permute.xlu0 %1880
      %1882 = vrot.lane.b32.xlu0 %v1087, 45
      %v1883 = vpop.permute.xlu0 %1882
      %1884 = vrot.lane.b32.xlu0 %v1090, 45
      %v1885 = vpop.permute.xlu0 %1884
      %1886 = vrot.lane.b32.xlu0 %v1092, 45
      %v1887 = vpop.permute.xlu0 %1886
      %1888 = vrot.lane.b32.xlu0 %v1095, 45
      %v1889 = vpop.permute.xlu0 %1888
      %1890 = vrot.lane.b32.xlu0 %v1097, 45
      %v1891 = vpop.permute.xlu0 %1890
      %1892 = vrot.lane.b32.xlu0 %v1100, 45
      %v1893 = vpop.permute.xlu0 %1892
      %1894 = vrot.lane.b32.xlu0 %v1102, 45
      %v1895 = vpop.permute.xlu0 %1894
      %1896 = vrot.lane.b32.xlu0 %v1105, 45
      %v1897 = vpop.permute.xlu0 %1896
      %1898 = vrot.lane.b32.xlu0 %v1107, 45
      %v1899 = vpop.permute.xlu0 %1898
      %1900 = vrot.lane.b32.xlu0 %v1110, 45
      %v1901 = vpop.permute.xlu0 %1900
      %1902 = vrot.lane.b32.xlu0 %v1112, 45
      %v1903 = vpop.permute.xlu0 %1902
      %1904 = vrot.lane.b32.xlu0 %v1115, 45
      %v1905 = vpop.permute.xlu0 %1904
      %1906 = vrot.lane.b32.xlu0 %v1117, 45
      %v1907 = vpop.permute.xlu0 %1906
      %1908 = vrot.lane.b32.xlu0 %v1120, 45
      %v1909 = vpop.permute.xlu0 %1908
      %1910 = vrot.lane.b32.xlu0 %v1122, 45
      %v1911 = vpop.permute.xlu0 %1910
      %1912 = vrot.lane.b32.xlu0 %v1125, 45
      %v1913 = vpop.permute.xlu0 %1912
      %1914 = vrot.lane.b32.xlu0 %v1127, 45
      %v1915 = vpop.permute.xlu0 %1914
      %1916 = vrot.lane.b32.xlu0 %v1130, 45
      %v1917 = vpop.permute.xlu0 %1916
      %1918 = vrot.lane.b32.xlu0 %v1132, 45
      %v1919 = vpop.permute.xlu0 %1918
      %1920 = vrot.lane.b32.xlu0 %v1135, 45
      %v1921 = vpop.permute.xlu0 %1920
      %1922 = vrot.lane.b32.xlu0 %v1137, 45
      %v1923 = vpop.permute.xlu0 %1922
      %1924 = vrot.lane.b32.xlu0 %v1877, 45
      %v1925 = vpop.permute.xlu0 %1924
      %1926 = vrot.lane.b32.xlu0 %v1879, 45
      %v1927 = vpop.permute.xlu0 %1926
      %vm1952 = vcmask 23552
      %v1953 = vsel %vm1952, %v316, %v474
      %v1954 = vsel %vm1952, %v317, %v476
      %v1955 = vsel %vm1952, %v319, %v478
      %v1956 = vsel %vm1952, %v320, %v480
      %v1957 = vsel %vm1952, %v322, %v482
      %v1958 = vsel %vm1952, %v323, %v484
      %v1959 = vsel %vm1952, %v325, %v486
      %v1960 = vsel %vm1952, %v326, %v488
      %v1961 = vsel %vm1952, %v328, %v490
      %v1962 = vsel %vm1952, %v329, %v492
      %v1963 = vsel %vm1952, %v331, %v494
      %v1964 = vsel %vm1952, %v332, %v496
      %v1965 = vsel %vm1952, %v334, %v498
      %v1966 = vsel %vm1952, %v335, %v500
      %v1967 = vsel %vm1952, %v337, %v502
      %v1968 = vsel %vm1952, %v338, %v504
      %v1969 = vsel %vm1952, %v340, %v506
      %v1970 = vsel %vm1952, %v341, %v508
      %v1971 = vsel %vm1952, %v343, %v510
      %v1972 = vsel %vm1952, %v344, %v512
      %v1973 = vsel %vm1952, %v346, %v514
      %v1974 = vsel %vm1952, %v347, %v516
      %v1975 = vsel %vm1952, %v349, %v518
      %v1976 = vsel %vm1952, %v350, %v520
      %vm1977 = vcmask 48128
      %v1978 = vsel %vm1977, %v1953, %v607
      %v1979 = vsel %vm1977, %v1954, %v609
      %v1980 = vsel %vm1977, %v1955, %v611
      %v1981 = vsel %vm1977, %v1956, %v613
      %v1982 = vsel %vm1977, %v1957, %v615
      %v1983 = vsel %vm1977, %v1958, %v617
      %v1984 = vsel %vm1977, %v1959, %v619
      %v1985 = vsel %vm1977, %v1960, %v621
      %v1986 = vsel %vm1977, %v1961, %v623
      %v1987 = vsel %vm1977, %v1962, %v625
      %v1988 = vsel %vm1977, %v1963, %v627
      %v1989 = vsel %vm1977, %v1964, %v629
      %v1990 = vsel %vm1977, %v1965, %v631
      %v1991 = vsel %vm1977, %v1966, %v633
      %v1992 = vsel %vm1977, %v1967, %v635
      %v1993 = vsel %vm1977, %v1968, %v637
      %v1994 = vsel %vm1977, %v1969, %v639
      %v1995 = vsel %vm1977, %v1970, %v641
      %v1996 = vsel %vm1977, %v1971, %v643
      %v1997 = vsel %vm1977, %v1972, %v645
      %v1998 = vsel %vm1977, %v1973, %v647
      %v1999 = vsel %vm1977, %v1974, %v649
      %v2000 = vsel %vm1977, %v1975, %v651
      %v2001 = vsel %vm1977, %v1976, %v653
      %vm2002 = vcmask 72704
      %v2003 = vsel %vm2002, %v1978, %v740
      %v2004 = vsel %vm2002, %v1979, %v742
      %v2005 = vsel %vm2002, %v1980, %v744
      %v2006 = vsel %vm2002, %v1981, %v746
      %v2007 = vsel %vm2002, %v1982, %v748
      %v2008 = vsel %vm2002, %v1983, %v750
      %v2009 = vsel %vm2002, %v1984, %v752
      %v2010 = vsel %vm2002, %v1985, %v754
      %v2011 = vsel %vm2002, %v1986, %v756
      %v2012 = vsel %vm2002, %v1987, %v758
      %v2013 = vsel %vm2002, %v1988, %v760
      %v2014 = vsel %vm2002, %v1989, %v762
      %v2015 = vsel %vm2002, %v1990, %v764
      %v2016 = vsel %vm2002, %v1991, %v766
      %v2017 = vsel %vm2002, %v1992, %v768
      %v2018 = vsel %vm2002, %v1993, %v770
      %v2019 = vsel %vm2002, %v1994, %v772
      %v2020 = vsel %vm2002, %v1995, %v774
      %v2021 = vsel %vm2002, %v1996, %v776
      %v2022 = vsel %vm2002, %v1997, %v778
      %v2023 = vsel %vm2002, %v1998, %v780
      %v2024 = vsel %vm2002, %v1999, %v782
      %v2025 = vsel %vm2002, %v2000, %v784
      %v2026 = vsel %vm2002, %v2001, %v786
      %vm2027 = vcmask 97280
      %v2028 = vsel %vm2027, %v2003, %v873
      %v2029 = vsel %vm2027, %v2004, %v875
      %v2030 = vsel %vm2027, %v2005, %v877
      %v2031 = vsel %vm2027, %v2006, %v879
      %v2032 = vsel %vm2027, %v2007, %v881
      %v2033 = vsel %vm2027, %v2008, %v883
      %v2034 = vsel %vm2027, %v2009, %v885
      %v2035 = vsel %vm2027, %v2010, %v887
      %v2036 = vsel %vm2027, %v2011, %v889
      %v2037 = vsel %vm2027, %v2012, %v891
      %v2038 = vsel %vm2027, %v2013, %v893
      %v2039 = vsel %vm2027, %v2014, %v895
      %v2040 = vsel %vm2027, %v2015, %v897
      %v2041 = vsel %vm2027, %v2016, %v899
      %v2042 = vsel %vm2027, %v2017, %v901
      %v2043 = vsel %vm2027, %v2018, %v903
      %v2044 = vsel %vm2027, %v2019, %v905
      %v2045 = vsel %vm2027, %v2020, %v907
      %v2046 = vsel %vm2027, %v2021, %v909
      %v2047 = vsel %vm2027, %v2022, %v911
      %v2048 = vsel %vm2027, %v2023, %v913
      %v2049 = vsel %vm2027, %v2024, %v915
      %v2050 = vsel %vm2027, %v2025, %v917
      %v2051 = vsel %vm2027, %v2026, %v919
      %vm2052 = vcmask 121856
      %v2053 = vsel %vm2052, %v2028, %v1006
      %v2054 = vsel %vm2052, %v2029, %v1008
      %v2055 = vsel %vm2052, %v2030, %v1010
      %v2056 = vsel %vm2052, %v2031, %v1012
      %v2057 = vsel %vm2052, %v2032, %v1014
      %v2058 = vsel %vm2052, %v2033, %v1016
      %v2059 = vsel %vm2052, %v2034, %v1018
      %v2060 = vsel %vm2052, %v2035, %v1020
      %v2061 = vsel %vm2052, %v2036, %v1022
      %v2062 = vsel %vm2052, %v2037, %v1024
      %v2063 = vsel %vm2052, %v2038, %v1026
      %v2064 = vsel %vm2052, %v2039, %v1028
      %v2065 = vsel %vm2052, %v2040, %v1030
      %v2066 = vsel %vm2052, %v2041, %v1032
      %v2067 = vsel %vm2052, %v2042, %v1034
      %v2068 = vsel %vm2052, %v2043, %v1036
      %v2069 = vsel %vm2052, %v2044, %v1038
      %v2070 = vsel %vm2052, %v2045, %v1040
      %v2071 = vsel %vm2052, %v2046, %v1042
      %v2072 = vsel %vm2052, %v2047, %v1044
      %v2073 = vsel %vm2052, %v2048, %v1046
      %v2074 = vsel %vm2052, %v2049, %v1048
      %v2075 = vsel %vm2052, %v2050, %v1050
      %v2076 = vsel %vm2052, %v2051, %v1052
      %vm2077 = vcmask 146432
      %v2078 = vsel %vm2077, %v2053, %v1139
      %v2079 = vsel %vm2077, %v2054, %v1141
      %v2080 = vsel %vm2077, %v2055, %v1143
      %v2081 = vsel %vm2077, %v2056, %v1145
      %v2082 = vsel %vm2077, %v2057, %v1147
      %v2083 = vsel %vm2077, %v2058, %v1149
      %v2084 = vsel %vm2077, %v2059, %v1151
      %v2085 = vsel %vm2077, %v2060, %v1153
      %v2086 = vsel %vm2077, %v2061, %v1155
      %v2087 = vsel %vm2077, %v2062, %v1157
      %v2088 = vsel %vm2077, %v2063, %v1159
      %v2089 = vsel %vm2077, %v2064, %v1161
      %v2090 = vsel %vm2077, %v2065, %v1163
      %v2091 = vsel %vm2077, %v2066, %v1165
      %v2092 = vsel %vm2077, %v2067, %v1167
      %v2093 = vsel %vm2077, %v2068, %v1169
      %v2094 = vsel %vm2077, %v2069, %v1171
      %v2095 = vsel %vm2077, %v2070, %v1173
      %v2096 = vsel %vm2077, %v2071, %v1175
      %v2097 = vsel %vm2077, %v2072, %v1177
      %v2098 = vsel %vm2077, %v2073, %v1179
      %v2099 = vsel %vm2077, %v2074, %v1181
      %v2100 = vsel %vm2077, %v2075, %v1183
      %v2101 = vsel %vm2077, %v2076, %v1185
      %vm2102 = vcmask 171008
      %v2103 = vsel %vm2102, %v2078, %v1272
      %v2104 = vsel %vm2102, %v2079, %v1274
      %v2105 = vsel %vm2102, %v2080, %v1276
      %v2106 = vsel %vm2102, %v2081, %v1278
      %v2107 = vsel %vm2102, %v2082, %v1280
      %v2108 = vsel %vm2102, %v2083, %v1282
      %v2109 = vsel %vm2102, %v2084, %v1284
      %v2110 = vsel %vm2102, %v2085, %v1286
      %v2111 = vsel %vm2102, %v2086, %v1288
      %v2112 = vsel %vm2102, %v2087, %v1290
      %v2113 = vsel %vm2102, %v2088, %v1292
      %v2114 = vsel %vm2102, %v2089, %v1294
      %v2115 = vsel %vm2102, %v2090, %v1296
      %v2116 = vsel %vm2102, %v2091, %v1298
      %v2117 = vsel %vm2102, %v2092, %v1300
      %v2118 = vsel %vm2102, %v2093, %v1302
      %v2119 = vsel %vm2102, %v2094, %v1304
      %v2120 = vsel %vm2102, %v2095, %v1306
      %v2121 = vsel %vm2102, %v2096, %v1308
      %v2122 = vsel %vm2102, %v2097, %v1310
      %v2123 = vsel %vm2102, %v2098, %v1312
      %v2124 = vsel %vm2102, %v2099, %v1314
      %v2125 = vsel %vm2102, %v2100, %v1316
      %v2126 = vsel %vm2102, %v2101, %v1318
      %vm2127 = vcmask 195584
      %v2128 = vsel %vm2127, %v2103, %v1344
      %v2129 = vsel %vm2127, %v2104, %v1346
      %v2130 = vsel %vm2127, %v2105, %v1348
      %v2131 = vsel %vm2127, %v2106, %v1350
      %v2132 = vsel %vm2127, %v2107, %v1352
      %v2133 = vsel %vm2127, %v2108, %v1354
      %v2134 = vsel %vm2127, %v2109, %v1356
      %v2135 = vsel %vm2127, %v2110, %v1358
      %v2136 = vsel %vm2127, %v2111, %v1360
      %v2137 = vsel %vm2127, %v2112, %v1362
      %v2138 = vsel %vm2127, %v2113, %v1364
      %v2139 = vsel %vm2127, %v2114, %v1366
      %v2140 = vsel %vm2127, %v2115, %v1368
      %v2141 = vsel %vm2127, %v2116, %v1370
      %v2142 = vsel %vm2127, %v2117, %v1372
      %v2143 = vsel %vm2127, %v2118, %v1374
      %v2144 = vsel %vm2127, %v2119, %v1376
      %v2145 = vsel %vm2127, %v2120, %v1378
      %v2146 = vsel %vm2127, %v2121, %v1380
      %v2147 = vsel %vm2127, %v2122, %v1382
      %v2148 = vsel %vm2127, %v2123, %v1384
      %v2149 = vsel %vm2127, %v2124, %v1386
      %v2150 = vsel %vm2127, %v2125, %v1388
      %v2151 = vsel %vm2127, %v2126, %v1390
      %vm2152 = vcmask 220160
      %v2153 = vsel %vm2152, %v2128, %v1418
      %v2154 = vsel %vm2152, %v2129, %v1420
      %v2155 = vsel %vm2152, %v2130, %v1422
      %v2156 = vsel %vm2152, %v2131, %v1424
      %v2157 = vsel %vm2152, %v2132, %v1426
      %v2158 = vsel %vm2152, %v2133, %v1428
      %v2159 = vsel %vm2152, %v2134, %v1430
      %v2160 = vsel %vm2152, %v2135, %v1432
      %v2161 = vsel %vm2152, %v2136, %v1434
      %v2162 = vsel %vm2152, %v2137, %v1436
      %v2163 = vsel %vm2152, %v2138, %v1438
      %v2164 = vsel %vm2152, %v2139, %v1440
      %v2165 = vsel %vm2152, %v2140, %v1442
      %v2166 = vsel %vm2152, %v2141, %v1444
      %v2167 = vsel %vm2152, %v2142, %v1446
      %v2168 = vsel %vm2152, %v2143, %v1448
      %v2169 = vsel %vm2152, %v2144, %v1450
      %v2170 = vsel %vm2152, %v2145, %v1452
      %v2171 = vsel %vm2152, %v2146, %v1454
      %v2172 = vsel %vm2152, %v2147, %v1456
      %v2173 = vsel %vm2152, %v2148, %v1458
      %v2174 = vsel %vm2152, %v2149, %v1460
      %v2175 = vsel %vm2152, %v2150, %v1462
      %v2176 = vsel %vm2152, %v2151, %v1464
      %vm2177 = vcmask 244736
      %v2178 = vsel %vm2177, %v2153, %v1496
      %v2179 = vsel %vm2177, %v2154, %v1498
      %v2180 = vsel %vm2177, %v2155, %v1500
      %v2181 = vsel %vm2177, %v2156, %v1502
      %v2182 = vsel %vm2177, %v2157, %v1504
      %v2183 = vsel %vm2177, %v2158, %v1506
      %v2184 = vsel %vm2177, %v2159, %v1508
      %v2185 = vsel %vm2177, %v2160, %v1510
      %v2186 = vsel %vm2177, %v2161, %v1512
      %v2187 = vsel %vm2177, %v2162, %v1514
      %v2188 = vsel %vm2177, %v2163, %v1516
      %v2189 = vsel %vm2177, %v2164, %v1518
      %v2190 = vsel %vm2177, %v2165, %v1520
      %v2191 = vsel %vm2177, %v2166, %v1522
      %v2192 = vsel %vm2177, %v2167, %v1524
      %v2193 = vsel %vm2177, %v2168, %v1526
      %v2194 = vsel %vm2177, %v2169, %v1528
      %v2195 = vsel %vm2177, %v2170, %v1530
      %v2196 = vsel %vm2177, %v2171, %v1532
      %v2197 = vsel %vm2177, %v2172, %v1534
      %v2198 = vsel %vm2177, %v2173, %v1536
      %v2199 = vsel %vm2177, %v2174, %v1538
      %v2200 = vsel %vm2177, %v2175, %v1540
      %v2201 = vsel %vm2177, %v2176, %v1542
      %vm2202 = vcmask 269312
      %v2203 = vsel %vm2202, %v2178, %v1573
      %v2204 = vsel %vm2202, %v2179, %v1575
      %v2205 = vsel %vm2202, %v2180, %v1577
      %v2206 = vsel %vm2202, %v2181, %v1579
      %v2207 = vsel %vm2202, %v2182, %v1581
      %v2208 = vsel %vm2202, %v2183, %v1583
      %v2209 = vsel %vm2202, %v2184, %v1585
      %v2210 = vsel %vm2202, %v2185, %v1587
      %v2211 = vsel %vm2202, %v2186, %v1589
      %v2212 = vsel %vm2202, %v2187, %v1591
      %v2213 = vsel %vm2202, %v2188, %v1593
      %v2214 = vsel %vm2202, %v2189, %v1595
      %v2215 = vsel %vm2202, %v2190, %v1597
      %v2216 = vsel %vm2202, %v2191, %v1599
      %v2217 = vsel %vm2202, %v2192, %v1601
      %v2218 = vsel %vm2202, %v2193, %v1603
      %v2219 = vsel %vm2202, %v2194, %v1605
      %v2220 = vsel %vm2202, %v2195, %v1607
      %v2221 = vsel %vm2202, %v2196, %v1609
      %v2222 = vsel %vm2202, %v2197, %v1611
      %v2223 = vsel %vm2202, %v2198, %v1613
      %v2224 = vsel %vm2202, %v2199, %v1615
      %v2225 = vsel %vm2202, %v2200, %v1617
      %v2226 = vsel %vm2202, %v2201, %v1619
      %vm2227 = vcmask 293888
      %v2228 = vsel %vm2227, %v2203, %v1650
      %v2229 = vsel %vm2227, %v2204, %v1652
      %v2230 = vsel %vm2227, %v2205, %v1654
      %v2231 = vsel %vm2227, %v2206, %v1656
      %v2232 = vsel %vm2227, %v2207, %v1658
      %v2233 = vsel %vm2227, %v2208, %v1660
      %v2234 = vsel %vm2227, %v2209, %v1662
      %v2235 = vsel %vm2227, %v2210, %v1664
      %v2236 = vsel %vm2227, %v2211, %v1666
      %v2237 = vsel %vm2227, %v2212, %v1668
      %v2238 = vsel %vm2227, %v2213, %v1670
      %v2239 = vsel %vm2227, %v2214, %v1672
      %v2240 = vsel %vm2227, %v2215, %v1674
      %v2241 = vsel %vm2227, %v2216, %v1676
      %v2242 = vsel %vm2227, %v2217, %v1678
      %v2243 = vsel %vm2227, %v2218, %v1680
      %v2244 = vsel %vm2227, %v2219, %v1682
      %v2245 = vsel %vm2227, %v2220, %v1684
      %v2246 = vsel %vm2227, %v2221, %v1686
      %v2247 = vsel %vm2227, %v2222, %v1688
      %v2248 = vsel %vm2227, %v2223, %v1690
      %v2249 = vsel %vm2227, %v2224, %v1692
      %v2250 = vsel %vm2227, %v2225, %v1694
      %v2251 = vsel %vm2227, %v2226, %v1696
      %vm2252 = vcmask 318464
      %v2253 = vsel %vm2252, %v2228, %v1727
      %v2254 = vsel %vm2252, %v2229, %v1729
      %v2255 = vsel %vm2252, %v2230, %v1731
      %v2256 = vsel %vm2252, %v2231, %v1733
      %v2257 = vsel %vm2252, %v2232, %v1735
      %v2258 = vsel %vm2252, %v2233, %v1737
      %v2259 = vsel %vm2252, %v2234, %v1739
      %v2260 = vsel %vm2252, %v2235, %v1741
      %v2261 = vsel %vm2252, %v2236, %v1743
      %v2262 = vsel %vm2252, %v2237, %v1745
      %v2263 = vsel %vm2252, %v2238, %v1747
      %v2264 = vsel %vm2252, %v2239, %v1749
      %v2265 = vsel %vm2252, %v2240, %v1751
      %v2266 = vsel %vm2252, %v2241, %v1753
      %v2267 = vsel %vm2252, %v2242, %v1755
      %v2268 = vsel %vm2252, %v2243, %v1757
      %v2269 = vsel %vm2252, %v2244, %v1759
      %v2270 = vsel %vm2252, %v2245, %v1761
      %v2271 = vsel %vm2252, %v2246, %v1763
      %v2272 = vsel %vm2252, %v2247, %v1765
      %v2273 = vsel %vm2252, %v2248, %v1767
      %v2274 = vsel %vm2252, %v2249, %v1769
      %v2275 = vsel %vm2252, %v2250, %v1771
      %v2276 = vsel %vm2252, %v2251, %v1773
      %vm2277 = vcmask 343040
      %v2278 = vsel %vm2277, %v2253, %v1804
      %v2279 = vsel %vm2277, %v2254, %v1806
      %v2280 = vsel %vm2277, %v2255, %v1808
      %v2281 = vsel %vm2277, %v2256, %v1810
      %v2282 = vsel %vm2277, %v2257, %v1812
      %v2283 = vsel %vm2277, %v2258, %v1814
      %v2284 = vsel %vm2277, %v2259, %v1816
      %v2285 = vsel %vm2277, %v2260, %v1818
      %v2286 = vsel %vm2277, %v2261, %v1820
      %v2287 = vsel %vm2277, %v2262, %v1822
      %v2288 = vsel %vm2277, %v2263, %v1824
      %v2289 = vsel %vm2277, %v2264, %v1826
      %v2290 = vsel %vm2277, %v2265, %v1828
      %v2291 = vsel %vm2277, %v2266, %v1830
      %v2292 = vsel %vm2277, %v2267, %v1832
      %v2293 = vsel %vm2277, %v2268, %v1834
      %v2294 = vsel %vm2277, %v2269, %v1836
      %v2295 = vsel %vm2277, %v2270, %v1838
      %v2296 = vsel %vm2277, %v2271, %v1840
      %v2297 = vsel %vm2277, %v2272, %v1842
      %v2298 = vsel %vm2277, %v2273, %v1844
      %v2299 = vsel %vm2277, %v2274, %v1846
      %v2300 = vsel %vm2277, %v2275, %v1848
      %v2301 = vsel %vm2277, %v2276, %v1850
      %vm2302 = vcmask 367616
      %v2303 = vsel %vm2302, %v2278, %v1881
      %v2304 = vsel %vm2302, %v2279, %v1883
      %v2305 = vsel %vm2302, %v2280, %v1885
      %v2306 = vsel %vm2302, %v2281, %v1887
      %v2307 = vsel %vm2302, %v2282, %v1889
      %v2308 = vsel %vm2302, %v2283, %v1891
      %v2309 = vsel %vm2302, %v2284, %v1893
      %v2310 = vsel %vm2302, %v2285, %v1895
      %v2311 = vsel %vm2302, %v2286, %v1897
      %v2312 = vsel %vm2302, %v2287, %v1899
      %v2313 = vsel %vm2302, %v2288, %v1901
      %v2314 = vsel %vm2302, %v2289, %v1903
      %v2315 = vsel %vm2302, %v2290, %v1905
      %v2316 = vsel %vm2302, %v2291, %v1907
      %v2317 = vsel %vm2302, %v2292, %v1909
      %v2318 = vsel %vm2302, %v2293, %v1911
      %v2319 = vsel %vm2302, %v2294, %v1913
      %v2320 = vsel %vm2302, %v2295, %v1915
      %v2321 = vsel %vm2302, %v2296, %v1917
      %v2322 = vsel %vm2302, %v2297, %v1919
      %v2323 = vsel %vm2302, %v2298, %v1921
      %v2324 = vsel %vm2302, %v2299, %v1923
      %v2325 = vsel %vm2302, %v2300, %v1925
      %v2326 = vsel %vm2302, %v2301, %v1927
      %2327 = vrot.lane.b32.xlu0 %v419, 3
      %v2328 = vpop.permute.xlu0 %2327
      %2329 = vrot.lane.b32.xlu0 %v421, 3
      %v2330 = vpop.permute.xlu0 %2329
      %2331 = vrot.lane.b32.xlu0 %v424, 3
      %v2332 = vpop.permute.xlu0 %2331
      %2333 = vrot.lane.b32.xlu0 %v426, 3
      %v2334 = vpop.permute.xlu0 %2333
      %2335 = vrot.lane.b32.xlu0 %v429, 3
      %v2336 = vpop.permute.xlu0 %2335
      %2337 = vrot.lane.b32.xlu0 %v431, 3
      %v2338 = vpop.permute.xlu0 %2337
      %2339 = vrot.lane.b32.xlu0 %v434, 3
      %v2340 = vpop.permute.xlu0 %2339
      %2341 = vrot.lane.b32.xlu0 %v436, 3
      %v2342 = vpop.permute.xlu0 %2341
      %2343 = vrot.lane.b32.xlu0 %v439, 3
      %v2344 = vpop.permute.xlu0 %2343
      %2345 = vrot.lane.b32.xlu0 %v441, 3
      %v2346 = vpop.permute.xlu0 %2345
      %2347 = vrot.lane.b32.xlu0 %v444, 3
      %v2348 = vpop.permute.xlu0 %2347
      %2349 = vrot.lane.b32.xlu0 %v446, 3
      %v2350 = vpop.permute.xlu0 %2349
      %2351 = vrot.lane.b32.xlu0 %v449, 3
      %v2352 = vpop.permute.xlu0 %2351
      %2353 = vrot.lane.b32.xlu0 %v451, 3
      %v2354 = vpop.permute.xlu0 %2353
      %2355 = vrot.lane.b32.xlu0 %v454, 3
      %v2356 = vpop.permute.xlu0 %2355
      %2357 = vrot.lane.b32.xlu0 %v456, 3
      %v2358 = vpop.permute.xlu0 %2357
      %2359 = vrot.lane.b32.xlu0 %v459, 3
      %v2360 = vpop.permute.xlu0 %2359
      %2361 = vrot.lane.b32.xlu0 %v461, 3
      %v2362 = vpop.permute.xlu0 %2361
      %2363 = vrot.lane.b32.xlu0 %v464, 3
      %v2364 = vpop.permute.xlu0 %2363
      %2365 = vrot.lane.b32.xlu0 %v466, 3
      %v2366 = vpop.permute.xlu0 %2365
      %2367 = vrot.lane.b32.xlu0 %v469, 3
      %v2368 = vpop.permute.xlu0 %2367
      %2369 = vrot.lane.b32.xlu0 %v471, 3
      %v2370 = vpop.permute.xlu0 %2369
      %2371 = vrot.lane.b32.xlu0 %v1491, 3
      %v2372 = vpop.permute.xlu0 %2371
      %2373 = vrot.lane.b32.xlu0 %v1494, 3
      %v2374 = vpop.permute.xlu0 %2373
      %2375 = vrot.lane.b32.xlu0 %v1493, 3
      %v2376 = vpop.permute.xlu0 %2375
      %v2404 = vrot.slane %v355, 1
      %v2405 = vrot.slane %v356, 1
      %v2406 = vsel %vm412, %v2404, %v2405
      %2407 = vrot.lane.b32.xlu0 %v423, 6
      %v2408 = vpop.permute.xlu0 %2407
      %2409 = vrot.lane.b32.xlu0 %v425, 6
      %v2410 = vpop.permute.xlu0 %2409
      %2411 = vrot.lane.b32.xlu0 %v424, 6
      %v2412 = vpop.permute.xlu0 %2411
      %2413 = vrot.lane.b32.xlu0 %v428, 6
      %v2414 = vpop.permute.xlu0 %2413
      %2415 = vrot.lane.b32.xlu0 %v430, 6
      %v2416 = vpop.permute.xlu0 %2415
      %2417 = vrot.lane.b32.xlu0 %v429, 6
      %v2418 = vpop.permute.xlu0 %2417
      %2419 = vrot.lane.b32.xlu0 %v433, 6
      %v2420 = vpop.permute.xlu0 %2419
      %2421 = vrot.lane.b32.xlu0 %v435, 6
      %v2422 = vpop.permute.xlu0 %2421
      %2423 = vrot.lane.b32.xlu0 %v434, 6
      %v2424 = vpop.permute.xlu0 %2423
      %2425 = vrot.lane.b32.xlu0 %v438, 6
      %v2426 = vpop.permute.xlu0 %2425
      %2427 = vrot.lane.b32.xlu0 %v440, 6
      %v2428 = vpop.permute.xlu0 %2427
      %2429 = vrot.lane.b32.xlu0 %v439, 6
      %v2430 = vpop.permute.xlu0 %2429
      %2431 = vrot.lane.b32.xlu0 %v443, 6
      %v2432 = vpop.permute.xlu0 %2431
      %2433 = vrot.lane.b32.xlu0 %v445, 6
      %v2434 = vpop.permute.xlu0 %2433
      %2435 = vrot.lane.b32.xlu0 %v444, 6
      %v2436 = vpop.permute.xlu0 %2435
      %2437 = vrot.lane.b32.xlu0 %v448, 6
      %v2438 = vpop.permute.xlu0 %2437
      %2439 = vrot.lane.b32.xlu0 %v450, 6
      %v2440 = vpop.permute.xlu0 %2439
      %2441 = vrot.lane.b32.xlu0 %v449, 6
      %v2442 = vpop.permute.xlu0 %2441
      %2443 = vrot.lane.b32.xlu0 %v453, 6
      %v2444 = vpop.permute.xlu0 %2443
      %2445 = vrot.lane.b32.xlu0 %v455, 6
      %v2446 = vpop.permute.xlu0 %2445
      %2447 = vrot.lane.b32.xlu0 %v454, 6
      %v2448 = vpop.permute.xlu0 %2447
      %2449 = vrot.lane.b32.xlu0 %v458, 6
      %v2450 = vpop.permute.xlu0 %2449
      %2451 = vrot.lane.b32.xlu0 %v460, 6
      %v2452 = vpop.permute.xlu0 %2451
      %2453 = vrot.lane.b32.xlu0 %v459, 6
      %v2454 = vpop.permute.xlu0 %2453
      %2455 = vrot.lane.b32.xlu0 %v463, 6
      %v2456 = vpop.permute.xlu0 %2455
      %2457 = vrot.lane.b32.xlu0 %v465, 6
      %v2458 = vpop.permute.xlu0 %2457
      %2459 = vrot.lane.b32.xlu0 %v464, 6
      %v2460 = vpop.permute.xlu0 %2459
      %2461 = vrot.lane.b32.xlu0 %v468, 6
      %v2462 = vpop.permute.xlu0 %2461
      %2463 = vrot.lane.b32.xlu0 %v470, 6
      %v2464 = vpop.permute.xlu0 %2463
      %2465 = vrot.lane.b32.xlu0 %v469, 6
      %v2466 = vpop.permute.xlu0 %2465
      %2467 = vrot.lane.b32.xlu0 %v1490, 6
      %v2468 = vpop.permute.xlu0 %2467
      %2469 = vrot.lane.b32.xlu0 %v1492, 6
      %v2470 = vpop.permute.xlu0 %2469
      %2471 = vrot.lane.b32.xlu0 %v1491, 6
      %v2472 = vpop.permute.xlu0 %2471
      %2473 = vrot.lane.b32.xlu0 %v2404, 6
      %v2474 = vpop.permute.xlu0 %2473
      %2475 = vrot.lane.b32.xlu0 %v2406, 6
      %v2476 = vpop.permute.xlu0 %2475
      %2477 = vrot.lane.b32.xlu0 %v2405, 6
      %v2478 = vpop.permute.xlu0 %2477
      %v2516 = vrot.slane %v355, 2
      %v2517 = vrot.slane %v356, 2
      %v2518 = vsel %vm545, %v2516, %v2517
      %v2519 = vrot.slane %v357, 2
      %v2520 = vsel %vm545, %v2517, %v2519
      %2521 = vrot.lane.b32.xlu0 %v556, 9
      %v2522 = vpop.permute.xlu0 %2521
      %2523 = vrot.lane.b32.xlu0 %v558, 9
      %v2524 = vpop.permute.xlu0 %2523
      %2525 = vrot.lane.b32.xlu0 %v560, 9
      %v2526 = vpop.permute.xlu0 %2525
      %2527 = vrot.lane.b32.xlu0 %v561, 9
      %v2528 = vpop.permute.xlu0 %2527
      %2529 = vrot.lane.b32.xlu0 %v563, 9
      %v2530 = vpop.permute.xlu0 %2529
      %2531 = vrot.lane.b32.xlu0 %v565, 9
      %v2532 = vpop.permute.xlu0 %2531
      %2533 = vrot.lane.b32.xlu0 %v566, 9
      %v2534 = vpop.permute.xlu0 %2533
      %2535 = vrot.lane.b32.xlu0 %v568, 9
      %v2536 = vpop.permute.xlu0 %2535
      %2537 = vrot.lane.b32.xlu0 %v570, 9
      %v2538 = vpop.permute.xlu0 %2537
      %2539 = vrot.lane.b32.xlu0 %v571, 9
      %v2540 = vpop.permute.xlu0 %2539
      %2541 = vrot.lane.b32.xlu0 %v573, 9
      %v2542 = vpop.permute.xlu0 %2541
      %2543 = vrot.lane.b32.xlu0 %v575, 9
      %v2544 = vpop.permute.xlu0 %2543
      %2545 = vrot.lane.b32.xlu0 %v576, 9
      %v2546 = vpop.permute.xlu0 %2545
      %2547 = vrot.lane.b32.xlu0 %v578, 9
      %v2548 = vpop.permute.xlu0 %2547
      %2549 = vrot.lane.b32.xlu0 %v580, 9
      %v2550 = vpop.permute.xlu0 %2549
      %2551 = vrot.lane.b32.xlu0 %v581, 9
      %v2552 = vpop.permute.xlu0 %2551
      %2553 = vrot.lane.b32.xlu0 %v583, 9
      %v2554 = vpop.permute.xlu0 %2553
      %2555 = vrot.lane.b32.xlu0 %v585, 9
      %v2556 = vpop.permute.xlu0 %2555
      %2557 = vrot.lane.b32.xlu0 %v586, 9
      %v2558 = vpop.permute.xlu0 %2557
      %2559 = vrot.lane.b32.xlu0 %v588, 9
      %v2560 = vpop.permute.xlu0 %2559
      %2561 = vrot.lane.b32.xlu0 %v590, 9
      %v2562 = vpop.permute.xlu0 %2561
      %2563 = vrot.lane.b32.xlu0 %v591, 9
      %v2564 = vpop.permute.xlu0 %2563
      %2565 = vrot.lane.b32.xlu0 %v593, 9
      %v2566 = vpop.permute.xlu0 %2565
      %2567 = vrot.lane.b32.xlu0 %v595, 9
      %v2568 = vpop.permute.xlu0 %2567
      %2569 = vrot.lane.b32.xlu0 %v596, 9
      %v2570 = vpop.permute.xlu0 %2569
      %2571 = vrot.lane.b32.xlu0 %v598, 9
      %v2572 = vpop.permute.xlu0 %2571
      %2573 = vrot.lane.b32.xlu0 %v600, 9
      %v2574 = vpop.permute.xlu0 %2573
      %2575 = vrot.lane.b32.xlu0 %v601, 9
      %v2576 = vpop.permute.xlu0 %2575
      %2577 = vrot.lane.b32.xlu0 %v603, 9
      %v2578 = vpop.permute.xlu0 %2577
      %2579 = vrot.lane.b32.xlu0 %v605, 9
      %v2580 = vpop.permute.xlu0 %2579
      %2581 = vrot.lane.b32.xlu0 %v1567, 9
      %v2582 = vpop.permute.xlu0 %2581
      %2583 = vrot.lane.b32.xlu0 %v1569, 9
      %v2584 = vpop.permute.xlu0 %2583
      %2585 = vrot.lane.b32.xlu0 %v1571, 9
      %v2586 = vpop.permute.xlu0 %2585
      %2587 = vrot.lane.b32.xlu0 %v2516, 9
      %v2588 = vpop.permute.xlu0 %2587
      %2589 = vrot.lane.b32.xlu0 %v2518, 9
      %v2590 = vpop.permute.xlu0 %2589
      %2591 = vrot.lane.b32.xlu0 %v2520, 9
      %v2592 = vpop.permute.xlu0 %2591
      %v2629 = vrot.slane %v355, 3
      %v2630 = vrot.slane %v356, 3
      %v2631 = vsel %vm678, %v2629, %v2630
      %v2632 = vrot.slane %v357, 3
      %v2633 = vsel %vm678, %v2630, %v2632
      %2634 = vrot.lane.b32.xlu0 %v689, 12
      %v2635 = vpop.permute.xlu0 %2634
      %2636 = vrot.lane.b32.xlu0 %v691, 12
      %v2637 = vpop.permute.xlu0 %2636
      %2638 = vrot.lane.b32.xlu0 %v693, 12
      %v2639 = vpop.permute.xlu0 %2638
      %2640 = vrot.lane.b32.xlu0 %v694, 12
      %v2641 = vpop.permute.xlu0 %2640
      %2642 = vrot.lane.b32.xlu0 %v696, 12
      %v2643 = vpop.permute.xlu0 %2642
      %2644 = vrot.lane.b32.xlu0 %v698, 12
      %v2645 = vpop.permute.xlu0 %2644
      %2646 = vrot.lane.b32.xlu0 %v699, 12
      %v2647 = vpop.permute.xlu0 %2646
      %2648 = vrot.lane.b32.xlu0 %v701, 12
      %v2649 = vpop.permute.xlu0 %2648
      %2650 = vrot.lane.b32.xlu0 %v703, 12
      %v2651 = vpop.permute.xlu0 %2650
      %2652 = vrot.lane.b32.xlu0 %v704, 12
      %v2653 = vpop.permute.xlu0 %2652
      %2654 = vrot.lane.b32.xlu0 %v706, 12
      %v2655 = vpop.permute.xlu0 %2654
      %2656 = vrot.lane.b32.xlu0 %v708, 12
      %v2657 = vpop.permute.xlu0 %2656
      %2658 = vrot.lane.b32.xlu0 %v709, 12
      %v2659 = vpop.permute.xlu0 %2658
      %2660 = vrot.lane.b32.xlu0 %v711, 12
      %v2661 = vpop.permute.xlu0 %2660
      %2662 = vrot.lane.b32.xlu0 %v713, 12
      %v2663 = vpop.permute.xlu0 %2662
      %2664 = vrot.lane.b32.xlu0 %v714, 12
      %v2665 = vpop.permute.xlu0 %2664
      %2666 = vrot.lane.b32.xlu0 %v716, 12
      %v2667 = vpop.permute.xlu0 %2666
      %2668 = vrot.lane.b32.xlu0 %v718, 12
      %v2669 = vpop.permute.xlu0 %2668
      %2670 = vrot.lane.b32.xlu0 %v719, 12
      %v2671 = vpop.permute.xlu0 %2670
      %2672 = vrot.lane.b32.xlu0 %v721, 12
      %v2673 = vpop.permute.xlu0 %2672
      %2674 = vrot.lane.b32.xlu0 %v723, 12
      %v2675 = vpop.permute.xlu0 %2674
      %2676 = vrot.lane.b32.xlu0 %v724, 12
      %v2677 = vpop.permute.xlu0 %2676
      %2678 = vrot.lane.b32.xlu0 %v726, 12
      %v2679 = vpop.permute.xlu0 %2678
      %2680 = vrot.lane.b32.xlu0 %v728, 12
      %v2681 = vpop.permute.xlu0 %2680
      %2682 = vrot.lane.b32.xlu0 %v729, 12
      %v2683 = vpop.permute.xlu0 %2682
      %2684 = vrot.lane.b32.xlu0 %v731, 12
      %v2685 = vpop.permute.xlu0 %2684
      %2686 = vrot.lane.b32.xlu0 %v733, 12
      %v2687 = vpop.permute.xlu0 %2686
      %2688 = vrot.lane.b32.xlu0 %v734, 12
      %v2689 = vpop.permute.xlu0 %2688
      %2690 = vrot.lane.b32.xlu0 %v736, 12
      %v2691 = vpop.permute.xlu0 %2690
      %2692 = vrot.lane.b32.xlu0 %v738, 12
      %v2693 = vpop.permute.xlu0 %2692
      %2694 = vrot.lane.b32.xlu0 %v1644, 12
      %v2695 = vpop.permute.xlu0 %2694
      %2696 = vrot.lane.b32.xlu0 %v1646, 12
      %v2697 = vpop.permute.xlu0 %2696
      %2698 = vrot.lane.b32.xlu0 %v1648, 12
      %v2699 = vpop.permute.xlu0 %2698
      %2700 = vrot.lane.b32.xlu0 %v2629, 12
      %v2701 = vpop.permute.xlu0 %2700
      %2702 = vrot.lane.b32.xlu0 %v2631, 12
      %v2703 = vpop.permute.xlu0 %2702
      %2704 = vrot.lane.b32.xlu0 %v2633, 12
      %v2705 = vpop.permute.xlu0 %2704
      %v2742 = vrot.slane %v355, 4
      %v2743 = vrot.slane %v356, 4
      %v2744 = vsel %vm811, %v2742, %v2743
      %v2745 = vrot.slane %v357, 4
      %v2746 = vsel %vm811, %v2743, %v2745
      %2747 = vrot.lane.b32.xlu0 %v822, 15
      %v2748 = vpop.permute.xlu0 %2747
      %2749 = vrot.lane.b32.xlu0 %v824, 15
      %v2750 = vpop.permute.xlu0 %2749
      %2751 = vrot.lane.b32.xlu0 %v826, 15
      %v2752 = vpop.permute.xlu0 %2751
      %2753 = vrot.lane.b32.xlu0 %v827, 15
      %v2754 = vpop.permute.xlu0 %2753
      %2755 = vrot.lane.b32.xlu0 %v829, 15
      %v2756 = vpop.permute.xlu0 %2755
      %2757 = vrot.lane.b32.xlu0 %v831, 15
      %v2758 = vpop.permute.xlu0 %2757
      %2759 = vrot.lane.b32.xlu0 %v832, 15
      %v2760 = vpop.permute.xlu0 %2759
      %2761 = vrot.lane.b32.xlu0 %v834, 15
      %v2762 = vpop.permute.xlu0 %2761
      %2763 = vrot.lane.b32.xlu0 %v836, 15
      %v2764 = vpop.permute.xlu0 %2763
      %2765 = vrot.lane.b32.xlu0 %v837, 15
      %v2766 = vpop.permute.xlu0 %2765
      %2767 = vrot.lane.b32.xlu0 %v839, 15
      %v2768 = vpop.permute.xlu0 %2767
      %2769 = vrot.lane.b32.xlu0 %v841, 15
      %v2770 = vpop.permute.xlu0 %2769
      %2771 = vrot.lane.b32.xlu0 %v842, 15
      %v2772 = vpop.permute.xlu0 %2771
      %2773 = vrot.lane.b32.xlu0 %v844, 15
      %v2774 = vpop.permute.xlu0 %2773
      %2775 = vrot.lane.b32.xlu0 %v846, 15
      %v2776 = vpop.permute.xlu0 %2775
      %2777 = vrot.lane.b32.xlu0 %v847, 15
      %v2778 = vpop.permute.xlu0 %2777
      %2779 = vrot.lane.b32.xlu0 %v849, 15
      %v2780 = vpop.permute.xlu0 %2779
      %2781 = vrot.lane.b32.xlu0 %v851, 15
      %v2782 = vpop.permute.xlu0 %2781
      %2783 = vrot.lane.b32.xlu0 %v852, 15
      %v2784 = vpop.permute.xlu0 %2783
      %2785 = vrot.lane.b32.xlu0 %v854, 15
      %v2786 = vpop.permute.xlu0 %2785
      %2787 = vrot.lane.b32.xlu0 %v856, 15
      %v2788 = vpop.permute.xlu0 %2787
      %2789 = vrot.lane.b32.xlu0 %v857, 15
      %v2790 = vpop.permute.xlu0 %2789
      %2791 = vrot.lane.b32.xlu0 %v859, 15
      %v2792 = vpop.permute.xlu0 %2791
      %2793 = vrot.lane.b32.xlu0 %v861, 15
      %v2794 = vpop.permute.xlu0 %2793
      %2795 = vrot.lane.b32.xlu0 %v862, 15
      %v2796 = vpop.permute.xlu0 %2795
      %2797 = vrot.lane.b32.xlu0 %v864, 15
      %v2798 = vpop.permute.xlu0 %2797
      %2799 = vrot.lane.b32.xlu0 %v866, 15
      %v2800 = vpop.permute.xlu0 %2799
      %2801 = vrot.lane.b32.xlu0 %v867, 15
      %v2802 = vpop.permute.xlu0 %2801
      %2803 = vrot.lane.b32.xlu0 %v869, 15
      %v2804 = vpop.permute.xlu0 %2803
      %2805 = vrot.lane.b32.xlu0 %v871, 15
      %v2806 = vpop.permute.xlu0 %2805
      %2807 = vrot.lane.b32.xlu0 %v1721, 15
      %v2808 = vpop.permute.xlu0 %2807
      %2809 = vrot.lane.b32.xlu0 %v1723, 15
      %v2810 = vpop.permute.xlu0 %2809
      %2811 = vrot.lane.b32.xlu0 %v1725, 15
      %v2812 = vpop.permute.xlu0 %2811
      %2813 = vrot.lane.b32.xlu0 %v2742, 15
      %v2814 = vpop.permute.xlu0 %2813
      %2815 = vrot.lane.b32.xlu0 %v2744, 15
      %v2816 = vpop.permute.xlu0 %2815
      %2817 = vrot.lane.b32.xlu0 %v2746, 15
      %v2818 = vpop.permute.xlu0 %2817
      %v2855 = vrot.slane %v355, 5
      %v2856 = vrot.slane %v356, 5
      %v2857 = vsel %vm944, %v2855, %v2856
      %v2858 = vrot.slane %v357, 5
      %v2859 = vsel %vm944, %v2856, %v2858
      %2860 = vrot.lane.b32.xlu0 %v955, 18
      %v2861 = vpop.permute.xlu0 %2860
      %2862 = vrot.lane.b32.xlu0 %v957, 18
      %v2863 = vpop.permute.xlu0 %2862
      %2864 = vrot.lane.b32.xlu0 %v959, 18
      %v2865 = vpop.permute.xlu0 %2864
      %2866 = vrot.lane.b32.xlu0 %v960, 18
      %v2867 = vpop.permute.xlu0 %2866
      %2868 = vrot.lane.b32.xlu0 %v962, 18
      %v2869 = vpop.permute.xlu0 %2868
      %2870 = vrot.lane.b32.xlu0 %v964, 18
      %v2871 = vpop.permute.xlu0 %2870
      %2872 = vrot.lane.b32.xlu0 %v965, 18
      %v2873 = vpop.permute.xlu0 %2872
      %2874 = vrot.lane.b32.xlu0 %v967, 18
      %v2875 = vpop.permute.xlu0 %2874
      %2876 = vrot.lane.b32.xlu0 %v969, 18
      %v2877 = vpop.permute.xlu0 %2876
      %2878 = vrot.lane.b32.xlu0 %v970, 18
      %v2879 = vpop.permute.xlu0 %2878
      %2880 = vrot.lane.b32.xlu0 %v972, 18
      %v2881 = vpop.permute.xlu0 %2880
      %2882 = vrot.lane.b32.xlu0 %v974, 18
      %v2883 = vpop.permute.xlu0 %2882
      %2884 = vrot.lane.b32.xlu0 %v975, 18
      %v2885 = vpop.permute.xlu0 %2884
      %2886 = vrot.lane.b32.xlu0 %v977, 18
      %v2887 = vpop.permute.xlu0 %2886
      %2888 = vrot.lane.b32.xlu0 %v979, 18
      %v2889 = vpop.permute.xlu0 %2888
      %2890 = vrot.lane.b32.xlu0 %v980, 18
      %v2891 = vpop.permute.xlu0 %2890
      %2892 = vrot.lane.b32.xlu0 %v982, 18
      %v2893 = vpop.permute.xlu0 %2892
      %2894 = vrot.lane.b32.xlu0 %v984, 18
      %v2895 = vpop.permute.xlu0 %2894
      %2896 = vrot.lane.b32.xlu0 %v985, 18
      %v2897 = vpop.permute.xlu0 %2896
      %2898 = vrot.lane.b32.xlu0 %v987, 18
      %v2899 = vpop.permute.xlu0 %2898
      %2900 = vrot.lane.b32.xlu0 %v989, 18
      %v2901 = vpop.permute.xlu0 %2900
      %2902 = vrot.lane.b32.xlu0 %v990, 18
      %v2903 = vpop.permute.xlu0 %2902
      %2904 = vrot.lane.b32.xlu0 %v992, 18
      %v2905 = vpop.permute.xlu0 %2904
      %2906 = vrot.lane.b32.xlu0 %v994, 18
      %v2907 = vpop.permute.xlu0 %2906
      %2908 = vrot.lane.b32.xlu0 %v995, 18
      %v2909 = vpop.permute.xlu0 %2908
      %2910 = vrot.lane.b32.xlu0 %v997, 18
      %v2911 = vpop.permute.xlu0 %2910
      %2912 = vrot.lane.b32.xlu0 %v999, 18
      %v2913 = vpop.permute.xlu0 %2912
      %2914 = vrot.lane.b32.xlu0 %v1000, 18
      %v2915 = vpop.permute.xlu0 %2914
      %2916 = vrot.lane.b32.xlu0 %v1002, 18
      %v2917 = vpop.permute.xlu0 %2916
      %2918 = vrot.lane.b32.xlu0 %v1004, 18
      %v2919 = vpop.permute.xlu0 %2918
      %2920 = vrot.lane.b32.xlu0 %v1798, 18
      %v2921 = vpop.permute.xlu0 %2920
      %2922 = vrot.lane.b32.xlu0 %v1800, 18
      %v2923 = vpop.permute.xlu0 %2922
      %2924 = vrot.lane.b32.xlu0 %v1802, 18
      %v2925 = vpop.permute.xlu0 %2924
      %2926 = vrot.lane.b32.xlu0 %v2855, 18
      %v2927 = vpop.permute.xlu0 %2926
      %2928 = vrot.lane.b32.xlu0 %v2857, 18
      %v2929 = vpop.permute.xlu0 %2928
      %2930 = vrot.lane.b32.xlu0 %v2859, 18
      %v2931 = vpop.permute.xlu0 %2930
      %v2968 = vrot.slane %v355, 6
      %v2969 = vrot.slane %v356, 6
      %v2970 = vsel %vm1077, %v2968, %v2969
      %v2971 = vrot.slane %v357, 6
      %v2972 = vsel %vm1077, %v2969, %v2971
      %2973 = vrot.lane.b32.xlu0 %v1088, 21
      %v2974 = vpop.permute.xlu0 %2973
      %2975 = vrot.lane.b32.xlu0 %v1090, 21
      %v2976 = vpop.permute.xlu0 %2975
      %2977 = vrot.lane.b32.xlu0 %v1092, 21
      %v2978 = vpop.permute.xlu0 %2977
      %2979 = vrot.lane.b32.xlu0 %v1093, 21
      %v2980 = vpop.permute.xlu0 %2979
      %2981 = vrot.lane.b32.xlu0 %v1095, 21
      %v2982 = vpop.permute.xlu0 %2981
      %2983 = vrot.lane.b32.xlu0 %v1097, 21
      %v2984 = vpop.permute.xlu0 %2983
      %2985 = vrot.lane.b32.xlu0 %v1098, 21
      %v2986 = vpop.permute.xlu0 %2985
      %2987 = vrot.lane.b32.xlu0 %v1100, 21
      %v2988 = vpop.permute.xlu0 %2987
      %2989 = vrot.lane.b32.xlu0 %v1102, 21
      %v2990 = vpop.permute.xlu0 %2989
      %2991 = vrot.lane.b32.xlu0 %v1103, 21
      %v2992 = vpop.permute.xlu0 %2991
      %2993 = vrot.lane.b32.xlu0 %v1105, 21
      %v2994 = vpop.permute.xlu0 %2993
      %2995 = vrot.lane.b32.xlu0 %v1107, 21
      %v2996 = vpop.permute.xlu0 %2995
      %2997 = vrot.lane.b32.xlu0 %v1108, 21
      %v2998 = vpop.permute.xlu0 %2997
      %2999 = vrot.lane.b32.xlu0 %v1110, 21
      %v3000 = vpop.permute.xlu0 %2999
      %3001 = vrot.lane.b32.xlu0 %v1112, 21
      %v3002 = vpop.permute.xlu0 %3001
      %3003 = vrot.lane.b32.xlu0 %v1113, 21
      %v3004 = vpop.permute.xlu0 %3003
      %3005 = vrot.lane.b32.xlu0 %v1115, 21
      %v3006 = vpop.permute.xlu0 %3005
      %3007 = vrot.lane.b32.xlu0 %v1117, 21
      %v3008 = vpop.permute.xlu0 %3007
      %3009 = vrot.lane.b32.xlu0 %v1118, 21
      %v3010 = vpop.permute.xlu0 %3009
      %3011 = vrot.lane.b32.xlu0 %v1120, 21
      %v3012 = vpop.permute.xlu0 %3011
      %3013 = vrot.lane.b32.xlu0 %v1122, 21
      %v3014 = vpop.permute.xlu0 %3013
      %3015 = vrot.lane.b32.xlu0 %v1123, 21
      %v3016 = vpop.permute.xlu0 %3015
      %3017 = vrot.lane.b32.xlu0 %v1125, 21
      %v3018 = vpop.permute.xlu0 %3017
      %3019 = vrot.lane.b32.xlu0 %v1127, 21
      %v3020 = vpop.permute.xlu0 %3019
      %3021 = vrot.lane.b32.xlu0 %v1128, 21
      %v3022 = vpop.permute.xlu0 %3021
      %3023 = vrot.lane.b32.xlu0 %v1130, 21
      %v3024 = vpop.permute.xlu0 %3023
      %3025 = vrot.lane.b32.xlu0 %v1132, 21
      %v3026 = vpop.permute.xlu0 %3025
      %3027 = vrot.lane.b32.xlu0 %v1133, 21
      %v3028 = vpop.permute.xlu0 %3027
      %3029 = vrot.lane.b32.xlu0 %v1135, 21
      %v3030 = vpop.permute.xlu0 %3029
      %3031 = vrot.lane.b32.xlu0 %v1137, 21
      %v3032 = vpop.permute.xlu0 %3031
      %3033 = vrot.lane.b32.xlu0 %v1875, 21
      %v3034 = vpop.permute.xlu0 %3033
      %3035 = vrot.lane.b32.xlu0 %v1877, 21
      %v3036 = vpop.permute.xlu0 %3035
      %3037 = vrot.lane.b32.xlu0 %v1879, 21
      %v3038 = vpop.permute.xlu0 %3037
      %3039 = vrot.lane.b32.xlu0 %v2968, 21
      %v3040 = vpop.permute.xlu0 %3039
      %3041 = vrot.lane.b32.xlu0 %v2970, 21
      %v3042 = vpop.permute.xlu0 %3041
      %3043 = vrot.lane.b32.xlu0 %v2972, 21
      %v3044 = vpop.permute.xlu0 %3043
      %v3081 = vrot.slane %v352, 7
      %v3082 = vrot.slane %v353, 7
      %v3083 = vsel %vm1210, %v3081, %v3082
      %v3084 = vrot.slane %v354, 7
      %v3085 = vsel %vm1210, %v3082, %v3084
      %v3086 = vrot.slane %v355, 7
      %v3087 = vrot.slane %v356, 7
      %v3088 = vsel %vm1210, %v3086, %v3087
      %v3089 = vrot.slane %v357, 7
      %v3090 = vsel %vm1210, %v3087, %v3089
      %3091 = vrot.lane.b32.xlu0 %v1221, 24
      %v3092 = vpop.permute.xlu0 %3091
      %3093 = vrot.lane.b32.xlu0 %v1223, 24
      %v3094 = vpop.permute.xlu0 %3093
      %3095 = vrot.lane.b32.xlu0 %v1225, 24
      %v3096 = vpop.permute.xlu0 %3095
      %3097 = vrot.lane.b32.xlu0 %v1226, 24
      %v3098 = vpop.permute.xlu0 %3097
      %3099 = vrot.lane.b32.xlu0 %v1228, 24
      %v3100 = vpop.permute.xlu0 %3099
      %3101 = vrot.lane.b32.xlu0 %v1230, 24
      %v3102 = vpop.permute.xlu0 %3101
      %3103 = vrot.lane.b32.xlu0 %v1231, 24
      %v3104 = vpop.permute.xlu0 %3103
      %3105 = vrot.lane.b32.xlu0 %v1233, 24
      %v3106 = vpop.permute.xlu0 %3105
      %3107 = vrot.lane.b32.xlu0 %v1235, 24
      %v3108 = vpop.permute.xlu0 %3107
      %3109 = vrot.lane.b32.xlu0 %v1236, 24
      %v3110 = vpop.permute.xlu0 %3109
      %3111 = vrot.lane.b32.xlu0 %v1238, 24
      %v3112 = vpop.permute.xlu0 %3111
      %3113 = vrot.lane.b32.xlu0 %v1240, 24
      %v3114 = vpop.permute.xlu0 %3113
      %3115 = vrot.lane.b32.xlu0 %v1241, 24
      %v3116 = vpop.permute.xlu0 %3115
      %3117 = vrot.lane.b32.xlu0 %v1243, 24
      %v3118 = vpop.permute.xlu0 %3117
      %3119 = vrot.lane.b32.xlu0 %v1245, 24
      %v3120 = vpop.permute.xlu0 %3119
      %3121 = vrot.lane.b32.xlu0 %v1246, 24
      %v3122 = vpop.permute.xlu0 %3121
      %3123 = vrot.lane.b32.xlu0 %v1248, 24
      %v3124 = vpop.permute.xlu0 %3123
      %3125 = vrot.lane.b32.xlu0 %v1250, 24
      %v3126 = vpop.permute.xlu0 %3125
      %3127 = vrot.lane.b32.xlu0 %v1251, 24
      %v3128 = vpop.permute.xlu0 %3127
      %3129 = vrot.lane.b32.xlu0 %v1253, 24
      %v3130 = vpop.permute.xlu0 %3129
      %3131 = vrot.lane.b32.xlu0 %v1255, 24
      %v3132 = vpop.permute.xlu0 %3131
      %3133 = vrot.lane.b32.xlu0 %v1256, 24
      %v3134 = vpop.permute.xlu0 %3133
      %3135 = vrot.lane.b32.xlu0 %v1258, 24
      %v3136 = vpop.permute.xlu0 %3135
      %3137 = vrot.lane.b32.xlu0 %v1260, 24
      %v3138 = vpop.permute.xlu0 %3137
      %3139 = vrot.lane.b32.xlu0 %v1261, 24
      %v3140 = vpop.permute.xlu0 %3139
      %3141 = vrot.lane.b32.xlu0 %v1263, 24
      %v3142 = vpop.permute.xlu0 %3141
      %3143 = vrot.lane.b32.xlu0 %v1265, 24
      %v3144 = vpop.permute.xlu0 %3143
      %3145 = vrot.lane.b32.xlu0 %v1266, 24
      %v3146 = vpop.permute.xlu0 %3145
      %3147 = vrot.lane.b32.xlu0 %v1268, 24
      %v3148 = vpop.permute.xlu0 %3147
      %3149 = vrot.lane.b32.xlu0 %v1270, 24
      %v3150 = vpop.permute.xlu0 %3149
      %3151 = vrot.lane.b32.xlu0 %v3081, 24
      %v3152 = vpop.permute.xlu0 %3151
      %3153 = vrot.lane.b32.xlu0 %v3083, 24
      %v3154 = vpop.permute.xlu0 %3153
      %3155 = vrot.lane.b32.xlu0 %v3085, 24
      %v3156 = vpop.permute.xlu0 %3155
      %3157 = vrot.lane.b32.xlu0 %v3086, 24
      %v3158 = vpop.permute.xlu0 %3157
      %3159 = vrot.lane.b32.xlu0 %v3088, 24
      %v3160 = vpop.permute.xlu0 %3159
      %3161 = vrot.lane.b32.xlu0 %v3090, 24
      %v3162 = vpop.permute.xlu0 %3161
      %3199 = vrot.lane.b32.xlu0 %v324, 27
      %v3200 = vpop.permute.xlu0 %3199
      %3201 = vrot.lane.b32.xlu0 %v327, 27
      %v3202 = vpop.permute.xlu0 %3201
      %3203 = vrot.lane.b32.xlu0 %v330, 27
      %v3204 = vpop.permute.xlu0 %3203
      %3205 = vrot.lane.b32.xlu0 %v333, 27
      %v3206 = vpop.permute.xlu0 %3205
      %3207 = vrot.lane.b32.xlu0 %v336, 27
      %v3208 = vpop.permute.xlu0 %3207
      %3209 = vrot.lane.b32.xlu0 %v339, 27
      %v3210 = vpop.permute.xlu0 %3209
      %3211 = vrot.lane.b32.xlu0 %v342, 27
      %v3212 = vpop.permute.xlu0 %3211
      %3213 = vrot.lane.b32.xlu0 %v345, 27
      %v3214 = vpop.permute.xlu0 %3213
      %3215 = vrot.lane.b32.xlu0 %v348, 27
      %v3216 = vpop.permute.xlu0 %3215
      %3217 = vrot.lane.b32.xlu0 %v351, 27
      %v3218 = vpop.permute.xlu0 %3217
      %3219 = vrot.lane.b32.xlu0 %v354, 27
      %v3220 = vpop.permute.xlu0 %3219
      %3221 = vrot.lane.b32.xlu0 %v355, 27
      %v3222 = vpop.permute.xlu0 %3221
      %3223 = vrot.lane.b32.xlu0 %v356, 27
      %v3224 = vpop.permute.xlu0 %3223
      %3225 = vrot.lane.b32.xlu0 %v357, 27
      %v3226 = vpop.permute.xlu0 %3225
      %v3241 = vrot.slane %v357, 1
      %v3242 = vsel %vm412, %v2405, %v3241
      %3243 = vrot.lane.b32.xlu0 %v424, 30
      %v3244 = vpop.permute.xlu0 %3243
      %3245 = vrot.lane.b32.xlu0 %v426, 30
      %v3246 = vpop.permute.xlu0 %3245
      %3247 = vrot.lane.b32.xlu0 %v429, 30
      %v3248 = vpop.permute.xlu0 %3247
      %3249 = vrot.lane.b32.xlu0 %v431, 30
      %v3250 = vpop.permute.xlu0 %3249
      %3251 = vrot.lane.b32.xlu0 %v434, 30
      %v3252 = vpop.permute.xlu0 %3251
      %3253 = vrot.lane.b32.xlu0 %v436, 30
      %v3254 = vpop.permute.xlu0 %3253
      %3255 = vrot.lane.b32.xlu0 %v439, 30
      %v3256 = vpop.permute.xlu0 %3255
      %3257 = vrot.lane.b32.xlu0 %v441, 30
      %v3258 = vpop.permute.xlu0 %3257
      %3259 = vrot.lane.b32.xlu0 %v444, 30
      %v3260 = vpop.permute.xlu0 %3259
      %3261 = vrot.lane.b32.xlu0 %v446, 30
      %v3262 = vpop.permute.xlu0 %3261
      %3263 = vrot.lane.b32.xlu0 %v449, 30
      %v3264 = vpop.permute.xlu0 %3263
      %3265 = vrot.lane.b32.xlu0 %v451, 30
      %v3266 = vpop.permute.xlu0 %3265
      %3267 = vrot.lane.b32.xlu0 %v454, 30
      %v3268 = vpop.permute.xlu0 %3267
      %3269 = vrot.lane.b32.xlu0 %v456, 30
      %v3270 = vpop.permute.xlu0 %3269
      %3271 = vrot.lane.b32.xlu0 %v459, 30
      %v3272 = vpop.permute.xlu0 %3271
      %3273 = vrot.lane.b32.xlu0 %v461, 30
      %v3274 = vpop.permute.xlu0 %3273
      %3275 = vrot.lane.b32.xlu0 %v464, 30
      %v3276 = vpop.permute.xlu0 %3275
      %3277 = vrot.lane.b32.xlu0 %v466, 30
      %v3278 = vpop.permute.xlu0 %3277
      %3279 = vrot.lane.b32.xlu0 %v469, 30
      %v3280 = vpop.permute.xlu0 %3279
      %3281 = vrot.lane.b32.xlu0 %v471, 30
      %v3282 = vpop.permute.xlu0 %3281
      %3283 = vrot.lane.b32.xlu0 %v1491, 30
      %v3284 = vpop.permute.xlu0 %3283
      %3285 = vrot.lane.b32.xlu0 %v1493, 30
      %v3286 = vpop.permute.xlu0 %3285
      %3287 = vrot.lane.b32.xlu0 %v2405, 30
      %v3288 = vpop.permute.xlu0 %3287
      %3289 = vrot.lane.b32.xlu0 %v3242, 30
      %v3290 = vpop.permute.xlu0 %3289
      %3291 = vrot.lane.b32.xlu0 %v3241, 30
      %v3292 = vpop.permute.xlu0 %3291
      %v3320 = vrot.slane %v358, 1
      %v3321 = vrot.slane %v359, 1
      %v3322 = vsel %vm412, %v3320, %v3321
      %3323 = vrot.lane.b32.xlu0 %v428, 33
      %v3324 = vpop.permute.xlu0 %3323
      %3325 = vrot.lane.b32.xlu0 %v430, 33
      %v3326 = vpop.permute.xlu0 %3325
      %3327 = vrot.lane.b32.xlu0 %v429, 33
      %v3328 = vpop.permute.xlu0 %3327
      %3329 = vrot.lane.b32.xlu0 %v433, 33
      %v3330 = vpop.permute.xlu0 %3329
      %3331 = vrot.lane.b32.xlu0 %v435, 33
      %v3332 = vpop.permute.xlu0 %3331
      %3333 = vrot.lane.b32.xlu0 %v434, 33
      %v3334 = vpop.permute.xlu0 %3333
      %3335 = vrot.lane.b32.xlu0 %v438, 33
      %v3336 = vpop.permute.xlu0 %3335
      %3337 = vrot.lane.b32.xlu0 %v440, 33
      %v3338 = vpop.permute.xlu0 %3337
      %3339 = vrot.lane.b32.xlu0 %v439, 33
      %v3340 = vpop.permute.xlu0 %3339
      %3341 = vrot.lane.b32.xlu0 %v443, 33
      %v3342 = vpop.permute.xlu0 %3341
      %3343 = vrot.lane.b32.xlu0 %v445, 33
      %v3344 = vpop.permute.xlu0 %3343
      %3345 = vrot.lane.b32.xlu0 %v444, 33
      %v3346 = vpop.permute.xlu0 %3345
      %3347 = vrot.lane.b32.xlu0 %v448, 33
      %v3348 = vpop.permute.xlu0 %3347
      %3349 = vrot.lane.b32.xlu0 %v450, 33
      %v3350 = vpop.permute.xlu0 %3349
      %3351 = vrot.lane.b32.xlu0 %v449, 33
      %v3352 = vpop.permute.xlu0 %3351
      %3353 = vrot.lane.b32.xlu0 %v453, 33
      %v3354 = vpop.permute.xlu0 %3353
      %3355 = vrot.lane.b32.xlu0 %v455, 33
      %v3356 = vpop.permute.xlu0 %3355
      %3357 = vrot.lane.b32.xlu0 %v454, 33
      %v3358 = vpop.permute.xlu0 %3357
      %3359 = vrot.lane.b32.xlu0 %v458, 33
      %v3360 = vpop.permute.xlu0 %3359
      %3361 = vrot.lane.b32.xlu0 %v460, 33
      %v3362 = vpop.permute.xlu0 %3361
      %3363 = vrot.lane.b32.xlu0 %v459, 33
      %v3364 = vpop.permute.xlu0 %3363
      %3365 = vrot.lane.b32.xlu0 %v463, 33
      %v3366 = vpop.permute.xlu0 %3365
      %3367 = vrot.lane.b32.xlu0 %v465, 33
      %v3368 = vpop.permute.xlu0 %3367
      %3369 = vrot.lane.b32.xlu0 %v464, 33
      %v3370 = vpop.permute.xlu0 %3369
      %3371 = vrot.lane.b32.xlu0 %v468, 33
      %v3372 = vpop.permute.xlu0 %3371
      %3373 = vrot.lane.b32.xlu0 %v470, 33
      %v3374 = vpop.permute.xlu0 %3373
      %3375 = vrot.lane.b32.xlu0 %v469, 33
      %v3376 = vpop.permute.xlu0 %3375
      %3377 = vrot.lane.b32.xlu0 %v1490, 33
      %v3378 = vpop.permute.xlu0 %3377
      %3379 = vrot.lane.b32.xlu0 %v1492, 33
      %v3380 = vpop.permute.xlu0 %3379
      %3381 = vrot.lane.b32.xlu0 %v1491, 33
      %v3382 = vpop.permute.xlu0 %3381
      %3383 = vrot.lane.b32.xlu0 %v2404, 33
      %v3384 = vpop.permute.xlu0 %3383
      %3385 = vrot.lane.b32.xlu0 %v2406, 33
      %v3386 = vpop.permute.xlu0 %3385
      %3387 = vrot.lane.b32.xlu0 %v2405, 33
      %v3388 = vpop.permute.xlu0 %3387
      %3389 = vrot.lane.b32.xlu0 %v3320, 33
      %v3390 = vpop.permute.xlu0 %3389
      %3391 = vrot.lane.b32.xlu0 %v3322, 33
      %v3392 = vpop.permute.xlu0 %3391
      %3393 = vrot.lane.b32.xlu0 %v3321, 33
      %v3394 = vpop.permute.xlu0 %3393
      %v3432 = vrot.slane %v358, 2
      %v3433 = vrot.slane %v359, 2
      %v3434 = vsel %vm545, %v3432, %v3433
      %v3435 = vrot.slane %v360, 2
      %v3436 = vsel %vm545, %v3433, %v3435
      %3437 = vrot.lane.b32.xlu0 %v561, 36
      %v3438 = vpop.permute.xlu0 %3437
      %3439 = vrot.lane.b32.xlu0 %v563, 36
      %v3440 = vpop.permute.xlu0 %3439
      %3441 = vrot.lane.b32.xlu0 %v565, 36
      %v3442 = vpop.permute.xlu0 %3441
      %3443 = vrot.lane.b32.xlu0 %v566, 36
      %v3444 = vpop.permute.xlu0 %3443
      %3445 = vrot.lane.b32.xlu0 %v568, 36
      %v3446 = vpop.permute.xlu0 %3445
      %3447 = vrot.lane.b32.xlu0 %v570, 36
      %v3448 = vpop.permute.xlu0 %3447
      %3449 = vrot.lane.b32.xlu0 %v571, 36
      %v3450 = vpop.permute.xlu0 %3449
      %3451 = vrot.lane.b32.xlu0 %v573, 36
      %v3452 = vpop.permute.xlu0 %3451
      %3453 = vrot.lane.b32.xlu0 %v575, 36
      %v3454 = vpop.permute.xlu0 %3453
      %3455 = vrot.lane.b32.xlu0 %v576, 36
      %v3456 = vpop.permute.xlu0 %3455
      %3457 = vrot.lane.b32.xlu0 %v578, 36
      %v3458 = vpop.permute.xlu0 %3457
      %3459 = vrot.lane.b32.xlu0 %v580, 36
      %v3460 = vpop.permute.xlu0 %3459
      %3461 = vrot.lane.b32.xlu0 %v581, 36
      %v3462 = vpop.permute.xlu0 %3461
      %3463 = vrot.lane.b32.xlu0 %v583, 36
      %v3464 = vpop.permute.xlu0 %3463
      %3465 = vrot.lane.b32.xlu0 %v585, 36
      %v3466 = vpop.permute.xlu0 %3465
      %3467 = vrot.lane.b32.xlu0 %v586, 36
      %v3468 = vpop.permute.xlu0 %3467
      %3469 = vrot.lane.b32.xlu0 %v588, 36
      %v3470 = vpop.permute.xlu0 %3469
      %3471 = vrot.lane.b32.xlu0 %v590, 36
      %v3472 = vpop.permute.xlu0 %3471
      %3473 = vrot.lane.b32.xlu0 %v591, 36
      %v3474 = vpop.permute.xlu0 %3473
      %3475 = vrot.lane.b32.xlu0 %v593, 36
      %v3476 = vpop.permute.xlu0 %3475
      %3477 = vrot.lane.b32.xlu0 %v595, 36
      %v3478 = vpop.permute.xlu0 %3477
      %3479 = vrot.lane.b32.xlu0 %v596, 36
      %v3480 = vpop.permute.xlu0 %3479
      %3481 = vrot.lane.b32.xlu0 %v598, 36
      %v3482 = vpop.permute.xlu0 %3481
      %3483 = vrot.lane.b32.xlu0 %v600, 36
      %v3484 = vpop.permute.xlu0 %3483
      %3485 = vrot.lane.b32.xlu0 %v601, 36
      %v3486 = vpop.permute.xlu0 %3485
      %3487 = vrot.lane.b32.xlu0 %v603, 36
      %v3488 = vpop.permute.xlu0 %3487
      %3489 = vrot.lane.b32.xlu0 %v605, 36
      %v3490 = vpop.permute.xlu0 %3489
      %3491 = vrot.lane.b32.xlu0 %v1567, 36
      %v3492 = vpop.permute.xlu0 %3491
      %3493 = vrot.lane.b32.xlu0 %v1569, 36
      %v3494 = vpop.permute.xlu0 %3493
      %3495 = vrot.lane.b32.xlu0 %v1571, 36
      %v3496 = vpop.permute.xlu0 %3495
      %3497 = vrot.lane.b32.xlu0 %v2516, 36
      %v3498 = vpop.permute.xlu0 %3497
      %3499 = vrot.lane.b32.xlu0 %v2518, 36
      %v3500 = vpop.permute.xlu0 %3499
      %3501 = vrot.lane.b32.xlu0 %v2520, 36
      %v3502 = vpop.permute.xlu0 %3501
      %3503 = vrot.lane.b32.xlu0 %v3432, 36
      %v3504 = vpop.permute.xlu0 %3503
      %3505 = vrot.lane.b32.xlu0 %v3434, 36
      %v3506 = vpop.permute.xlu0 %3505
      %3507 = vrot.lane.b32.xlu0 %v3436, 36
      %v3508 = vpop.permute.xlu0 %3507
      %v3545 = vrot.slane %v358, 3
      %v3546 = vrot.slane %v359, 3
      %v3547 = vsel %vm678, %v3545, %v3546
      %v3548 = vrot.slane %v360, 3
      %v3549 = vsel %vm678, %v3546, %v3548
      %3550 = vrot.lane.b32.xlu0 %v694, 39
      %v3551 = vpop.permute.xlu0 %3550
      %3552 = vrot.lane.b32.xlu0 %v696, 39
      %v3553 = vpop.permute.xlu0 %3552
      %3554 = vrot.lane.b32.xlu0 %v698, 39
      %v3555 = vpop.permute.xlu0 %3554
      %3556 = vrot.lane.b32.xlu0 %v699, 39
      %v3557 = vpop.permute.xlu0 %3556
      %3558 = vrot.lane.b32.xlu0 %v701, 39
      %v3559 = vpop.permute.xlu0 %3558
      %3560 = vrot.lane.b32.xlu0 %v703, 39
      %v3561 = vpop.permute.xlu0 %3560
      %3562 = vrot.lane.b32.xlu0 %v704, 39
      %v3563 = vpop.permute.xlu0 %3562
      %3564 = vrot.lane.b32.xlu0 %v706, 39
      %v3565 = vpop.permute.xlu0 %3564
      %3566 = vrot.lane.b32.xlu0 %v708, 39
      %v3567 = vpop.permute.xlu0 %3566
      %3568 = vrot.lane.b32.xlu0 %v709, 39
      %v3569 = vpop.permute.xlu0 %3568
      %3570 = vrot.lane.b32.xlu0 %v711, 39
      %v3571 = vpop.permute.xlu0 %3570
      %3572 = vrot.lane.b32.xlu0 %v713, 39
      %v3573 = vpop.permute.xlu0 %3572
      %3574 = vrot.lane.b32.xlu0 %v714, 39
      %v3575 = vpop.permute.xlu0 %3574
      %3576 = vrot.lane.b32.xlu0 %v716, 39
      %v3577 = vpop.permute.xlu0 %3576
      %3578 = vrot.lane.b32.xlu0 %v718, 39
      %v3579 = vpop.permute.xlu0 %3578
      %3580 = vrot.lane.b32.xlu0 %v719, 39
      %v3581 = vpop.permute.xlu0 %3580
      %3582 = vrot.lane.b32.xlu0 %v721, 39
      %v3583 = vpop.permute.xlu0 %3582
      %3584 = vrot.lane.b32.xlu0 %v723, 39
      %v3585 = vpop.permute.xlu0 %3584
      %3586 = vrot.lane.b32.xlu0 %v724, 39
      %v3587 = vpop.permute.xlu0 %3586
      %3588 = vrot.lane.b32.xlu0 %v726, 39
      %v3589 = vpop.permute.xlu0 %3588
      %3590 = vrot.lane.b32.xlu0 %v728, 39
      %v3591 = vpop.permute.xlu0 %3590
      %3592 = vrot.lane.b32.xlu0 %v729, 39
      %v3593 = vpop.permute.xlu0 %3592
      %3594 = vrot.lane.b32.xlu0 %v731, 39
      %v3595 = vpop.permute.xlu0 %3594
      %3596 = vrot.lane.b32.xlu0 %v733, 39
      %v3597 = vpop.permute.xlu0 %3596
      %3598 = vrot.lane.b32.xlu0 %v734, 39
      %v3599 = vpop.permute.xlu0 %3598
      %3600 = vrot.lane.b32.xlu0 %v736, 39
      %v3601 = vpop.permute.xlu0 %3600
      %3602 = vrot.lane.b32.xlu0 %v738, 39
      %v3603 = vpop.permute.xlu0 %3602
      %3604 = vrot.lane.b32.xlu0 %v1644, 39
      %v3605 = vpop.permute.xlu0 %3604
      %3606 = vrot.lane.b32.xlu0 %v1646, 39
      %v3607 = vpop.permute.xlu0 %3606
      %3608 = vrot.lane.b32.xlu0 %v1648, 39
      %v3609 = vpop.permute.xlu0 %3608
      %3610 = vrot.lane.b32.xlu0 %v2629, 39
      %v3611 = vpop.permute.xlu0 %3610
      %3612 = vrot.lane.b32.xlu0 %v2631, 39
      %v3613 = vpop.permute.xlu0 %3612
      %3614 = vrot.lane.b32.xlu0 %v2633, 39
      %v3615 = vpop.permute.xlu0 %3614
      %3616 = vrot.lane.b32.xlu0 %v3545, 39
      %v3617 = vpop.permute.xlu0 %3616
      %3618 = vrot.lane.b32.xlu0 %v3547, 39
      %v3619 = vpop.permute.xlu0 %3618
      %3620 = vrot.lane.b32.xlu0 %v3549, 39
      %v3621 = vpop.permute.xlu0 %3620
      %v3658 = vrot.slane %v358, 4
      %v3659 = vrot.slane %v359, 4
      %v3660 = vsel %vm811, %v3658, %v3659
      %v3661 = vrot.slane %v360, 4
      %v3662 = vsel %vm811, %v3659, %v3661
      %3663 = vrot.lane.b32.xlu0 %v827, 42
      %v3664 = vpop.permute.xlu0 %3663
      %3665 = vrot.lane.b32.xlu0 %v829, 42
      %v3666 = vpop.permute.xlu0 %3665
      %3667 = vrot.lane.b32.xlu0 %v831, 42
      %v3668 = vpop.permute.xlu0 %3667
      %3669 = vrot.lane.b32.xlu0 %v832, 42
      %v3670 = vpop.permute.xlu0 %3669
      %3671 = vrot.lane.b32.xlu0 %v834, 42
      %v3672 = vpop.permute.xlu0 %3671
      %3673 = vrot.lane.b32.xlu0 %v836, 42
      %v3674 = vpop.permute.xlu0 %3673
      %3675 = vrot.lane.b32.xlu0 %v837, 42
      %v3676 = vpop.permute.xlu0 %3675
      %3677 = vrot.lane.b32.xlu0 %v839, 42
      %v3678 = vpop.permute.xlu0 %3677
      %3679 = vrot.lane.b32.xlu0 %v841, 42
      %v3680 = vpop.permute.xlu0 %3679
      %3681 = vrot.lane.b32.xlu0 %v842, 42
      %v3682 = vpop.permute.xlu0 %3681
      %3683 = vrot.lane.b32.xlu0 %v844, 42
      %v3684 = vpop.permute.xlu0 %3683
      %3685 = vrot.lane.b32.xlu0 %v846, 42
      %v3686 = vpop.permute.xlu0 %3685
      %3687 = vrot.lane.b32.xlu0 %v847, 42
      %v3688 = vpop.permute.xlu0 %3687
      %3689 = vrot.lane.b32.xlu0 %v849, 42
      %v3690 = vpop.permute.xlu0 %3689
      %3691 = vrot.lane.b32.xlu0 %v851, 42
      %v3692 = vpop.permute.xlu0 %3691
      %3693 = vrot.lane.b32.xlu0 %v852, 42
      %v3694 = vpop.permute.xlu0 %3693
      %3695 = vrot.lane.b32.xlu0 %v854, 42
      %v3696 = vpop.permute.xlu0 %3695
      %3697 = vrot.lane.b32.xlu0 %v856, 42
      %v3698 = vpop.permute.xlu0 %3697
      %3699 = vrot.lane.b32.xlu0 %v857, 42
      %v3700 = vpop.permute.xlu0 %3699
      %3701 = vrot.lane.b32.xlu0 %v859, 42
      %v3702 = vpop.permute.xlu0 %3701
      %3703 = vrot.lane.b32.xlu0 %v861, 42
      %v3704 = vpop.permute.xlu0 %3703
      %3705 = vrot.lane.b32.xlu0 %v862, 42
      %v3706 = vpop.permute.xlu0 %3705
      %3707 = vrot.lane.b32.xlu0 %v864, 42
      %v3708 = vpop.permute.xlu0 %3707
      %3709 = vrot.lane.b32.xlu0 %v866, 42
      %v3710 = vpop.permute.xlu0 %3709
      %3711 = vrot.lane.b32.xlu0 %v867, 42
      %v3712 = vpop.permute.xlu0 %3711
      %3713 = vrot.lane.b32.xlu0 %v869, 42
      %v3714 = vpop.permute.xlu0 %3713
      %3715 = vrot.lane.b32.xlu0 %v871, 42
      %v3716 = vpop.permute.xlu0 %3715
      %3717 = vrot.lane.b32.xlu0 %v1721, 42
      %v3718 = vpop.permute.xlu0 %3717
      %3719 = vrot.lane.b32.xlu0 %v1723, 42
      %v3720 = vpop.permute.xlu0 %3719
      %3721 = vrot.lane.b32.xlu0 %v1725, 42
      %v3722 = vpop.permute.xlu0 %3721
      %3723 = vrot.lane.b32.xlu0 %v2742, 42
      %v3724 = vpop.permute.xlu0 %3723
      %3725 = vrot.lane.b32.xlu0 %v2744, 42
      %v3726 = vpop.permute.xlu0 %3725
      %3727 = vrot.lane.b32.xlu0 %v2746, 42
      %v3728 = vpop.permute.xlu0 %3727
      %3729 = vrot.lane.b32.xlu0 %v3658, 42
      %v3730 = vpop.permute.xlu0 %3729
      %3731 = vrot.lane.b32.xlu0 %v3660, 42
      %v3732 = vpop.permute.xlu0 %3731
      %3733 = vrot.lane.b32.xlu0 %v3662, 42
      %v3734 = vpop.permute.xlu0 %3733
      %v3771 = vrot.slane %v358, 5
      %v3772 = vrot.slane %v359, 5
      %v3773 = vsel %vm944, %v3771, %v3772
      %v3774 = vrot.slane %v360, 5
      %v3775 = vsel %vm944, %v3772, %v3774
      %3776 = vrot.lane.b32.xlu0 %v960, 45
      %v3777 = vpop.permute.xlu0 %3776
      %3778 = vrot.lane.b32.xlu0 %v962, 45
      %v3779 = vpop.permute.xlu0 %3778
      %3780 = vrot.lane.b32.xlu0 %v964, 45
      %v3781 = vpop.permute.xlu0 %3780
      %3782 = vrot.lane.b32.xlu0 %v965, 45
      %v3783 = vpop.permute.xlu0 %3782
      %3784 = vrot.lane.b32.xlu0 %v967, 45
      %v3785 = vpop.permute.xlu0 %3784
      %3786 = vrot.lane.b32.xlu0 %v969, 45
      %v3787 = vpop.permute.xlu0 %3786
      %3788 = vrot.lane.b32.xlu0 %v970, 45
      %v3789 = vpop.permute.xlu0 %3788
      %3790 = vrot.lane.b32.xlu0 %v972, 45
      %v3791 = vpop.permute.xlu0 %3790
      %3792 = vrot.lane.b32.xlu0 %v974, 45
      %v3793 = vpop.permute.xlu0 %3792
      %3794 = vrot.lane.b32.xlu0 %v975, 45
      %v3795 = vpop.permute.xlu0 %3794
      %3796 = vrot.lane.b32.xlu0 %v977, 45
      %v3797 = vpop.permute.xlu0 %3796
      %3798 = vrot.lane.b32.xlu0 %v979, 45
      %v3799 = vpop.permute.xlu0 %3798
      %3800 = vrot.lane.b32.xlu0 %v980, 45
      %v3801 = vpop.permute.xlu0 %3800
      %3802 = vrot.lane.b32.xlu0 %v982, 45
      %v3803 = vpop.permute.xlu0 %3802
      %3804 = vrot.lane.b32.xlu0 %v984, 45
      %v3805 = vpop.permute.xlu0 %3804
      %3806 = vrot.lane.b32.xlu0 %v985, 45
      %v3807 = vpop.permute.xlu0 %3806
      %3808 = vrot.lane.b32.xlu0 %v987, 45
      %v3809 = vpop.permute.xlu0 %3808
      %3810 = vrot.lane.b32.xlu0 %v989, 45
      %v3811 = vpop.permute.xlu0 %3810
      %3812 = vrot.lane.b32.xlu0 %v990, 45
      %v3813 = vpop.permute.xlu0 %3812
      %3814 = vrot.lane.b32.xlu0 %v992, 45
      %v3815 = vpop.permute.xlu0 %3814
      %3816 = vrot.lane.b32.xlu0 %v994, 45
      %v3817 = vpop.permute.xlu0 %3816
      %3818 = vrot.lane.b32.xlu0 %v995, 45
      %v3819 = vpop.permute.xlu0 %3818
      %3820 = vrot.lane.b32.xlu0 %v997, 45
      %v3821 = vpop.permute.xlu0 %3820
      %3822 = vrot.lane.b32.xlu0 %v999, 45
      %v3823 = vpop.permute.xlu0 %3822
      %3824 = vrot.lane.b32.xlu0 %v1000, 45
      %v3825 = vpop.permute.xlu0 %3824
      %3826 = vrot.lane.b32.xlu0 %v1002, 45
      %v3827 = vpop.permute.xlu0 %3826
      %3828 = vrot.lane.b32.xlu0 %v1004, 45
      %v3829 = vpop.permute.xlu0 %3828
      %3830 = vrot.lane.b32.xlu0 %v1798, 45
      %v3831 = vpop.permute.xlu0 %3830
      %3832 = vrot.lane.b32.xlu0 %v1800, 45
      %v3833 = vpop.permute.xlu0 %3832
      %3834 = vrot.lane.b32.xlu0 %v1802, 45
      %v3835 = vpop.permute.xlu0 %3834
      %3836 = vrot.lane.b32.xlu0 %v2855, 45
      %v3837 = vpop.permute.xlu0 %3836
      %3838 = vrot.lane.b32.xlu0 %v2857, 45
      %v3839 = vpop.permute.xlu0 %3838
      %3840 = vrot.lane.b32.xlu0 %v2859, 45
      %v3841 = vpop.permute.xlu0 %3840
      %3842 = vrot.lane.b32.xlu0 %v3771, 45
      %v3843 = vpop.permute.xlu0 %3842
      %3844 = vrot.lane.b32.xlu0 %v3773, 45
      %v3845 = vpop.permute.xlu0 %3844
      %3846 = vrot.lane.b32.xlu0 %v3775, 45
      %v3847 = vpop.permute.xlu0 %3846
      %v3884 = vsel %vm1952, %v319, %v2328
      %v3885 = vsel %vm1952, %v321, %v2330
      %v3886 = vsel %vm1952, %v322, %v2332
      %v3887 = vsel %vm1952, %v324, %v2334
      %v3888 = vsel %vm1952, %v325, %v2336
      %v3889 = vsel %vm1952, %v327, %v2338
      %v3890 = vsel %vm1952, %v328, %v2340
      %v3891 = vsel %vm1952, %v330, %v2342
      %v3892 = vsel %vm1952, %v331, %v2344
      %v3893 = vsel %vm1952, %v333, %v2346
      %v3894 = vsel %vm1952, %v334, %v2348
      %v3895 = vsel %vm1952, %v336, %v2350
      %v3896 = vsel %vm1952, %v337, %v2352
      %v3897 = vsel %vm1952, %v339, %v2354
      %v3898 = vsel %vm1952, %v340, %v2356
      %v3899 = vsel %vm1952, %v342, %v2358
      %v3900 = vsel %vm1952, %v343, %v2360
      %v3901 = vsel %vm1952, %v345, %v2362
      %v3902 = vsel %vm1952, %v346, %v2364
      %v3903 = vsel %vm1952, %v348, %v2366
      %v3904 = vsel %vm1952, %v349, %v2368
      %v3905 = vsel %vm1952, %v351, %v2370
      %v3906 = vsel %vm1952, %v352, %v2372
      %v3907 = vsel %vm1952, %v353, %v2374
      %v3908 = vsel %vm1952, %v354, %v2376
      %v3909 = vsel %vm1977, %v3884, %v2408
      %v3910 = vsel %vm1977, %v1956, %v2410
      %v3911 = vsel %vm1977, %v3885, %v2412
      %v3912 = vsel %vm1977, %v3886, %v2414
      %v3913 = vsel %vm1977, %v1958, %v2416
      %v3914 = vsel %vm1977, %v3887, %v2418
      %v3915 = vsel %vm1977, %v3888, %v2420
      %v3916 = vsel %vm1977, %v1960, %v2422
      %v3917 = vsel %vm1977, %v3889, %v2424
      %v3918 = vsel %vm1977, %v3890, %v2426
      %v3919 = vsel %vm1977, %v1962, %v2428
      %v3920 = vsel %vm1977, %v3891, %v2430
      %v3921 = vsel %vm1977, %v3892, %v2432
      %v3922 = vsel %vm1977, %v1964, %v2434
      %v3923 = vsel %vm1977, %v3893, %v2436
      %v3924 = vsel %vm1977, %v3894, %v2438
      %v3925 = vsel %vm1977, %v1966, %v2440
      %v3926 = vsel %vm1977, %v3895, %v2442
      %v3927 = vsel %vm1977, %v3896, %v2444
      %v3928 = vsel %vm1977, %v1968, %v2446
      %v3929 = vsel %vm1977, %v3897, %v2448
      %v3930 = vsel %vm1977, %v3898, %v2450
      %v3931 = vsel %vm1977, %v1970, %v2452
      %v3932 = vsel %vm1977, %v3899, %v2454
      %v3933 = vsel %vm1977, %v3900, %v2456
      %v3934 = vsel %vm1977, %v1972, %v2458
      %v3935 = vsel %vm1977, %v3901, %v2460
      %v3936 = vsel %vm1977, %v3902, %v2462
      %v3937 = vsel %vm1977, %v1974, %v2464
      %v3938 = vsel %vm1977, %v3903, %v2466
      %v3939 = vsel %vm1977, %v3904, %v2468
      %v3940 = vsel %vm1977, %v1976, %v2470
      %v3941 = vsel %vm1977, %v3905, %v2472
      %v3942 = vsel %vm1977, %v3906, %v2474
      %v3943 = vsel %vm1977, %v3907, %v2476
      %v3944 = vsel %vm1977, %v3908, %v2478
      %v3945 = vsel %vm2002, %v3909, %v2522
      %v3946 = vsel %vm2002, %v3910, %v2524
      %v3947 = vsel %vm2002, %v3911, %v2526
      %v3948 = vsel %vm2002, %v3912, %v2528
      %v3949 = vsel %vm2002, %v3913, %v2530
      %v3950 = vsel %vm2002, %v3914, %v2532
      %v3951 = vsel %vm2002, %v3915, %v2534
      %v3952 = vsel %vm2002, %v3916, %v2536
      %v3953 = vsel %vm2002, %v3917, %v2538
      %v3954 = vsel %vm2002, %v3918, %v2540
      %v3955 = vsel %vm2002, %v3919, %v2542
      %v3956 = vsel %vm2002, %v3920, %v2544
      %v3957 = vsel %vm2002, %v3921, %v2546
      %v3958 = vsel %vm2002, %v3922, %v2548
      %v3959 = vsel %vm2002, %v3923, %v2550
      %v3960 = vsel %vm2002, %v3924, %v2552
      %v3961 = vsel %vm2002, %v3925, %v2554
      %v3962 = vsel %vm2002, %v3926, %v2556
      %v3963 = vsel %vm2002, %v3927, %v2558
      %v3964 = vsel %vm2002, %v3928, %v2560
      %v3965 = vsel %vm2002, %v3929, %v2562
      %v3966 = vsel %vm2002, %v3930, %v2564
      %v3967 = vsel %vm2002, %v3931, %v2566
      %v3968 = vsel %vm2002, %v3932, %v2568
      %v3969 = vsel %vm2002, %v3933, %v2570
      %v3970 = vsel %vm2002, %v3934, %v2572
      %v3971 = vsel %vm2002, %v3935, %v2574
      %v3972 = vsel %vm2002, %v3936, %v2576
      %v3973 = vsel %vm2002, %v3937, %v2578
      %v3974 = vsel %vm2002, %v3938, %v2580
      %v3975 = vsel %vm2002, %v3939, %v2582
      %v3976 = vsel %vm2002, %v3940, %v2584
      %v3977 = vsel %vm2002, %v3941, %v2586
      %v3978 = vsel %vm2002, %v3942, %v2588
      %v3979 = vsel %vm2002, %v3943, %v2590
      %v3980 = vsel %vm2002, %v3944, %v2592
      %v3981 = vsel %vm2027, %v3945, %v2635
      %v3982 = vsel %vm2027, %v3946, %v2637
      %v3983 = vsel %vm2027, %v3947, %v2639
      %v3984 = vsel %vm2027, %v3948, %v2641
      %v3985 = vsel %vm2027, %v3949, %v2643
      %v3986 = vsel %vm2027, %v3950, %v2645
      %v3987 = vsel %vm2027, %v3951, %v2647
      %v3988 = vsel %vm2027, %v3952, %v2649
      %v3989 = vsel %vm2027, %v3953, %v2651
      %v3990 = vsel %vm2027, %v3954, %v2653
      %v3991 = vsel %vm2027, %v3955, %v2655
      %v3992 = vsel %vm2027, %v3956, %v2657
      %v3993 = vsel %vm2027, %v3957, %v2659
      %v3994 = vsel %vm2027, %v3958, %v2661
      %v3995 = vsel %vm2027, %v3959, %v2663
      %v3996 = vsel %vm2027, %v3960, %v2665
      %v3997 = vsel %vm2027, %v3961, %v2667
      %v3998 = vsel %vm2027, %v3962, %v2669
      %v3999 = vsel %vm2027, %v3963, %v2671
      %v4000 = vsel %vm2027, %v3964, %v2673
      %v4001 = vsel %vm2027, %v3965, %v2675
      %v4002 = vsel %vm2027, %v3966, %v2677
      %v4003 = vsel %vm2027, %v3967, %v2679
      %v4004 = vsel %vm2027, %v3968, %v2681
      %v4005 = vsel %vm2027, %v3969, %v2683
      %v4006 = vsel %vm2027, %v3970, %v2685
      %v4007 = vsel %vm2027, %v3971, %v2687
      %v4008 = vsel %vm2027, %v3972, %v2689
      %v4009 = vsel %vm2027, %v3973, %v2691
      %v4010 = vsel %vm2027, %v3974, %v2693
      %v4011 = vsel %vm2027, %v3975, %v2695
      %v4012 = vsel %vm2027, %v3976, %v2697
      %v4013 = vsel %vm2027, %v3977, %v2699
      %v4014 = vsel %vm2027, %v3978, %v2701
      %v4015 = vsel %vm2027, %v3979, %v2703
      %v4016 = vsel %vm2027, %v3980, %v2705
      %v4017 = vsel %vm2052, %v3981, %v2748
      %v4018 = vsel %vm2052, %v3982, %v2750
      %v4019 = vsel %vm2052, %v3983, %v2752
      %v4020 = vsel %vm2052, %v3984, %v2754
      %v4021 = vsel %vm2052, %v3985, %v2756
      %v4022 = vsel %vm2052, %v3986, %v2758
      %v4023 = vsel %vm2052, %v3987, %v2760
      %v4024 = vsel %vm2052, %v3988, %v2762
      %v4025 = vsel %vm2052, %v3989, %v2764
      %v4026 = vsel %vm2052, %v3990, %v2766
      %v4027 = vsel %vm2052, %v3991, %v2768
      %v4028 = vsel %vm2052, %v3992, %v2770
      %v4029 = vsel %vm2052, %v3993, %v2772
      %v4030 = vsel %vm2052, %v3994, %v2774
      %v4031 = vsel %vm2052, %v3995, %v2776
      %v4032 = vsel %vm2052, %v3996, %v2778
      %v4033 = vsel %vm2052, %v3997, %v2780
      %v4034 = vsel %vm2052, %v3998, %v2782
      %v4035 = vsel %vm2052, %v3999, %v2784
      %v4036 = vsel %vm2052, %v4000, %v2786
      %v4037 = vsel %vm2052, %v4001, %v2788
      %v4038 = vsel %vm2052, %v4002, %v2790
      %v4039 = vsel %vm2052, %v4003, %v2792
      %v4040 = vsel %vm2052, %v4004, %v2794
      %v4041 = vsel %vm2052, %v4005, %v2796
      %v4042 = vsel %vm2052, %v4006, %v2798
      %v4043 = vsel %vm2052, %v4007, %v2800
      %v4044 = vsel %vm2052, %v4008, %v2802
      %v4045 = vsel %vm2052, %v4009, %v2804
      %v4046 = vsel %vm2052, %v4010, %v2806
      %v4047 = vsel %vm2052, %v4011, %v2808
      %v4048 = vsel %vm2052, %v4012, %v2810
      %v4049 = vsel %vm2052, %v4013, %v2812
      %v4050 = vsel %vm2052, %v4014, %v2814
      %v4051 = vsel %vm2052, %v4015, %v2816
      %v4052 = vsel %vm2052, %v4016, %v2818
      %v4053 = vsel %vm2077, %v4017, %v2861
      %v4054 = vsel %vm2077, %v4018, %v2863
      %v4055 = vsel %vm2077, %v4019, %v2865
      %v4056 = vsel %vm2077, %v4020, %v2867
      %v4057 = vsel %vm2077, %v4021, %v2869
      %v4058 = vsel %vm2077, %v4022, %v2871
      %v4059 = vsel %vm2077, %v4023, %v2873
      %v4060 = vsel %vm2077, %v4024, %v2875
      %v4061 = vsel %vm2077, %v4025, %v2877
      %v4062 = vsel %vm2077, %v4026, %v2879
      %v4063 = vsel %vm2077, %v4027, %v2881
      %v4064 = vsel %vm2077, %v4028, %v2883
      %v4065 = vsel %vm2077, %v4029, %v2885
      %v4066 = vsel %vm2077, %v4030, %v2887
      %v4067 = vsel %vm2077, %v4031, %v2889
      %v4068 = vsel %vm2077, %v4032, %v2891
      %v4069 = vsel %vm2077, %v4033, %v2893
      %v4070 = vsel %vm2077, %v4034, %v2895
      %v4071 = vsel %vm2077, %v4035, %v2897
      %v4072 = vsel %vm2077, %v4036, %v2899
      %v4073 = vsel %vm2077, %v4037, %v2901
      %v4074 = vsel %vm2077, %v4038, %v2903
      %v4075 = vsel %vm2077, %v4039, %v2905
      %v4076 = vsel %vm2077, %v4040, %v2907
      %v4077 = vsel %vm2077, %v4041, %v2909
      %v4078 = vsel %vm2077, %v4042, %v2911
      %v4079 = vsel %vm2077, %v4043, %v2913
      %v4080 = vsel %vm2077, %v4044, %v2915
      %v4081 = vsel %vm2077, %v4045, %v2917
      %v4082 = vsel %vm2077, %v4046, %v2919
      %v4083 = vsel %vm2077, %v4047, %v2921
      %v4084 = vsel %vm2077, %v4048, %v2923
      %v4085 = vsel %vm2077, %v4049, %v2925
      %v4086 = vsel %vm2077, %v4050, %v2927
      %v4087 = vsel %vm2077, %v4051, %v2929
      %v4088 = vsel %vm2077, %v4052, %v2931
      %v4089 = vsel %vm2102, %v4053, %v2974
      %v4090 = vsel %vm2102, %v4054, %v2976
      %v4091 = vsel %vm2102, %v4055, %v2978
      %v4092 = vsel %vm2102, %v4056, %v2980
      %v4093 = vsel %vm2102, %v4057, %v2982
      %v4094 = vsel %vm2102, %v4058, %v2984
      %v4095 = vsel %vm2102, %v4059, %v2986
      %v4096 = vsel %vm2102, %v4060, %v2988
      %v4097 = vsel %vm2102, %v4061, %v2990
      %v4098 = vsel %vm2102, %v4062, %v2992
      %v4099 = vsel %vm2102, %v4063, %v2994
      %v4100 = vsel %vm2102, %v4064, %v2996
      %v4101 = vsel %vm2102, %v4065, %v2998
      %v4102 = vsel %vm2102, %v4066, %v3000
      %v4103 = vsel %vm2102, %v4067, %v3002
      %v4104 = vsel %vm2102, %v4068, %v3004
      %v4105 = vsel %vm2102, %v4069, %v3006
      %v4106 = vsel %vm2102, %v4070, %v3008
      %v4107 = vsel %vm2102, %v4071, %v3010
      %v4108 = vsel %vm2102, %v4072, %v3012
      %v4109 = vsel %vm2102, %v4073, %v3014
      %v4110 = vsel %vm2102, %v4074, %v3016
      %v4111 = vsel %vm2102, %v4075, %v3018
      %v4112 = vsel %vm2102, %v4076, %v3020
      %v4113 = vsel %vm2102, %v4077, %v3022
      %v4114 = vsel %vm2102, %v4078, %v3024
      %v4115 = vsel %vm2102, %v4079, %v3026
      %v4116 = vsel %vm2102, %v4080, %v3028
      %v4117 = vsel %vm2102, %v4081, %v3030
      %v4118 = vsel %vm2102, %v4082, %v3032
      %v4119 = vsel %vm2102, %v4083, %v3034
      %v4120 = vsel %vm2102, %v4084, %v3036
      %v4121 = vsel %vm2102, %v4085, %v3038
      %v4122 = vsel %vm2102, %v4086, %v3040
      %v4123 = vsel %vm2102, %v4087, %v3042
      %v4124 = vsel %vm2102, %v4088, %v3044
      %v4125 = vsel %vm2127, %v4089, %v3092
      %v4126 = vsel %vm2127, %v4090, %v3094
      %v4127 = vsel %vm2127, %v4091, %v3096
      %v4128 = vsel %vm2127, %v4092, %v3098
      %v4129 = vsel %vm2127, %v4093, %v3100
      %v4130 = vsel %vm2127, %v4094, %v3102
      %v4131 = vsel %vm2127, %v4095, %v3104
      %v4132 = vsel %vm2127, %v4096, %v3106
      %v4133 = vsel %vm2127, %v4097, %v3108
      %v4134 = vsel %vm2127, %v4098, %v3110
      %v4135 = vsel %vm2127, %v4099, %v3112
      %v4136 = vsel %vm2127, %v4100, %v3114
      %v4137 = vsel %vm2127, %v4101, %v3116
      %v4138 = vsel %vm2127, %v4102, %v3118
      %v4139 = vsel %vm2127, %v4103, %v3120
      %v4140 = vsel %vm2127, %v4104, %v3122
      %v4141 = vsel %vm2127, %v4105, %v3124
      %v4142 = vsel %vm2127, %v4106, %v3126
      %v4143 = vsel %vm2127, %v4107, %v3128
      %v4144 = vsel %vm2127, %v4108, %v3130
      %v4145 = vsel %vm2127, %v4109, %v3132
      %v4146 = vsel %vm2127, %v4110, %v3134
      %v4147 = vsel %vm2127, %v4111, %v3136
      %v4148 = vsel %vm2127, %v4112, %v3138
      %v4149 = vsel %vm2127, %v4113, %v3140
      %v4150 = vsel %vm2127, %v4114, %v3142
      %v4151 = vsel %vm2127, %v4115, %v3144
      %v4152 = vsel %vm2127, %v4116, %v3146
      %v4153 = vsel %vm2127, %v4117, %v3148
      %v4154 = vsel %vm2127, %v4118, %v3150
      %v4155 = vsel %vm2127, %v4119, %v3152
      %v4156 = vsel %vm2127, %v4120, %v3154
      %v4157 = vsel %vm2127, %v4121, %v3156
      %v4158 = vsel %vm2127, %v4122, %v3158
      %v4159 = vsel %vm2127, %v4123, %v3160
      %v4160 = vsel %vm2127, %v4124, %v3162
      %v4161 = vsel %vm2152, %v4125, %v1422
      %v4162 = vsel %vm2152, %v4126, %v1424
      %v4163 = vsel %vm2152, %v4127, %v3200
      %v4164 = vsel %vm2152, %v4128, %v1426
      %v4165 = vsel %vm2152, %v4129, %v1428
      %v4166 = vsel %vm2152, %v4130, %v3202
      %v4167 = vsel %vm2152, %v4131, %v1430
      %v4168 = vsel %vm2152, %v4132, %v1432
      %v4169 = vsel %vm2152, %v4133, %v3204
      %v4170 = vsel %vm2152, %v4134, %v1434
      %v4171 = vsel %vm2152, %v4135, %v1436
      %v4172 = vsel %vm2152, %v4136, %v3206
      %v4173 = vsel %vm2152, %v4137, %v1438
      %v4174 = vsel %vm2152, %v4138, %v1440
      %v4175 = vsel %vm2152, %v4139, %v3208
      %v4176 = vsel %vm2152, %v4140, %v1442
      %v4177 = vsel %vm2152, %v4141, %v1444
      %v4178 = vsel %vm2152, %v4142, %v3210
      %v4179 = vsel %vm2152, %v4143, %v1446
      %v4180 = vsel %vm2152, %v4144, %v1448
      %v4181 = vsel %vm2152, %v4145, %v3212
      %v4182 = vsel %vm2152, %v4146, %v1450
      %v4183 = vsel %vm2152, %v4147, %v1452
      %v4184 = vsel %vm2152, %v4148, %v3214
      %v4185 = vsel %vm2152, %v4149, %v1454
      %v4186 = vsel %vm2152, %v4150, %v1456
      %v4187 = vsel %vm2152, %v4151, %v3216
      %v4188 = vsel %vm2152, %v4152, %v1458
      %v4189 = vsel %vm2152, %v4153, %v1460
      %v4190 = vsel %vm2152, %v4154, %v3218
      %v4191 = vsel %vm2152, %v4155, %v1462
      %v4192 = vsel %vm2152, %v4156, %v1464
      %v4193 = vsel %vm2152, %v4157, %v3220
      %v4194 = vsel %vm2152, %v4158, %v3222
      %v4195 = vsel %vm2152, %v4159, %v3224
      %v4196 = vsel %vm2152, %v4160, %v3226
      %v4197 = vsel %vm2177, %v4161, %v3244
      %v4198 = vsel %vm2177, %v4162, %v1502
      %v4199 = vsel %vm2177, %v4163, %v3246
      %v4200 = vsel %vm2177, %v4164, %v3248
      %v4201 = vsel %vm2177, %v4165, %v1506
      %v4202 = vsel %vm2177, %v4166, %v3250
      %v4203 = vsel %vm2177, %v4167, %v3252
      %v4204 = vsel %vm2177, %v4168, %v1510
      %v4205 = vsel %vm2177, %v4169, %v3254
      %v4206 = vsel %vm2177, %v4170, %v3256
      %v4207 = vsel %vm2177, %v4171, %v1514
      %v4208 = vsel %vm2177, %v4172, %v3258
      %v4209 = vsel %vm2177, %v4173, %v3260
      %v4210 = vsel %vm2177, %v4174, %v1518
      %v4211 = vsel %vm2177, %v4175, %v3262
      %v4212 = vsel %vm2177, %v4176, %v3264
      %v4213 = vsel %vm2177, %v4177, %v1522
      %v4214 = vsel %vm2177, %v4178, %v3266
      %v4215 = vsel %vm2177, %v4179, %v3268
      %v4216 = vsel %vm2177, %v4180, %v1526
      %v4217 = vsel %vm2177, %v4181, %v3270
      %v4218 = vsel %vm2177, %v4182, %v3272
      %v4219 = vsel %vm2177, %v4183, %v1530
      %v4220 = vsel %vm2177, %v4184, %v3274
      %v4221 = vsel %vm2177, %v4185, %v3276
      %v4222 = vsel %vm2177, %v4186, %v1534
      %v4223 = vsel %vm2177, %v4187, %v3278
      %v4224 = vsel %vm2177, %v4188, %v3280
      %v4225 = vsel %vm2177, %v4189, %v1538
      %v4226 = vsel %vm2177, %v4190, %v3282
      %v4227 = vsel %vm2177, %v4191, %v3284
      %v4228 = vsel %vm2177, %v4192, %v1542
      %v4229 = vsel %vm2177, %v4193, %v3286
      %v4230 = vsel %vm2177, %v4194, %v3288
      %v4231 = vsel %vm2177, %v4195, %v3290
      %v4232 = vsel %vm2177, %v4196, %v3292
      %v4233 = vsel %vm2202, %v4197, %v3324
      %v4234 = vsel %vm2202, %v4198, %v3326
      %v4235 = vsel %vm2202, %v4199, %v3328
      %v4236 = vsel %vm2202, %v4200, %v3330
      %v4237 = vsel %vm2202, %v4201, %v3332
      %v4238 = vsel %vm2202, %v4202, %v3334
      %v4239 = vsel %vm2202, %v4203, %v3336
      %v4240 = vsel %vm2202, %v4204, %v3338
      %v4241 = vsel %vm2202, %v4205, %v3340
      %v4242 = vsel %vm2202, %v4206, %v3342
      %v4243 = vsel %vm2202, %v4207, %v3344
      %v4244 = vsel %vm2202, %v4208, %v3346
      %v4245 = vsel %vm2202, %v4209, %v3348
      %v4246 = vsel %vm2202, %v4210, %v3350
      %v4247 = vsel %vm2202, %v4211, %v3352
      %v4248 = vsel %vm2202, %v4212, %v3354
      %v4249 = vsel %vm2202, %v4213, %v3356
      %v4250 = vsel %vm2202, %v4214, %v3358
      %v4251 = vsel %vm2202, %v4215, %v3360
      %v4252 = vsel %vm2202, %v4216, %v3362
      %v4253 = vsel %vm2202, %v4217, %v3364
      %v4254 = vsel %vm2202, %v4218, %v3366
      %v4255 = vsel %vm2202, %v4219, %v3368
      %v4256 = vsel %vm2202, %v4220, %v3370
      %v4257 = vsel %vm2202, %v4221, %v3372
      %v4258 = vsel %vm2202, %v4222, %v3374
      %v4259 = vsel %vm2202, %v4223, %v3376
      %v4260 = vsel %vm2202, %v4224, %v3378
      %v4261 = vsel %vm2202, %v4225, %v3380
      %v4262 = vsel %vm2202, %v4226, %v3382
      %v4263 = vsel %vm2202, %v4227, %v3384
      %v4264 = vsel %vm2202, %v4228, %v3386
      %v4265 = vsel %vm2202, %v4229, %v3388
      %v4266 = vsel %vm2202, %v4230, %v3390
      %v4267 = vsel %vm2202, %v4231, %v3392
      %v4268 = vsel %vm2202, %v4232, %v3394
      %v4269 = vsel %vm2227, %v4233, %v3438
      %v4270 = vsel %vm2227, %v4234, %v3440
      %v4271 = vsel %vm2227, %v4235, %v3442
      %v4272 = vsel %vm2227, %v4236, %v3444
      %v4273 = vsel %vm2227, %v4237, %v3446
      %v4274 = vsel %vm2227, %v4238, %v3448
      %v4275 = vsel %vm2227, %v4239, %v3450
      %v4276 = vsel %vm2227, %v4240, %v3452
      %v4277 = vsel %vm2227, %v4241, %v3454
      %v4278 = vsel %vm2227, %v4242, %v3456
      %v4279 = vsel %vm2227, %v4243, %v3458
      %v4280 = vsel %vm2227, %v4244, %v3460
      %v4281 = vsel %vm2227, %v4245, %v3462
      %v4282 = vsel %vm2227, %v4246, %v3464
      %v4283 = vsel %vm2227, %v4247, %v3466
      %v4284 = vsel %vm2227, %v4248, %v3468
      %v4285 = vsel %vm2227, %v4249, %v3470
      %v4286 = vsel %vm2227, %v4250, %v3472
      %v4287 = vsel %vm2227, %v4251, %v3474
      %v4288 = vsel %vm2227, %v4252, %v3476
      %v4289 = vsel %vm2227, %v4253, %v3478
      %v4290 = vsel %vm2227, %v4254, %v3480
      %v4291 = vsel %vm2227, %v4255, %v3482
      %v4292 = vsel %vm2227, %v4256, %v3484
      %v4293 = vsel %vm2227, %v4257, %v3486
      %v4294 = vsel %vm2227, %v4258, %v3488
      %v4295 = vsel %vm2227, %v4259, %v3490
      %v4296 = vsel %vm2227, %v4260, %v3492
      %v4297 = vsel %vm2227, %v4261, %v3494
      %v4298 = vsel %vm2227, %v4262, %v3496
      %v4299 = vsel %vm2227, %v4263, %v3498
      %v4300 = vsel %vm2227, %v4264, %v3500
      %v4301 = vsel %vm2227, %v4265, %v3502
      %v4302 = vsel %vm2227, %v4266, %v3504
      %v4303 = vsel %vm2227, %v4267, %v3506
      %v4304 = vsel %vm2227, %v4268, %v3508
      %v4305 = vsel %vm2252, %v4269, %v3551
      %v4306 = vsel %vm2252, %v4270, %v3553
      %v4307 = vsel %vm2252, %v4271, %v3555
      %v4308 = vsel %vm2252, %v4272, %v3557
      %v4309 = vsel %vm2252, %v4273, %v3559
      %v4310 = vsel %vm2252, %v4274, %v3561
      %v4311 = vsel %vm2252, %v4275, %v3563
      %v4312 = vsel %vm2252, %v4276, %v3565
      %v4313 = vsel %vm2252, %v4277, %v3567
      %v4314 = vsel %vm2252, %v4278, %v3569
      %v4315 = vsel %vm2252, %v4279, %v3571
      %v4316 = vsel %vm2252, %v4280, %v3573
      %v4317 = vsel %vm2252, %v4281, %v3575
      %v4318 = vsel %vm2252, %v4282, %v3577
      %v4319 = vsel %vm2252, %v4283, %v3579
      %v4320 = vsel %vm2252, %v4284, %v3581
      %v4321 = vsel %vm2252, %v4285, %v3583
      %v4322 = vsel %vm2252, %v4286, %v3585
      %v4323 = vsel %vm2252, %v4287, %v3587
      %v4324 = vsel %vm2252, %v4288, %v3589
      %v4325 = vsel %vm2252, %v4289, %v3591
      %v4326 = vsel %vm2252, %v4290, %v3593
      %v4327 = vsel %vm2252, %v4291, %v3595
      %v4328 = vsel %vm2252, %v4292, %v3597
      %v4329 = vsel %vm2252, %v4293, %v3599
      %v4330 = vsel %vm2252, %v4294, %v3601
      %v4331 = vsel %vm2252, %v4295, %v3603
      %v4332 = vsel %vm2252, %v4296, %v3605
      %v4333 = vsel %vm2252, %v4297, %v3607
      %v4334 = vsel %vm2252, %v4298, %v3609
      %v4335 = vsel %vm2252, %v4299, %v3611
      %v4336 = vsel %vm2252, %v4300, %v3613
      %v4337 = vsel %vm2252, %v4301, %v3615
      %v4338 = vsel %vm2252, %v4302, %v3617
      %v4339 = vsel %vm2252, %v4303, %v3619
      %v4340 = vsel %vm2252, %v4304, %v3621
      %v4341 = vsel %vm2277, %v4305, %v3664
      %v4342 = vsel %vm2277, %v4306, %v3666
      %v4343 = vsel %vm2277, %v4307, %v3668
      %v4344 = vsel %vm2277, %v4308, %v3670
      %v4345 = vsel %vm2277, %v4309, %v3672
      %v4346 = vsel %vm2277, %v4310, %v3674
      %v4347 = vsel %vm2277, %v4311, %v3676
      %v4348 = vsel %vm2277, %v4312, %v3678
      %v4349 = vsel %vm2277, %v4313, %v3680
      %v4350 = vsel %vm2277, %v4314, %v3682
      %v4351 = vsel %vm2277, %v4315, %v3684
      %v4352 = vsel %vm2277, %v4316, %v3686
      %v4353 = vsel %vm2277, %v4317, %v3688
      %v4354 = vsel %vm2277, %v4318, %v3690
      %v4355 = vsel %vm2277, %v4319, %v3692
      %v4356 = vsel %vm2277, %v4320, %v3694
      %v4357 = vsel %vm2277, %v4321, %v3696
      %v4358 = vsel %vm2277, %v4322, %v3698
      %v4359 = vsel %vm2277, %v4323, %v3700
      %v4360 = vsel %vm2277, %v4324, %v3702
      %v4361 = vsel %vm2277, %v4325, %v3704
      %v4362 = vsel %vm2277, %v4326, %v3706
      %v4363 = vsel %vm2277, %v4327, %v3708
      %v4364 = vsel %vm2277, %v4328, %v3710
      %v4365 = vsel %vm2277, %v4329, %v3712
      %v4366 = vsel %vm2277, %v4330, %v3714
      %v4367 = vsel %vm2277, %v4331, %v3716
      %v4368 = vsel %vm2277, %v4332, %v3718
      %v4369 = vsel %vm2277, %v4333, %v3720
      %v4370 = vsel %vm2277, %v4334, %v3722
      %v4371 = vsel %vm2277, %v4335, %v3724
      %v4372 = vsel %vm2277, %v4336, %v3726
      %v4373 = vsel %vm2277, %v4337, %v3728
      %v4374 = vsel %vm2277, %v4338, %v3730
      %v4375 = vsel %vm2277, %v4339, %v3732
      %v4376 = vsel %vm2277, %v4340, %v3734
      %v4377 = vsel %vm2302, %v4341, %v3777
      %v4378 = vsel %vm2302, %v4342, %v3779
      %v4379 = vsel %vm2302, %v4343, %v3781
      %v4380 = vsel %vm2302, %v4344, %v3783
      %v4381 = vsel %vm2302, %v4345, %v3785
      %v4382 = vsel %vm2302, %v4346, %v3787
      %v4383 = vsel %vm2302, %v4347, %v3789
      %v4384 = vsel %vm2302, %v4348, %v3791
      %v4385 = vsel %vm2302, %v4349, %v3793
      %v4386 = vsel %vm2302, %v4350, %v3795
      %v4387 = vsel %vm2302, %v4351, %v3797
      %v4388 = vsel %vm2302, %v4352, %v3799
      %v4389 = vsel %vm2302, %v4353, %v3801
      %v4390 = vsel %vm2302, %v4354, %v3803
      %v4391 = vsel %vm2302, %v4355, %v3805
      %v4392 = vsel %vm2302, %v4356, %v3807
      %v4393 = vsel %vm2302, %v4357, %v3809
      %v4394 = vsel %vm2302, %v4358, %v3811
      %v4395 = vsel %vm2302, %v4359, %v3813
      %v4396 = vsel %vm2302, %v4360, %v3815
      %v4397 = vsel %vm2302, %v4361, %v3817
      %v4398 = vsel %vm2302, %v4362, %v3819
      %v4399 = vsel %vm2302, %v4363, %v3821
      %v4400 = vsel %vm2302, %v4364, %v3823
      %v4401 = vsel %vm2302, %v4365, %v3825
      %v4402 = vsel %vm2302, %v4366, %v3827
      %v4403 = vsel %vm2302, %v4367, %v3829
      %v4404 = vsel %vm2302, %v4368, %v3831
      %v4405 = vsel %vm2302, %v4369, %v3833
      %v4406 = vsel %vm2302, %v4370, %v3835
      %v4407 = vsel %vm2302, %v4371, %v3837
      %v4408 = vsel %vm2302, %v4372, %v3839
      %v4409 = vsel %vm2302, %v4373, %v3841
      %v4410 = vsel %vm2302, %v4374, %v3843
      %v4411 = vsel %vm2302, %v4375, %v3845
      %v4412 = vsel %vm2302, %v4376, %v3847
      %v4413 = vrot.slane %v360, 1
      %v4414 = vsel %vm412, %v3321, %v4413
      %4415 = vrot.lane.b32.xlu0 %v1492, 3
      %v4416 = vpop.permute.xlu0 %4415
      %4417 = vrot.lane.b32.xlu0 %v2406, 3
      %v4418 = vpop.permute.xlu0 %4417
      %4419 = vrot.lane.b32.xlu0 %v3242, 3
      %v4420 = vpop.permute.xlu0 %4419
      %4421 = vrot.lane.b32.xlu0 %v3241, 3
      %v4422 = vpop.permute.xlu0 %4421
      %4423 = vrot.lane.b32.xlu0 %v3322, 3
      %v4424 = vpop.permute.xlu0 %4423
      %4425 = vrot.lane.b32.xlu0 %v4414, 3
      %v4426 = vpop.permute.xlu0 %4425
      %4427 = vrot.lane.b32.xlu0 %v4413, 3
      %v4428 = vpop.permute.xlu0 %4427
      %4436 = vrot.lane.b32.xlu0 %v564, 6
      %v4437 = vpop.permute.xlu0 %4436
      %4438 = vrot.lane.b32.xlu0 %v569, 6
      %v4439 = vpop.permute.xlu0 %4438
      %4440 = vrot.lane.b32.xlu0 %v574, 6
      %v4441 = vpop.permute.xlu0 %4440
      %4442 = vrot.lane.b32.xlu0 %v579, 6
      %v4443 = vpop.permute.xlu0 %4442
      %4444 = vrot.lane.b32.xlu0 %v584, 6
      %v4445 = vpop.permute.xlu0 %4444
      %4446 = vrot.lane.b32.xlu0 %v589, 6
      %v4447 = vpop.permute.xlu0 %4446
      %4448 = vrot.lane.b32.xlu0 %v594, 6
      %v4449 = vpop.permute.xlu0 %4448
      %4450 = vrot.lane.b32.xlu0 %v599, 6
      %v4451 = vpop.permute.xlu0 %4450
      %4452 = vrot.lane.b32.xlu0 %v604, 6
      %v4453 = vpop.permute.xlu0 %4452
      %4454 = vrot.lane.b32.xlu0 %v1569, 6
      %v4455 = vpop.permute.xlu0 %4454
      %4456 = vrot.lane.b32.xlu0 %v1571, 6
      %v4457 = vpop.permute.xlu0 %4456
      %4458 = vrot.lane.b32.xlu0 %v1570, 6
      %v4459 = vpop.permute.xlu0 %4458
      %4460 = vrot.lane.b32.xlu0 %v2518, 6
      %v4461 = vpop.permute.xlu0 %4460
      %4462 = vrot.lane.b32.xlu0 %v2520, 6
      %v4463 = vpop.permute.xlu0 %4462
      %4464 = vrot.lane.b32.xlu0 %v2519, 6
      %v4465 = vpop.permute.xlu0 %4464
      %4466 = vrot.lane.b32.xlu0 %v3434, 6
      %v4467 = vpop.permute.xlu0 %4466
      %4468 = vrot.lane.b32.xlu0 %v3436, 6
      %v4469 = vpop.permute.xlu0 %4468
      %4470 = vrot.lane.b32.xlu0 %v3435, 6
      %v4471 = vpop.permute.xlu0 %4470
      %4490 = vrot.lane.b32.xlu0 %v695, 9
      %v4491 = vpop.permute.xlu0 %4490
      %4492 = vrot.lane.b32.xlu0 %v697, 9
      %v4493 = vpop.permute.xlu0 %4492
      %4494 = vrot.lane.b32.xlu0 %v700, 9
      %v4495 = vpop.permute.xlu0 %4494
      %4496 = vrot.lane.b32.xlu0 %v702, 9
      %v4497 = vpop.permute.xlu0 %4496
      %4498 = vrot.lane.b32.xlu0 %v705, 9
      %v4499 = vpop.permute.xlu0 %4498
      %4500 = vrot.lane.b32.xlu0 %v707, 9
      %v4501 = vpop.permute.xlu0 %4500
      %4502 = vrot.lane.b32.xlu0 %v710, 9
      %v4503 = vpop.permute.xlu0 %4502
      %4504 = vrot.lane.b32.xlu0 %v712, 9
      %v4505 = vpop.permute.xlu0 %4504
      %4506 = vrot.lane.b32.xlu0 %v715, 9
      %v4507 = vpop.permute.xlu0 %4506
      %4508 = vrot.lane.b32.xlu0 %v717, 9
      %v4509 = vpop.permute.xlu0 %4508
      %4510 = vrot.lane.b32.xlu0 %v720, 9
      %v4511 = vpop.permute.xlu0 %4510
      %4512 = vrot.lane.b32.xlu0 %v722, 9
      %v4513 = vpop.permute.xlu0 %4512
      %4514 = vrot.lane.b32.xlu0 %v725, 9
      %v4515 = vpop.permute.xlu0 %4514
      %4516 = vrot.lane.b32.xlu0 %v727, 9
      %v4517 = vpop.permute.xlu0 %4516
      %4518 = vrot.lane.b32.xlu0 %v730, 9
      %v4519 = vpop.permute.xlu0 %4518
      %4520 = vrot.lane.b32.xlu0 %v732, 9
      %v4521 = vpop.permute.xlu0 %4520
      %4522 = vrot.lane.b32.xlu0 %v735, 9
      %v4523 = vpop.permute.xlu0 %4522
      %4524 = vrot.lane.b32.xlu0 %v737, 9
      %v4525 = vpop.permute.xlu0 %4524
      %4526 = vrot.lane.b32.xlu0 %v1645, 9
      %v4527 = vpop.permute.xlu0 %4526
      %4528 = vrot.lane.b32.xlu0 %v1648, 9
      %v4529 = vpop.permute.xlu0 %4528
      %4530 = vrot.lane.b32.xlu0 %v1647, 9
      %v4531 = vpop.permute.xlu0 %4530
      %4532 = vrot.lane.b32.xlu0 %v2630, 9
      %v4533 = vpop.permute.xlu0 %4532
      %4534 = vrot.lane.b32.xlu0 %v2633, 9
      %v4535 = vpop.permute.xlu0 %4534
      %4536 = vrot.lane.b32.xlu0 %v2632, 9
      %v4537 = vpop.permute.xlu0 %4536
      %4538 = vrot.lane.b32.xlu0 %v3546, 9
      %v4539 = vpop.permute.xlu0 %4538
      %4540 = vrot.lane.b32.xlu0 %v3549, 9
      %v4541 = vpop.permute.xlu0 %4540
      %4542 = vrot.lane.b32.xlu0 %v3548, 9
      %v4543 = vpop.permute.xlu0 %4542
      %v4573 = vrot.slane %v361, 3
      %v4574 = vrot.slane %v362, 3
      %v4575 = vsel %vm678, %v4573, %v4574
      %4576 = vrot.lane.b32.xlu0 %v700, 12
      %v4577 = vpop.permute.xlu0 %4576
      %4578 = vrot.lane.b32.xlu0 %v705, 12
      %v4579 = vpop.permute.xlu0 %4578
      %4580 = vrot.lane.b32.xlu0 %v710, 12
      %v4581 = vpop.permute.xlu0 %4580
      %4582 = vrot.lane.b32.xlu0 %v715, 12
      %v4583 = vpop.permute.xlu0 %4582
      %4584 = vrot.lane.b32.xlu0 %v720, 12
      %v4585 = vpop.permute.xlu0 %4584
      %4586 = vrot.lane.b32.xlu0 %v725, 12
      %v4587 = vpop.permute.xlu0 %4586
      %4588 = vrot.lane.b32.xlu0 %v730, 12
      %v4589 = vpop.permute.xlu0 %4588
      %4590 = vrot.lane.b32.xlu0 %v735, 12
      %v4591 = vpop.permute.xlu0 %4590
      %4592 = vrot.lane.b32.xlu0 %v1645, 12
      %v4593 = vpop.permute.xlu0 %4592
      %4594 = vrot.lane.b32.xlu0 %v2630, 12
      %v4595 = vpop.permute.xlu0 %4594
      %4596 = vrot.lane.b32.xlu0 %v3545, 12
      %v4597 = vpop.permute.xlu0 %4596
      %4598 = vrot.lane.b32.xlu0 %v3547, 12
      %v4599 = vpop.permute.xlu0 %4598
      %4600 = vrot.lane.b32.xlu0 %v3546, 12
      %v4601 = vpop.permute.xlu0 %4600
      %4602 = vrot.lane.b32.xlu0 %v4573, 12
      %v4603 = vpop.permute.xlu0 %4602
      %4604 = vrot.lane.b32.xlu0 %v4575, 12
      %v4605 = vpop.permute.xlu0 %4604
      %4606 = vrot.lane.b32.xlu0 %v4574, 12
      %v4607 = vpop.permute.xlu0 %4606
      %v4625 = vrot.slane %v361, 4
      %v4626 = vrot.slane %v362, 4
      %v4627 = vsel %vm811, %v4625, %v4626
      %v4628 = vrot.slane %v363, 4
      %v4629 = vsel %vm811, %v4626, %v4628
      %4630 = vrot.lane.b32.xlu0 %v3658, 15
      %v4631 = vpop.permute.xlu0 %4630
      %4632 = vrot.lane.b32.xlu0 %v3660, 15
      %v4633 = vpop.permute.xlu0 %4632
      %4634 = vrot.lane.b32.xlu0 %v3662, 15
      %v4635 = vpop.permute.xlu0 %4634
      %4636 = vrot.lane.b32.xlu0 %v4625, 15
      %v4637 = vpop.permute.xlu0 %4636
      %4638 = vrot.lane.b32.xlu0 %v4627, 15
      %v4639 = vpop.permute.xlu0 %4638
      %4640 = vrot.lane.b32.xlu0 %v4629, 15
      %v4641 = vpop.permute.xlu0 %4640
      %v4648 = vrot.slane %v361, 5
      %v4649 = vrot.slane %v362, 5
      %v4650 = vsel %vm944, %v4648, %v4649
      %v4651 = vrot.slane %v363, 5
      %v4652 = vsel %vm944, %v4649, %v4651
      %4653 = vrot.lane.b32.xlu0 %v3771, 18
      %v4654 = vpop.permute.xlu0 %4653
      %4655 = vrot.lane.b32.xlu0 %v3773, 18
      %v4656 = vpop.permute.xlu0 %4655
      %4657 = vrot.lane.b32.xlu0 %v3775, 18
      %v4658 = vpop.permute.xlu0 %4657
      %4659 = vrot.lane.b32.xlu0 %v4648, 18
      %v4660 = vpop.permute.xlu0 %4659
      %4661 = vrot.lane.b32.xlu0 %v4650, 18
      %v4662 = vpop.permute.xlu0 %4661
      %4663 = vrot.lane.b32.xlu0 %v4652, 18
      %v4664 = vpop.permute.xlu0 %4663
      %v4671 = vrot.slane %v358, 6
      %v4672 = vrot.slane %v359, 6
      %v4673 = vsel %vm1077, %v4671, %v4672
      %v4674 = vrot.slane %v360, 6
      %v4675 = vsel %vm1077, %v4672, %v4674
      %v4676 = vrot.slane %v361, 6
      %v4677 = vrot.slane %v362, 6
      %v4678 = vsel %vm1077, %v4676, %v4677
      %v4679 = vrot.slane %v363, 6
      %v4680 = vsel %vm1077, %v4677, %v4679
      %4681 = vrot.lane.b32.xlu0 %v4671, 21
      %v4682 = vpop.permute.xlu0 %4681
      %4683 = vrot.lane.b32.xlu0 %v4673, 21
      %v4684 = vpop.permute.xlu0 %4683
      %4685 = vrot.lane.b32.xlu0 %v4675, 21
      %v4686 = vpop.permute.xlu0 %4685
      %4687 = vrot.lane.b32.xlu0 %v4676, 21
      %v4688 = vpop.permute.xlu0 %4687
      %4689 = vrot.lane.b32.xlu0 %v4678, 21
      %v4690 = vpop.permute.xlu0 %4689
      %4691 = vrot.lane.b32.xlu0 %v4680, 21
      %v4692 = vpop.permute.xlu0 %4691
      %v4699 = vrot.slane %v358, 7
      %v4700 = vrot.slane %v359, 7
      %v4701 = vsel %vm1210, %v4699, %v4700
      %v4702 = vrot.slane %v360, 7
      %v4703 = vsel %vm1210, %v4700, %v4702
      %v4704 = vrot.slane %v361, 7
      %v4705 = vrot.slane %v362, 7
      %v4706 = vsel %vm1210, %v4704, %v4705
      %v4707 = vrot.slane %v363, 7
      %v4708 = vsel %vm1210, %v4705, %v4707
      %4709 = vrot.lane.b32.xlu0 %v4699, 24
      %v4710 = vpop.permute.xlu0 %4709
      %4711 = vrot.lane.b32.xlu0 %v4701, 24
      %v4712 = vpop.permute.xlu0 %4711
      %4713 = vrot.lane.b32.xlu0 %v4703, 24
      %v4714 = vpop.permute.xlu0 %4713
      %4715 = vrot.lane.b32.xlu0 %v4704, 24
      %v4716 = vpop.permute.xlu0 %4715
      %4717 = vrot.lane.b32.xlu0 %v4706, 24
      %v4718 = vpop.permute.xlu0 %4717
      %4719 = vrot.lane.b32.xlu0 %v4708, 24
      %v4720 = vpop.permute.xlu0 %4719
      %4727 = vrot.lane.b32.xlu0 %v358, 27
      %v4728 = vpop.permute.xlu0 %4727
      %4729 = vrot.lane.b32.xlu0 %v359, 27
      %v4730 = vpop.permute.xlu0 %4729
      %4731 = vrot.lane.b32.xlu0 %v360, 27
      %v4732 = vpop.permute.xlu0 %4731
      %4733 = vrot.lane.b32.xlu0 %v361, 27
      %v4734 = vpop.permute.xlu0 %4733
      %4735 = vrot.lane.b32.xlu0 %v362, 27
      %v4736 = vpop.permute.xlu0 %4735
      %4737 = vrot.lane.b32.xlu0 %v363, 27
      %v4738 = vpop.permute.xlu0 %4737
      %v4745 = vrot.slane %v361, 1
      %v4746 = vrot.slane %v362, 1
      %v4747 = vsel %vm412, %v4745, %v4746
      %v4748 = vrot.slane %v363, 1
      %v4749 = vsel %vm412, %v4746, %v4748
      %4750 = vrot.lane.b32.xlu0 %v2406, 30
      %v4751 = vpop.permute.xlu0 %4750
      %4752 = vrot.lane.b32.xlu0 %v3322, 30
      %v4753 = vpop.permute.xlu0 %4752
      %4754 = vrot.lane.b32.xlu0 %v4414, 30
      %v4755 = vpop.permute.xlu0 %4754
      %4756 = vrot.lane.b32.xlu0 %v4413, 30
      %v4757 = vpop.permute.xlu0 %4756
      %4758 = vrot.lane.b32.xlu0 %v4747, 30
      %v4759 = vpop.permute.xlu0 %4758
      %4760 = vrot.lane.b32.xlu0 %v4749, 30
      %v4761 = vpop.permute.xlu0 %4760
      %4762 = vrot.lane.b32.xlu0 %v4748, 30
      %v4763 = vpop.permute.xlu0 %4762
      %v4771 = vrot.slane %v361, 2
      %v4772 = vrot.slane %v362, 2
      %v4773 = vsel %vm545, %v4771, %v4772
      %v4774 = vrot.slane %v363, 2
      %v4775 = vsel %vm545, %v4772, %v4774
      %4776 = vrot.lane.b32.xlu0 %v569, 33
      %v4777 = vpop.permute.xlu0 %4776
      %4778 = vrot.lane.b32.xlu0 %v574, 33
      %v4779 = vpop.permute.xlu0 %4778
      %4780 = vrot.lane.b32.xlu0 %v579, 33
      %v4781 = vpop.permute.xlu0 %4780
      %4782 = vrot.lane.b32.xlu0 %v584, 33
      %v4783 = vpop.permute.xlu0 %4782
      %4784 = vrot.lane.b32.xlu0 %v589, 33
      %v4785 = vpop.permute.xlu0 %4784
      %4786 = vrot.lane.b32.xlu0 %v594, 33
      %v4787 = vpop.permute.xlu0 %4786
      %4788 = vrot.lane.b32.xlu0 %v599, 33
      %v4789 = vpop.permute.xlu0 %4788
      %4790 = vrot.lane.b32.xlu0 %v604, 33
      %v4791 = vpop.permute.xlu0 %4790
      %4792 = vrot.lane.b32.xlu0 %v1570, 33
      %v4793 = vpop.permute.xlu0 %4792
      %4794 = vrot.lane.b32.xlu0 %v2518, 33
      %v4795 = vpop.permute.xlu0 %4794
      %4796 = vrot.lane.b32.xlu0 %v2520, 33
      %v4797 = vpop.permute.xlu0 %4796
      %4798 = vrot.lane.b32.xlu0 %v2519, 33
      %v4799 = vpop.permute.xlu0 %4798
      %4800 = vrot.lane.b32.xlu0 %v3434, 33
      %v4801 = vpop.permute.xlu0 %4800
      %4802 = vrot.lane.b32.xlu0 %v3436, 33
      %v4803 = vpop.permute.xlu0 %4802
      %4804 = vrot.lane.b32.xlu0 %v3435, 33
      %v4805 = vpop.permute.xlu0 %4804
      %4806 = vrot.lane.b32.xlu0 %v4773, 33
      %v4807 = vpop.permute.xlu0 %4806
      %4808 = vrot.lane.b32.xlu0 %v4775, 33
      %v4809 = vpop.permute.xlu0 %4808
      %4810 = vrot.lane.b32.xlu0 %v4774, 33
      %v4811 = vpop.permute.xlu0 %4810
      %v4830 = vrot.slane %v363, 3
      %v4831 = vsel %vm678, %v4574, %v4830
      %4832 = vrot.lane.b32.xlu0 %v700, 36
      %v4833 = vpop.permute.xlu0 %4832
      %4834 = vrot.lane.b32.xlu0 %v702, 36
      %v4835 = vpop.permute.xlu0 %4834
      %4836 = vrot.lane.b32.xlu0 %v705, 36
      %v4837 = vpop.permute.xlu0 %4836
      %4838 = vrot.lane.b32.xlu0 %v707, 36
      %v4839 = vpop.permute.xlu0 %4838
      %4840 = vrot.lane.b32.xlu0 %v710, 36
      %v4841 = vpop.permute.xlu0 %4840
      %4842 = vrot.lane.b32.xlu0 %v712, 36
      %v4843 = vpop.permute.xlu0 %4842
      %4844 = vrot.lane.b32.xlu0 %v715, 36
      %v4845 = vpop.permute.xlu0 %4844
      %4846 = vrot.lane.b32.xlu0 %v717, 36
      %v4847 = vpop.permute.xlu0 %4846
      %4848 = vrot.lane.b32.xlu0 %v720, 36
      %v4849 = vpop.permute.xlu0 %4848
      %4850 = vrot.lane.b32.xlu0 %v722, 36
      %v4851 = vpop.permute.xlu0 %4850
      %4852 = vrot.lane.b32.xlu0 %v725, 36
      %v4853 = vpop.permute.xlu0 %4852
      %4854 = vrot.lane.b32.xlu0 %v727, 36
      %v4855 = vpop.permute.xlu0 %4854
      %4856 = vrot.lane.b32.xlu0 %v730, 36
      %v4857 = vpop.permute.xlu0 %4856
      %4858 = vrot.lane.b32.xlu0 %v732, 36
      %v4859 = vpop.permute.xlu0 %4858
      %4860 = vrot.lane.b32.xlu0 %v735, 36
      %v4861 = vpop.permute.xlu0 %4860
      %4862 = vrot.lane.b32.xlu0 %v737, 36
      %v4863 = vpop.permute.xlu0 %4862
      %4864 = vrot.lane.b32.xlu0 %v1645, 36
      %v4865 = vpop.permute.xlu0 %4864
      %4866 = vrot.lane.b32.xlu0 %v1647, 36
      %v4867 = vpop.permute.xlu0 %4866
      %4868 = vrot.lane.b32.xlu0 %v2630, 36
      %v4869 = vpop.permute.xlu0 %4868
      %4870 = vrot.lane.b32.xlu0 %v2633, 36
      %v4871 = vpop.permute.xlu0 %4870
      %4872 = vrot.lane.b32.xlu0 %v2632, 36
      %v4873 = vpop.permute.xlu0 %4872
      %4874 = vrot.lane.b32.xlu0 %v3546, 36
      %v4875 = vpop.permute.xlu0 %4874
      %4876 = vrot.lane.b32.xlu0 %v3549, 36
      %v4877 = vpop.permute.xlu0 %4876
      %4878 = vrot.lane.b32.xlu0 %v3548, 36
      %v4879 = vpop.permute.xlu0 %4878
      %4880 = vrot.lane.b32.xlu0 %v4574, 36
      %v4881 = vpop.permute.xlu0 %4880
      %4882 = vrot.lane.b32.xlu0 %v4831, 36
      %v4883 = vpop.permute.xlu0 %4882
      %4884 = vrot.lane.b32.xlu0 %v4830, 36
      %v4885 = vpop.permute.xlu0 %4884
      %v4915 = vrot.slane %v364, 3
      %v4916 = vrot.slane %v365, 3
      %v4917 = vsel %vm678, %v4915, %v4916
      %4918 = vrot.lane.b32.xlu0 %v705, 39
      %v4919 = vpop.permute.xlu0 %4918
      %4920 = vrot.lane.b32.xlu0 %v710, 39
      %v4921 = vpop.permute.xlu0 %4920
      %4922 = vrot.lane.b32.xlu0 %v715, 39
      %v4923 = vpop.permute.xlu0 %4922
      %4924 = vrot.lane.b32.xlu0 %v720, 39
      %v4925 = vpop.permute.xlu0 %4924
      %4926 = vrot.lane.b32.xlu0 %v725, 39
      %v4927 = vpop.permute.xlu0 %4926
      %4928 = vrot.lane.b32.xlu0 %v730, 39
      %v4929 = vpop.permute.xlu0 %4928
      %4930 = vrot.lane.b32.xlu0 %v735, 39
      %v4931 = vpop.permute.xlu0 %4930
      %4932 = vrot.lane.b32.xlu0 %v1645, 39
      %v4933 = vpop.permute.xlu0 %4932
      %4934 = vrot.lane.b32.xlu0 %v2630, 39
      %v4935 = vpop.permute.xlu0 %4934
      %4936 = vrot.lane.b32.xlu0 %v3546, 39
      %v4937 = vpop.permute.xlu0 %4936
      %4938 = vrot.lane.b32.xlu0 %v4573, 39
      %v4939 = vpop.permute.xlu0 %4938
      %4940 = vrot.lane.b32.xlu0 %v4575, 39
      %v4941 = vpop.permute.xlu0 %4940
      %4942 = vrot.lane.b32.xlu0 %v4574, 39
      %v4943 = vpop.permute.xlu0 %4942
      %4944 = vrot.lane.b32.xlu0 %v4915, 39
      %v4945 = vpop.permute.xlu0 %4944
      %4946 = vrot.lane.b32.xlu0 %v4917, 39
      %v4947 = vpop.permute.xlu0 %4946
      %4948 = vrot.lane.b32.xlu0 %v4916, 39
      %v4949 = vpop.permute.xlu0 %4948
      %v4967 = vrot.slane %v364, 4
      %v4968 = vrot.slane %v365, 4
      %v4969 = vsel %vm811, %v4967, %v4968
      %v4970 = vrot.slane %v366, 4
      %v4971 = vsel %vm811, %v4968, %v4970
      %4972 = vrot.lane.b32.xlu0 %v4625, 42
      %v4973 = vpop.permute.xlu0 %4972
      %4974 = vrot.lane.b32.xlu0 %v4627, 42
      %v4975 = vpop.permute.xlu0 %4974
      %4976 = vrot.lane.b32.xlu0 %v4629, 42
      %v4977 = vpop.permute.xlu0 %4976
      %4978 = vrot.lane.b32.xlu0 %v4967, 42
      %v4979 = vpop.permute.xlu0 %4978
      %4980 = vrot.lane.b32.xlu0 %v4969, 42
      %v4981 = vpop.permute.xlu0 %4980
      %4982 = vrot.lane.b32.xlu0 %v4971, 42
      %v4983 = vpop.permute.xlu0 %4982
      %v4990 = vrot.slane %v364, 5
      %v4991 = vrot.slane %v365, 5
      %v4992 = vsel %vm944, %v4990, %v4991
      %v4993 = vrot.slane %v366, 5
      %v4994 = vsel %vm944, %v4991, %v4993
      %4995 = vrot.lane.b32.xlu0 %v4648, 45
      %v4996 = vpop.permute.xlu0 %4995
      %4997 = vrot.lane.b32.xlu0 %v4650, 45
      %v4998 = vpop.permute.xlu0 %4997
      %4999 = vrot.lane.b32.xlu0 %v4652, 45
      %v5000 = vpop.permute.xlu0 %4999
      %5001 = vrot.lane.b32.xlu0 %v4990, 45
      %v5002 = vpop.permute.xlu0 %5001
      %5003 = vrot.lane.b32.xlu0 %v4992, 45
      %v5004 = vpop.permute.xlu0 %5003
      %5005 = vrot.lane.b32.xlu0 %v4994, 45
      %v5006 = vpop.permute.xlu0 %5005
      %v5013 = vsel %vm1952, %v352, %v4416
      %v5014 = vsel %vm1952, %v355, %v4418
      %v5015 = vsel %vm1952, %v356, %v4420
      %v5016 = vsel %vm1952, %v357, %v4422
      %v5017 = vsel %vm1952, %v358, %v4424
      %v5018 = vsel %vm1952, %v359, %v4426
      %v5019 = vsel %vm1952, %v360, %v4428
      %v5020 = vsel %vm1977, %v3889, %v4437
      %v5021 = vsel %vm1977, %v3891, %v4439
      %v5022 = vsel %vm1977, %v3893, %v4441
      %v5023 = vsel %vm1977, %v3895, %v4443
      %v5024 = vsel %vm1977, %v3897, %v4445
      %v5025 = vsel %vm1977, %v3899, %v4447
      %v5026 = vsel %vm1977, %v3901, %v4449
      %v5027 = vsel %vm1977, %v3903, %v4451
      %v5028 = vsel %vm1977, %v3905, %v4453
      %v5029 = vsel %vm1977, %v5013, %v4455
      %v5030 = vsel %vm1977, %v3907, %v4457
      %v5031 = vsel %vm1977, %v3908, %v4459
      %v5032 = vsel %vm1977, %v5014, %v4461
      %v5033 = vsel %vm1977, %v5015, %v4463
      %v5034 = vsel %vm1977, %v5016, %v4465
      %v5035 = vsel %vm1977, %v5017, %v4467
      %v5036 = vsel %vm1977, %v5018, %v4469
      %v5037 = vsel %vm1977, %v5019, %v4471
      %v5038 = vsel %vm2002, %v1984, %v4491
      %v5039 = vsel %vm2002, %v5020, %v4493
      %v5040 = vsel %vm2002, %v1986, %v4495
      %v5041 = vsel %vm2002, %v5021, %v4497
      %v5042 = vsel %vm2002, %v1988, %v4499
      %v5043 = vsel %vm2002, %v5022, %v4501
      %v5044 = vsel %vm2002, %v1990, %v4503
      %v5045 = vsel %vm2002, %v5023, %v4505
      %v5046 = vsel %vm2002, %v1992, %v4507
      %v5047 = vsel %vm2002, %v5024, %v4509
      %v5048 = vsel %vm2002, %v1994, %v4511
      %v5049 = vsel %vm2002, %v5025, %v4513
      %v5050 = vsel %vm2002, %v1996, %v4515
      %v5051 = vsel %vm2002, %v5026, %v4517
      %v5052 = vsel %vm2002, %v1998, %v4519
      %v5053 = vsel %vm2002, %v5027, %v4521
      %v5054 = vsel %vm2002, %v2000, %v4523
      %v5055 = vsel %vm2002, %v5028, %v4525
      %v5056 = vsel %vm2002, %v5029, %v4527
      %v5057 = vsel %vm2002, %v5030, %v4529
      %v5058 = vsel %vm2002, %v5031, %v4531
      %v5059 = vsel %vm2002, %v5032, %v4533
      %v5060 = vsel %vm2002, %v5033, %v4535
      %v5061 = vsel %vm2002, %v5034, %v4537
      %v5062 = vsel %vm2002, %v5035, %v4539
      %v5063 = vsel %vm2002, %v5036, %v4541
      %v5064 = vsel %vm2002, %v5037, %v4543
      %v5065 = vsel %vm2027, %v5038, %v2647
      %v5066 = vsel %vm2027, %v2010, %v2649
      %v5067 = vsel %vm2027, %v5039, %v4577
      %v5068 = vsel %vm2027, %v5040, %v2653
      %v5069 = vsel %vm2027, %v2012, %v2655
      %v5070 = vsel %vm2027, %v5041, %v4579
      %v5071 = vsel %vm2027, %v5042, %v2659
      %v5072 = vsel %vm2027, %v2014, %v2661
      %v5073 = vsel %vm2027, %v5043, %v4581
      %v5074 = vsel %vm2027, %v5044, %v2665
      %v5075 = vsel %vm2027, %v2016, %v2667
      %v5076 = vsel %vm2027, %v5045, %v4583
      %v5077 = vsel %vm2027, %v5046, %v2671
      %v5078 = vsel %vm2027, %v2018, %v2673
      %v5079 = vsel %vm2027, %v5047, %v4585
      %v5080 = vsel %vm2027, %v5048, %v2677
      %v5081 = vsel %vm2027, %v2020, %v2679
      %v5082 = vsel %vm2027, %v5049, %v4587
      %v5083 = vsel %vm2027, %v5050, %v2683
      %v5084 = vsel %vm2027, %v2022, %v2685
      %v5085 = vsel %vm2027, %v5051, %v4589
      %v5086 = vsel %vm2027, %v5052, %v2689
      %v5087 = vsel %vm2027, %v2024, %v2691
      %v5088 = vsel %vm2027, %v5053, %v4591
      %v5089 = vsel %vm2027, %v5054, %v2695
      %v5090 = vsel %vm2027, %v2026, %v2697
      %v5091 = vsel %vm2027, %v5055, %v4593
      %v5092 = vsel %vm2027, %v5056, %v2701
      %v5093 = vsel %vm2027, %v5057, %v2703
      %v5094 = vsel %vm2027, %v5058, %v4595
      %v5095 = vsel %vm2027, %v5059, %v4597
      %v5096 = vsel %vm2027, %v5060, %v4599
      %v5097 = vsel %vm2027, %v5061, %v4601
      %v5098 = vsel %vm2027, %v5062, %v4603
      %v5099 = vsel %vm2027, %v5063, %v4605
      %v5100 = vsel %vm2027, %v5064, %v4607
      %v5101 = vsel %vm2052, %v5065, %v2760
      %v5102 = vsel %vm2052, %v5066, %v2762
      %v5103 = vsel %vm2052, %v5067, %v2764
      %v5104 = vsel %vm2052, %v5068, %v2766
      %v5105 = vsel %vm2052, %v5069, %v2768
      %v5106 = vsel %vm2052, %v5070, %v2770
      %v5107 = vsel %vm2052, %v5071, %v2772
      %v5108 = vsel %vm2052, %v5072, %v2774
      %v5109 = vsel %vm2052, %v5073, %v2776
      %v5110 = vsel %vm2052, %v5074, %v2778
      %v5111 = vsel %vm2052, %v5075, %v2780
      %v5112 = vsel %vm2052, %v5076, %v2782
      %v5113 = vsel %vm2052, %v5077, %v2784
      %v5114 = vsel %vm2052, %v5078, %v2786
      %v5115 = vsel %vm2052, %v5079, %v2788
      %v5116 = vsel %vm2052, %v5080, %v2790
      %v5117 = vsel %vm2052, %v5081, %v2792
      %v5118 = vsel %vm2052, %v5082, %v2794
      %v5119 = vsel %vm2052, %v5083, %v2796
      %v5120 = vsel %vm2052, %v5084, %v2798
      %v5121 = vsel %vm2052, %v5085, %v2800
      %v5122 = vsel %vm2052, %v5086, %v2802
      %v5123 = vsel %vm2052, %v5087, %v2804
      %v5124 = vsel %vm2052, %v5088, %v2806
      %v5125 = vsel %vm2052, %v5089, %v2808
      %v5126 = vsel %vm2052, %v5090, %v2810
      %v5127 = vsel %vm2052, %v5091, %v2812
      %v5128 = vsel %vm2052, %v5092, %v2814
      %v5129 = vsel %vm2052, %v5093, %v2816
      %v5130 = vsel %vm2052, %v5094, %v2818
      %v5131 = vsel %vm2052, %v5095, %v4631
      %v5132 = vsel %vm2052, %v5096, %v4633
      %v5133 = vsel %vm2052, %v5097, %v4635
      %v5134 = vsel %vm2052, %v5098, %v4637
      %v5135 = vsel %vm2052, %v5099, %v4639
      %v5136 = vsel %vm2052, %v5100, %v4641
      %v5137 = vsel %vm2077, %v5101, %v2873
      %v5138 = vsel %vm2077, %v5102, %v2875
      %v5139 = vsel %vm2077, %v5103, %v2877
      %v5140 = vsel %vm2077, %v5104, %v2879
      %v5141 = vsel %vm2077, %v5105, %v2881
      %v5142 = vsel %vm2077, %v5106, %v2883
      %v5143 = vsel %vm2077, %v5107, %v2885
      %v5144 = vsel %vm2077, %v5108, %v2887
      %v5145 = vsel %vm2077, %v5109, %v2889
      %v5146 = vsel %vm2077, %v5110, %v2891
      %v5147 = vsel %vm2077, %v5111, %v2893
      %v5148 = vsel %vm2077, %v5112, %v2895
      %v5149 = vsel %vm2077, %v5113, %v2897
      %v5150 = vsel %vm2077, %v5114, %v2899
      %v5151 = vsel %vm2077, %v5115, %v2901
      %v5152 = vsel %vm2077, %v5116, %v2903
      %v5153 = vsel %vm2077, %v5117, %v2905
      %v5154 = vsel %vm2077, %v5118, %v2907
      %v5155 = vsel %vm2077, %v5119, %v2909
      %v5156 = vsel %vm2077, %v5120, %v2911
      %v5157 = vsel %vm2077, %v5121, %v2913
      %v5158 = vsel %vm2077, %v5122, %v2915
      %v5159 = vsel %vm2077, %v5123, %v2917
      %v5160 = vsel %vm2077, %v5124, %v2919
      %v5161 = vsel %vm2077, %v5125, %v2921
      %v5162 = vsel %vm2077, %v5126, %v2923
      %v5163 = vsel %vm2077, %v5127, %v2925
      %v5164 = vsel %vm2077, %v5128, %v2927
      %v5165 = vsel %vm2077, %v5129, %v2929
      %v5166 = vsel %vm2077, %v5130, %v2931
      %v5167 = vsel %vm2077, %v5131, %v4654
      %v5168 = vsel %vm2077, %v5132, %v4656
      %v5169 = vsel %vm2077, %v5133, %v4658
      %v5170 = vsel %vm2077, %v5134, %v4660
      %v5171 = vsel %vm2077, %v5135, %v4662
      %v5172 = vsel %vm2077, %v5136, %v4664
      %v5173 = vsel %vm2102, %v5137, %v2986
      %v5174 = vsel %vm2102, %v5138, %v2988
      %v5175 = vsel %vm2102, %v5139, %v2990
      %v5176 = vsel %vm2102, %v5140, %v2992
      %v5177 = vsel %vm2102, %v5141, %v2994
      %v5178 = vsel %vm2102, %v5142, %v2996
      %v5179 = vsel %vm2102, %v5143, %v2998
      %v5180 = vsel %vm2102, %v5144, %v3000
      %v5181 = vsel %vm2102, %v5145, %v3002
      %v5182 = vsel %vm2102, %v5146, %v3004
      %v5183 = vsel %vm2102, %v5147, %v3006
      %v5184 = vsel %vm2102, %v5148, %v3008
      %v5185 = vsel %vm2102, %v5149, %v3010
      %v5186 = vsel %vm2102, %v5150, %v3012
      %v5187 = vsel %vm2102, %v5151, %v3014
      %v5188 = vsel %vm2102, %v5152, %v3016
      %v5189 = vsel %vm2102, %v5153, %v3018
      %v5190 = vsel %vm2102, %v5154, %v3020
      %v5191 = vsel %vm2102, %v5155, %v3022
      %v5192 = vsel %vm2102, %v5156, %v3024
      %v5193 = vsel %vm2102, %v5157, %v3026
      %v5194 = vsel %vm2102, %v5158, %v3028
      %v5195 = vsel %vm2102, %v5159, %v3030
      %v5196 = vsel %vm2102, %v5160, %v3032
      %v5197 = vsel %vm2102, %v5161, %v3034
      %v5198 = vsel %vm2102, %v5162, %v3036
      %v5199 = vsel %vm2102, %v5163, %v3038
      %v5200 = vsel %vm2102, %v5164, %v3040
      %v5201 = vsel %vm2102, %v5165, %v3042
      %v5202 = vsel %vm2102, %v5166, %v3044
      %v5203 = vsel %vm2102, %v5167, %v4682
      %v5204 = vsel %vm2102, %v5168, %v4684
      %v5205 = vsel %vm2102, %v5169, %v4686
      %v5206 = vsel %vm2102, %v5170, %v4688
      %v5207 = vsel %vm2102, %v5171, %v4690
      %v5208 = vsel %vm2102, %v5172, %v4692
      %v5209 = vsel %vm2127, %v5173, %v3104
      %v5210 = vsel %vm2127, %v5174, %v3106
      %v5211 = vsel %vm2127, %v5175, %v3108
      %v5212 = vsel %vm2127, %v5176, %v3110
      %v5213 = vsel %vm2127, %v5177, %v3112
      %v5214 = vsel %vm2127, %v5178, %v3114
      %v5215 = vsel %vm2127, %v5179, %v3116
      %v5216 = vsel %vm2127, %v5180, %v3118
      %v5217 = vsel %vm2127, %v5181, %v3120
      %v5218 = vsel %vm2127, %v5182, %v3122
      %v5219 = vsel %vm2127, %v5183, %v3124
      %v5220 = vsel %vm2127, %v5184, %v3126
      %v5221 = vsel %vm2127, %v5185, %v3128
      %v5222 = vsel %vm2127, %v5186, %v3130
      %v5223 = vsel %vm2127, %v5187, %v3132
      %v5224 = vsel %vm2127, %v5188, %v3134
      %v5225 = vsel %vm2127, %v5189, %v3136
      %v5226 = vsel %vm2127, %v5190, %v3138
      %v5227 = vsel %vm2127, %v5191, %v3140
      %v5228 = vsel %vm2127, %v5192, %v3142
      %v5229 = vsel %vm2127, %v5193, %v3144
      %v5230 = vsel %vm2127, %v5194, %v3146
      %v5231 = vsel %vm2127, %v5195, %v3148
      %v5232 = vsel %vm2127, %v5196, %v3150
      %v5233 = vsel %vm2127, %v5197, %v3152
      %v5234 = vsel %vm2127, %v5198, %v3154
      %v5235 = vsel %vm2127, %v5199, %v3156
      %v5236 = vsel %vm2127, %v5200, %v3158
      %v5237 = vsel %vm2127, %v5201, %v3160
      %v5238 = vsel %vm2127, %v5202, %v3162
      %v5239 = vsel %vm2127, %v5203, %v4710
      %v5240 = vsel %vm2127, %v5204, %v4712
      %v5241 = vsel %vm2127, %v5205, %v4714
      %v5242 = vsel %vm2127, %v5206, %v4716
      %v5243 = vsel %vm2127, %v5207, %v4718
      %v5244 = vsel %vm2127, %v5208, %v4720
      %v5245 = vsel %vm2152, %v5209, %v1430
      %v5246 = vsel %vm2152, %v5210, %v1432
      %v5247 = vsel %vm2152, %v5211, %v3204
      %v5248 = vsel %vm2152, %v5212, %v1434
      %v5249 = vsel %vm2152, %v5213, %v1436
      %v5250 = vsel %vm2152, %v5214, %v3206
      %v5251 = vsel %vm2152, %v5215, %v1438
      %v5252 = vsel %vm2152, %v5216, %v1440
      %v5253 = vsel %vm2152, %v5217, %v3208
      %v5254 = vsel %vm2152, %v5218, %v1442
      %v5255 = vsel %vm2152, %v5219, %v1444
      %v5256 = vsel %vm2152, %v5220, %v3210
      %v5257 = vsel %vm2152, %v5221, %v1446
      %v5258 = vsel %vm2152, %v5222, %v1448
      %v5259 = vsel %vm2152, %v5223, %v3212
      %v5260 = vsel %vm2152, %v5224, %v1450
      %v5261 = vsel %vm2152, %v5225, %v1452
      %v5262 = vsel %vm2152, %v5226, %v3214
      %v5263 = vsel %vm2152, %v5227, %v1454
      %v5264 = vsel %vm2152, %v5228, %v1456
      %v5265 = vsel %vm2152, %v5229, %v3216
      %v5266 = vsel %vm2152, %v5230, %v1458
      %v5267 = vsel %vm2152, %v5231, %v1460
      %v5268 = vsel %vm2152, %v5232, %v3218
      %v5269 = vsel %vm2152, %v5233, %v1462
      %v5270 = vsel %vm2152, %v5234, %v1464
      %v5271 = vsel %vm2152, %v5235, %v3220
      %v5272 = vsel %vm2152, %v5236, %v3222
      %v5273 = vsel %vm2152, %v5237, %v3224
      %v5274 = vsel %vm2152, %v5238, %v3226
      %v5275 = vsel %vm2152, %v5239, %v4728
      %v5276 = vsel %vm2152, %v5240, %v4730
      %v5277 = vsel %vm2152, %v5241, %v4732
      %v5278 = vsel %vm2152, %v5242, %v4734
      %v5279 = vsel %vm2152, %v5243, %v4736
      %v5280 = vsel %vm2152, %v5244, %v4738
      %v5281 = vsel %vm2177, %v5245, %v1508
      %v5282 = vsel %vm2177, %v5246, %v1510
      %v5283 = vsel %vm2177, %v5247, %v3254
      %v5284 = vsel %vm2177, %v5248, %v1512
      %v5285 = vsel %vm2177, %v5249, %v1514
      %v5286 = vsel %vm2177, %v5250, %v3258
      %v5287 = vsel %vm2177, %v5251, %v1516
      %v5288 = vsel %vm2177, %v5252, %v1518
      %v5289 = vsel %vm2177, %v5253, %v3262
      %v5290 = vsel %vm2177, %v5254, %v1520
      %v5291 = vsel %vm2177, %v5255, %v1522
      %v5292 = vsel %vm2177, %v5256, %v3266
      %v5293 = vsel %vm2177, %v5257, %v1524
      %v5294 = vsel %vm2177, %v5258, %v1526
      %v5295 = vsel %vm2177, %v5259, %v3270
      %v5296 = vsel %vm2177, %v5260, %v1528
      %v5297 = vsel %vm2177, %v5261, %v1530
      %v5298 = vsel %vm2177, %v5262, %v3274
      %v5299 = vsel %vm2177, %v5263, %v1532
      %v5300 = vsel %vm2177, %v5264, %v1534
      %v5301 = vsel %vm2177, %v5265, %v3278
      %v5302 = vsel %vm2177, %v5266, %v1536
      %v5303 = vsel %vm2177, %v5267, %v1538
      %v5304 = vsel %vm2177, %v5268, %v3282
      %v5305 = vsel %vm2177, %v5269, %v1540
      %v5306 = vsel %vm2177, %v5270, %v1542
      %v5307 = vsel %vm2177, %v5271, %v3286
      %v5308 = vsel %vm2177, %v5272, %v4751
      %v5309 = vsel %vm2177, %v5273, %v3290
      %v5310 = vsel %vm2177, %v5274, %v3292
      %v5311 = vsel %vm2177, %v5275, %v4753
      %v5312 = vsel %vm2177, %v5276, %v4755
      %v5313 = vsel %vm2177, %v5277, %v4757
      %v5314 = vsel %vm2177, %v5278, %v4759
      %v5315 = vsel %vm2177, %v5279, %v4761
      %v5316 = vsel %vm2177, %v5280, %v4763
      %v5317 = vsel %vm2202, %v5281, %v1585
      %v5318 = vsel %vm2202, %v5282, %v1587
      %v5319 = vsel %vm2202, %v5283, %v4777
      %v5320 = vsel %vm2202, %v5284, %v1589
      %v5321 = vsel %vm2202, %v5285, %v1591
      %v5322 = vsel %vm2202, %v5286, %v4779
      %v5323 = vsel %vm2202, %v5287, %v1593
      %v5324 = vsel %vm2202, %v5288, %v1595
      %v5325 = vsel %vm2202, %v5289, %v4781
      %v5326 = vsel %vm2202, %v5290, %v1597
      %v5327 = vsel %vm2202, %v5291, %v1599
      %v5328 = vsel %vm2202, %v5292, %v4783
      %v5329 = vsel %vm2202, %v5293, %v1601
      %v5330 = vsel %vm2202, %v5294, %v1603
      %v5331 = vsel %vm2202, %v5295, %v4785
      %v5332 = vsel %vm2202, %v5296, %v1605
      %v5333 = vsel %vm2202, %v5297, %v1607
      %v5334 = vsel %vm2202, %v5298, %v4787
      %v5335 = vsel %vm2202, %v5299, %v1609
      %v5336 = vsel %vm2202, %v5300, %v1611
      %v5337 = vsel %vm2202, %v5301, %v4789
      %v5338 = vsel %vm2202, %v5302, %v1613
      %v5339 = vsel %vm2202, %v5303, %v1615
      %v5340 = vsel %vm2202, %v5304, %v4791
      %v5341 = vsel %vm2202, %v5305, %v1617
      %v5342 = vsel %vm2202, %v5306, %v1619
      %v5343 = vsel %vm2202, %v5307, %v4793
      %v5344 = vsel %vm2202, %v5308, %v4795
      %v5345 = vsel %vm2202, %v5309, %v4797
      %v5346 = vsel %vm2202, %v5310, %v4799
      %v5347 = vsel %vm2202, %v5311, %v4801
      %v5348 = vsel %vm2202, %v5312, %v4803
      %v5349 = vsel %vm2202, %v5313, %v4805
      %v5350 = vsel %vm2202, %v5314, %v4807
      %v5351 = vsel %vm2202, %v5315, %v4809
      %v5352 = vsel %vm2202, %v5316, %v4811
      %v5353 = vsel %vm2227, %v5317, %v4833
      %v5354 = vsel %vm2227, %v5318, %v1664
      %v5355 = vsel %vm2227, %v5319, %v4835
      %v5356 = vsel %vm2227, %v5320, %v4837
      %v5357 = vsel %vm2227, %v5321, %v1668
      %v5358 = vsel %vm2227, %v5322, %v4839
      %v5359 = vsel %vm2227, %v5323, %v4841
      %v5360 = vsel %vm2227, %v5324, %v1672
      %v5361 = vsel %vm2227, %v5325, %v4843
      %v5362 = vsel %vm2227, %v5326, %v4845
      %v5363 = vsel %vm2227, %v5327, %v1676
      %v5364 = vsel %vm2227, %v5328, %v4847
      %v5365 = vsel %vm2227, %v5329, %v4849
      %v5366 = vsel %vm2227, %v5330, %v1680
      %v5367 = vsel %vm2227, %v5331, %v4851
      %v5368 = vsel %vm2227, %v5332, %v4853
      %v5369 = vsel %vm2227, %v5333, %v1684
      %v5370 = vsel %vm2227, %v5334, %v4855
      %v5371 = vsel %vm2227, %v5335, %v4857
      %v5372 = vsel %vm2227, %v5336, %v1688
      %v5373 = vsel %vm2227, %v5337, %v4859
      %v5374 = vsel %vm2227, %v5338, %v4861
      %v5375 = vsel %vm2227, %v5339, %v1692
      %v5376 = vsel %vm2227, %v5340, %v4863
      %v5377 = vsel %vm2227, %v5341, %v4865
      %v5378 = vsel %vm2227, %v5342, %v1696
      %v5379 = vsel %vm2227, %v5343, %v4867
      %v5380 = vsel %vm2227, %v5344, %v4869
      %v5381 = vsel %vm2227, %v5345, %v4871
      %v5382 = vsel %vm2227, %v5346, %v4873
      %v5383 = vsel %vm2227, %v5347, %v4875
      %v5384 = vsel %vm2227, %v5348, %v4877
      %v5385 = vsel %vm2227, %v5349, %v4879
      %v5386 = vsel %vm2227, %v5350, %v4881
      %v5387 = vsel %vm2227, %v5351, %v4883
      %v5388 = vsel %vm2227, %v5352, %v4885
      %v5389 = vsel %vm2252, %v5353, %v3563
      %v5390 = vsel %vm2252, %v5354, %v3565
      %v5391 = vsel %vm2252, %v5355, %v4919
      %v5392 = vsel %vm2252, %v5356, %v3569
      %v5393 = vsel %vm2252, %v5357, %v3571
      %v5394 = vsel %vm2252, %v5358, %v4921
      %v5395 = vsel %vm2252, %v5359, %v3575
      %v5396 = vsel %vm2252, %v5360, %v3577
      %v5397 = vsel %vm2252, %v5361, %v4923
      %v5398 = vsel %vm2252, %v5362, %v3581
      %v5399 = vsel %vm2252, %v5363, %v3583
      %v5400 = vsel %vm2252, %v5364, %v4925
      %v5401 = vsel %vm2252, %v5365, %v3587
      %v5402 = vsel %vm2252, %v5366, %v3589
      %v5403 = vsel %vm2252, %v5367, %v4927
      %v5404 = vsel %vm2252, %v5368, %v3593
      %v5405 = vsel %vm2252, %v5369, %v3595
      %v5406 = vsel %vm2252, %v5370, %v4929
      %v5407 = vsel %vm2252, %v5371, %v3599
      %v5408 = vsel %vm2252, %v5372, %v3601
      %v5409 = vsel %vm2252, %v5373, %v4931
      %v5410 = vsel %vm2252, %v5374, %v3605
      %v5411 = vsel %vm2252, %v5375, %v3607
      %v5412 = vsel %vm2252, %v5376, %v4933
      %v5413 = vsel %vm2252, %v5377, %v3611
      %v5414 = vsel %vm2252, %v5378, %v3613
      %v5415 = vsel %vm2252, %v5379, %v4935
      %v5416 = vsel %vm2252, %v5380, %v3617
      %v5417 = vsel %vm2252, %v5381, %v3619
      %v5418 = vsel %vm2252, %v5382, %v4937
      %v5419 = vsel %vm2252, %v5383, %v4939
      %v5420 = vsel %vm2252, %v5384, %v4941
      %v5421 = vsel %vm2252, %v5385, %v4943
      %v5422 = vsel %vm2252, %v5386, %v4945
      %v5423 = vsel %vm2252, %v5387, %v4947
      %v5424 = vsel %vm2252, %v5388, %v4949
      %v5425 = vsel %vm2277, %v5389, %v3676
      %v5426 = vsel %vm2277, %v5390, %v3678
      %v5427 = vsel %vm2277, %v5391, %v3680
      %v5428 = vsel %vm2277, %v5392, %v3682
      %v5429 = vsel %vm2277, %v5393, %v3684
      %v5430 = vsel %vm2277, %v5394, %v3686
      %v5431 = vsel %vm2277, %v5395, %v3688
      %v5432 = vsel %vm2277, %v5396, %v3690
      %v5433 = vsel %vm2277, %v5397, %v3692
      %v5434 = vsel %vm2277, %v5398, %v3694
      %v5435 = vsel %vm2277, %v5399, %v3696
      %v5436 = vsel %vm2277, %v5400, %v3698
      %v5437 = vsel %vm2277, %v5401, %v3700
      %v5438 = vsel %vm2277, %v5402, %v3702
      %v5439 = vsel %vm2277, %v5403, %v3704
      %v5440 = vsel %vm2277, %v5404, %v3706
      %v5441 = vsel %vm2277, %v5405, %v3708
      %v5442 = vsel %vm2277, %v5406, %v3710
      %v5443 = vsel %vm2277, %v5407, %v3712
      %v5444 = vsel %vm2277, %v5408, %v3714
      %v5445 = vsel %vm2277, %v5409, %v3716
      %v5446 = vsel %vm2277, %v5410, %v3718
      %v5447 = vsel %vm2277, %v5411, %v3720
      %v5448 = vsel %vm2277, %v5412, %v3722
      %v5449 = vsel %vm2277, %v5413, %v3724
      %v5450 = vsel %vm2277, %v5414, %v3726
      %v5451 = vsel %vm2277, %v5415, %v3728
      %v5452 = vsel %vm2277, %v5416, %v3730
      %v5453 = vsel %vm2277, %v5417, %v3732
      %v5454 = vsel %vm2277, %v5418, %v3734
      %v5455 = vsel %vm2277, %v5419, %v4973
      %v5456 = vsel %vm2277, %v5420, %v4975
      %v5457 = vsel %vm2277, %v5421, %v4977
      %v5458 = vsel %vm2277, %v5422, %v4979
      %v5459 = vsel %vm2277, %v5423, %v4981
      %v5460 = vsel %vm2277, %v5424, %v4983
      %v5461 = vsel %vm2302, %v5425, %v3789
      %v5462 = vsel %vm2302, %v5426, %v3791
      %v5463 = vsel %vm2302, %v5427, %v3793
      %v5464 = vsel %vm2302, %v5428, %v3795
      %v5465 = vsel %vm2302, %v5429, %v3797
      %v5466 = vsel %vm2302, %v5430, %v3799
      %v5467 = vsel %vm2302, %v5431, %v3801
      %v5468 = vsel %vm2302, %v5432, %v3803
      %v5469 = vsel %vm2302, %v5433, %v3805
      %v5470 = vsel %vm2302, %v5434, %v3807
      %v5471 = vsel %vm2302, %v5435, %v3809
      %v5472 = vsel %vm2302, %v5436, %v3811
      %v5473 = vsel %vm2302, %v5437, %v3813
      %v5474 = vsel %vm2302, %v5438, %v3815
      %v5475 = vsel %vm2302, %v5439, %v3817
      %v5476 = vsel %vm2302, %v5440, %v3819
      %v5477 = vsel %vm2302, %v5441, %v3821
      %v5478 = vsel %vm2302, %v5442, %v3823
      %v5479 = vsel %vm2302, %v5443, %v3825
      %v5480 = vsel %vm2302, %v5444, %v3827
      %v5481 = vsel %vm2302, %v5445, %v3829
      %v5482 = vsel %vm2302, %v5446, %v3831
      %v5483 = vsel %vm2302, %v5447, %v3833
      %v5484 = vsel %vm2302, %v5448, %v3835
      %v5485 = vsel %vm2302, %v5449, %v3837
      %v5486 = vsel %vm2302, %v5450, %v3839
      %v5487 = vsel %vm2302, %v5451, %v3841
      %v5488 = vsel %vm2302, %v5452, %v3843
      %v5489 = vsel %vm2302, %v5453, %v3845
      %v5490 = vsel %vm2302, %v5454, %v3847
      %v5491 = vsel %vm2302, %v5455, %v4996
      %v5492 = vsel %vm2302, %v5456, %v4998
      %v5493 = vsel %vm2302, %v5457, %v5000
      %v5494 = vsel %vm2302, %v5458, %v5002
      %v5495 = vsel %vm2302, %v5459, %v5004
      %v5496 = vsel %vm2302, %v5460, %v5006
      %v5497 = vrot.slane %v364, 1
      %v5498 = vrot.slane %v365, 1
      %v5499 = vsel %vm412, %v5497, %v5498
      %v5500 = vrot.slane %v366, 1
      %v5501 = vsel %vm412, %v5498, %v5500
      %5502 = vrot.lane.b32.xlu0 %v4747, 3
      %v5503 = vpop.permute.xlu0 %5502
      %5504 = vrot.lane.b32.xlu0 %v4749, 3
      %v5505 = vpop.permute.xlu0 %5504
      %5506 = vrot.lane.b32.xlu0 %v4748, 3
      %v5507 = vpop.permute.xlu0 %5506
      %5508 = vrot.lane.b32.xlu0 %v5499, 3
      %v5509 = vpop.permute.xlu0 %5508
      %5510 = vrot.lane.b32.xlu0 %v5501, 3
      %v5511 = vpop.permute.xlu0 %5510
      %5512 = vrot.lane.b32.xlu0 %v5500, 3
      %v5513 = vpop.permute.xlu0 %5512
      %v5520 = vrot.slane %v364, 2
      %v5521 = vrot.slane %v365, 2
      %v5522 = vsel %vm545, %v5520, %v5521
      %v5523 = vrot.slane %v366, 2
      %v5524 = vsel %vm545, %v5521, %v5523
      %5525 = vrot.lane.b32.xlu0 %v4773, 6
      %v5526 = vpop.permute.xlu0 %5525
      %5527 = vrot.lane.b32.xlu0 %v4775, 6
      %v5528 = vpop.permute.xlu0 %5527
      %5529 = vrot.lane.b32.xlu0 %v4774, 6
      %v5530 = vpop.permute.xlu0 %5529
      %5531 = vrot.lane.b32.xlu0 %v5522, 6
      %v5532 = vpop.permute.xlu0 %5531
      %5533 = vrot.lane.b32.xlu0 %v5524, 6
      %v5534 = vpop.permute.xlu0 %5533
      %5535 = vrot.lane.b32.xlu0 %v5523, 6
      %v5536 = vpop.permute.xlu0 %5535
      %v5543 = vrot.slane %v366, 3
      %v5544 = vsel %vm678, %v4916, %v5543
      %5545 = vrot.lane.b32.xlu0 %v1646, 9
      %v5546 = vpop.permute.xlu0 %5545
      %5547 = vrot.lane.b32.xlu0 %v2631, 9
      %v5548 = vpop.permute.xlu0 %5547
      %5549 = vrot.lane.b32.xlu0 %v3547, 9
      %v5550 = vpop.permute.xlu0 %5549
      %5551 = vrot.lane.b32.xlu0 %v4575, 9
      %v5552 = vpop.permute.xlu0 %5551
      %5553 = vrot.lane.b32.xlu0 %v4831, 9
      %v5554 = vpop.permute.xlu0 %5553
      %5555 = vrot.lane.b32.xlu0 %v4830, 9
      %v5556 = vpop.permute.xlu0 %5555
      %5557 = vrot.lane.b32.xlu0 %v4917, 9
      %v5558 = vpop.permute.xlu0 %5557
      %5559 = vrot.lane.b32.xlu0 %v5544, 9
      %v5560 = vpop.permute.xlu0 %5559
      %5561 = vrot.lane.b32.xlu0 %v5543, 9
      %v5562 = vpop.permute.xlu0 %5561
      %5572 = vrot.lane.b32.xlu0 %v840, 12
      %v5573 = vpop.permute.xlu0 %5572
      %5574 = vrot.lane.b32.xlu0 %v845, 12
      %v5575 = vpop.permute.xlu0 %5574
      %5576 = vrot.lane.b32.xlu0 %v850, 12
      %v5577 = vpop.permute.xlu0 %5576
      %5578 = vrot.lane.b32.xlu0 %v855, 12
      %v5579 = vpop.permute.xlu0 %5578
      %5580 = vrot.lane.b32.xlu0 %v860, 12
      %v5581 = vpop.permute.xlu0 %5580
      %5582 = vrot.lane.b32.xlu0 %v865, 12
      %v5583 = vpop.permute.xlu0 %5582
      %5584 = vrot.lane.b32.xlu0 %v870, 12
      %v5585 = vpop.permute.xlu0 %5584
      %5586 = vrot.lane.b32.xlu0 %v1723, 12
      %v5587 = vpop.permute.xlu0 %5586
      %5588 = vrot.lane.b32.xlu0 %v1725, 12
      %v5589 = vpop.permute.xlu0 %5588
      %5590 = vrot.lane.b32.xlu0 %v1724, 12
      %v5591 = vpop.permute.xlu0 %5590
      %5592 = vrot.lane.b32.xlu0 %v2744, 12
      %v5593 = vpop.permute.xlu0 %5592
      %5594 = vrot.lane.b32.xlu0 %v2746, 12
      %v5595 = vpop.permute.xlu0 %5594
      %5596 = vrot.lane.b32.xlu0 %v2745, 12
      %v5597 = vpop.permute.xlu0 %5596
      %5598 = vrot.lane.b32.xlu0 %v3660, 12
      %v5599 = vpop.permute.xlu0 %5598
      %5600 = vrot.lane.b32.xlu0 %v3662, 12
      %v5601 = vpop.permute.xlu0 %5600
      %5602 = vrot.lane.b32.xlu0 %v3661, 12
      %v5603 = vpop.permute.xlu0 %5602
      %5604 = vrot.lane.b32.xlu0 %v4627, 12
      %v5605 = vpop.permute.xlu0 %5604
      %5606 = vrot.lane.b32.xlu0 %v4629, 12
      %v5607 = vpop.permute.xlu0 %5606
      %5608 = vrot.lane.b32.xlu0 %v4628, 12
      %v5609 = vpop.permute.xlu0 %5608
      %5610 = vrot.lane.b32.xlu0 %v4969, 12
      %v5611 = vpop.permute.xlu0 %5610
      %5612 = vrot.lane.b32.xlu0 %v4971, 12
      %v5613 = vpop.permute.xlu0 %5612
      %5614 = vrot.lane.b32.xlu0 %v4970, 12
      %v5615 = vpop.permute.xlu0 %5614
      %5638 = vrot.lane.b32.xlu0 %v971, 15
      %v5639 = vpop.permute.xlu0 %5638
      %5640 = vrot.lane.b32.xlu0 %v973, 15
      %v5641 = vpop.permute.xlu0 %5640
      %5642 = vrot.lane.b32.xlu0 %v976, 15
      %v5643 = vpop.permute.xlu0 %5642
      %5644 = vrot.lane.b32.xlu0 %v978, 15
      %v5645 = vpop.permute.xlu0 %5644
      %5646 = vrot.lane.b32.xlu0 %v981, 15
      %v5647 = vpop.permute.xlu0 %5646
      %5648 = vrot.lane.b32.xlu0 %v983, 15
      %v5649 = vpop.permute.xlu0 %5648
      %5650 = vrot.lane.b32.xlu0 %v986, 15
      %v5651 = vpop.permute.xlu0 %5650
      %5652 = vrot.lane.b32.xlu0 %v988, 15
      %v5653 = vpop.permute.xlu0 %5652
      %5654 = vrot.lane.b32.xlu0 %v991, 15
      %v5655 = vpop.permute.xlu0 %5654
      %5656 = vrot.lane.b32.xlu0 %v993, 15
      %v5657 = vpop.permute.xlu0 %5656
      %5658 = vrot.lane.b32.xlu0 %v996, 15
      %v5659 = vpop.permute.xlu0 %5658
      %5660 = vrot.lane.b32.xlu0 %v998, 15
      %v5661 = vpop.permute.xlu0 %5660
      %5662 = vrot.lane.b32.xlu0 %v1001, 15
      %v5663 = vpop.permute.xlu0 %5662
      %5664 = vrot.lane.b32.xlu0 %v1003, 15
      %v5665 = vpop.permute.xlu0 %5664
      %5666 = vrot.lane.b32.xlu0 %v1799, 15
      %v5667 = vpop.permute.xlu0 %5666
      %5668 = vrot.lane.b32.xlu0 %v1802, 15
      %v5669 = vpop.permute.xlu0 %5668
      %5670 = vrot.lane.b32.xlu0 %v1801, 15
      %v5671 = vpop.permute.xlu0 %5670
      %5672 = vrot.lane.b32.xlu0 %v2856, 15
      %v5673 = vpop.permute.xlu0 %5672
      %5674 = vrot.lane.b32.xlu0 %v2859, 15
      %v5675 = vpop.permute.xlu0 %5674
      %5676 = vrot.lane.b32.xlu0 %v2858, 15
      %v5677 = vpop.permute.xlu0 %5676
      %5678 = vrot.lane.b32.xlu0 %v3772, 15
      %v5679 = vpop.permute.xlu0 %5678
      %5680 = vrot.lane.b32.xlu0 %v3775, 15
      %v5681 = vpop.permute.xlu0 %5680
      %5682 = vrot.lane.b32.xlu0 %v3774, 15
      %v5683 = vpop.permute.xlu0 %5682
      %5684 = vrot.lane.b32.xlu0 %v4649, 15
      %v5685 = vpop.permute.xlu0 %5684
      %5686 = vrot.lane.b32.xlu0 %v4652, 15
      %v5687 = vpop.permute.xlu0 %5686
      %5688 = vrot.lane.b32.xlu0 %v4651, 15
      %v5689 = vpop.permute.xlu0 %5688
      %5690 = vrot.lane.b32.xlu0 %v4991, 15
      %v5691 = vpop.permute.xlu0 %5690
      %5692 = vrot.lane.b32.xlu0 %v4994, 15
      %v5693 = vpop.permute.xlu0 %5692
      %5694 = vrot.lane.b32.xlu0 %v4993, 15
      %v5695 = vpop.permute.xlu0 %5694
      %v5727 = vrot.slane %v367, 5
      %v5728 = vrot.slane %v368, 5
      %v5729 = vsel %vm944, %v5727, %v5728
      %5730 = vrot.lane.b32.xlu0 %v976, 18
      %v5731 = vpop.permute.xlu0 %5730
      %5732 = vrot.lane.b32.xlu0 %v981, 18
      %v5733 = vpop.permute.xlu0 %5732
      %5734 = vrot.lane.b32.xlu0 %v986, 18
      %v5735 = vpop.permute.xlu0 %5734
      %5736 = vrot.lane.b32.xlu0 %v991, 18
      %v5737 = vpop.permute.xlu0 %5736
      %5738 = vrot.lane.b32.xlu0 %v996, 18
      %v5739 = vpop.permute.xlu0 %5738
      %5740 = vrot.lane.b32.xlu0 %v1001, 18
      %v5741 = vpop.permute.xlu0 %5740
      %5742 = vrot.lane.b32.xlu0 %v1799, 18
      %v5743 = vpop.permute.xlu0 %5742
      %5744 = vrot.lane.b32.xlu0 %v2856, 18
      %v5745 = vpop.permute.xlu0 %5744
      %5746 = vrot.lane.b32.xlu0 %v3772, 18
      %v5747 = vpop.permute.xlu0 %5746
      %5748 = vrot.lane.b32.xlu0 %v4649, 18
      %v5749 = vpop.permute.xlu0 %5748
      %5750 = vrot.lane.b32.xlu0 %v4990, 18
      %v5751 = vpop.permute.xlu0 %5750
      %5752 = vrot.lane.b32.xlu0 %v4992, 18
      %v5753 = vpop.permute.xlu0 %5752
      %5754 = vrot.lane.b32.xlu0 %v4991, 18
      %v5755 = vpop.permute.xlu0 %5754
      %5756 = vrot.lane.b32.xlu0 %v5727, 18
      %v5757 = vpop.permute.xlu0 %5756
      %5758 = vrot.lane.b32.xlu0 %v5729, 18
      %v5759 = vpop.permute.xlu0 %5758
      %5760 = vrot.lane.b32.xlu0 %v5728, 18
      %v5761 = vpop.permute.xlu0 %5760
      %v5779 = vrot.slane %v364, 6
      %v5780 = vrot.slane %v365, 6
      %v5781 = vsel %vm1077, %v5779, %v5780
      %v5782 = vrot.slane %v366, 6
      %v5783 = vsel %vm1077, %v5780, %v5782
      %v5784 = vrot.slane %v367, 6
      %v5785 = vrot.slane %v368, 6
      %v5786 = vsel %vm1077, %v5784, %v5785
      %v5787 = vrot.slane %v369, 6
      %v5788 = vsel %vm1077, %v5785, %v5787
      %5789 = vrot.lane.b32.xlu0 %v5779, 21
      %v5790 = vpop.permute.xlu0 %5789
      %5791 = vrot.lane.b32.xlu0 %v5781, 21
      %v5792 = vpop.permute.xlu0 %5791
      %5793 = vrot.lane.b32.xlu0 %v5783, 21
      %v5794 = vpop.permute.xlu0 %5793
      %5795 = vrot.lane.b32.xlu0 %v5784, 21
      %v5796 = vpop.permute.xlu0 %5795
      %5797 = vrot.lane.b32.xlu0 %v5786, 21
      %v5798 = vpop.permute.xlu0 %5797
      %5799 = vrot.lane.b32.xlu0 %v5788, 21
      %v5800 = vpop.permute.xlu0 %5799
      %v5807 = vrot.slane %v364, 7
      %v5808 = vrot.slane %v365, 7
      %v5809 = vsel %vm1210, %v5807, %v5808
      %v5810 = vrot.slane %v366, 7
      %v5811 = vsel %vm1210, %v5808, %v5810
      %v5812 = vrot.slane %v367, 7
      %v5813 = vrot.slane %v368, 7
      %v5814 = vsel %vm1210, %v5812, %v5813
      %v5815 = vrot.slane %v369, 7
      %v5816 = vsel %vm1210, %v5813, %v5815
      %5817 = vrot.lane.b32.xlu0 %v5807, 24
      %v5818 = vpop.permute.xlu0 %5817
      %5819 = vrot.lane.b32.xlu0 %v5809, 24
      %v5820 = vpop.permute.xlu0 %5819
      %5821 = vrot.lane.b32.xlu0 %v5811, 24
      %v5822 = vpop.permute.xlu0 %5821
      %5823 = vrot.lane.b32.xlu0 %v5812, 24
      %v5824 = vpop.permute.xlu0 %5823
      %5825 = vrot.lane.b32.xlu0 %v5814, 24
      %v5826 = vpop.permute.xlu0 %5825
      %5827 = vrot.lane.b32.xlu0 %v5816, 24
      %v5828 = vpop.permute.xlu0 %5827
      %5835 = vrot.lane.b32.xlu0 %v364, 27
      %v5836 = vpop.permute.xlu0 %5835
      %5837 = vrot.lane.b32.xlu0 %v365, 27
      %v5838 = vpop.permute.xlu0 %5837
      %5839 = vrot.lane.b32.xlu0 %v366, 27
      %v5840 = vpop.permute.xlu0 %5839
      %5841 = vrot.lane.b32.xlu0 %v367, 27
      %v5842 = vpop.permute.xlu0 %5841
      %5843 = vrot.lane.b32.xlu0 %v368, 27
      %v5844 = vpop.permute.xlu0 %5843
      %5845 = vrot.lane.b32.xlu0 %v369, 27
      %v5846 = vpop.permute.xlu0 %5845
      %v5853 = vrot.slane %v367, 1
      %v5854 = vrot.slane %v368, 1
      %v5855 = vsel %vm412, %v5853, %v5854
      %v5856 = vrot.slane %v369, 1
      %v5857 = vsel %vm412, %v5854, %v5856
      %5858 = vrot.lane.b32.xlu0 %v5499, 30
      %v5859 = vpop.permute.xlu0 %5858
      %5860 = vrot.lane.b32.xlu0 %v5501, 30
      %v5861 = vpop.permute.xlu0 %5860
      %5862 = vrot.lane.b32.xlu0 %v5500, 30
      %v5863 = vpop.permute.xlu0 %5862
      %5864 = vrot.lane.b32.xlu0 %v5855, 30
      %v5865 = vpop.permute.xlu0 %5864
      %5866 = vrot.lane.b32.xlu0 %v5857, 30
      %v5867 = vpop.permute.xlu0 %5866
      %5868 = vrot.lane.b32.xlu0 %v5856, 30
      %v5869 = vpop.permute.xlu0 %5868
      %v5876 = vrot.slane %v367, 2
      %v5877 = vrot.slane %v368, 2
      %v5878 = vsel %vm545, %v5876, %v5877
      %v5879 = vrot.slane %v369, 2
      %v5880 = vsel %vm545, %v5877, %v5879
      %5881 = vrot.lane.b32.xlu0 %v5522, 33
      %v5882 = vpop.permute.xlu0 %5881
      %5883 = vrot.lane.b32.xlu0 %v5524, 33
      %v5884 = vpop.permute.xlu0 %5883
      %5885 = vrot.lane.b32.xlu0 %v5523, 33
      %v5886 = vpop.permute.xlu0 %5885
      %5887 = vrot.lane.b32.xlu0 %v5878, 33
      %v5888 = vpop.permute.xlu0 %5887
      %5889 = vrot.lane.b32.xlu0 %v5880, 33
      %v5890 = vpop.permute.xlu0 %5889
      %5891 = vrot.lane.b32.xlu0 %v5879, 33
      %v5892 = vpop.permute.xlu0 %5891
      %v5899 = vrot.slane %v367, 3
      %v5900 = vrot.slane %v368, 3
      %v5901 = vsel %vm678, %v5899, %v5900
      %v5902 = vrot.slane %v369, 3
      %v5903 = vsel %vm678, %v5900, %v5902
      %5904 = vrot.lane.b32.xlu0 %v2631, 36
      %v5905 = vpop.permute.xlu0 %5904
      %5906 = vrot.lane.b32.xlu0 %v3547, 36
      %v5907 = vpop.permute.xlu0 %5906
      %5908 = vrot.lane.b32.xlu0 %v4575, 36
      %v5909 = vpop.permute.xlu0 %5908
      %5910 = vrot.lane.b32.xlu0 %v4917, 36
      %v5911 = vpop.permute.xlu0 %5910
      %5912 = vrot.lane.b32.xlu0 %v5544, 36
      %v5913 = vpop.permute.xlu0 %5912
      %5914 = vrot.lane.b32.xlu0 %v5543, 36
      %v5915 = vpop.permute.xlu0 %5914
      %5916 = vrot.lane.b32.xlu0 %v5901, 36
      %v5917 = vpop.permute.xlu0 %5916
      %5918 = vrot.lane.b32.xlu0 %v5903, 36
      %v5919 = vpop.permute.xlu0 %5918
      %5920 = vrot.lane.b32.xlu0 %v5902, 36
      %v5921 = vpop.permute.xlu0 %5920
      %v5931 = vrot.slane %v367, 4
      %v5932 = vrot.slane %v368, 4
      %v5933 = vsel %vm811, %v5931, %v5932
      %v5934 = vrot.slane %v369, 4
      %v5935 = vsel %vm811, %v5932, %v5934
      %5936 = vrot.lane.b32.xlu0 %v845, 39
      %v5937 = vpop.permute.xlu0 %5936
      %5938 = vrot.lane.b32.xlu0 %v850, 39
      %v5939 = vpop.permute.xlu0 %5938
      %5940 = vrot.lane.b32.xlu0 %v855, 39
      %v5941 = vpop.permute.xlu0 %5940
      %5942 = vrot.lane.b32.xlu0 %v860, 39
      %v5943 = vpop.permute.xlu0 %5942
      %5944 = vrot.lane.b32.xlu0 %v865, 39
      %v5945 = vpop.permute.xlu0 %5944
      %5946 = vrot.lane.b32.xlu0 %v870, 39
      %v5947 = vpop.permute.xlu0 %5946
      %5948 = vrot.lane.b32.xlu0 %v1724, 39
      %v5949 = vpop.permute.xlu0 %5948
      %5950 = vrot.lane.b32.xlu0 %v2744, 39
      %v5951 = vpop.permute.xlu0 %5950
      %5952 = vrot.lane.b32.xlu0 %v2746, 39
      %v5953 = vpop.permute.xlu0 %5952
      %5954 = vrot.lane.b32.xlu0 %v2745, 39
      %v5955 = vpop.permute.xlu0 %5954
      %5956 = vrot.lane.b32.xlu0 %v3660, 39
      %v5957 = vpop.permute.xlu0 %5956
      %5958 = vrot.lane.b32.xlu0 %v3662, 39
      %v5959 = vpop.permute.xlu0 %5958
      %5960 = vrot.lane.b32.xlu0 %v3661, 39
      %v5961 = vpop.permute.xlu0 %5960
      %5962 = vrot.lane.b32.xlu0 %v4627, 39
      %v5963 = vpop.permute.xlu0 %5962
      %5964 = vrot.lane.b32.xlu0 %v4629, 39
      %v5965 = vpop.permute.xlu0 %5964
      %5966 = vrot.lane.b32.xlu0 %v4628, 39
      %v5967 = vpop.permute.xlu0 %5966
      %5968 = vrot.lane.b32.xlu0 %v4969, 39
      %v5969 = vpop.permute.xlu0 %5968
      %5970 = vrot.lane.b32.xlu0 %v4971, 39
      %v5971 = vpop.permute.xlu0 %5970
      %5972 = vrot.lane.b32.xlu0 %v4970, 39
      %v5973 = vpop.permute.xlu0 %5972
      %5974 = vrot.lane.b32.xlu0 %v5933, 39
      %v5975 = vpop.permute.xlu0 %5974
      %5976 = vrot.lane.b32.xlu0 %v5935, 39
      %v5977 = vpop.permute.xlu0 %5976
      %5978 = vrot.lane.b32.xlu0 %v5934, 39
      %v5979 = vpop.permute.xlu0 %5978
      %v6002 = vrot.slane %v369, 5
      %v6003 = vsel %vm944, %v5728, %v6002
      %6004 = vrot.lane.b32.xlu0 %v976, 42
      %v6005 = vpop.permute.xlu0 %6004
      %6006 = vrot.lane.b32.xlu0 %v978, 42
      %v6007 = vpop.permute.xlu0 %6006
      %6008 = vrot.lane.b32.xlu0 %v981, 42
      %v6009 = vpop.permute.xlu0 %6008
      %6010 = vrot.lane.b32.xlu0 %v983, 42
      %v6011 = vpop.permute.xlu0 %6010
      %6012 = vrot.lane.b32.xlu0 %v986, 42
      %v6013 = vpop.permute.xlu0 %6012
      %6014 = vrot.lane.b32.xlu0 %v988, 42
      %v6015 = vpop.permute.xlu0 %6014
      %6016 = vrot.lane.b32.xlu0 %v991, 42
      %v6017 = vpop.permute.xlu0 %6016
      %6018 = vrot.lane.b32.xlu0 %v993, 42
      %v6019 = vpop.permute.xlu0 %6018
      %6020 = vrot.lane.b32.xlu0 %v996, 42
      %v6021 = vpop.permute.xlu0 %6020
      %6022 = vrot.lane.b32.xlu0 %v998, 42
      %v6023 = vpop.permute.xlu0 %6022
      %6024 = vrot.lane.b32.xlu0 %v1001, 42
      %v6025 = vpop.permute.xlu0 %6024
      %6026 = vrot.lane.b32.xlu0 %v1003, 42
      %v6027 = vpop.permute.xlu0 %6026
      %6028 = vrot.lane.b32.xlu0 %v1799, 42
      %v6029 = vpop.permute.xlu0 %6028
      %6030 = vrot.lane.b32.xlu0 %v1801, 42
      %v6031 = vpop.permute.xlu0 %6030
      %6032 = vrot.lane.b32.xlu0 %v2856, 42
      %v6033 = vpop.permute.xlu0 %6032
      %6034 = vrot.lane.b32.xlu0 %v2859, 42
      %v6035 = vpop.permute.xlu0 %6034
      %6036 = vrot.lane.b32.xlu0 %v2858, 42
      %v6037 = vpop.permute.xlu0 %6036
      %6038 = vrot.lane.b32.xlu0 %v3772, 42
      %v6039 = vpop.permute.xlu0 %6038
      %6040 = vrot.lane.b32.xlu0 %v3775, 42
      %v6041 = vpop.permute.xlu0 %6040
      %6042 = vrot.lane.b32.xlu0 %v3774, 42
      %v6043 = vpop.permute.xlu0 %6042
      %6044 = vrot.lane.b32.xlu0 %v4649, 42
      %v6045 = vpop.permute.xlu0 %6044
      %6046 = vrot.lane.b32.xlu0 %v4652, 42
      %v6047 = vpop.permute.xlu0 %6046
      %6048 = vrot.lane.b32.xlu0 %v4651, 42
      %v6049 = vpop.permute.xlu0 %6048
      %6050 = vrot.lane.b32.xlu0 %v4991, 42
      %v6051 = vpop.permute.xlu0 %6050
      %6052 = vrot.lane.b32.xlu0 %v4994, 42
      %v6053 = vpop.permute.xlu0 %6052
      %6054 = vrot.lane.b32.xlu0 %v4993, 42
      %v6055 = vpop.permute.xlu0 %6054
      %6056 = vrot.lane.b32.xlu0 %v5728, 42
      %v6057 = vpop.permute.xlu0 %6056
      %6058 = vrot.lane.b32.xlu0 %v6003, 42
      %v6059 = vpop.permute.xlu0 %6058
      %6060 = vrot.lane.b32.xlu0 %v6002, 42
      %v6061 = vpop.permute.xlu0 %6060
      %v6093 = vrot.slane %v370, 5
      %v6094 = vrot.slane %v371, 5
      %v6095 = vsel %vm944, %v6093, %v6094
      %6096 = vrot.lane.b32.xlu0 %v981, 45
      %v6097 = vpop.permute.xlu0 %6096
      %6098 = vrot.lane.b32.xlu0 %v986, 45
      %v6099 = vpop.permute.xlu0 %6098
      %6100 = vrot.lane.b32.xlu0 %v991, 45
      %v6101 = vpop.permute.xlu0 %6100
      %6102 = vrot.lane.b32.xlu0 %v996, 45
      %v6103 = vpop.permute.xlu0 %6102
      %6104 = vrot.lane.b32.xlu0 %v1001, 45
      %v6105 = vpop.permute.xlu0 %6104
      %6106 = vrot.lane.b32.xlu0 %v1799, 45
      %v6107 = vpop.permute.xlu0 %6106
      %6108 = vrot.lane.b32.xlu0 %v2856, 45
      %v6109 = vpop.permute.xlu0 %6108
      %6110 = vrot.lane.b32.xlu0 %v3772, 45
      %v6111 = vpop.permute.xlu0 %6110
      %6112 = vrot.lane.b32.xlu0 %v4649, 45
      %v6113 = vpop.permute.xlu0 %6112
      %6114 = vrot.lane.b32.xlu0 %v4991, 45
      %v6115 = vpop.permute.xlu0 %6114
      %6116 = vrot.lane.b32.xlu0 %v5727, 45
      %v6117 = vpop.permute.xlu0 %6116
      %6118 = vrot.lane.b32.xlu0 %v5729, 45
      %v6119 = vpop.permute.xlu0 %6118
      %6120 = vrot.lane.b32.xlu0 %v5728, 45
      %v6121 = vpop.permute.xlu0 %6120
      %6122 = vrot.lane.b32.xlu0 %v6093, 45
      %v6123 = vpop.permute.xlu0 %6122
      %6124 = vrot.lane.b32.xlu0 %v6095, 45
      %v6125 = vpop.permute.xlu0 %6124
      %6126 = vrot.lane.b32.xlu0 %v6094, 45
      %v6127 = vpop.permute.xlu0 %6126
      %v6144 = vsel %vm1952, %v361, %v5503
      %v6145 = vsel %vm1952, %v362, %v5505
      %v6146 = vsel %vm1952, %v363, %v5507
      %v6147 = vsel %vm1952, %v364, %v5509
      %v6148 = vsel %vm1952, %v365, %v5511
      %v6149 = vsel %vm1952, %v366, %v5513
      %v6150 = vsel %vm1977, %v6144, %v5526
      %v6151 = vsel %vm1977, %v6145, %v5528
      %v6152 = vsel %vm1977, %v6146, %v5530
      %v6153 = vsel %vm1977, %v6147, %v5532
      %v6154 = vsel %vm1977, %v6148, %v5534
      %v6155 = vsel %vm1977, %v6149, %v5536
      %v6156 = vsel %vm2002, %v5029, %v5546
      %v6157 = vsel %vm2002, %v5032, %v5548
      %v6158 = vsel %vm2002, %v5035, %v5550
      %v6159 = vsel %vm2002, %v6150, %v5552
      %v6160 = vsel %vm2002, %v6151, %v5554
      %v6161 = vsel %vm2002, %v6152, %v5556
      %v6162 = vsel %vm2002, %v6153, %v5558
      %v6163 = vsel %vm2002, %v6154, %v5560
      %v6164 = vsel %vm2002, %v6155, %v5562
      %v6165 = vsel %vm2027, %v5043, %v5573
      %v6166 = vsel %vm2027, %v5045, %v5575
      %v6167 = vsel %vm2027, %v5047, %v5577
      %v6168 = vsel %vm2027, %v5049, %v5579
      %v6169 = vsel %vm2027, %v5051, %v5581
      %v6170 = vsel %vm2027, %v5053, %v5583
      %v6171 = vsel %vm2027, %v5055, %v5585
      %v6172 = vsel %vm2027, %v6156, %v5587
      %v6173 = vsel %vm2027, %v5057, %v5589
      %v6174 = vsel %vm2027, %v5058, %v5591
      %v6175 = vsel %vm2027, %v6157, %v5593
      %v6176 = vsel %vm2027, %v5060, %v5595
      %v6177 = vsel %vm2027, %v5061, %v5597
      %v6178 = vsel %vm2027, %v6158, %v5599
      %v6179 = vsel %vm2027, %v5063, %v5601
      %v6180 = vsel %vm2027, %v5064, %v5603
      %v6181 = vsel %vm2027, %v6159, %v5605
      %v6182 = vsel %vm2027, %v6160, %v5607
      %v6183 = vsel %vm2027, %v6161, %v5609
      %v6184 = vsel %vm2027, %v6162, %v5611
      %v6185 = vsel %vm2027, %v6163, %v5613
      %v6186 = vsel %vm2027, %v6164, %v5615
      %v6187 = vsel %vm2052, %v2038, %v5639
      %v6188 = vsel %vm2052, %v6165, %v5641
      %v6189 = vsel %vm2052, %v2040, %v5643
      %v6190 = vsel %vm2052, %v6166, %v5645
      %v6191 = vsel %vm2052, %v2042, %v5647
      %v6192 = vsel %vm2052, %v6167, %v5649
      %v6193 = vsel %vm2052, %v2044, %v5651
      %v6194 = vsel %vm2052, %v6168, %v5653
      %v6195 = vsel %vm2052, %v2046, %v5655
      %v6196 = vsel %vm2052, %v6169, %v5657
      %v6197 = vsel %vm2052, %v2048, %v5659
      %v6198 = vsel %vm2052, %v6170, %v5661
      %v6199 = vsel %vm2052, %v2050, %v5663
      %v6200 = vsel %vm2052, %v6171, %v5665
      %v6201 = vsel %vm2052, %v6172, %v5667
      %v6202 = vsel %vm2052, %v6173, %v5669
      %v6203 = vsel %vm2052, %v6174, %v5671
      %v6204 = vsel %vm2052, %v6175, %v5673
      %v6205 = vsel %vm2052, %v6176, %v5675
      %v6206 = vsel %vm2052, %v6177, %v5677
      %v6207 = vsel %vm2052, %v6178, %v5679
      %v6208 = vsel %vm2052, %v6179, %v5681
      %v6209 = vsel %vm2052, %v6180, %v5683
      %v6210 = vsel %vm2052, %v6181, %v5685
      %v6211 = vsel %vm2052, %v6182, %v5687
      %v6212 = vsel %vm2052, %v6183, %v5689
      %v6213 = vsel %vm2052, %v6184, %v5691
      %v6214 = vsel %vm2052, %v6185, %v5693
      %v6215 = vsel %vm2052, %v6186, %v5695
      %v6216 = vsel %vm2077, %v6187, %v2885
      %v6217 = vsel %vm2077, %v2064, %v2887
      %v6218 = vsel %vm2077, %v6188, %v5731
      %v6219 = vsel %vm2077, %v6189, %v2891
      %v6220 = vsel %vm2077, %v2066, %v2893
      %v6221 = vsel %vm2077, %v6190, %v5733
      %v6222 = vsel %vm2077, %v6191, %v2897
      %v6223 = vsel %vm2077, %v2068, %v2899
      %v6224 = vsel %vm2077, %v6192, %v5735
      %v6225 = vsel %vm2077, %v6193, %v2903
      %v6226 = vsel %vm2077, %v2070, %v2905
      %v6227 = vsel %vm2077, %v6194, %v5737
      %v6228 = vsel %vm2077, %v6195, %v2909
      %v6229 = vsel %vm2077, %v2072, %v2911
      %v6230 = vsel %vm2077, %v6196, %v5739
      %v6231 = vsel %vm2077, %v6197, %v2915
      %v6232 = vsel %vm2077, %v2074, %v2917
      %v6233 = vsel %vm2077, %v6198, %v5741
      %v6234 = vsel %vm2077, %v6199, %v2921
      %v6235 = vsel %vm2077, %v2076, %v2923
      %v6236 = vsel %vm2077, %v6200, %v5743
      %v6237 = vsel %vm2077, %v6201, %v2927
      %v6238 = vsel %vm2077, %v6202, %v2929
      %v6239 = vsel %vm2077, %v6203, %v5745
      %v6240 = vsel %vm2077, %v6204, %v4654
      %v6241 = vsel %vm2077, %v6205, %v4656
      %v6242 = vsel %vm2077, %v6206, %v5747
      %v6243 = vsel %vm2077, %v6207, %v4660
      %v6244 = vsel %vm2077, %v6208, %v4662
      %v6245 = vsel %vm2077, %v6209, %v5749
      %v6246 = vsel %vm2077, %v6210, %v5751
      %v6247 = vsel %vm2077, %v6211, %v5753
      %v6248 = vsel %vm2077, %v6212, %v5755
      %v6249 = vsel %vm2077, %v6213, %v5757
      %v6250 = vsel %vm2077, %v6214, %v5759
      %v6251 = vsel %vm2077, %v6215, %v5761
      %v6252 = vsel %vm2102, %v6216, %v2998
      %v6253 = vsel %vm2102, %v6217, %v3000
      %v6254 = vsel %vm2102, %v6218, %v3002
      %v6255 = vsel %vm2102, %v6219, %v3004
      %v6256 = vsel %vm2102, %v6220, %v3006
      %v6257 = vsel %vm2102, %v6221, %v3008
      %v6258 = vsel %vm2102, %v6222, %v3010
      %v6259 = vsel %vm2102, %v6223, %v3012
      %v6260 = vsel %vm2102, %v6224, %v3014
      %v6261 = vsel %vm2102, %v6225, %v3016
      %v6262 = vsel %vm2102, %v6226, %v3018
      %v6263 = vsel %vm2102, %v6227, %v3020
      %v6264 = vsel %vm2102, %v6228, %v3022
      %v6265 = vsel %vm2102, %v6229, %v3024
      %v6266 = vsel %vm2102, %v6230, %v3026
      %v6267 = vsel %vm2102, %v6231, %v3028
      %v6268 = vsel %vm2102, %v6232, %v3030
      %v6269 = vsel %vm2102, %v6233, %v3032
      %v6270 = vsel %vm2102, %v6234, %v3034
      %v6271 = vsel %vm2102, %v6235, %v3036
      %v6272 = vsel %vm2102, %v6236, %v3038
      %v6273 = vsel %vm2102, %v6237, %v3040
      %v6274 = vsel %vm2102, %v6238, %v3042
      %v6275 = vsel %vm2102, %v6239, %v3044
      %v6276 = vsel %vm2102, %v6240, %v4682
      %v6277 = vsel %vm2102, %v6241, %v4684
      %v6278 = vsel %vm2102, %v6242, %v4686
      %v6279 = vsel %vm2102, %v6243, %v4688
      %v6280 = vsel %vm2102, %v6244, %v4690
      %v6281 = vsel %vm2102, %v6245, %v4692
      %v6282 = vsel %vm2102, %v6246, %v5790
      %v6283 = vsel %vm2102, %v6247, %v5792
      %v6284 = vsel %vm2102, %v6248, %v5794
      %v6285 = vsel %vm2102, %v6249, %v5796
      %v6286 = vsel %vm2102, %v6250, %v5798
      %v6287 = vsel %vm2102, %v6251, %v5800
      %v6288 = vsel %vm2127, %v6252, %v3116
      %v6289 = vsel %vm2127, %v6253, %v3118
      %v6290 = vsel %vm2127, %v6254, %v3120
      %v6291 = vsel %vm2127, %v6255, %v3122
      %v6292 = vsel %vm2127, %v6256, %v3124
      %v6293 = vsel %vm2127, %v6257, %v3126
      %v6294 = vsel %vm2127, %v6258, %v3128
      %v6295 = vsel %vm2127, %v6259, %v3130
      %v6296 = vsel %vm2127, %v6260, %v3132
      %v6297 = vsel %vm2127, %v6261, %v3134
      %v6298 = vsel %vm2127, %v6262, %v3136
      %v6299 = vsel %vm2127, %v6263, %v3138
      %v6300 = vsel %vm2127, %v6264, %v3140
      %v6301 = vsel %vm2127, %v6265, %v3142
      %v6302 = vsel %vm2127, %v6266, %v3144
      %v6303 = vsel %vm2127, %v6267, %v3146
      %v6304 = vsel %vm2127, %v6268, %v3148
      %v6305 = vsel %vm2127, %v6269, %v3150
      %v6306 = vsel %vm2127, %v6270, %v3152
      %v6307 = vsel %vm2127, %v6271, %v3154
      %v6308 = vsel %vm2127, %v6272, %v3156
      %v6309 = vsel %vm2127, %v6273, %v3158
      %v6310 = vsel %vm2127, %v6274, %v3160
      %v6311 = vsel %vm2127, %v6275, %v3162
      %v6312 = vsel %vm2127, %v6276, %v4710
      %v6313 = vsel %vm2127, %v6277, %v4712
      %v6314 = vsel %vm2127, %v6278, %v4714
      %v6315 = vsel %vm2127, %v6279, %v4716
      %v6316 = vsel %vm2127, %v6280, %v4718
      %v6317 = vsel %vm2127, %v6281, %v4720
      %v6318 = vsel %vm2127, %v6282, %v5818
      %v6319 = vsel %vm2127, %v6283, %v5820
      %v6320 = vsel %vm2127, %v6284, %v5822
      %v6321 = vsel %vm2127, %v6285, %v5824
      %v6322 = vsel %vm2127, %v6286, %v5826
      %v6323 = vsel %vm2127, %v6287, %v5828
      %v6324 = vsel %vm2152, %v6288, %v1438
      %v6325 = vsel %vm2152, %v6289, %v1440
      %v6326 = vsel %vm2152, %v6290, %v3208
      %v6327 = vsel %vm2152, %v6291, %v1442
      %v6328 = vsel %vm2152, %v6292, %v1444
      %v6329 = vsel %vm2152, %v6293, %v3210
      %v6330 = vsel %vm2152, %v6294, %v1446
      %v6331 = vsel %vm2152, %v6295, %v1448
      %v6332 = vsel %vm2152, %v6296, %v3212
      %v6333 = vsel %vm2152, %v6297, %v1450
      %v6334 = vsel %vm2152, %v6298, %v1452
      %v6335 = vsel %vm2152, %v6299, %v3214
      %v6336 = vsel %vm2152, %v6300, %v1454
      %v6337 = vsel %vm2152, %v6301, %v1456
      %v6338 = vsel %vm2152, %v6302, %v3216
      %v6339 = vsel %vm2152, %v6303, %v1458
      %v6340 = vsel %vm2152, %v6304, %v1460
      %v6341 = vsel %vm2152, %v6305, %v3218
      %v6342 = vsel %vm2152, %v6306, %v1462
      %v6343 = vsel %vm2152, %v6307, %v1464
      %v6344 = vsel %vm2152, %v6308, %v3220
      %v6345 = vsel %vm2152, %v6309, %v3222
      %v6346 = vsel %vm2152, %v6310, %v3224
      %v6347 = vsel %vm2152, %v6311, %v3226
      %v6348 = vsel %vm2152, %v6312, %v4728
      %v6349 = vsel %vm2152, %v6313, %v4730
      %v6350 = vsel %vm2152, %v6314, %v4732
      %v6351 = vsel %vm2152, %v6315, %v4734
      %v6352 = vsel %vm2152, %v6316, %v4736
      %v6353 = vsel %vm2152, %v6317, %v4738
      %v6354 = vsel %vm2152, %v6318, %v5836
      %v6355 = vsel %vm2152, %v6319, %v5838
      %v6356 = vsel %vm2152, %v6320, %v5840
      %v6357 = vsel %vm2152, %v6321, %v5842
      %v6358 = vsel %vm2152, %v6322, %v5844
      %v6359 = vsel %vm2152, %v6323, %v5846
      %v6360 = vsel %vm2177, %v6324, %v1516
      %v6361 = vsel %vm2177, %v6325, %v1518
      %v6362 = vsel %vm2177, %v6326, %v3262
      %v6363 = vsel %vm2177, %v6327, %v1520
      %v6364 = vsel %vm2177, %v6328, %v1522
      %v6365 = vsel %vm2177, %v6329, %v3266
      %v6366 = vsel %vm2177, %v6330, %v1524
      %v6367 = vsel %vm2177, %v6331, %v1526
      %v6368 = vsel %vm2177, %v6332, %v3270
      %v6369 = vsel %vm2177, %v6333, %v1528
      %v6370 = vsel %vm2177, %v6334, %v1530
      %v6371 = vsel %vm2177, %v6335, %v3274
      %v6372 = vsel %vm2177, %v6336, %v1532
      %v6373 = vsel %vm2177, %v6337, %v1534
      %v6374 = vsel %vm2177, %v6338, %v3278
      %v6375 = vsel %vm2177, %v6339, %v1536
      %v6376 = vsel %vm2177, %v6340, %v1538
      %v6377 = vsel %vm2177, %v6341, %v3282
      %v6378 = vsel %vm2177, %v6342, %v1540
      %v6379 = vsel %vm2177, %v6343, %v1542
      %v6380 = vsel %vm2177, %v6344, %v3286
      %v6381 = vsel %vm2177, %v6345, %v4751
      %v6382 = vsel %vm2177, %v6346, %v3290
      %v6383 = vsel %vm2177, %v6347, %v3292
      %v6384 = vsel %vm2177, %v6348, %v4753
      %v6385 = vsel %vm2177, %v6349, %v4755
      %v6386 = vsel %vm2177, %v6350, %v4757
      %v6387 = vsel %vm2177, %v6351, %v4759
      %v6388 = vsel %vm2177, %v6352, %v4761
      %v6389 = vsel %vm2177, %v6353, %v4763
      %v6390 = vsel %vm2177, %v6354, %v5859
      %v6391 = vsel %vm2177, %v6355, %v5861
      %v6392 = vsel %vm2177, %v6356, %v5863
      %v6393 = vsel %vm2177, %v6357, %v5865
      %v6394 = vsel %vm2177, %v6358, %v5867
      %v6395 = vsel %vm2177, %v6359, %v5869
      %v6396 = vsel %vm2202, %v6360, %v1593
      %v6397 = vsel %vm2202, %v6361, %v1595
      %v6398 = vsel %vm2202, %v6362, %v4781
      %v6399 = vsel %vm2202, %v6363, %v1597
      %v6400 = vsel %vm2202, %v6364, %v1599
      %v6401 = vsel %vm2202, %v6365, %v4783
      %v6402 = vsel %vm2202, %v6366, %v1601
      %v6403 = vsel %vm2202, %v6367, %v1603
      %v6404 = vsel %vm2202, %v6368, %v4785
      %v6405 = vsel %vm2202, %v6369, %v1605
      %v6406 = vsel %vm2202, %v6370, %v1607
      %v6407 = vsel %vm2202, %v6371, %v4787
      %v6408 = vsel %vm2202, %v6372, %v1609
      %v6409 = vsel %vm2202, %v6373, %v1611
      %v6410 = vsel %vm2202, %v6374, %v4789
      %v6411 = vsel %vm2202, %v6375, %v1613
      %v6412 = vsel %vm2202, %v6376, %v1615
      %v6413 = vsel %vm2202, %v6377, %v4791
      %v6414 = vsel %vm2202, %v6378, %v1617
      %v6415 = vsel %vm2202, %v6379, %v1619
      %v6416 = vsel %vm2202, %v6380, %v4793
      %v6417 = vsel %vm2202, %v6381, %v4795
      %v6418 = vsel %vm2202, %v6382, %v4797
      %v6419 = vsel %vm2202, %v6383, %v4799
      %v6420 = vsel %vm2202, %v6384, %v4801
      %v6421 = vsel %vm2202, %v6385, %v4803
      %v6422 = vsel %vm2202, %v6386, %v4805
      %v6423 = vsel %vm2202, %v6387, %v4807
      %v6424 = vsel %vm2202, %v6388, %v4809
      %v6425 = vsel %vm2202, %v6389, %v4811
      %v6426 = vsel %vm2202, %v6390, %v5882
      %v6427 = vsel %vm2202, %v6391, %v5884
      %v6428 = vsel %vm2202, %v6392, %v5886
      %v6429 = vsel %vm2202, %v6393, %v5888
      %v6430 = vsel %vm2202, %v6394, %v5890
      %v6431 = vsel %vm2202, %v6395, %v5892
      %v6432 = vsel %vm2227, %v6396, %v1670
      %v6433 = vsel %vm2227, %v6397, %v1672
      %v6434 = vsel %vm2227, %v6398, %v4843
      %v6435 = vsel %vm2227, %v6399, %v1674
      %v6436 = vsel %vm2227, %v6400, %v1676
      %v6437 = vsel %vm2227, %v6401, %v4847
      %v6438 = vsel %vm2227, %v6402, %v1678
      %v6439 = vsel %vm2227, %v6403, %v1680
      %v6440 = vsel %vm2227, %v6404, %v4851
      %v6441 = vsel %vm2227, %v6405, %v1682
      %v6442 = vsel %vm2227, %v6406, %v1684
      %v6443 = vsel %vm2227, %v6407, %v4855
      %v6444 = vsel %vm2227, %v6408, %v1686
      %v6445 = vsel %vm2227, %v6409, %v1688
      %v6446 = vsel %vm2227, %v6410, %v4859
      %v6447 = vsel %vm2227, %v6411, %v1690
      %v6448 = vsel %vm2227, %v6412, %v1692
      %v6449 = vsel %vm2227, %v6413, %v4863
      %v6450 = vsel %vm2227, %v6414, %v1694
      %v6451 = vsel %vm2227, %v6415, %v1696
      %v6452 = vsel %vm2227, %v6416, %v4867
      %v6453 = vsel %vm2227, %v6417, %v5905
      %v6454 = vsel %vm2227, %v6418, %v4871
      %v6455 = vsel %vm2227, %v6419, %v4873
      %v6456 = vsel %vm2227, %v6420, %v5907
      %v6457 = vsel %vm2227, %v6421, %v4877
      %v6458 = vsel %vm2227, %v6422, %v4879
      %v6459 = vsel %vm2227, %v6423, %v5909
      %v6460 = vsel %vm2227, %v6424, %v4883
      %v6461 = vsel %vm2227, %v6425, %v4885
      %v6462 = vsel %vm2227, %v6426, %v5911
      %v6463 = vsel %vm2227, %v6427, %v5913
      %v6464 = vsel %vm2227, %v6428, %v5915
      %v6465 = vsel %vm2227, %v6429, %v5917
      %v6466 = vsel %vm2227, %v6430, %v5919
      %v6467 = vsel %vm2227, %v6431, %v5921
      %v6468 = vsel %vm2252, %v6432, %v1747
      %v6469 = vsel %vm2252, %v6433, %v1749
      %v6470 = vsel %vm2252, %v6434, %v5937
      %v6471 = vsel %vm2252, %v6435, %v1751
      %v6472 = vsel %vm2252, %v6436, %v1753
      %v6473 = vsel %vm2252, %v6437, %v5939
      %v6474 = vsel %vm2252, %v6438, %v1755
      %v6475 = vsel %vm2252, %v6439, %v1757
      %v6476 = vsel %vm2252, %v6440, %v5941
      %v6477 = vsel %vm2252, %v6441, %v1759
      %v6478 = vsel %vm2252, %v6442, %v1761
      %v6479 = vsel %vm2252, %v6443, %v5943
      %v6480 = vsel %vm2252, %v6444, %v1763
      %v6481 = vsel %vm2252, %v6445, %v1765
      %v6482 = vsel %vm2252, %v6446, %v5945
      %v6483 = vsel %vm2252, %v6447, %v1767
      %v6484 = vsel %vm2252, %v6448, %v1769
      %v6485 = vsel %vm2252, %v6449, %v5947
      %v6486 = vsel %vm2252, %v6450, %v1771
      %v6487 = vsel %vm2252, %v6451, %v1773
      %v6488 = vsel %vm2252, %v6452, %v5949
      %v6489 = vsel %vm2252, %v6453, %v5951
      %v6490 = vsel %vm2252, %v6454, %v5953
      %v6491 = vsel %vm2252, %v6455, %v5955
      %v6492 = vsel %vm2252, %v6456, %v5957
      %v6493 = vsel %vm2252, %v6457, %v5959
      %v6494 = vsel %vm2252, %v6458, %v5961
      %v6495 = vsel %vm2252, %v6459, %v5963
      %v6496 = vsel %vm2252, %v6460, %v5965
      %v6497 = vsel %vm2252, %v6461, %v5967
      %v6498 = vsel %vm2252, %v6462, %v5969
      %v6499 = vsel %vm2252, %v6463, %v5971
      %v6500 = vsel %vm2252, %v6464, %v5973
      %v6501 = vsel %vm2252, %v6465, %v5975
      %v6502 = vsel %vm2252, %v6466, %v5977
      %v6503 = vsel %vm2252, %v6467, %v5979
      %v6504 = vsel %vm2277, %v6468, %v6005
      %v6505 = vsel %vm2277, %v6469, %v1826
      %v6506 = vsel %vm2277, %v6470, %v6007
      %v6507 = vsel %vm2277, %v6471, %v6009
      %v6508 = vsel %vm2277, %v6472, %v1830
      %v6509 = vsel %vm2277, %v6473, %v6011
      %v6510 = vsel %vm2277, %v6474, %v6013
      %v6511 = vsel %vm2277, %v6475, %v1834
      %v6512 = vsel %vm2277, %v6476, %v6015
      %v6513 = vsel %vm2277, %v6477, %v6017
      %v6514 = vsel %vm2277, %v6478, %v1838
      %v6515 = vsel %vm2277, %v6479, %v6019
      %v6516 = vsel %vm2277, %v6480, %v6021
      %v6517 = vsel %vm2277, %v6481, %v1842
      %v6518 = vsel %vm2277, %v6482, %v6023
      %v6519 = vsel %vm2277, %v6483, %v6025
      %v6520 = vsel %vm2277, %v6484, %v1846
      %v6521 = vsel %vm2277, %v6485, %v6027
      %v6522 = vsel %vm2277, %v6486, %v6029
      %v6523 = vsel %vm2277, %v6487, %v1850
      %v6524 = vsel %vm2277, %v6488, %v6031
      %v6525 = vsel %vm2277, %v6489, %v6033
      %v6526 = vsel %vm2277, %v6490, %v6035
      %v6527 = vsel %vm2277, %v6491, %v6037
      %v6528 = vsel %vm2277, %v6492, %v6039
      %v6529 = vsel %vm2277, %v6493, %v6041
      %v6530 = vsel %vm2277, %v6494, %v6043
      %v6531 = vsel %vm2277, %v6495, %v6045
      %v6532 = vsel %vm2277, %v6496, %v6047
      %v6533 = vsel %vm2277, %v6497, %v6049
      %v6534 = vsel %vm2277, %v6498, %v6051
      %v6535 = vsel %vm2277, %v6499, %v6053
      %v6536 = vsel %vm2277, %v6500, %v6055
      %v6537 = vsel %vm2277, %v6501, %v6057
      %v6538 = vsel %vm2277, %v6502, %v6059
      %v6539 = vsel %vm2277, %v6503, %v6061
      %v6540 = vsel %vm2302, %v6504, %v3801
      %v6541 = vsel %vm2302, %v6505, %v3803
      %v6542 = vsel %vm2302, %v6506, %v6097
      %v6543 = vsel %vm2302, %v6507, %v3807
      %v6544 = vsel %vm2302, %v6508, %v3809
      %v6545 = vsel %vm2302, %v6509, %v6099
      %v6546 = vsel %vm2302, %v6510, %v3813
      %v6547 = vsel %vm2302, %v6511, %v3815
      %v6548 = vsel %vm2302, %v6512, %v6101
      %v6549 = vsel %vm2302, %v6513, %v3819
      %v6550 = vsel %vm2302, %v6514, %v3821
      %v6551 = vsel %vm2302, %v6515, %v6103
      %v6552 = vsel %vm2302, %v6516, %v3825
      %v6553 = vsel %vm2302, %v6517, %v3827
      %v6554 = vsel %vm2302, %v6518, %v6105
      %v6555 = vsel %vm2302, %v6519, %v3831
      %v6556 = vsel %vm2302, %v6520, %v3833
      %v6557 = vsel %vm2302, %v6521, %v6107
      %v6558 = vsel %vm2302, %v6522, %v3837
      %v6559 = vsel %vm2302, %v6523, %v3839
      %v6560 = vsel %vm2302, %v6524, %v6109
      %v6561 = vsel %vm2302, %v6525, %v3843
      %v6562 = vsel %vm2302, %v6526, %v3845
      %v6563 = vsel %vm2302, %v6527, %v6111
      %v6564 = vsel %vm2302, %v6528, %v4996
      %v6565 = vsel %vm2302, %v6529, %v4998
      %v6566 = vsel %vm2302, %v6530, %v6113
      %v6567 = vsel %vm2302, %v6531, %v5002
      %v6568 = vsel %vm2302, %v6532, %v5004
      %v6569 = vsel %vm2302, %v6533, %v6115
      %v6570 = vsel %vm2302, %v6534, %v6117
      %v6571 = vsel %vm2302, %v6535, %v6119
      %v6572 = vsel %vm2302, %v6536, %v6121
      %v6573 = vsel %vm2302, %v6537, %v6123
      %v6574 = vsel %vm2302, %v6538, %v6125
      %v6575 = vsel %vm2302, %v6539, %v6127
      %v6577 = vrot.slane %v370, 1
      %v6578 = vrot.slane %v371, 1
      %v6579 = vsel %vm412, %v6577, %v6578
      %v6580 = vrot.slane %v372, 1
      %v6581 = vsel %vm412, %v6578, %v6580
      %6582 = vrot.lane.b32.xlu0 %v5855, 3
      %v6583 = vpop.permute.xlu0 %6582
      %6584 = vrot.lane.b32.xlu0 %v5857, 3
      %v6585 = vpop.permute.xlu0 %6584
      %6586 = vrot.lane.b32.xlu0 %v5856, 3
      %v6587 = vpop.permute.xlu0 %6586
      %6588 = vrot.lane.b32.xlu0 %v6579, 3
      %v6589 = vpop.permute.xlu0 %6588
      %6590 = vrot.lane.b32.xlu0 %v6581, 3
      %v6591 = vpop.permute.xlu0 %6590
      %6592 = vrot.lane.b32.xlu0 %v6580, 3
      %v6593 = vpop.permute.xlu0 %6592
      %v6600 = vrot.slane %v370, 2
      %v6601 = vrot.slane %v371, 2
      %v6602 = vsel %vm545, %v6600, %v6601
      %v6603 = vrot.slane %v372, 2
      %v6604 = vsel %vm545, %v6601, %v6603
      %6605 = vrot.lane.b32.xlu0 %v5878, 6
      %v6606 = vpop.permute.xlu0 %6605
      %6607 = vrot.lane.b32.xlu0 %v5880, 6
      %v6608 = vpop.permute.xlu0 %6607
      %6609 = vrot.lane.b32.xlu0 %v5879, 6
      %v6610 = vpop.permute.xlu0 %6609
      %6611 = vrot.lane.b32.xlu0 %v6602, 6
      %v6612 = vpop.permute.xlu0 %6611
      %6613 = vrot.lane.b32.xlu0 %v6604, 6
      %v6614 = vpop.permute.xlu0 %6613
      %6615 = vrot.lane.b32.xlu0 %v6603, 6
      %v6616 = vpop.permute.xlu0 %6615
      %v6623 = vrot.slane %v370, 3
      %v6624 = vrot.slane %v371, 3
      %v6625 = vsel %vm678, %v6623, %v6624
      %v6626 = vrot.slane %v372, 3
      %v6627 = vsel %vm678, %v6624, %v6626
      %6628 = vrot.lane.b32.xlu0 %v5901, 9
      %v6629 = vpop.permute.xlu0 %6628
      %6630 = vrot.lane.b32.xlu0 %v5903, 9
      %v6631 = vpop.permute.xlu0 %6630
      %6632 = vrot.lane.b32.xlu0 %v5902, 9
      %v6633 = vpop.permute.xlu0 %6632
      %6634 = vrot.lane.b32.xlu0 %v6625, 9
      %v6635 = vpop.permute.xlu0 %6634
      %6636 = vrot.lane.b32.xlu0 %v6627, 9
      %v6637 = vpop.permute.xlu0 %6636
      %6638 = vrot.lane.b32.xlu0 %v6626, 9
      %v6639 = vpop.permute.xlu0 %6638
      %v6646 = vrot.slane %v370, 4
      %v6647 = vrot.slane %v371, 4
      %v6648 = vsel %vm811, %v6646, %v6647
      %v6649 = vrot.slane %v372, 4
      %v6650 = vsel %vm811, %v6647, %v6649
      %6651 = vrot.lane.b32.xlu0 %v5933, 12
      %v6652 = vpop.permute.xlu0 %6651
      %6653 = vrot.lane.b32.xlu0 %v5935, 12
      %v6654 = vpop.permute.xlu0 %6653
      %6655 = vrot.lane.b32.xlu0 %v5934, 12
      %v6656 = vpop.permute.xlu0 %6655
      %6657 = vrot.lane.b32.xlu0 %v6648, 12
      %v6658 = vpop.permute.xlu0 %6657
      %6659 = vrot.lane.b32.xlu0 %v6650, 12
      %v6660 = vpop.permute.xlu0 %6659
      %6661 = vrot.lane.b32.xlu0 %v6649, 12
      %v6662 = vpop.permute.xlu0 %6661
      %v6669 = vrot.slane %v372, 5
      %v6670 = vsel %vm944, %v6094, %v6669
      %6671 = vrot.lane.b32.xlu0 %v1800, 15
      %v6672 = vpop.permute.xlu0 %6671
      %6673 = vrot.lane.b32.xlu0 %v2857, 15
      %v6674 = vpop.permute.xlu0 %6673
      %6675 = vrot.lane.b32.xlu0 %v3773, 15
      %v6676 = vpop.permute.xlu0 %6675
      %6677 = vrot.lane.b32.xlu0 %v4650, 15
      %v6678 = vpop.permute.xlu0 %6677
      %6679 = vrot.lane.b32.xlu0 %v4992, 15
      %v6680 = vpop.permute.xlu0 %6679
      %6681 = vrot.lane.b32.xlu0 %v5729, 15
      %v6682 = vpop.permute.xlu0 %6681
      %6683 = vrot.lane.b32.xlu0 %v6003, 15
      %v6684 = vpop.permute.xlu0 %6683
      %6685 = vrot.lane.b32.xlu0 %v6002, 15
      %v6686 = vpop.permute.xlu0 %6685
      %6687 = vrot.lane.b32.xlu0 %v6095, 15
      %v6688 = vpop.permute.xlu0 %6687
      %6689 = vrot.lane.b32.xlu0 %v6670, 15
      %v6690 = vpop.permute.xlu0 %6689
      %6691 = vrot.lane.b32.xlu0 %v6669, 15
      %v6692 = vpop.permute.xlu0 %6691
      %v6704 = vrot.slane %v370, 6
      %v6705 = vrot.slane %v371, 6
      %v6706 = vsel %vm1077, %v6704, %v6705
      %v6707 = vrot.slane %v372, 6
      %v6708 = vsel %vm1077, %v6705, %v6707
      %6709 = vrot.lane.b32.xlu0 %v1116, 18
      %v6710 = vpop.permute.xlu0 %6709
      %6711 = vrot.lane.b32.xlu0 %v1121, 18
      %v6712 = vpop.permute.xlu0 %6711
      %6713 = vrot.lane.b32.xlu0 %v1126, 18
      %v6714 = vpop.permute.xlu0 %6713
      %6715 = vrot.lane.b32.xlu0 %v1131, 18
      %v6716 = vpop.permute.xlu0 %6715
      %6717 = vrot.lane.b32.xlu0 %v1136, 18
      %v6718 = vpop.permute.xlu0 %6717
      %6719 = vrot.lane.b32.xlu0 %v1877, 18
      %v6720 = vpop.permute.xlu0 %6719
      %6721 = vrot.lane.b32.xlu0 %v1879, 18
      %v6722 = vpop.permute.xlu0 %6721
      %6723 = vrot.lane.b32.xlu0 %v1878, 18
      %v6724 = vpop.permute.xlu0 %6723
      %6725 = vrot.lane.b32.xlu0 %v2970, 18
      %v6726 = vpop.permute.xlu0 %6725
      %6727 = vrot.lane.b32.xlu0 %v2972, 18
      %v6728 = vpop.permute.xlu0 %6727
      %6729 = vrot.lane.b32.xlu0 %v2971, 18
      %v6730 = vpop.permute.xlu0 %6729
      %6731 = vrot.lane.b32.xlu0 %v4673, 18
      %v6732 = vpop.permute.xlu0 %6731
      %6733 = vrot.lane.b32.xlu0 %v4675, 18
      %v6734 = vpop.permute.xlu0 %6733
      %6735 = vrot.lane.b32.xlu0 %v4674, 18
      %v6736 = vpop.permute.xlu0 %6735
      %6737 = vrot.lane.b32.xlu0 %v4678, 18
      %v6738 = vpop.permute.xlu0 %6737
      %6739 = vrot.lane.b32.xlu0 %v4680, 18
      %v6740 = vpop.permute.xlu0 %6739
      %6741 = vrot.lane.b32.xlu0 %v4679, 18
      %v6742 = vpop.permute.xlu0 %6741
      %6743 = vrot.lane.b32.xlu0 %v5781, 18
      %v6744 = vpop.permute.xlu0 %6743
      %6745 = vrot.lane.b32.xlu0 %v5783, 18
      %v6746 = vpop.permute.xlu0 %6745
      %6747 = vrot.lane.b32.xlu0 %v5782, 18
      %v6748 = vpop.permute.xlu0 %6747
      %6749 = vrot.lane.b32.xlu0 %v5786, 18
      %v6750 = vpop.permute.xlu0 %6749
      %6751 = vrot.lane.b32.xlu0 %v5788, 18
      %v6752 = vpop.permute.xlu0 %6751
      %6753 = vrot.lane.b32.xlu0 %v5787, 18
      %v6754 = vpop.permute.xlu0 %6753
      %6755 = vrot.lane.b32.xlu0 %v6706, 18
      %v6756 = vpop.permute.xlu0 %6755
      %6757 = vrot.lane.b32.xlu0 %v6708, 18
      %v6758 = vpop.permute.xlu0 %6757
      %6759 = vrot.lane.b32.xlu0 %v6707, 18
      %v6760 = vpop.permute.xlu0 %6759
      %v6787 = vrot.slane %v371, 7
      %v6788 = vrot.slane %v372, 7
      %v6789 = vsel %vm1210, %v6787, %v6788
      %6790 = vrot.lane.b32.xlu0 %v1247, 21
      %v6791 = vpop.permute.xlu0 %6790
      %6792 = vrot.lane.b32.xlu0 %v1249, 21
      %v6793 = vpop.permute.xlu0 %6792
      %6794 = vrot.lane.b32.xlu0 %v1252, 21
      %v6795 = vpop.permute.xlu0 %6794
      %6796 = vrot.lane.b32.xlu0 %v1254, 21
      %v6797 = vpop.permute.xlu0 %6796
      %6798 = vrot.lane.b32.xlu0 %v1257, 21
      %v6799 = vpop.permute.xlu0 %6798
      %6800 = vrot.lane.b32.xlu0 %v1259, 21
      %v6801 = vpop.permute.xlu0 %6800
      %6802 = vrot.lane.b32.xlu0 %v1262, 21
      %v6803 = vpop.permute.xlu0 %6802
      %6804 = vrot.lane.b32.xlu0 %v1264, 21
      %v6805 = vpop.permute.xlu0 %6804
      %6806 = vrot.lane.b32.xlu0 %v1267, 21
      %v6807 = vpop.permute.xlu0 %6806
      %6808 = vrot.lane.b32.xlu0 %v1269, 21
      %v6809 = vpop.permute.xlu0 %6808
      %6810 = vrot.lane.b32.xlu0 %v3082, 21
      %v6811 = vpop.permute.xlu0 %6810
      %6812 = vrot.lane.b32.xlu0 %v3085, 21
      %v6813 = vpop.permute.xlu0 %6812
      %6814 = vrot.lane.b32.xlu0 %v3084, 21
      %v6815 = vpop.permute.xlu0 %6814
      %6816 = vrot.lane.b32.xlu0 %v3087, 21
      %v6817 = vpop.permute.xlu0 %6816
      %6818 = vrot.lane.b32.xlu0 %v3090, 21
      %v6819 = vpop.permute.xlu0 %6818
      %6820 = vrot.lane.b32.xlu0 %v3089, 21
      %v6821 = vpop.permute.xlu0 %6820
      %6822 = vrot.lane.b32.xlu0 %v4700, 21
      %v6823 = vpop.permute.xlu0 %6822
      %6824 = vrot.lane.b32.xlu0 %v4703, 21
      %v6825 = vpop.permute.xlu0 %6824
      %6826 = vrot.lane.b32.xlu0 %v4702, 21
      %v6827 = vpop.permute.xlu0 %6826
      %6828 = vrot.lane.b32.xlu0 %v4705, 21
      %v6829 = vpop.permute.xlu0 %6828
      %6830 = vrot.lane.b32.xlu0 %v4708, 21
      %v6831 = vpop.permute.xlu0 %6830
      %6832 = vrot.lane.b32.xlu0 %v4707, 21
      %v6833 = vpop.permute.xlu0 %6832
      %6834 = vrot.lane.b32.xlu0 %v5808, 21
      %v6835 = vpop.permute.xlu0 %6834
      %6836 = vrot.lane.b32.xlu0 %v5811, 21
      %v6837 = vpop.permute.xlu0 %6836
      %6838 = vrot.lane.b32.xlu0 %v5810, 21
      %v6839 = vpop.permute.xlu0 %6838
      %6840 = vrot.lane.b32.xlu0 %v5813, 21
      %v6841 = vpop.permute.xlu0 %6840
      %6842 = vrot.lane.b32.xlu0 %v5816, 21
      %v6843 = vpop.permute.xlu0 %6842
      %6844 = vrot.lane.b32.xlu0 %v5815, 21
      %v6845 = vpop.permute.xlu0 %6844
      %6846 = vrot.lane.b32.xlu0 %v6787, 21
      %v6847 = vpop.permute.xlu0 %6846
      %6848 = vrot.lane.b32.xlu0 %v6789, 21
      %v6849 = vpop.permute.xlu0 %6848
      %6850 = vrot.lane.b32.xlu0 %v6788, 21
      %v6851 = vpop.permute.xlu0 %6850
      %v6885 = vrot.slane %v370, 7
      %v6886 = vsel %vm1210, %v6885, %v6787
      %v6887 = vrot.slane %v373, 7
      %v6888 = vrot.slane %v374, 7
      %v6889 = vsel %vm1210, %v6887, %v6888
      %6890 = vrot.lane.b32.xlu0 %v1252, 24
      %v6891 = vpop.permute.xlu0 %6890
      %6892 = vrot.lane.b32.xlu0 %v1257, 24
      %v6893 = vpop.permute.xlu0 %6892
      %6894 = vrot.lane.b32.xlu0 %v1262, 24
      %v6895 = vpop.permute.xlu0 %6894
      %6896 = vrot.lane.b32.xlu0 %v1267, 24
      %v6897 = vpop.permute.xlu0 %6896
      %6898 = vrot.lane.b32.xlu0 %v3082, 24
      %v6899 = vpop.permute.xlu0 %6898
      %6900 = vrot.lane.b32.xlu0 %v3087, 24
      %v6901 = vpop.permute.xlu0 %6900
      %6902 = vrot.lane.b32.xlu0 %v4700, 24
      %v6903 = vpop.permute.xlu0 %6902
      %6904 = vrot.lane.b32.xlu0 %v4705, 24
      %v6905 = vpop.permute.xlu0 %6904
      %6906 = vrot.lane.b32.xlu0 %v5808, 24
      %v6907 = vpop.permute.xlu0 %6906
      %6908 = vrot.lane.b32.xlu0 %v5813, 24
      %v6909 = vpop.permute.xlu0 %6908
      %6910 = vrot.lane.b32.xlu0 %v6885, 24
      %v6911 = vpop.permute.xlu0 %6910
      %6912 = vrot.lane.b32.xlu0 %v6886, 24
      %v6913 = vpop.permute.xlu0 %6912
      %6914 = vrot.lane.b32.xlu0 %v6787, 24
      %v6915 = vpop.permute.xlu0 %6914
      %6916 = vrot.lane.b32.xlu0 %v6887, 24
      %v6917 = vpop.permute.xlu0 %6916
      %6918 = vrot.lane.b32.xlu0 %v6889, 24
      %v6919 = vpop.permute.xlu0 %6918
      %6920 = vrot.lane.b32.xlu0 %v6888, 24
      %v6921 = vpop.permute.xlu0 %6920
      %6939 = vrot.lane.b32.xlu0 %v370, 27
      %v6940 = vpop.permute.xlu0 %6939
      %6941 = vrot.lane.b32.xlu0 %v371, 27
      %v6942 = vpop.permute.xlu0 %6941
      %6943 = vrot.lane.b32.xlu0 %v372, 27
      %v6944 = vpop.permute.xlu0 %6943
      %6945 = vrot.lane.b32.xlu0 %v373, 27
      %v6946 = vpop.permute.xlu0 %6945
      %6947 = vrot.lane.b32.xlu0 %v374, 27
      %v6948 = vpop.permute.xlu0 %6947
      %6949 = vrot.lane.b32.xlu0 %v375, 27
      %v6950 = vpop.permute.xlu0 %6949
      %v6957 = vrot.slane %v373, 1
      %v6958 = vrot.slane %v374, 1
      %v6959 = vsel %vm412, %v6957, %v6958
      %v6960 = vrot.slane %v375, 1
      %v6961 = vsel %vm412, %v6958, %v6960
      %6962 = vrot.lane.b32.xlu0 %v6579, 30
      %v6963 = vpop.permute.xlu0 %6962
      %6964 = vrot.lane.b32.xlu0 %v6581, 30
      %v6965 = vpop.permute.xlu0 %6964
      %6966 = vrot.lane.b32.xlu0 %v6580, 30
      %v6967 = vpop.permute.xlu0 %6966
      %6968 = vrot.lane.b32.xlu0 %v6959, 30
      %v6969 = vpop.permute.xlu0 %6968
      %6970 = vrot.lane.b32.xlu0 %v6961, 30
      %v6971 = vpop.permute.xlu0 %6970
      %6972 = vrot.lane.b32.xlu0 %v6960, 30
      %v6973 = vpop.permute.xlu0 %6972
      %v6980 = vrot.slane %v373, 2
      %v6981 = vrot.slane %v374, 2
      %v6982 = vsel %vm545, %v6980, %v6981
      %v6983 = vrot.slane %v375, 2
      %v6984 = vsel %vm545, %v6981, %v6983
      %6985 = vrot.lane.b32.xlu0 %v6602, 33
      %v6986 = vpop.permute.xlu0 %6985
      %6987 = vrot.lane.b32.xlu0 %v6604, 33
      %v6988 = vpop.permute.xlu0 %6987
      %6989 = vrot.lane.b32.xlu0 %v6603, 33
      %v6990 = vpop.permute.xlu0 %6989
      %6991 = vrot.lane.b32.xlu0 %v6982, 33
      %v6992 = vpop.permute.xlu0 %6991
      %6993 = vrot.lane.b32.xlu0 %v6984, 33
      %v6994 = vpop.permute.xlu0 %6993
      %6995 = vrot.lane.b32.xlu0 %v6983, 33
      %v6996 = vpop.permute.xlu0 %6995
      %v7003 = vrot.slane %v373, 3
      %v7004 = vrot.slane %v374, 3
      %v7005 = vsel %vm678, %v7003, %v7004
      %v7006 = vrot.slane %v375, 3
      %v7007 = vsel %vm678, %v7004, %v7006
      %7008 = vrot.lane.b32.xlu0 %v6625, 36
      %v7009 = vpop.permute.xlu0 %7008
      %7010 = vrot.lane.b32.xlu0 %v6627, 36
      %v7011 = vpop.permute.xlu0 %7010
      %7012 = vrot.lane.b32.xlu0 %v6626, 36
      %v7013 = vpop.permute.xlu0 %7012
      %7014 = vrot.lane.b32.xlu0 %v7005, 36
      %v7015 = vpop.permute.xlu0 %7014
      %7016 = vrot.lane.b32.xlu0 %v7007, 36
      %v7017 = vpop.permute.xlu0 %7016
      %7018 = vrot.lane.b32.xlu0 %v7006, 36
      %v7019 = vpop.permute.xlu0 %7018
      %v7026 = vrot.slane %v373, 4
      %v7027 = vrot.slane %v374, 4
      %v7028 = vsel %vm811, %v7026, %v7027
      %v7029 = vrot.slane %v375, 4
      %v7030 = vsel %vm811, %v7027, %v7029
      %7031 = vrot.lane.b32.xlu0 %v6648, 39
      %v7032 = vpop.permute.xlu0 %7031
      %7033 = vrot.lane.b32.xlu0 %v6650, 39
      %v7034 = vpop.permute.xlu0 %7033
      %7035 = vrot.lane.b32.xlu0 %v6649, 39
      %v7036 = vpop.permute.xlu0 %7035
      %7037 = vrot.lane.b32.xlu0 %v7028, 39
      %v7038 = vpop.permute.xlu0 %7037
      %7039 = vrot.lane.b32.xlu0 %v7030, 39
      %v7040 = vpop.permute.xlu0 %7039
      %7041 = vrot.lane.b32.xlu0 %v7029, 39
      %v7042 = vpop.permute.xlu0 %7041
      %v7049 = vrot.slane %v373, 5
      %v7050 = vrot.slane %v374, 5
      %v7051 = vsel %vm944, %v7049, %v7050
      %v7052 = vrot.slane %v375, 5
      %v7053 = vsel %vm944, %v7050, %v7052
      %7054 = vrot.lane.b32.xlu0 %v2857, 42
      %v7055 = vpop.permute.xlu0 %7054
      %7056 = vrot.lane.b32.xlu0 %v3773, 42
      %v7057 = vpop.permute.xlu0 %7056
      %7058 = vrot.lane.b32.xlu0 %v4650, 42
      %v7059 = vpop.permute.xlu0 %7058
      %7060 = vrot.lane.b32.xlu0 %v4992, 42
      %v7061 = vpop.permute.xlu0 %7060
      %7062 = vrot.lane.b32.xlu0 %v5729, 42
      %v7063 = vpop.permute.xlu0 %7062
      %7064 = vrot.lane.b32.xlu0 %v6095, 42
      %v7065 = vpop.permute.xlu0 %7064
      %7066 = vrot.lane.b32.xlu0 %v6670, 42
      %v7067 = vpop.permute.xlu0 %7066
      %7068 = vrot.lane.b32.xlu0 %v6669, 42
      %v7069 = vpop.permute.xlu0 %7068
      %7070 = vrot.lane.b32.xlu0 %v7051, 42
      %v7071 = vpop.permute.xlu0 %7070
      %7072 = vrot.lane.b32.xlu0 %v7053, 42
      %v7073 = vpop.permute.xlu0 %7072
      %7074 = vrot.lane.b32.xlu0 %v7052, 42
      %v7075 = vpop.permute.xlu0 %7074
      %v7087 = vrot.slane %v373, 6
      %v7088 = vrot.slane %v374, 6
      %v7089 = vsel %vm1077, %v7087, %v7088
      %v7090 = vrot.slane %v375, 6
      %v7091 = vsel %vm1077, %v7088, %v7090
      %7092 = vrot.lane.b32.xlu0 %v1121, 45
      %v7093 = vpop.permute.xlu0 %7092
      %7094 = vrot.lane.b32.xlu0 %v1126, 45
      %v7095 = vpop.permute.xlu0 %7094
      %7096 = vrot.lane.b32.xlu0 %v1131, 45
      %v7097 = vpop.permute.xlu0 %7096
      %7098 = vrot.lane.b32.xlu0 %v1136, 45
      %v7099 = vpop.permute.xlu0 %7098
      %7100 = vrot.lane.b32.xlu0 %v1878, 45
      %v7101 = vpop.permute.xlu0 %7100
      %7102 = vrot.lane.b32.xlu0 %v2970, 45
      %v7103 = vpop.permute.xlu0 %7102
      %7104 = vrot.lane.b32.xlu0 %v2972, 45
      %v7105 = vpop.permute.xlu0 %7104
      %7106 = vrot.lane.b32.xlu0 %v2971, 45
      %v7107 = vpop.permute.xlu0 %7106
      %7108 = vrot.lane.b32.xlu0 %v4673, 45
      %v7109 = vpop.permute.xlu0 %7108
      %7110 = vrot.lane.b32.xlu0 %v4675, 45
      %v7111 = vpop.permute.xlu0 %7110
      %7112 = vrot.lane.b32.xlu0 %v4674, 45
      %v7113 = vpop.permute.xlu0 %7112
      %7114 = vrot.lane.b32.xlu0 %v4678, 45
      %v7115 = vpop.permute.xlu0 %7114
      %7116 = vrot.lane.b32.xlu0 %v4680, 45
      %v7117 = vpop.permute.xlu0 %7116
      %7118 = vrot.lane.b32.xlu0 %v4679, 45
      %v7119 = vpop.permute.xlu0 %7118
      %7120 = vrot.lane.b32.xlu0 %v5781, 45
      %v7121 = vpop.permute.xlu0 %7120
      %7122 = vrot.lane.b32.xlu0 %v5783, 45
      %v7123 = vpop.permute.xlu0 %7122
      %7124 = vrot.lane.b32.xlu0 %v5782, 45
      %v7125 = vpop.permute.xlu0 %7124
      %7126 = vrot.lane.b32.xlu0 %v5786, 45
      %v7127 = vpop.permute.xlu0 %7126
      %7128 = vrot.lane.b32.xlu0 %v5788, 45
      %v7129 = vpop.permute.xlu0 %7128
      %7130 = vrot.lane.b32.xlu0 %v5787, 45
      %v7131 = vpop.permute.xlu0 %7130
      %7132 = vrot.lane.b32.xlu0 %v6706, 45
      %v7133 = vpop.permute.xlu0 %7132
      %7134 = vrot.lane.b32.xlu0 %v6708, 45
      %v7135 = vpop.permute.xlu0 %7134
      %7136 = vrot.lane.b32.xlu0 %v6707, 45
      %v7137 = vpop.permute.xlu0 %7136
      %7138 = vrot.lane.b32.xlu0 %v7089, 45
      %v7139 = vpop.permute.xlu0 %7138
      %7140 = vrot.lane.b32.xlu0 %v7091, 45
      %v7141 = vpop.permute.xlu0 %7140
      %7142 = vrot.lane.b32.xlu0 %v7090, 45
      %v7143 = vpop.permute.xlu0 %7142
      %v7170 = vsel %vm1952, %v367, %v6583
      %v7171 = vsel %vm1952, %v368, %v6585
      %v7172 = vsel %vm1952, %v369, %v6587
      %v7173 = vsel %vm1952, %v370, %v6589
      %v7174 = vsel %vm1952, %v371, %v6591
      %v7175 = vsel %vm1952, %v372, %v6593
      %v7176 = vsel %vm1977, %v7170, %v6606
      %v7177 = vsel %vm1977, %v7171, %v6608
      %v7178 = vsel %vm1977, %v7172, %v6610
      %v7179 = vsel %vm1977, %v7173, %v6612
      %v7180 = vsel %vm1977, %v7174, %v6614
      %v7181 = vsel %vm1977, %v7175, %v6616
      %v7182 = vsel %vm2002, %v7176, %v6629
      %v7183 = vsel %vm2002, %v7177, %v6631
      %v7184 = vsel %vm2002, %v7178, %v6633
      %v7185 = vsel %vm2002, %v7179, %v6635
      %v7186 = vsel %vm2002, %v7180, %v6637
      %v7187 = vsel %vm2002, %v7181, %v6639
      %v7188 = vsel %vm2027, %v7182, %v6652
      %v7189 = vsel %vm2027, %v7183, %v6654
      %v7190 = vsel %vm2027, %v7184, %v6656
      %v7191 = vsel %vm2027, %v7185, %v6658
      %v7192 = vsel %vm2027, %v7186, %v6660
      %v7193 = vsel %vm2027, %v7187, %v6662
      %v7194 = vsel %vm2052, %v6172, %v6672
      %v7195 = vsel %vm2052, %v6175, %v6674
      %v7196 = vsel %vm2052, %v6178, %v6676
      %v7197 = vsel %vm2052, %v6181, %v6678
      %v7198 = vsel %vm2052, %v6184, %v6680
      %v7199 = vsel %vm2052, %v7188, %v6682
      %v7200 = vsel %vm2052, %v7189, %v6684
      %v7201 = vsel %vm2052, %v7190, %v6686
      %v7202 = vsel %vm2052, %v7191, %v6688
      %v7203 = vsel %vm2052, %v7192, %v6690
      %v7204 = vsel %vm2052, %v7193, %v6692
      %v7205 = vsel %vm2077, %v6192, %v6710
      %v7206 = vsel %vm2077, %v6194, %v6712
      %v7207 = vsel %vm2077, %v6196, %v6714
      %v7208 = vsel %vm2077, %v6198, %v6716
      %v7209 = vsel %vm2077, %v6200, %v6718
      %v7210 = vsel %vm2077, %v7194, %v6720
      %v7211 = vsel %vm2077, %v6202, %v6722
      %v7212 = vsel %vm2077, %v6203, %v6724
      %v7213 = vsel %vm2077, %v7195, %v6726
      %v7214 = vsel %vm2077, %v6205, %v6728
      %v7215 = vsel %vm2077, %v6206, %v6730
      %v7216 = vsel %vm2077, %v7196, %v6732
      %v7217 = vsel %vm2077, %v6208, %v6734
      %v7218 = vsel %vm2077, %v6209, %v6736
      %v7219 = vsel %vm2077, %v7197, %v6738
      %v7220 = vsel %vm2077, %v6211, %v6740
      %v7221 = vsel %vm2077, %v6212, %v6742
      %v7222 = vsel %vm2077, %v7198, %v6744
      %v7223 = vsel %vm2077, %v6214, %v6746
      %v7224 = vsel %vm2077, %v6215, %v6748
      %v7225 = vsel %vm2077, %v7199, %v6750
      %v7226 = vsel %vm2077, %v7200, %v6752
      %v7227 = vsel %vm2077, %v7201, %v6754
      %v7228 = vsel %vm2077, %v7202, %v6756
      %v7229 = vsel %vm2077, %v7203, %v6758
      %v7230 = vsel %vm2077, %v7204, %v6760
      %v7231 = vsel %vm2102, %v2092, %v6791
      %v7232 = vsel %vm2102, %v7205, %v6793
      %v7233 = vsel %vm2102, %v2094, %v6795
      %v7234 = vsel %vm2102, %v7206, %v6797
      %v7235 = vsel %vm2102, %v2096, %v6799
      %v7236 = vsel %vm2102, %v7207, %v6801
      %v7237 = vsel %vm2102, %v2098, %v6803
      %v7238 = vsel %vm2102, %v7208, %v6805
      %v7239 = vsel %vm2102, %v2100, %v6807
      %v7240 = vsel %vm2102, %v7209, %v6809
      %v7241 = vsel %vm2102, %v7210, %v6811
      %v7242 = vsel %vm2102, %v7211, %v6813
      %v7243 = vsel %vm2102, %v7212, %v6815
      %v7244 = vsel %vm2102, %v7213, %v6817
      %v7245 = vsel %vm2102, %v7214, %v6819
      %v7246 = vsel %vm2102, %v7215, %v6821
      %v7247 = vsel %vm2102, %v7216, %v6823
      %v7248 = vsel %vm2102, %v7217, %v6825
      %v7249 = vsel %vm2102, %v7218, %v6827
      %v7250 = vsel %vm2102, %v7219, %v6829
      %v7251 = vsel %vm2102, %v7220, %v6831
      %v7252 = vsel %vm2102, %v7221, %v6833
      %v7253 = vsel %vm2102, %v7222, %v6835
      %v7254 = vsel %vm2102, %v7223, %v6837
      %v7255 = vsel %vm2102, %v7224, %v6839
      %v7256 = vsel %vm2102, %v7225, %v6841
      %v7257 = vsel %vm2102, %v7226, %v6843
      %v7258 = vsel %vm2102, %v7227, %v6845
      %v7259 = vsel %vm2102, %v7228, %v6847
      %v7260 = vsel %vm2102, %v7229, %v6849
      %v7261 = vsel %vm2102, %v7230, %v6851
      %v7262 = vsel %vm2127, %v7231, %v3128
      %v7263 = vsel %vm2127, %v2118, %v3130
      %v7264 = vsel %vm2127, %v7232, %v6891
      %v7265 = vsel %vm2127, %v7233, %v3134
      %v7266 = vsel %vm2127, %v2120, %v3136
      %v7267 = vsel %vm2127, %v7234, %v6893
      %v7268 = vsel %vm2127, %v7235, %v3140
      %v7269 = vsel %vm2127, %v2122, %v3142
      %v7270 = vsel %vm2127, %v7236, %v6895
      %v7271 = vsel %vm2127, %v7237, %v3146
      %v7272 = vsel %vm2127, %v2124, %v3148
      %v7273 = vsel %vm2127, %v7238, %v6897
      %v7274 = vsel %vm2127, %v7239, %v3152
      %v7275 = vsel %vm2127, %v2126, %v3154
      %v7276 = vsel %vm2127, %v7240, %v6899
      %v7277 = vsel %vm2127, %v7241, %v3158
      %v7278 = vsel %vm2127, %v7242, %v3160
      %v7279 = vsel %vm2127, %v7243, %v6901
      %v7280 = vsel %vm2127, %v7244, %v4710
      %v7281 = vsel %vm2127, %v7245, %v4712
      %v7282 = vsel %vm2127, %v7246, %v6903
      %v7283 = vsel %vm2127, %v7247, %v4716
      %v7284 = vsel %vm2127, %v7248, %v4718
      %v7285 = vsel %vm2127, %v7249, %v6905
      %v7286 = vsel %vm2127, %v7250, %v5818
      %v7287 = vsel %vm2127, %v7251, %v5820
      %v7288 = vsel %vm2127, %v7252, %v6907
      %v7289 = vsel %vm2127, %v7253, %v5824
      %v7290 = vsel %vm2127, %v7254, %v5826
      %v7291 = vsel %vm2127, %v7255, %v6909
      %v7292 = vsel %vm2127, %v7256, %v6911
      %v7293 = vsel %vm2127, %v7257, %v6913
      %v7294 = vsel %vm2127, %v7258, %v6915
      %v7295 = vsel %vm2127, %v7259, %v6917
      %v7296 = vsel %vm2127, %v7260, %v6919
      %v7297 = vsel %vm2127, %v7261, %v6921
      %v7298 = vsel %vm2152, %v7262, %v1446
      %v7299 = vsel %vm2152, %v7263, %v1448
      %v7300 = vsel %vm2152, %v7264, %v3212
      %v7301 = vsel %vm2152, %v7265, %v1450
      %v7302 = vsel %vm2152, %v7266, %v1452
      %v7303 = vsel %vm2152, %v7267, %v3214
      %v7304 = vsel %vm2152, %v7268, %v1454
      %v7305 = vsel %vm2152, %v7269, %v1456
      %v7306 = vsel %vm2152, %v7270, %v3216
      %v7307 = vsel %vm2152, %v7271, %v1458
      %v7308 = vsel %vm2152, %v7272, %v1460
      %v7309 = vsel %vm2152, %v7273, %v3218
      %v7310 = vsel %vm2152, %v7274, %v1462
      %v7311 = vsel %vm2152, %v7275, %v1464
      %v7312 = vsel %vm2152, %v7276, %v3220
      %v7313 = vsel %vm2152, %v7277, %v3222
      %v7314 = vsel %vm2152, %v7278, %v3224
      %v7315 = vsel %vm2152, %v7279, %v3226
      %v7316 = vsel %vm2152, %v7280, %v4728
      %v7317 = vsel %vm2152, %v7281, %v4730
      %v7318 = vsel %vm2152, %v7282, %v4732
      %v7319 = vsel %vm2152, %v7283, %v4734
      %v7320 = vsel %vm2152, %v7284, %v4736
      %v7321 = vsel %vm2152, %v7285, %v4738
      %v7322 = vsel %vm2152, %v7286, %v5836
      %v7323 = vsel %vm2152, %v7287, %v5838
      %v7324 = vsel %vm2152, %v7288, %v5840
      %v7325 = vsel %vm2152, %v7289, %v5842
      %v7326 = vsel %vm2152, %v7290, %v5844
      %v7327 = vsel %vm2152, %v7291, %v5846
      %v7328 = vsel %vm2152, %v7292, %v6940
      %v7329 = vsel %vm2152, %v7293, %v6942
      %v7330 = vsel %vm2152, %v7294, %v6944
      %v7331 = vsel %vm2152, %v7295, %v6946
      %v7332 = vsel %vm2152, %v7296, %v6948
      %v7333 = vsel %vm2152, %v7297, %v6950
      %v7334 = vsel %vm2177, %v7298, %v1524
      %v7335 = vsel %vm2177, %v7299, %v1526
      %v7336 = vsel %vm2177, %v7300, %v3270
      %v7337 = vsel %vm2177, %v7301, %v1528
      %v7338 = vsel %vm2177, %v7302, %v1530
      %v7339 = vsel %vm2177, %v7303, %v3274
      %v7340 = vsel %vm2177, %v7304, %v1532
      %v7341 = vsel %vm2177, %v7305, %v1534
      %v7342 = vsel %vm2177, %v7306, %v3278
      %v7343 = vsel %vm2177, %v7307, %v1536
      %v7344 = vsel %vm2177, %v7308, %v1538
      %v7345 = vsel %vm2177, %v7309, %v3282
      %v7346 = vsel %vm2177, %v7310, %v1540
      %v7347 = vsel %vm2177, %v7311, %v1542
      %v7348 = vsel %vm2177, %v7312, %v3286
      %v7349 = vsel %vm2177, %v7313, %v4751
      %v7350 = vsel %vm2177, %v7314, %v3290
      %v7351 = vsel %vm2177, %v7315, %v3292
      %v7352 = vsel %vm2177, %v7316, %v4753
      %v7353 = vsel %vm2177, %v7317, %v4755
      %v7354 = vsel %vm2177, %v7318, %v4757
      %v7355 = vsel %vm2177, %v7319, %v4759
      %v7356 = vsel %vm2177, %v7320, %v4761
      %v7357 = vsel %vm2177, %v7321, %v4763
      %v7358 = vsel %vm2177, %v7322, %v5859
      %v7359 = vsel %vm2177, %v7323, %v5861
      %v7360 = vsel %vm2177, %v7324, %v5863
      %v7361 = vsel %vm2177, %v7325, %v5865
      %v7362 = vsel %vm2177, %v7326, %v5867
      %v7363 = vsel %vm2177, %v7327, %v5869
      %v7364 = vsel %vm2177, %v7328, %v6963
      %v7365 = vsel %vm2177, %v7329, %v6965
      %v7366 = vsel %vm2177, %v7330, %v6967
      %v7367 = vsel %vm2177, %v7331, %v6969
      %v7368 = vsel %vm2177, %v7332, %v6971
      %v7369 = vsel %vm2177, %v7333, %v6973
      %v7370 = vsel %vm2202, %v7334, %v1601
      %v7371 = vsel %vm2202, %v7335, %v1603
      %v7372 = vsel %vm2202, %v7336, %v4785
      %v7373 = vsel %vm2202, %v7337, %v1605
      %v7374 = vsel %vm2202, %v7338, %v1607
      %v7375 = vsel %vm2202, %v7339, %v4787
      %v7376 = vsel %vm2202, %v7340, %v1609
      %v7377 = vsel %vm2202, %v7341, %v1611
      %v7378 = vsel %vm2202, %v7342, %v4789
      %v7379 = vsel %vm2202, %v7343, %v1613
      %v7380 = vsel %vm2202, %v7344, %v1615
      %v7381 = vsel %vm2202, %v7345, %v4791
      %v7382 = vsel %vm2202, %v7346, %v1617
      %v7383 = vsel %vm2202, %v7347, %v1619
      %v7384 = vsel %vm2202, %v7348, %v4793
      %v7385 = vsel %vm2202, %v7349, %v4795
      %v7386 = vsel %vm2202, %v7350, %v4797
      %v7387 = vsel %vm2202, %v7351, %v4799
      %v7388 = vsel %vm2202, %v7352, %v4801
      %v7389 = vsel %vm2202, %v7353, %v4803
      %v7390 = vsel %vm2202, %v7354, %v4805
      %v7391 = vsel %vm2202, %v7355, %v4807
      %v7392 = vsel %vm2202, %v7356, %v4809
      %v7393 = vsel %vm2202, %v7357, %v4811
      %v7394 = vsel %vm2202, %v7358, %v5882
      %v7395 = vsel %vm2202, %v7359, %v5884
      %v7396 = vsel %vm2202, %v7360, %v5886
      %v7397 = vsel %vm2202, %v7361, %v5888
      %v7398 = vsel %vm2202, %v7362, %v5890
      %v7399 = vsel %vm2202, %v7363, %v5892
      %v7400 = vsel %vm2202, %v7364, %v6986
      %v7401 = vsel %vm2202, %v7365, %v6988
      %v7402 = vsel %vm2202, %v7366, %v6990
      %v7403 = vsel %vm2202, %v7367, %v6992
      %v7404 = vsel %vm2202, %v7368, %v6994
      %v7405 = vsel %vm2202, %v7369, %v6996
      %v7406 = vsel %vm2227, %v7370, %v1678
      %v7407 = vsel %vm2227, %v7371, %v1680
      %v7408 = vsel %vm2227, %v7372, %v4851
      %v7409 = vsel %vm2227, %v7373, %v1682
      %v7410 = vsel %vm2227, %v7374, %v1684
      %v7411 = vsel %vm2227, %v7375, %v4855
      %v7412 = vsel %vm2227, %v7376, %v1686
      %v7413 = vsel %vm2227, %v7377, %v1688
      %v7414 = vsel %vm2227, %v7378, %v4859
      %v7415 = vsel %vm2227, %v7379, %v1690
      %v7416 = vsel %vm2227, %v7380, %v1692
      %v7417 = vsel %vm2227, %v7381, %v4863
      %v7418 = vsel %vm2227, %v7382, %v1694
      %v7419 = vsel %vm2227, %v7383, %v1696
      %v7420 = vsel %vm2227, %v7384, %v4867
      %v7421 = vsel %vm2227, %v7385, %v5905
      %v7422 = vsel %vm2227, %v7386, %v4871
      %v7423 = vsel %vm2227, %v7387, %v4873
      %v7424 = vsel %vm2227, %v7388, %v5907
      %v7425 = vsel %vm2227, %v7389, %v4877
      %v7426 = vsel %vm2227, %v7390, %v4879
      %v7427 = vsel %vm2227, %v7391, %v5909
      %v7428 = vsel %vm2227, %v7392, %v4883
      %v7429 = vsel %vm2227, %v7393, %v4885
      %v7430 = vsel %vm2227, %v7394, %v5911
      %v7431 = vsel %vm2227, %v7395, %v5913
      %v7432 = vsel %vm2227, %v7396, %v5915
      %v7433 = vsel %vm2227, %v7397, %v5917
      %v7434 = vsel %vm2227, %v7398, %v5919
      %v7435 = vsel %vm2227, %v7399, %v5921
      %v7436 = vsel %vm2227, %v7400, %v7009
      %v7437 = vsel %vm2227, %v7401, %v7011
      %v7438 = vsel %vm2227, %v7402, %v7013
      %v7439 = vsel %vm2227, %v7403, %v7015
      %v7440 = vsel %vm2227, %v7404, %v7017
      %v7441 = vsel %vm2227, %v7405, %v7019
      %v7442 = vsel %vm2252, %v7406, %v1755
      %v7443 = vsel %vm2252, %v7407, %v1757
      %v7444 = vsel %vm2252, %v7408, %v5941
      %v7445 = vsel %vm2252, %v7409, %v1759
      %v7446 = vsel %vm2252, %v7410, %v1761
      %v7447 = vsel %vm2252, %v7411, %v5943
      %v7448 = vsel %vm2252, %v7412, %v1763
      %v7449 = vsel %vm2252, %v7413, %v1765
      %v7450 = vsel %vm2252, %v7414, %v5945
      %v7451 = vsel %vm2252, %v7415, %v1767
      %v7452 = vsel %vm2252, %v7416, %v1769
      %v7453 = vsel %vm2252, %v7417, %v5947
      %v7454 = vsel %vm2252, %v7418, %v1771
      %v7455 = vsel %vm2252, %v7419, %v1773
      %v7456 = vsel %vm2252, %v7420, %v5949
      %v7457 = vsel %vm2252, %v7421, %v5951
      %v7458 = vsel %vm2252, %v7422, %v5953
      %v7459 = vsel %vm2252, %v7423, %v5955
      %v7460 = vsel %vm2252, %v7424, %v5957
      %v7461 = vsel %vm2252, %v7425, %v5959
      %v7462 = vsel %vm2252, %v7426, %v5961
      %v7463 = vsel %vm2252, %v7427, %v5963
      %v7464 = vsel %vm2252, %v7428, %v5965
      %v7465 = vsel %vm2252, %v7429, %v5967
      %v7466 = vsel %vm2252, %v7430, %v5969
      %v7467 = vsel %vm2252, %v7431, %v5971
      %v7468 = vsel %vm2252, %v7432, %v5973
      %v7469 = vsel %vm2252, %v7433, %v5975
      %v7470 = vsel %vm2252, %v7434, %v5977
      %v7471 = vsel %vm2252, %v7435, %v5979
      %v7472 = vsel %vm2252, %v7436, %v7032
      %v7473 = vsel %vm2252, %v7437, %v7034
      %v7474 = vsel %vm2252, %v7438, %v7036
      %v7475 = vsel %vm2252, %v7439, %v7038
      %v7476 = vsel %vm2252, %v7440, %v7040
      %v7477 = vsel %vm2252, %v7441, %v7042
      %v7478 = vsel %vm2277, %v7442, %v1832
      %v7479 = vsel %vm2277, %v7443, %v1834
      %v7480 = vsel %vm2277, %v7444, %v6015
      %v7481 = vsel %vm2277, %v7445, %v1836
      %v7482 = vsel %vm2277, %v7446, %v1838
      %v7483 = vsel %vm2277, %v7447, %v6019
      %v7484 = vsel %vm2277, %v7448, %v1840
      %v7485 = vsel %vm2277, %v7449, %v1842
      %v7486 = vsel %vm2277, %v7450, %v6023
      %v7487 = vsel %vm2277, %v7451, %v1844
      %v7488 = vsel %vm2277, %v7452, %v1846
      %v7489 = vsel %vm2277, %v7453, %v6027
      %v7490 = vsel %vm2277, %v7454, %v1848
      %v7491 = vsel %vm2277, %v7455, %v1850
      %v7492 = vsel %vm2277, %v7456, %v6031
      %v7493 = vsel %vm2277, %v7457, %v7055
      %v7494 = vsel %vm2277, %v7458, %v6035
      %v7495 = vsel %vm2277, %v7459, %v6037
      %v7496 = vsel %vm2277, %v7460, %v7057
      %v7497 = vsel %vm2277, %v7461, %v6041
      %v7498 = vsel %vm2277, %v7462, %v6043
      %v7499 = vsel %vm2277, %v7463, %v7059
      %v7500 = vsel %vm2277, %v7464, %v6047
      %v7501 = vsel %vm2277, %v7465, %v6049
      %v7502 = vsel %vm2277, %v7466, %v7061
      %v7503 = vsel %vm2277, %v7467, %v6053
      %v7504 = vsel %vm2277, %v7468, %v6055
      %v7505 = vsel %vm2277, %v7469, %v7063
      %v7506 = vsel %vm2277, %v7470, %v6059
      %v7507 = vsel %vm2277, %v7471, %v6061
      %v7508 = vsel %vm2277, %v7472, %v7065
      %v7509 = vsel %vm2277, %v7473, %v7067
      %v7510 = vsel %vm2277, %v7474, %v7069
      %v7511 = vsel %vm2277, %v7475, %v7071
      %v7512 = vsel %vm2277, %v7476, %v7073
      %v7513 = vsel %vm2277, %v7477, %v7075
      %v7514 = vsel %vm2302, %v7478, %v1909
      %v7515 = vsel %vm2302, %v7479, %v1911
      %v7516 = vsel %vm2302, %v7480, %v7093
      %v7517 = vsel %vm2302, %v7481, %v1913
      %v7518 = vsel %vm2302, %v7482, %v1915
      %v7519 = vsel %vm2302, %v7483, %v7095
      %v7520 = vsel %vm2302, %v7484, %v1917
      %v7521 = vsel %vm2302, %v7485, %v1919
      %v7522 = vsel %vm2302, %v7486, %v7097
      %v7523 = vsel %vm2302, %v7487, %v1921
      %v7524 = vsel %vm2302, %v7488, %v1923
      %v7525 = vsel %vm2302, %v7489, %v7099
      %v7526 = vsel %vm2302, %v7490, %v1925
      %v7527 = vsel %vm2302, %v7491, %v1927
      %v7528 = vsel %vm2302, %v7492, %v7101
      %v7529 = vsel %vm2302, %v7493, %v7103
      %v7530 = vsel %vm2302, %v7494, %v7105
      %v7531 = vsel %vm2302, %v7495, %v7107
      %v7532 = vsel %vm2302, %v7496, %v7109
      %v7533 = vsel %vm2302, %v7497, %v7111
      %v7534 = vsel %vm2302, %v7498, %v7113
      %v7535 = vsel %vm2302, %v7499, %v7115
      %v7536 = vsel %vm2302, %v7500, %v7117
      %v7537 = vsel %vm2302, %v7501, %v7119
      %v7538 = vsel %vm2302, %v7502, %v7121
      %v7539 = vsel %vm2302, %v7503, %v7123
      %v7540 = vsel %vm2302, %v7504, %v7125
      %v7541 = vsel %vm2302, %v7505, %v7127
      %v7542 = vsel %vm2302, %v7506, %v7129
      %v7543 = vsel %vm2302, %v7507, %v7131
      %v7544 = vsel %vm2302, %v7508, %v7133
      %v7545 = vsel %vm2302, %v7509, %v7135
      %v7546 = vsel %vm2302, %v7510, %v7137
      %v7547 = vsel %vm2302, %v7511, %v7139
      %v7548 = vsel %vm2302, %v7512, %v7141
      %v7549 = vsel %vm2302, %v7513, %v7143
      %v7586 = vrot.slane %v4377, 7
      %v7587 = vrot.slane %v4378, 7
      %v7588 = vsel %vm1210, %v7586, %v7587
      %v7589 = vrot.slane %v4379, 7
      %v7590 = vsel %vm1210, %v7587, %v7589
      %v7591 = vrot.slane %v4380, 7
      %v7592 = vrot.slane %v4381, 7
      %v7593 = vsel %vm1210, %v7591, %v7592
      %v7594 = vrot.slane %v4382, 7
      %v7595 = vsel %vm1210, %v7592, %v7594
      %v7596 = vrot.slane %v4383, 7
      %v7597 = vrot.slane %v4384, 7
      %v7598 = vsel %vm1210, %v7596, %v7597
      %v7599 = vrot.slane %v4385, 7
      %v7600 = vsel %vm1210, %v7597, %v7599
      %v7601 = vrot.slane %v4386, 7
      %v7602 = vrot.slane %v4387, 7
      %v7603 = vsel %vm1210, %v7601, %v7602
      %v7604 = vrot.slane %v4388, 7
      %v7605 = vsel %vm1210, %v7602, %v7604
      %v7606 = vrot.slane %v4389, 7
      %v7607 = vrot.slane %v4390, 7
      %v7608 = vsel %vm1210, %v7606, %v7607
      %v7609 = vrot.slane %v4391, 7
      %v7610 = vsel %vm1210, %v7607, %v7609
      %v7611 = vrot.slane %v4392, 7
      %v7612 = vrot.slane %v4393, 7
      %v7613 = vsel %vm1210, %v7611, %v7612
      %v7614 = vrot.slane %v4394, 7
      %v7615 = vsel %vm1210, %v7612, %v7614
      %v7616 = vrot.slane %v4395, 7
      %v7617 = vrot.slane %v4396, 7
      %v7618 = vsel %vm1210, %v7616, %v7617
      %v7619 = vrot.slane %v4397, 7
      %v7620 = vsel %vm1210, %v7617, %v7619
      %v7621 = vrot.slane %v4398, 7
      %v7622 = vrot.slane %v4399, 7
      %v7623 = vsel %vm1210, %v7621, %v7622
      %v7624 = vrot.slane %v4400, 7
      %v7625 = vsel %vm1210, %v7622, %v7624
      %v7626 = vrot.slane %v4401, 7
      %v7627 = vrot.slane %v4402, 7
      %v7628 = vsel %vm1210, %v7626, %v7627
      %v7629 = vrot.slane %v4403, 7
      %v7630 = vsel %vm1210, %v7627, %v7629
      %v7631 = vrot.slane %v4404, 7
      %v7632 = vrot.slane %v4405, 7
      %v7633 = vsel %vm1210, %v7631, %v7632
      %v7634 = vrot.slane %v4406, 7
      %v7635 = vsel %vm1210, %v7632, %v7634
      %v7636 = vrot.slane %v4407, 7
      %v7637 = vrot.slane %v4408, 7
      %v7638 = vsel %vm1210, %v7636, %v7637
      %v7639 = vrot.slane %v4409, 7
      %v7640 = vsel %vm1210, %v7637, %v7639
      %v7641 = vrot.slane %v4410, 7
      %v7642 = vrot.slane %v4411, 7
      %v7643 = vsel %vm1210, %v7641, %v7642
      %v7644 = vrot.slane %v4412, 7
      %v7645 = vsel %vm1210, %v7642, %v7644
      %7646 = vrot.lane.b32.xlu0 %v7588, 48
      %v7647 = vpop.permute.xlu0 %7646
      %7648 = vrot.lane.b32.xlu0 %v7590, 48
      %v7649 = vpop.permute.xlu0 %7648
      %7650 = vrot.lane.b32.xlu0 %v7593, 48
      %v7651 = vpop.permute.xlu0 %7650
      %7652 = vrot.lane.b32.xlu0 %v7595, 48
      %v7653 = vpop.permute.xlu0 %7652
      %7654 = vrot.lane.b32.xlu0 %v7598, 48
      %v7655 = vpop.permute.xlu0 %7654
      %7656 = vrot.lane.b32.xlu0 %v7600, 48
      %v7657 = vpop.permute.xlu0 %7656
      %7658 = vrot.lane.b32.xlu0 %v7603, 48
      %v7659 = vpop.permute.xlu0 %7658
      %7660 = vrot.lane.b32.xlu0 %v7605, 48
      %v7661 = vpop.permute.xlu0 %7660
      %7662 = vrot.lane.b32.xlu0 %v7608, 48
      %v7663 = vpop.permute.xlu0 %7662
      %7664 = vrot.lane.b32.xlu0 %v7610, 48
      %v7665 = vpop.permute.xlu0 %7664
      %7666 = vrot.lane.b32.xlu0 %v7613, 48
      %v7667 = vpop.permute.xlu0 %7666
      %7668 = vrot.lane.b32.xlu0 %v7615, 48
      %v7669 = vpop.permute.xlu0 %7668
      %7670 = vrot.lane.b32.xlu0 %v7618, 48
      %v7671 = vpop.permute.xlu0 %7670
      %7672 = vrot.lane.b32.xlu0 %v7620, 48
      %v7673 = vpop.permute.xlu0 %7672
      %7674 = vrot.lane.b32.xlu0 %v7623, 48
      %v7675 = vpop.permute.xlu0 %7674
      %7676 = vrot.lane.b32.xlu0 %v7625, 48
      %v7677 = vpop.permute.xlu0 %7676
      %7678 = vrot.lane.b32.xlu0 %v7628, 48
      %v7679 = vpop.permute.xlu0 %7678
      %7680 = vrot.lane.b32.xlu0 %v7630, 48
      %v7681 = vpop.permute.xlu0 %7680
      %7682 = vrot.lane.b32.xlu0 %v7633, 48
      %v7683 = vpop.permute.xlu0 %7682
      %7684 = vrot.lane.b32.xlu0 %v7635, 48
      %v7685 = vpop.permute.xlu0 %7684
      %7686 = vrot.lane.b32.xlu0 %v7638, 48
      %v7687 = vpop.permute.xlu0 %7686
      %7688 = vrot.lane.b32.xlu0 %v7640, 48
      %v7689 = vpop.permute.xlu0 %7688
      %7690 = vrot.lane.b32.xlu0 %v7643, 48
      %v7691 = vpop.permute.xlu0 %7690
      %7692 = vrot.lane.b32.xlu0 %v7645, 48
      %v7693 = vpop.permute.xlu0 %7692
      %v7754 = vrot.slane %v5461, 5
      %v7755 = vrot.slane %v5462, 5
      %v7756 = vsel %vm944, %v7754, %v7755
      %v7757 = vrot.slane %v5463, 5
      %v7758 = vsel %vm944, %v7755, %v7757
      %v7759 = vrot.slane %v5464, 5
      %v7760 = vrot.slane %v5465, 5
      %v7761 = vsel %vm944, %v7759, %v7760
      %v7762 = vrot.slane %v5466, 5
      %v7763 = vsel %vm944, %v7760, %v7762
      %v7764 = vrot.slane %v5467, 5
      %v7765 = vrot.slane %v5468, 5
      %v7766 = vsel %vm944, %v7764, %v7765
      %v7767 = vrot.slane %v5469, 5
      %v7768 = vsel %vm944, %v7765, %v7767
      %v7769 = vrot.slane %v5470, 5
      %v7770 = vrot.slane %v5471, 5
      %v7771 = vsel %vm944, %v7769, %v7770
      %v7772 = vrot.slane %v5472, 5
      %v7773 = vsel %vm944, %v7770, %v7772
      %v7774 = vrot.slane %v5473, 5
      %v7775 = vrot.slane %v5474, 5
      %v7776 = vsel %vm944, %v7774, %v7775
      %v7777 = vrot.slane %v5475, 5
      %v7778 = vsel %vm944, %v7775, %v7777
      %v7779 = vrot.slane %v5476, 5
      %v7780 = vrot.slane %v5477, 5
      %v7781 = vsel %vm944, %v7779, %v7780
      %v7782 = vrot.slane %v5478, 5
      %v7783 = vsel %vm944, %v7780, %v7782
      %v7784 = vrot.slane %v5479, 5
      %v7785 = vrot.slane %v5480, 5
      %v7786 = vsel %vm944, %v7784, %v7785
      %v7787 = vrot.slane %v5481, 5
      %v7788 = vsel %vm944, %v7785, %v7787
      %v7789 = vrot.slane %v5482, 5
      %v7790 = vrot.slane %v5483, 5
      %v7791 = vsel %vm944, %v7789, %v7790
      %v7792 = vrot.slane %v5484, 5
      %v7793 = vsel %vm944, %v7790, %v7792
      %v7794 = vrot.slane %v5485, 5
      %v7795 = vrot.slane %v5486, 5
      %v7796 = vsel %vm944, %v7794, %v7795
      %v7797 = vrot.slane %v5487, 5
      %v7798 = vsel %vm944, %v7795, %v7797
      %v7799 = vrot.slane %v5488, 5
      %v7800 = vrot.slane %v5489, 5
      %v7801 = vsel %vm944, %v7799, %v7800
      %v7802 = vrot.slane %v5490, 5
      %v7803 = vsel %vm944, %v7800, %v7802
      %v7804 = vrot.slane %v5491, 5
      %v7805 = vrot.slane %v5492, 5
      %v7806 = vsel %vm944, %v7804, %v7805
      %v7807 = vrot.slane %v5493, 5
      %v7808 = vsel %vm944, %v7805, %v7807
      %v7809 = vrot.slane %v5494, 5
      %v7810 = vrot.slane %v5495, 5
      %v7811 = vsel %vm944, %v7809, %v7810
      %v7812 = vrot.slane %v5496, 5
      %v7813 = vsel %vm944, %v7810, %v7812
      %7814 = vrot.lane.b32.xlu0 %v7756, 96
      %v7815 = vpop.permute.xlu0 %7814
      %7816 = vrot.lane.b32.xlu0 %v7758, 96
      %v7817 = vpop.permute.xlu0 %7816
      %7818 = vrot.lane.b32.xlu0 %v7761, 96
      %v7819 = vpop.permute.xlu0 %7818
      %7820 = vrot.lane.b32.xlu0 %v7763, 96
      %v7821 = vpop.permute.xlu0 %7820
      %7822 = vrot.lane.b32.xlu0 %v7766, 96
      %v7823 = vpop.permute.xlu0 %7822
      %7824 = vrot.lane.b32.xlu0 %v7768, 96
      %v7825 = vpop.permute.xlu0 %7824
      %7826 = vrot.lane.b32.xlu0 %v7771, 96
      %v7827 = vpop.permute.xlu0 %7826
      %7828 = vrot.lane.b32.xlu0 %v7773, 96
      %v7829 = vpop.permute.xlu0 %7828
      %7830 = vrot.lane.b32.xlu0 %v7776, 96
      %v7831 = vpop.permute.xlu0 %7830
      %7832 = vrot.lane.b32.xlu0 %v7778, 96
      %v7833 = vpop.permute.xlu0 %7832
      %7834 = vrot.lane.b32.xlu0 %v7781, 96
      %v7835 = vpop.permute.xlu0 %7834
      %7836 = vrot.lane.b32.xlu0 %v7783, 96
      %v7837 = vpop.permute.xlu0 %7836
      %7838 = vrot.lane.b32.xlu0 %v7786, 96
      %v7839 = vpop.permute.xlu0 %7838
      %7840 = vrot.lane.b32.xlu0 %v7788, 96
      %v7841 = vpop.permute.xlu0 %7840
      %7842 = vrot.lane.b32.xlu0 %v7791, 96
      %v7843 = vpop.permute.xlu0 %7842
      %7844 = vrot.lane.b32.xlu0 %v7793, 96
      %v7845 = vpop.permute.xlu0 %7844
      %7846 = vrot.lane.b32.xlu0 %v7796, 96
      %v7847 = vpop.permute.xlu0 %7846
      %7848 = vrot.lane.b32.xlu0 %v7798, 96
      %v7849 = vpop.permute.xlu0 %7848
      %7850 = vrot.lane.b32.xlu0 %v7801, 96
      %v7851 = vpop.permute.xlu0 %7850
      %7852 = vrot.lane.b32.xlu0 %v7803, 96
      %v7853 = vpop.permute.xlu0 %7852
      %7854 = vrot.lane.b32.xlu0 %v7806, 96
      %v7855 = vpop.permute.xlu0 %7854
      %7856 = vrot.lane.b32.xlu0 %v7808, 96
      %v7857 = vpop.permute.xlu0 %7856
      %7858 = vrot.lane.b32.xlu0 %v7811, 96
      %v7859 = vpop.permute.xlu0 %7858
      %7860 = vrot.lane.b32.xlu0 %v7813, 96
      %v7861 = vpop.permute.xlu0 %7860
      %v7922 = vrot.slane %v6540, 3
      %v7923 = vrot.slane %v6541, 3
      %v7924 = vsel %vm678, %v7922, %v7923
      %v7925 = vrot.slane %v6542, 3
      %v7926 = vsel %vm678, %v7923, %v7925
      %v7927 = vrot.slane %v6543, 3
      %v7928 = vrot.slane %v6544, 3
      %v7929 = vsel %vm678, %v7927, %v7928
      %v7930 = vrot.slane %v6545, 3
      %v7931 = vsel %vm678, %v7928, %v7930
      %v7932 = vrot.slane %v6546, 3
      %v7933 = vrot.slane %v6547, 3
      %v7934 = vsel %vm678, %v7932, %v7933
      %v7935 = vrot.slane %v6548, 3
      %v7936 = vsel %vm678, %v7933, %v7935
      %v7937 = vrot.slane %v6549, 3
      %v7938 = vrot.slane %v6550, 3
      %v7939 = vsel %vm678, %v7937, %v7938
      %v7940 = vrot.slane %v6551, 3
      %v7941 = vsel %vm678, %v7938, %v7940
      %v7942 = vrot.slane %v6552, 3
      %v7943 = vrot.slane %v6553, 3
      %v7944 = vsel %vm678, %v7942, %v7943
      %v7945 = vrot.slane %v6554, 3
      %v7946 = vsel %vm678, %v7943, %v7945
      %v7947 = vrot.slane %v6555, 3
      %v7948 = vrot.slane %v6556, 3
      %v7949 = vsel %vm678, %v7947, %v7948
      %v7950 = vrot.slane %v6557, 3
      %v7951 = vsel %vm678, %v7948, %v7950
      %v7952 = vrot.slane %v6558, 3
      %v7953 = vrot.slane %v6559, 3
      %v7954 = vsel %vm678, %v7952, %v7953
      %v7955 = vrot.slane %v6560, 3
      %v7956 = vsel %vm678, %v7953, %v7955
      %v7957 = vrot.slane %v6561, 3
      %v7958 = vrot.slane %v6562, 3
      %v7959 = vsel %vm678, %v7957, %v7958
      %v7960 = vrot.slane %v6563, 3
      %v7961 = vsel %vm678, %v7958, %v7960
      %v7962 = vrot.slane %v6564, 3
      %v7963 = vrot.slane %v6565, 3
      %v7964 = vsel %vm678, %v7962, %v7963
      %v7965 = vrot.slane %v6566, 3
      %v7966 = vsel %vm678, %v7963, %v7965
      %v7967 = vrot.slane %v6567, 3
      %v7968 = vrot.slane %v6568, 3
      %v7969 = vsel %vm678, %v7967, %v7968
      %v7970 = vrot.slane %v6569, 3
      %v7971 = vsel %vm678, %v7968, %v7970
      %v7972 = vrot.slane %v6570, 3
      %v7973 = vrot.slane %v6571, 3
      %v7974 = vsel %vm678, %v7972, %v7973
      %v7975 = vrot.slane %v6572, 3
      %v7976 = vsel %vm678, %v7973, %v7975
      %v7977 = vrot.slane %v6573, 3
      %v7978 = vrot.slane %v6574, 3
      %v7979 = vsel %vm678, %v7977, %v7978
      %v7980 = vrot.slane %v6575, 3
      %v7981 = vsel %vm678, %v7978, %v7980
      %7982 = vrot.lane.b32.xlu0 %v7924, 16
      %v7983 = vpop.permute.xlu0 %7982
      %7984 = vrot.lane.b32.xlu0 %v7926, 16
      %v7985 = vpop.permute.xlu0 %7984
      %7986 = vrot.lane.b32.xlu0 %v7929, 16
      %v7987 = vpop.permute.xlu0 %7986
      %7988 = vrot.lane.b32.xlu0 %v7931, 16
      %v7989 = vpop.permute.xlu0 %7988
      %7990 = vrot.lane.b32.xlu0 %v7934, 16
      %v7991 = vpop.permute.xlu0 %7990
      %7992 = vrot.lane.b32.xlu0 %v7936, 16
      %v7993 = vpop.permute.xlu0 %7992
      %7994 = vrot.lane.b32.xlu0 %v7939, 16
      %v7995 = vpop.permute.xlu0 %7994
      %7996 = vrot.lane.b32.xlu0 %v7941, 16
      %v7997 = vpop.permute.xlu0 %7996
      %7998 = vrot.lane.b32.xlu0 %v7944, 16
      %v7999 = vpop.permute.xlu0 %7998
      %8000 = vrot.lane.b32.xlu0 %v7946, 16
      %v8001 = vpop.permute.xlu0 %8000
      %8002 = vrot.lane.b32.xlu0 %v7949, 16
      %v8003 = vpop.permute.xlu0 %8002
      %8004 = vrot.lane.b32.xlu0 %v7951, 16
      %v8005 = vpop.permute.xlu0 %8004
      %8006 = vrot.lane.b32.xlu0 %v7954, 16
      %v8007 = vpop.permute.xlu0 %8006
      %8008 = vrot.lane.b32.xlu0 %v7956, 16
      %v8009 = vpop.permute.xlu0 %8008
      %8010 = vrot.lane.b32.xlu0 %v7959, 16
      %v8011 = vpop.permute.xlu0 %8010
      %8012 = vrot.lane.b32.xlu0 %v7961, 16
      %v8013 = vpop.permute.xlu0 %8012
      %8014 = vrot.lane.b32.xlu0 %v7964, 16
      %v8015 = vpop.permute.xlu0 %8014
      %8016 = vrot.lane.b32.xlu0 %v7966, 16
      %v8017 = vpop.permute.xlu0 %8016
      %8018 = vrot.lane.b32.xlu0 %v7969, 16
      %v8019 = vpop.permute.xlu0 %8018
      %8020 = vrot.lane.b32.xlu0 %v7971, 16
      %v8021 = vpop.permute.xlu0 %8020
      %8022 = vrot.lane.b32.xlu0 %v7974, 16
      %v8023 = vpop.permute.xlu0 %8022
      %8024 = vrot.lane.b32.xlu0 %v7976, 16
      %v8025 = vpop.permute.xlu0 %8024
      %8026 = vrot.lane.b32.xlu0 %v7979, 16
      %v8027 = vpop.permute.xlu0 %8026
      %8028 = vrot.lane.b32.xlu0 %v7981, 16
      %v8029 = vpop.permute.xlu0 %8028
      %v8090 = vrot.slane %v7514, 1
      %v8091 = vrot.slane %v7515, 1
      %v8092 = vsel %vm412, %v8090, %v8091
      %v8093 = vrot.slane %v7516, 1
      %v8094 = vsel %vm412, %v8091, %v8093
      %v8095 = vrot.slane %v7517, 1
      %v8096 = vrot.slane %v7518, 1
      %v8097 = vsel %vm412, %v8095, %v8096
      %v8098 = vrot.slane %v7519, 1
      %v8099 = vsel %vm412, %v8096, %v8098
      %v8100 = vrot.slane %v7520, 1
      %v8101 = vrot.slane %v7521, 1
      %v8102 = vsel %vm412, %v8100, %v8101
      %v8103 = vrot.slane %v7522, 1
      %v8104 = vsel %vm412, %v8101, %v8103
      %v8105 = vrot.slane %v7523, 1
      %v8106 = vrot.slane %v7524, 1
      %v8107 = vsel %vm412, %v8105, %v8106
      %v8108 = vrot.slane %v7525, 1
      %v8109 = vsel %vm412, %v8106, %v8108
      %v8110 = vrot.slane %v7526, 1
      %v8111 = vrot.slane %v7527, 1
      %v8112 = vsel %vm412, %v8110, %v8111
      %v8113 = vrot.slane %v7528, 1
      %v8114 = vsel %vm412, %v8111, %v8113
      %v8115 = vrot.slane %v7529, 1
      %v8116 = vrot.slane %v7530, 1
      %v8117 = vsel %vm412, %v8115, %v8116
      %v8118 = vrot.slane %v7531, 1
      %v8119 = vsel %vm412, %v8116, %v8118
      %v8120 = vrot.slane %v7532, 1
      %v8121 = vrot.slane %v7533, 1
      %v8122 = vsel %vm412, %v8120, %v8121
      %v8123 = vrot.slane %v7534, 1
      %v8124 = vsel %vm412, %v8121, %v8123
      %v8125 = vrot.slane %v7535, 1
      %v8126 = vrot.slane %v7536, 1
      %v8127 = vsel %vm412, %v8125, %v8126
      %v8128 = vrot.slane %v7537, 1
      %v8129 = vsel %vm412, %v8126, %v8128
      %v8130 = vrot.slane %v7538, 1
      %v8131 = vrot.slane %v7539, 1
      %v8132 = vsel %vm412, %v8130, %v8131
      %v8133 = vrot.slane %v7540, 1
      %v8134 = vsel %vm412, %v8131, %v8133
      %v8135 = vrot.slane %v7541, 1
      %v8136 = vrot.slane %v7542, 1
      %v8137 = vsel %vm412, %v8135, %v8136
      %v8138 = vrot.slane %v7543, 1
      %v8139 = vsel %vm412, %v8136, %v8138
      %v8140 = vrot.slane %v7544, 1
      %v8141 = vrot.slane %v7545, 1
      %v8142 = vsel %vm412, %v8140, %v8141
      %v8143 = vrot.slane %v7546, 1
      %v8144 = vsel %vm412, %v8141, %v8143
      %v8145 = vrot.slane %v7547, 1
      %v8146 = vrot.slane %v7548, 1
      %v8147 = vsel %vm412, %v8145, %v8146
      %v8148 = vrot.slane %v7549, 1
      %v8149 = vsel %vm412, %v8146, %v8148
      %8150 = vrot.lane.b32.xlu0 %v8092, 64
      %v8151 = vpop.permute.xlu0 %8150
      %8152 = vrot.lane.b32.xlu0 %v8094, 64
      %v8153 = vpop.permute.xlu0 %8152
      %8154 = vrot.lane.b32.xlu0 %v8097, 64
      %v8155 = vpop.permute.xlu0 %8154
      %8156 = vrot.lane.b32.xlu0 %v8099, 64
      %v8157 = vpop.permute.xlu0 %8156
      %8158 = vrot.lane.b32.xlu0 %v8102, 64
      %v8159 = vpop.permute.xlu0 %8158
      %8160 = vrot.lane.b32.xlu0 %v8104, 64
      %v8161 = vpop.permute.xlu0 %8160
      %8162 = vrot.lane.b32.xlu0 %v8107, 64
      %v8163 = vpop.permute.xlu0 %8162
      %8164 = vrot.lane.b32.xlu0 %v8109, 64
      %v8165 = vpop.permute.xlu0 %8164
      %8166 = vrot.lane.b32.xlu0 %v8112, 64
      %v8167 = vpop.permute.xlu0 %8166
      %8168 = vrot.lane.b32.xlu0 %v8114, 64
      %v8169 = vpop.permute.xlu0 %8168
      %8170 = vrot.lane.b32.xlu0 %v8117, 64
      %v8171 = vpop.permute.xlu0 %8170
      %8172 = vrot.lane.b32.xlu0 %v8119, 64
      %v8173 = vpop.permute.xlu0 %8172
      %8174 = vrot.lane.b32.xlu0 %v8122, 64
      %v8175 = vpop.permute.xlu0 %8174
      %8176 = vrot.lane.b32.xlu0 %v8124, 64
      %v8177 = vpop.permute.xlu0 %8176
      %8178 = vrot.lane.b32.xlu0 %v8127, 64
      %v8179 = vpop.permute.xlu0 %8178
      %8180 = vrot.lane.b32.xlu0 %v8129, 64
      %v8181 = vpop.permute.xlu0 %8180
      %8182 = vrot.lane.b32.xlu0 %v8132, 64
      %v8183 = vpop.permute.xlu0 %8182
      %8184 = vrot.lane.b32.xlu0 %v8134, 64
      %v8185 = vpop.permute.xlu0 %8184
      %8186 = vrot.lane.b32.xlu0 %v8137, 64
      %v8187 = vpop.permute.xlu0 %8186
      %8188 = vrot.lane.b32.xlu0 %v8139, 64
      %v8189 = vpop.permute.xlu0 %8188
      %8190 = vrot.lane.b32.xlu0 %v8142, 64
      %v8191 = vpop.permute.xlu0 %8190
      %8192 = vrot.lane.b32.xlu0 %v8144, 64
      %v8193 = vpop.permute.xlu0 %8192
      %8194 = vrot.lane.b32.xlu0 %v8147, 64
      %v8195 = vpop.permute.xlu0 %8194
      %8196 = vrot.lane.b32.xlu0 %v8149, 64
      %v8197 = vpop.permute.xlu0 %8196
      %8222 = vrot.lane.b32.xlu0 %v341, 112
      %v8223 = vpop.permute.xlu0 %8222
      %8224 = vrot.lane.b32.xlu0 %v342, 112
      %v8225 = vpop.permute.xlu0 %8224
      %8226 = vrot.lane.b32.xlu0 %v344, 112
      %v8227 = vpop.permute.xlu0 %8226
      %8228 = vrot.lane.b32.xlu0 %v345, 112
      %v8229 = vpop.permute.xlu0 %8228
      %8230 = vrot.lane.b32.xlu0 %v347, 112
      %v8231 = vpop.permute.xlu0 %8230
      %8232 = vrot.lane.b32.xlu0 %v348, 112
      %v8233 = vpop.permute.xlu0 %8232
      %8234 = vrot.lane.b32.xlu0 %v350, 112
      %v8235 = vpop.permute.xlu0 %8234
      %8236 = vrot.lane.b32.xlu0 %v351, 112
      %v8237 = vpop.permute.xlu0 %8236
      %8238 = vrot.lane.b32.xlu0 %v353, 112
      %v8239 = vpop.permute.xlu0 %8238
      %8240 = vrot.lane.b32.xlu0 %v354, 112
      %v8241 = vpop.permute.xlu0 %8240
      %8242 = vrot.lane.b32.xlu0 %v356, 112
      %v8243 = vpop.permute.xlu0 %8242
      %8244 = vrot.lane.b32.xlu0 %v357, 112
      %v8245 = vpop.permute.xlu0 %8244
      %8246 = vrot.lane.b32.xlu0 %v359, 112
      %v8247 = vpop.permute.xlu0 %8246
      %8248 = vrot.lane.b32.xlu0 %v360, 112
      %v8249 = vpop.permute.xlu0 %8248
      %8250 = vrot.lane.b32.xlu0 %v362, 112
      %v8251 = vpop.permute.xlu0 %8250
      %8252 = vrot.lane.b32.xlu0 %v363, 112
      %v8253 = vpop.permute.xlu0 %8252
      %8254 = vrot.lane.b32.xlu0 %v365, 112
      %v8255 = vpop.permute.xlu0 %8254
      %8256 = vrot.lane.b32.xlu0 %v366, 112
      %v8257 = vpop.permute.xlu0 %8256
      %8258 = vrot.lane.b32.xlu0 %v368, 112
      %v8259 = vpop.permute.xlu0 %8258
      %8260 = vrot.lane.b32.xlu0 %v369, 112
      %v8261 = vpop.permute.xlu0 %8260
      %8262 = vrot.lane.b32.xlu0 %v371, 112
      %v8263 = vpop.permute.xlu0 %8262
      %8264 = vrot.lane.b32.xlu0 %v372, 112
      %v8265 = vpop.permute.xlu0 %8264
      %8266 = vrot.lane.b32.xlu0 %v374, 112
      %v8267 = vpop.permute.xlu0 %8266
      %8268 = vrot.lane.b32.xlu0 %v375, 112
      %v8269 = vpop.permute.xlu0 %8268
      %vm8294 = vcmask 392192
      %v8295 = vsel %vm8294, %v2303, %v7647
      %v8296 = vsel %vm8294, %v2304, %v7649
      %v8297 = vsel %vm8294, %v2305, %v7651
      %v8298 = vsel %vm8294, %v2306, %v7653
      %v8299 = vsel %vm8294, %v2307, %v7655
      %v8300 = vsel %vm8294, %v2308, %v7657
      %v8301 = vsel %vm8294, %v2309, %v7659
      %v8302 = vsel %vm8294, %v2310, %v7661
      %v8303 = vsel %vm8294, %v2311, %v7663
      %v8304 = vsel %vm8294, %v2312, %v7665
      %v8305 = vsel %vm8294, %v2313, %v7667
      %v8306 = vsel %vm8294, %v2314, %v7669
      %v8307 = vsel %vm8294, %v2315, %v7671
      %v8308 = vsel %vm8294, %v2316, %v7673
      %v8309 = vsel %vm8294, %v2317, %v7675
      %v8310 = vsel %vm8294, %v2318, %v7677
      %v8311 = vsel %vm8294, %v2319, %v7679
      %v8312 = vsel %vm8294, %v2320, %v7681
      %v8313 = vsel %vm8294, %v2321, %v7683
      %v8314 = vsel %vm8294, %v2322, %v7685
      %v8315 = vsel %vm8294, %v2323, %v7687
      %v8316 = vsel %vm8294, %v2324, %v7689
      %v8317 = vsel %vm8294, %v2325, %v7691
      %v8318 = vsel %vm8294, %v2326, %v7693
      %vm8319 = vcmask 785408
      %v8320 = vsel %vm8319, %v8295, %v7815
      %v8321 = vsel %vm8319, %v8296, %v7817
      %v8322 = vsel %vm8319, %v8297, %v7819
      %v8323 = vsel %vm8319, %v8298, %v7821
      %v8324 = vsel %vm8319, %v8299, %v7823
      %v8325 = vsel %vm8319, %v8300, %v7825
      %v8326 = vsel %vm8319, %v8301, %v7827
      %v8327 = vsel %vm8319, %v8302, %v7829
      %v8328 = vsel %vm8319, %v8303, %v7831
      %v8329 = vsel %vm8319, %v8304, %v7833
      %v8330 = vsel %vm8319, %v8305, %v7835
      %v8331 = vsel %vm8319, %v8306, %v7837
      %v8332 = vsel %vm8319, %v8307, %v7839
      %v8333 = vsel %vm8319, %v8308, %v7841
      %v8334 = vsel %vm8319, %v8309, %v7843
      %v8335 = vsel %vm8319, %v8310, %v7845
      %v8336 = vsel %vm8319, %v8311, %v7847
      %v8337 = vsel %vm8319, %v8312, %v7849
      %v8338 = vsel %vm8319, %v8313, %v7851
      %v8339 = vsel %vm8319, %v8314, %v7853
      %v8340 = vsel %vm8319, %v8315, %v7855
      %v8341 = vsel %vm8319, %v8316, %v7857
      %v8342 = vsel %vm8319, %v8317, %v7859
      %v8343 = vsel %vm8319, %v8318, %v7861
      %vm8344 = vcmask 130048
      %v8345 = vsel %vm8344, %v7815, %v7983
      %v8346 = vsel %vm8344, %v7817, %v7985
      %v8347 = vsel %vm8344, %v7819, %v7987
      %v8348 = vsel %vm8344, %v7821, %v7989
      %v8349 = vsel %vm8344, %v7823, %v7991
      %v8350 = vsel %vm8344, %v7825, %v7993
      %v8351 = vsel %vm8344, %v7827, %v7995
      %v8352 = vsel %vm8344, %v7829, %v7997
      %v8353 = vsel %vm8344, %v7831, %v7999
      %v8354 = vsel %vm8344, %v7833, %v8001
      %v8355 = vsel %vm8344, %v7835, %v8003
      %v8356 = vsel %vm8344, %v7837, %v8005
      %v8357 = vsel %vm8344, %v7839, %v8007
      %v8358 = vsel %vm8344, %v7841, %v8009
      %v8359 = vsel %vm8344, %v7843, %v8011
      %v8360 = vsel %vm8344, %v7845, %v8013
      %v8361 = vsel %vm8344, %v7847, %v8015
      %v8362 = vsel %vm8344, %v7849, %v8017
      %v8363 = vsel %vm8344, %v7851, %v8019
      %v8364 = vsel %vm8344, %v7853, %v8021
      %v8365 = vsel %vm8344, %v7855, %v8023
      %v8366 = vsel %vm8344, %v7857, %v8025
      %v8367 = vsel %vm8344, %v7859, %v8027
      %v8368 = vsel %vm8344, %v7861, %v8029
      %vm8369 = vcmask 523264
      %v8370 = vsel %vm8369, %v8345, %v8151
      %v8371 = vsel %vm8369, %v8346, %v8153
      %v8372 = vsel %vm8369, %v8347, %v8155
      %v8373 = vsel %vm8369, %v8348, %v8157
      %v8374 = vsel %vm8369, %v8349, %v8159
      %v8375 = vsel %vm8369, %v8350, %v8161
      %v8376 = vsel %vm8369, %v8351, %v8163
      %v8377 = vsel %vm8369, %v8352, %v8165
      %v8378 = vsel %vm8369, %v8353, %v8167
      %v8379 = vsel %vm8369, %v8354, %v8169
      %v8380 = vsel %vm8369, %v8355, %v8171
      %v8381 = vsel %vm8369, %v8356, %v8173
      %v8382 = vsel %vm8369, %v8357, %v8175
      %v8383 = vsel %vm8369, %v8358, %v8177
      %v8384 = vsel %vm8369, %v8359, %v8179
      %v8385 = vsel %vm8369, %v8360, %v8181
      %v8386 = vsel %vm8369, %v8361, %v8183
      %v8387 = vsel %vm8369, %v8362, %v8185
      %v8388 = vsel %vm8369, %v8363, %v8187
      %v8389 = vsel %vm8369, %v8364, %v8189
      %v8390 = vsel %vm8369, %v8365, %v8191
      %v8391 = vsel %vm8369, %v8366, %v8193
      %v8392 = vsel %vm8369, %v8367, %v8195
      %v8393 = vsel %vm8369, %v8368, %v8197
      %vm8394 = vcmask 916480
      %v8395 = vsel %vm8394, %v8370, %v8223
      %v8396 = vsel %vm8394, %v8371, %v8225
      %v8397 = vsel %vm8394, %v8372, %v8227
      %v8398 = vsel %vm8394, %v8373, %v8229
      %v8399 = vsel %vm8394, %v8374, %v8231
      %v8400 = vsel %vm8394, %v8375, %v8233
      %v8401 = vsel %vm8394, %v8376, %v8235
      %v8402 = vsel %vm8394, %v8377, %v8237
      %v8403 = vsel %vm8394, %v8378, %v8239
      %v8404 = vsel %vm8394, %v8379, %v8241
      %v8405 = vsel %vm8394, %v8380, %v8243
      %v8406 = vsel %vm8394, %v8381, %v8245
      %v8407 = vsel %vm8394, %v8382, %v8247
      %v8408 = vsel %vm8394, %v8383, %v8249
      %v8409 = vsel %vm8394, %v8384, %v8251
      %v8410 = vsel %vm8394, %v8385, %v8253
      %v8411 = vsel %vm8394, %v8386, %v8255
      %v8412 = vsel %vm8394, %v8387, %v8257
      %v8413 = vsel %vm8394, %v8388, %v8259
      %v8414 = vsel %vm8394, %v8389, %v8261
      %v8415 = vsel %vm8394, %v8390, %v8263
      %v8416 = vsel %vm8394, %v8391, %v8265
      %v8417 = vsel %vm8394, %v8392, %v8267
      %v8418 = vsel %vm8394, %v8393, %v8269
      %v8419 = vld [vmem:[%s1] sm:$0xff]
      %v8420 = vld [vmem:[%s1 + $0x8] sm:$0xff]
      %v8421 = vld [vmem:[%s1 + $0x10] sm:$0xff]
      %v8422 = vld [vmem:[%s1 + $0x18] sm:$0xff]
      %v8423 = vld [vmem:[%s1 + $0x20] sm:$0xff]
      %v8424 = vld [vmem:[%s1 + $0x28] sm:$0xff]
      %v8425 = vld [vmem:[%s1 + $0x30] sm:$0xff]
      %v8426 = vld [vmem:[%s1 + $0x38] sm:$0xff]
      %v8427 = vld [vmem:[%s1 + $0x40] sm:$0xff]
      %v8428 = vld [vmem:[%s1 + $0x48] sm:$0xff]
      %v8429 = vld [vmem:[%s1 + $0x50] sm:$0xff]
      %v8430 = vld [vmem:[%s1 + $0x58] sm:$0xff]
      %v8431 = vld [vmem:[%s1 + $0x60] sm:$0xff]
      %v8432 = vld [vmem:[%s1 + $0x68] sm:$0xff]
      %v8433 = vld [vmem:[%s1 + $0x70] sm:$0xff]
      %v8434 = vld [vmem:[%s1 + $0x78] sm:$0xff]
      %v8435 = vld [vmem:[%s1 + $0x80] sm:$0xff]
      %v8436 = vld [vmem:[%s1 + $0x88] sm:$0xff]
      %v8437 = vld [vmem:[%s1 + $0x90] sm:$0xff]
      %v8438 = vld [vmem:[%s1 + $0x98] sm:$0xff]
      %v8439 = vld [vmem:[%s1 + $0xa0] sm:$0xff]
      %v8440 = vld [vmem:[%s1 + $0xa8] sm:$0xff]
      %v8441 = vld [vmem:[%s1 + $0xb0] sm:$0xff]
      %v8442 = vld [vmem:[%s1 + $0xb8] sm:$0xff]
      %v8443 = vld [vmem:[%s1 + $0xc0] sm:$0xff]
      %v8444 = vld [vmem:[%s1 + $0xc8] sm:$0xff]
      %v8445 = vld [vmem:[%s1 + $0xd0] sm:$0xff]
      %v8446 = vld [vmem:[%s1 + $0xd8] sm:$0xff]
      %v8447 = vld [vmem:[%s1 + $0xe0] sm:$0xff]
      %v8448 = vld [vmem:[%s1 + $0xe8] sm:$0xff]
      %v8449 = vld [vmem:[%s1 + $0xf0] sm:$0x7]
      %v8450 = vld [vmem:[%s2] sm:$0x1]
      %v8452 = vperm.slane %v8450, 0
      %vm8454 = vcmask 941056
      %v8456 = vsel %vm8454, %v8395, 0
      %v8459 = vsel %vm8454, %v8396, 0
      %v8462 = vsel %vm8454, %v8397, 0
      %v8465 = vsel %vm8454, %v8398, 0
      %v8468 = vsel %vm8454, %v8399, 0
      %v8471 = vsel %vm8454, %v8400, 0
      %v8474 = vsel %vm8454, %v8401, 0
      %v8477 = vsel %vm8454, %v8402, 0
      %v8480 = vsel %vm8454, %v8403, 0
      %v8483 = vsel %vm8454, %v8404, 0
      %v8486 = vsel %vm8454, %v8405, 0
      %v8489 = vsel %vm8454, %v8406, 0
      %v8492 = vsel %vm8454, %v8407, 0
      %v8495 = vsel %vm8454, %v8408, 0
      %v8498 = vsel %vm8454, %v8409, 0
      %v8501 = vsel %vm8454, %v8410, 0
      %v8504 = vsel %vm8454, %v8411, 0
      %v8507 = vsel %vm8454, %v8412, 0
      %v8510 = vsel %vm8454, %v8413, 0
      %v8513 = vsel %vm8454, %v8414, 0
      %v8516 = vsel %vm8454, %v8415, 0
      %v8519 = vsel %vm8454, %v8416, 0
      %v8522 = vsel %vm8454, %v8417, 0
      %v8525 = vsel %vm8454, %v8418, 0
      %v8528 = vsel %vm944, %v8449, 0
      %8530 = vmatpush.msra.mxu0 %v8434
      %8531 = vmatpush.msra.mxu0 %v8433
      %8532 = vmatpush.msra.mxu0 %v8432
      %8533 = vmatpush.msra.mxu0 %v8431
      %8534 = vmatpush.msra.mxu0 %v8430
      %8535 = vmatpush.msra.mxu0 %v8429
      %8536 = vmatpush.msra.mxu0 %v8428
      %8537 = vmatpush.msra.mxu0 %v8427
      %8538 = vmatpush.msra.mxu0 %v8426
      %8539 = vmatpush.msra.mxu0 %v8425
      %8540 = vmatpush.msra.mxu0 %v8424
      %8541 = vmatpush.msra.mxu0 %v8423
      %8542 = vmatpush.msra.mxu0 %v8422
      %8543 = vmatpush.msra.mxu0 %v8421
      %8544 = vmatpush.msra.mxu0 %v8420
      %8545 = vmatpush.msra.mxu0 %v8419
      %8546 = vmatmul.f32.gmra.mxu0 %v8320
      %v8547 = vpop.f32.mrf.mxu0
      %v8548 = vadd.f32 %v8452, %v8547
      %8549 = vmatmul.f32.gmra.mxu0 %v8321
      %v8550 = vpop.f32.mrf.mxu0
      %v8551 = vadd.f32 %v8452, %v8550
      %8552 = vmatmul.f32.gmra.mxu0 %v8322
      %v8553 = vpop.f32.mrf.mxu0
      %v8554 = vadd.f32 %v8452, %v8553
      %8555 = vmatmul.f32.gmra.mxu0 %v8323
      %v8556 = vpop.f32.mrf.mxu0
      %v8557 = vadd.f32 %v8452, %v8556
      %8558 = vmatmul.f32.gmra.mxu0 %v8324
      %v8559 = vpop.f32.mrf.mxu0
      %v8560 = vadd.f32 %v8452, %v8559
      %8561 = vmatmul.f32.gmra.mxu0 %v8325
      %v8562 = vpop.f32.mrf.mxu0
      %v8563 = vadd.f32 %v8452, %v8562
      %8564 = vmatmul.f32.gmra.mxu0 %v8326
      %v8565 = vpop.f32.mrf.mxu0
      %v8566 = vadd.f32 %v8452, %v8565
      %8567 = vmatmul.f32.gmra.mxu0 %v8327
      %v8568 = vpop.f32.mrf.mxu0
      %v8569 = vadd.f32 %v8452, %v8568
      %8570 = vmatmul.f32.gmra.mxu0 %v8328
      %v8571 = vpop.f32.mrf.mxu0
      %v8572 = vadd.f32 %v8452, %v8571
      %8573 = vmatmul.f32.gmra.mxu0 %v8329
      %v8574 = vpop.f32.mrf.mxu0
      %v8575 = vadd.f32 %v8452, %v8574
      %8576 = vmatmul.f32.gmra.mxu0 %v8330
      %v8577 = vpop.f32.mrf.mxu0
      %v8578 = vadd.f32 %v8452, %v8577
      %8579 = vmatmul.f32.gmra.mxu0 %v8331
      %v8580 = vpop.f32.mrf.mxu0
      %v8581 = vadd.f32 %v8452, %v8580
      %8582 = vmatmul.f32.gmra.mxu0 %v8332
      %v8583 = vpop.f32.mrf.mxu0
      %v8584 = vadd.f32 %v8452, %v8583
      %8585 = vmatmul.f32.gmra.mxu0 %v8333
      %v8586 = vpop.f32.mrf.mxu0
      %v8587 = vadd.f32 %v8452, %v8586
      %8588 = vmatmul.f32.gmra.mxu0 %v8334
      %v8589 = vpop.f32.mrf.mxu0
      %v8590 = vadd.f32 %v8452, %v8589
      %8591 = vmatmul.f32.gmra.mxu0 %v8335
      %v8592 = vpop.f32.mrf.mxu0
      %v8593 = vadd.f32 %v8452, %v8592
      %8594 = vmatmul.f32.gmra.mxu0 %v8336
      %v8595 = vpop.f32.mrf.mxu0
      %v8596 = vadd.f32 %v8452, %v8595
      %8597 = vmatmul.f32.gmra.mxu0 %v8337
      %v8598 = vpop.f32.mrf.mxu0
      %v8599 = vadd.f32 %v8452, %v8598
      %8600 = vmatmul.f32.gmra.mxu0 %v8338
      %v8601 = vpop.f32.mrf.mxu0
      %v8602 = vadd.f32 %v8452, %v8601
      %8603 = vmatmul.f32.gmra.mxu0 %v8339
      %v8604 = vpop.f32.mrf.mxu0
      %v8605 = vadd.f32 %v8452, %v8604
      %8606 = vmatmul.f32.gmra.mxu0 %v8340
      %v8607 = vpop.f32.mrf.mxu0
      %v8608 = vadd.f32 %v8452, %v8607
      %8609 = vmatmul.f32.gmra.mxu0 %v8341
      %v8610 = vpop.f32.mrf.mxu0
      %v8611 = vadd.f32 %v8452, %v8610
      %8612 = vmatmul.f32.gmra.mxu0 %v8342
      %v8613 = vpop.f32.mrf.mxu0
      %v8614 = vadd.f32 %v8452, %v8613
      %8615 = vmatmul.f32.gmra.mxu0 %v8343
      %v8616 = vpop.f32.mrf.mxu0
      %v8617 = vadd.f32 %v8452, %v8616
      %8618 = vdwg.mxu0
      %8619 = vmatpush.msra.mxu0 0.0
      %8620 = vmatpush.msra.mxu0 %v8528
      %8621 = vmatpush.msra.mxu0 %v8448
      %8622 = vmatpush.msra.mxu0 %v8447
      %8623 = vmatpush.msra.mxu0 %v8446
      %8624 = vmatpush.msra.mxu0 %v8445
      %8625 = vmatpush.msra.mxu0 %v8444
      %8626 = vmatpush.msra.mxu0 %v8443
      %8627 = vmatpush.msra.mxu0 %v8442
      %8628 = vmatpush.msra.mxu0 %v8441
      %8629 = vmatpush.msra.mxu0 %v8440
      %8630 = vmatpush.msra.mxu0 %v8439
      %8631 = vmatpush.msra.mxu0 %v8438
      %8632 = vmatpush.msra.mxu0 %v8437
      %8633 = vmatpush.msra.mxu0 %v8436
      %8634 = vmatpush.msra.mxu0 %v8435
      %8635 = vmatmul.f32.gmra.mxu0 %v8456
      %v8636 = vpop.f32.mrf.mxu0
      %v8637 = vadd.f32 %v8548, %v8636
      %8638 = vmatmul.f32.gmra.mxu0 %v8459
      %v8639 = vpop.f32.mrf.mxu0
      %v8640 = vadd.f32 %v8551, %v8639
      %8641 = vmatmul.f32.gmra.mxu0 %v8462
      %v8642 = vpop.f32.mrf.mxu0
      %v8643 = vadd.f32 %v8554, %v8642
      %8644 = vmatmul.f32.gmra.mxu0 %v8465
      %v8645 = vpop.f32.mrf.mxu0
      %v8646 = vadd.f32 %v8557, %v8645
      %8647 = vmatmul.f32.gmra.mxu0 %v8468
      %v8648 = vpop.f32.mrf.mxu0
      %v8649 = vadd.f32 %v8560, %v8648
      %8650 = vmatmul.f32.gmra.mxu0 %v8471
      %v8651 = vpop.f32.mrf.mxu0
      %v8652 = vadd.f32 %v8563, %v8651
      %8653 = vmatmul.f32.gmra.mxu0 %v8474
      %v8654 = vpop.f32.mrf.mxu0
      %v8655 = vadd.f32 %v8566, %v8654
      %8656 = vmatmul.f32.gmra.mxu0 %v8477
      %v8657 = vpop.f32.mrf.mxu0
      %v8658 = vadd.f32 %v8569, %v8657
      %8659 = vmatmul.f32.gmra.mxu0 %v8480
      %v8660 = vpop.f32.mrf.mxu0
      %v8661 = vadd.f32 %v8572, %v8660
      %8662 = vmatmul.f32.gmra.mxu0 %v8483
      %v8663 = vpop.f32.mrf.mxu0
      %v8664 = vadd.f32 %v8575, %v8663
      %8665 = vmatmul.f32.gmra.mxu0 %v8486
      %v8666 = vpop.f32.mrf.mxu0
      %v8667 = vadd.f32 %v8578, %v8666
      %8668 = vmatmul.f32.gmra.mxu0 %v8489
      %v8669 = vpop.f32.mrf.mxu0
      %v8670 = vadd.f32 %v8581, %v8669
      %8671 = vmatmul.f32.gmra.mxu0 %v8492
      %v8672 = vpop.f32.mrf.mxu0
      %v8673 = vadd.f32 %v8584, %v8672
      %8674 = vmatmul.f32.gmra.mxu0 %v8495
      %v8675 = vpop.f32.mrf.mxu0
      %v8676 = vadd.f32 %v8587, %v8675
      %8677 = vmatmul.f32.gmra.mxu0 %v8498
      %v8678 = vpop.f32.mrf.mxu0
      %v8679 = vadd.f32 %v8590, %v8678
      %8680 = vmatmul.f32.gmra.mxu0 %v8501
      %v8681 = vpop.f32.mrf.mxu0
      %v8682 = vadd.f32 %v8593, %v8681
      %8683 = vmatmul.f32.gmra.mxu0 %v8504
      %v8684 = vpop.f32.mrf.mxu0
      %v8685 = vadd.f32 %v8596, %v8684
      %8686 = vmatmul.f32.gmra.mxu0 %v8507
      %v8687 = vpop.f32.mrf.mxu0
      %v8688 = vadd.f32 %v8599, %v8687
      %8689 = vmatmul.f32.gmra.mxu0 %v8510
      %v8690 = vpop.f32.mrf.mxu0
      %v8691 = vadd.f32 %v8602, %v8690
      %8692 = vmatmul.f32.gmra.mxu0 %v8513
      %v8693 = vpop.f32.mrf.mxu0
      %v8694 = vadd.f32 %v8605, %v8693
      %8695 = vmatmul.f32.gmra.mxu0 %v8516
      %v8696 = vpop.f32.mrf.mxu0
      %v8697 = vadd.f32 %v8608, %v8696
      %8698 = vmatmul.f32.gmra.mxu0 %v8519
      %v8699 = vpop.f32.mrf.mxu0
      %v8700 = vadd.f32 %v8611, %v8699
      %8701 = vmatmul.f32.gmra.mxu0 %v8522
      %v8702 = vpop.f32.mrf.mxu0
      %v8703 = vadd.f32 %v8614, %v8702
      %8704 = vmatmul.f32.gmra.mxu0 %v8525
      %v8705 = vpop.f32.mrf.mxu0
      %v8706 = vadd.f32 %v8617, %v8705
      %8707 = vdwg.mxu0
      %v8708 = vmax.f32 %v8637, 0.0
      %v8709 = vmax.f32 %v8640, 0.0
      %v8710 = vmax.f32 %v8643, 0.0
      %v8711 = vmax.f32 %v8646, 0.0
      %v8712 = vmax.f32 %v8649, 0.0
      %v8713 = vmax.f32 %v8652, 0.0
      %v8714 = vmax.f32 %v8655, 0.0
      %v8715 = vmax.f32 %v8658, 0.0
      %v8716 = vmax.f32 %v8661, 0.0
      %v8717 = vmax.f32 %v8664, 0.0
      %v8718 = vmax.f32 %v8667, 0.0
      %v8719 = vmax.f32 %v8670, 0.0
      %v8720 = vmax.f32 %v8673, 0.0
      %v8721 = vmax.f32 %v8676, 0.0
      %v8722 = vmax.f32 %v8679, 0.0
      %v8723 = vmax.f32 %v8682, 0.0
      %v8724 = vmax.f32 %v8685, 0.0
      %v8725 = vmax.f32 %v8688, 0.0
      %v8726 = vmax.f32 %v8691, 0.0
      %v8727 = vmax.f32 %v8694, 0.0
      %v8728 = vmax.f32 %v8697, 0.0
      %v8729 = vmax.f32 %v8700, 0.0
      %v8730 = vmax.f32 %v8703, 0.0
      %v8731 = vmax.f32 %v8706, 0.0
      %v8732 = vld [vmem:[%s3] sm:$0xff]
      %v8733 = vld [vmem:[%s3 + $0x8] sm:$0xff]
      %v8734 = vld [vmem:[%s3 + $0x10] sm:$0xff]
      %v8735 = vld [vmem:[%s3 + $0x18] sm:$0xff]
      %v8736 = vld [vmem:[%s3 + $0x20] sm:$0xff]
      %v8737 = vld [vmem:[%s3 + $0x28] sm:$0xff]
      %v8738 = vld [vmem:[%s3 + $0x30] sm:$0xff]
      %v8739 = vld [vmem:[%s3 + $0x38] sm:$0xff]
      %v8740 = vld [vmem:[%s4] sm:$0x1]
      %v8742 = vperm.slane %v8740, 0
      %v8745 = vsel %vm8369, %v8708, 0
      %v8748 = vsel %vm8369, %v8709, 0
      %v8751 = vsel %vm8369, %v8710, 0
      %v8754 = vsel %vm8369, %v8711, 0
      %v8757 = vsel %vm8369, %v8712, 0
      %v8760 = vsel %vm8369, %v8713, 0
      %v8763 = vsel %vm8369, %v8714, 0
      %v8766 = vsel %vm8369, %v8715, 0
      %v8769 = vsel %vm8369, %v8716, 0
      %v8772 = vsel %vm8369, %v8717, 0
      %v8775 = vsel %vm8369, %v8718, 0
      %v8778 = vsel %vm8369, %v8719, 0
      %v8781 = vsel %vm8369, %v8720, 0
      %v8784 = vsel %vm8369, %v8721, 0
      %v8787 = vsel %vm8369, %v8722, 0
      %v8790 = vsel %vm8369, %v8723, 0
      %v8793 = vsel %vm8369, %v8724, 0
      %v8796 = vsel %vm8369, %v8725, 0
      %v8799 = vsel %vm8369, %v8726, 0
      %v8802 = vsel %vm8369, %v8727, 0
      %v8805 = vsel %vm8369, %v8728, 0
      %v8808 = vsel %vm8369, %v8729, 0
      %v8811 = vsel %vm8369, %v8730, 0
      %v8814 = vsel %vm8369, %v8731, 0
      %8816 = vmatpush.msra.mxu0 0.0
      %8817 = vmatpush.msra.mxu0 0.0
      %8818 = vmatpush.msra.mxu0 0.0
      %8819 = vmatpush.msra.mxu0 0.0
      %8820 = vmatpush.msra.mxu0 0.0
      %8821 = vmatpush.msra.mxu0 0.0
      %8822 = vmatpush.msra.mxu0 0.0
      %8823 = vmatpush.msra.mxu0 0.0
      %8824 = vmatpush.msra.mxu0 %v8739
      %8825 = vmatpush.msra.mxu0 %v8738
      %8826 = vmatpush.msra.mxu0 %v8737
      %8827 = vmatpush.msra.mxu0 %v8736
      %8828 = vmatpush.msra.mxu0 %v8735
      %8829 = vmatpush.msra.mxu0 %v8734
      %8830 = vmatpush.msra.mxu0 %v8733
      %8831 = vmatpush.msra.mxu0 %v8732
      %8832 = vmatmul.f32.gmra.mxu0 %v8745
      %v8833 = vpop.f32.mrf.mxu0
      %v8834 = vadd.f32 %v8742, %v8833
      %8835 = vmatmul.f32.gmra.mxu0 %v8748
      %v8836 = vpop.f32.mrf.mxu0
      %v8837 = vadd.f32 %v8742, %v8836
      %8838 = vmatmul.f32.gmra.mxu0 %v8751
      %v8839 = vpop.f32.mrf.mxu0
      %v8840 = vadd.f32 %v8742, %v8839
      %8841 = vmatmul.f32.gmra.mxu0 %v8754
      %v8842 = vpop.f32.mrf.mxu0
      %v8843 = vadd.f32 %v8742, %v8842
      %8844 = vmatmul.f32.gmra.mxu0 %v8757
      %v8845 = vpop.f32.mrf.mxu0
      %v8846 = vadd.f32 %v8742, %v8845
      %8847 = vmatmul.f32.gmra.mxu0 %v8760
      %v8848 = vpop.f32.mrf.mxu0
      %v8849 = vadd.f32 %v8742, %v8848
      %8850 = vmatmul.f32.gmra.mxu0 %v8763
      %v8851 = vpop.f32.mrf.mxu0
      %v8852 = vadd.f32 %v8742, %v8851
      %8853 = vmatmul.f32.gmra.mxu0 %v8766
      %v8854 = vpop.f32.mrf.mxu0
      %v8855 = vadd.f32 %v8742, %v8854
      %8856 = vmatmul.f32.gmra.mxu0 %v8769
      %v8857 = vpop.f32.mrf.mxu0
      %v8858 = vadd.f32 %v8742, %v8857
      %8859 = vmatmul.f32.gmra.mxu0 %v8772
      %v8860 = vpop.f32.mrf.mxu0
      %v8861 = vadd.f32 %v8742, %v8860
      %8862 = vmatmul.f32.gmra.mxu0 %v8775
      %v8863 = vpop.f32.mrf.mxu0
      %v8864 = vadd.f32 %v8742, %v8863
      %8865 = vmatmul.f32.gmra.mxu0 %v8778
      %v8866 = vpop.f32.mrf.mxu0
      %v8867 = vadd.f32 %v8742, %v8866
      %8868 = vmatmul.f32.gmra.mxu0 %v8781
      %v8869 = vpop.f32.mrf.mxu0
      %v8870 = vadd.f32 %v8742, %v8869
      %8871 = vmatmul.f32.gmra.mxu0 %v8784
      %v8872 = vpop.f32.mrf.mxu0
      %v8873 = vadd.f32 %v8742, %v8872
      %8874 = vmatmul.f32.gmra.mxu0 %v8787
      %v8875 = vpop.f32.mrf.mxu0
      %v8876 = vadd.f32 %v8742, %v8875
      %8877 = vmatmul.f32.gmra.mxu0 %v8790
      %v8878 = vpop.f32.mrf.mxu0
      %v8879 = vadd.f32 %v8742, %v8878
      %8880 = vmatmul.f32.gmra.mxu0 %v8793
      %v8881 = vpop.f32.mrf.mxu0
      %v8882 = vadd.f32 %v8742, %v8881
      %8883 = vmatmul.f32.gmra.mxu0 %v8796
      %v8884 = vpop.f32.mrf.mxu0
      %v8885 = vadd.f32 %v8742, %v8884
      %8886 = vmatmul.f32.gmra.mxu0 %v8799
      %v8887 = vpop.f32.mrf.mxu0
      %v8888 = vadd.f32 %v8742, %v8887
      %8889 = vmatmul.f32.gmra.mxu0 %v8802
      %v8890 = vpop.f32.mrf.mxu0
      %v8891 = vadd.f32 %v8742, %v8890
      %8892 = vmatmul.f32.gmra.mxu0 %v8805
      %v8893 = vpop.f32.mrf.mxu0
      %v8894 = vadd.f32 %v8742, %v8893
      %8895 = vmatmul.f32.gmra.mxu0 %v8808
      %v8896 = vpop.f32.mrf.mxu0
      %v8897 = vadd.f32 %v8742, %v8896
      %8898 = vmatmul.f32.gmra.mxu0 %v8811
      %v8899 = vpop.f32.mrf.mxu0
      %v8900 = vadd.f32 %v8742, %v8899
      %8901 = vmatmul.f32.gmra.mxu0 %v8814
      %v8902 = vpop.f32.mrf.mxu0
      %v8903 = vadd.f32 %v8742, %v8902
      %8904 = vdwg.mxu0
      %v8905 = vmax.f32 %v8834, 0.0
      %v8906 = vmax.f32 %v8837, 0.0
      %v8907 = vmax.f32 %v8840, 0.0
      %v8908 = vmax.f32 %v8843, 0.0
      %v8909 = vmax.f32 %v8846, 0.0
      %v8910 = vmax.f32 %v8849, 0.0
      %v8911 = vmax.f32 %v8852, 0.0
      %v8912 = vmax.f32 %v8855, 0.0
      %v8913 = vmax.f32 %v8858, 0.0
      %v8914 = vmax.f32 %v8861, 0.0
      %v8915 = vmax.f32 %v8864, 0.0
      %v8916 = vmax.f32 %v8867, 0.0
      %v8917 = vmax.f32 %v8870, 0.0
      %v8918 = vmax.f32 %v8873, 0.0
      %v8919 = vmax.f32 %v8876, 0.0
      %v8920 = vmax.f32 %v8879, 0.0
      %v8921 = vmax.f32 %v8882, 0.0
      %v8922 = vmax.f32 %v8885, 0.0
      %v8923 = vmax.f32 %v8888, 0.0
      %v8924 = vmax.f32 %v8891, 0.0
      %v8925 = vmax.f32 %v8894, 0.0
      %v8926 = vmax.f32 %v8897, 0.0
      %v8927 = vmax.f32 %v8900, 0.0
      %v8928 = vmax.f32 %v8903, 0.0
      %vm8929 = vcmask 261120
      %8930 = vst.msk [vmem:[#allocation2 + $0x2] sm:$0xff] %vm8929, %v8905
      %8931 = vst.msk [vmem:[#allocation2 + $0xa] sm:$0xff] %vm8929, %v8906
      %8932 = vst.msk [vmem:[#allocation2 + $0x1a] sm:$0xff] %vm8929, %v8907
      %8933 = vst.msk [vmem:[#allocation2 + $0x22] sm:$0xff] %vm8929, %v8908
      %8934 = vst.msk [vmem:[#allocation2 + $0x32] sm:$0xff] %vm8929, %v8909
      %8935 = vst.msk [vmem:[#allocation2 + $0x3a] sm:$0xff] %vm8929, %v8910
      %8936 = vst.msk [vmem:[#allocation2 + $0x4a] sm:$0xff] %vm8929, %v8911
      %8937 = vst.msk [vmem:[#allocation2 + $0x52] sm:$0xff] %vm8929, %v8912
      %8938 = vst.msk [vmem:[#allocation2 + $0x62] sm:$0xff] %vm8929, %v8913
      %8939 = vst.msk [vmem:[#allocation2 + $0x6a] sm:$0xff] %vm8929, %v8914
      %8940 = vst.msk [vmem:[#allocation2 + $0x7a] sm:$0xff] %vm8929, %v8915
      %8941 = vst.msk [vmem:[#allocation2 + $0x82] sm:$0xff] %vm8929, %v8916
      %8942 = vst.msk [vmem:[#allocation2 + $0x92] sm:$0xff] %vm8929, %v8917
      %8943 = vst.msk [vmem:[#allocation2 + $0x9a] sm:$0xff] %vm8929, %v8918
      %8944 = vst.msk [vmem:[#allocation2 + $0xaa] sm:$0xff] %vm8929, %v8919
      %8945 = vst.msk [vmem:[#allocation2 + $0xb2] sm:$0xff] %vm8929, %v8920
      %8946 = vst.msk [vmem:[#allocation2 + $0xc2] sm:$0xff] %vm8929, %v8921
      %8947 = vst.msk [vmem:[#allocation2 + $0xca] sm:$0xff] %vm8929, %v8922
      %8948 = vst.msk [vmem:[#allocation2 + $0xda] sm:$0xff] %vm8929, %v8923
      %8949 = vst.msk [vmem:[#allocation2 + $0xe2] sm:$0xff] %vm8929, %v8924
      %8950 = vst.msk [vmem:[#allocation2 + $0xf2] sm:$0xff] %vm8929, %v8925
      %8951 = vst.msk [vmem:[#allocation2 + $0xfa] sm:$0xff] %vm8929, %v8926
      %8952 = vst.msk [vmem:[#allocation2 + $0x10a] sm:$0xff] %vm8929, %v8927
      %8953 = vst.msk [vmem:[#allocation2 + $0x112] sm:$0xff] %vm8929, %v8928
      %v8954 = vld [vmem:[#allocation2 + $0x2] sm:$0x1]
      %v8955 = vld [vmem:[#allocation2 + $0x1a] sm:$0x1]
      %v8956 = vld [vmem:[#allocation2 + $0x32] sm:$0x1]
      %v8957 = vld [vmem:[#allocation2 + $0x4a] sm:$0x1]
      %v8958 = vld [vmem:[#allocation2 + $0x62] sm:$0x1]
      %v8959 = vld [vmem:[#allocation2 + $0x7a] sm:$0x1]
      %v8960 = vld [vmem:[#allocation2 + $0x92] sm:$0x1]
      %v8961 = vld [vmem:[#allocation2 + $0xaa] sm:$0x1]
      %v8962 = vld [vmem:[#allocation2 + $0xc2] sm:$0x1]
      %v8963 = vld [vmem:[#allocation2 + $0xda] sm:$0x1]
      %v8964 = vld [vmem:[#allocation2 + $0xf2] sm:$0x1]
      %v8965 = vld [vmem:[#allocation2 + $0x10a] sm:$0x1]
      %vm8966 = vcmask 253952
      %8967 = vst.msk [vmem:[#allocation2] sm:$0x1] %vm8966, %v8954
      %8968 = vst.msk [vmem:[#allocation2 + $0x18] sm:$0x1] %vm8966, %v8955
      %8969 = vst.msk [vmem:[#allocation2 + $0x30] sm:$0x1] %vm8966, %v8956
      %8970 = vst.msk [vmem:[#allocation2 + $0x48] sm:$0x1] %vm8966, %v8957
      %8971 = vst.msk [vmem:[#allocation2 + $0x60] sm:$0x1] %vm8966, %v8958
      %8972 = vst.msk [vmem:[#allocation2 + $0x78] sm:$0x1] %vm8966, %v8959
      %8973 = vst.msk [vmem:[#allocation2 + $0x90] sm:$0x1] %vm8966, %v8960
      %8974 = vst.msk [vmem:[#allocation2 + $0xa8] sm:$0x1] %vm8966, %v8961
      %8975 = vst.msk [vmem:[#allocation2 + $0xc0] sm:$0x1] %vm8966, %v8962
      %8976 = vst.msk [vmem:[#allocation2 + $0xd8] sm:$0x1] %vm8966, %v8963
      %8977 = vst.msk [vmem:[#allocation2 + $0xf0] sm:$0x1] %vm8966, %v8964
      %8978 = vst.msk [vmem:[#allocation2 + $0x108] sm:$0x1] %vm8966, %v8965
      %v8979 = vld [vmem:[#allocation2 + $0x2] sm:$0x1]
      %v8980 = vld [vmem:[#allocation2 + $0x1a] sm:$0x1]
      %v8981 = vld [vmem:[#allocation2 + $0x32] sm:$0x1]
      %v8982 = vld [vmem:[#allocation2 + $0x4a] sm:$0x1]
      %v8983 = vld [vmem:[#allocation2 + $0x62] sm:$0x1]
      %v8984 = vld [vmem:[#allocation2 + $0x7a] sm:$0x1]
      %v8985 = vld [vmem:[#allocation2 + $0x92] sm:$0x1]
      %v8986 = vld [vmem:[#allocation2 + $0xaa] sm:$0x1]
      %v8987 = vld [vmem:[#allocation2 + $0xc2] sm:$0x1]
      %v8988 = vld [vmem:[#allocation2 + $0xda] sm:$0x1]
      %v8989 = vld [vmem:[#allocation2 + $0xf2] sm:$0x1]
      %v8990 = vld [vmem:[#allocation2 + $0x10a] sm:$0x1]
      %8991 = vst.msk [vmem:[#allocation2 + $0x1] sm:$0x1] %vm8966, %v8979
      %8992 = vst.msk [vmem:[#allocation2 + $0x19] sm:$0x1] %vm8966, %v8980
      %8993 = vst.msk [vmem:[#allocation2 + $0x31] sm:$0x1] %vm8966, %v8981
      %8994 = vst.msk [vmem:[#allocation2 + $0x49] sm:$0x1] %vm8966, %v8982
      %8995 = vst.msk [vmem:[#allocation2 + $0x61] sm:$0x1] %vm8966, %v8983
      %8996 = vst.msk [vmem:[#allocation2 + $0x79] sm:$0x1] %vm8966, %v8984
      %8997 = vst.msk [vmem:[#allocation2 + $0x91] sm:$0x1] %vm8966, %v8985
      %8998 = vst.msk [vmem:[#allocation2 + $0xa9] sm:$0x1] %vm8966, %v8986
      %8999 = vst.msk [vmem:[#allocation2 + $0xc1] sm:$0x1] %vm8966, %v8987
      %9000 = vst.msk [vmem:[#allocation2 + $0xd9] sm:$0x1] %vm8966, %v8988
      %9001 = vst.msk [vmem:[#allocation2 + $0xf1] sm:$0x1] %vm8966, %v8989
      %9002 = vst.msk [vmem:[#allocation2 + $0x109] sm:$0x1] %vm8966, %v8990
      %v9003 = vld [vmem:[#allocation2 + $0x11] sm:$0x1]
      %v9004 = vld [vmem:[#allocation2 + $0x29] sm:$0x1]
      %v9005 = vld [vmem:[#allocation2 + $0x41] sm:$0x1]
      %v9006 = vld [vmem:[#allocation2 + $0x59] sm:$0x1]
      %v9007 = vld [vmem:[#allocation2 + $0x71] sm:$0x1]
      %v9008 = vld [vmem:[#allocation2 + $0x89] sm:$0x1]
      %v9009 = vld [vmem:[#allocation2 + $0xa1] sm:$0x1]
      %v9010 = vld [vmem:[#allocation2 + $0xb9] sm:$0x1]
      %v9011 = vld [vmem:[#allocation2 + $0xd1] sm:$0x1]
      %v9012 = vld [vmem:[#allocation2 + $0xe9] sm:$0x1]
      %v9013 = vld [vmem:[#allocation2 + $0x101] sm:$0x1]
      %v9014 = vld [vmem:[#allocation2 + $0x119] sm:$0x1]
      %9015 = vst.msk [vmem:[#allocation2 + $0x12] sm:$0x1] %vm8966, %v9003
      %9016 = vst.msk [vmem:[#allocation2 + $0x2a] sm:$0x1] %vm8966, %v9004
      %9017 = vst.msk [vmem:[#allocation2 + $0x42] sm:$0x1] %vm8966, %v9005
      %9018 = vst.msk [vmem:[#allocation2 + $0x5a] sm:$0x1] %vm8966, %v9006
      %9019 = vst.msk [vmem:[#allocation2 + $0x72] sm:$0x1] %vm8966, %v9007
      %9020 = vst.msk [vmem:[#allocation2 + $0x8a] sm:$0x1] %vm8966, %v9008
      %9021 = vst.msk [vmem:[#allocation2 + $0xa2] sm:$0x1] %vm8966, %v9009
      %9022 = vst.msk [vmem:[#allocation2 + $0xba] sm:$0x1] %vm8966, %v9010
      %9023 = vst.msk [vmem:[#allocation2 + $0xd2] sm:$0x1] %vm8966, %v9011
      %9024 = vst.msk [vmem:[#allocation2 + $0xea] sm:$0x1] %vm8966, %v9012
      %9025 = vst.msk [vmem:[#allocation2 + $0x102] sm:$0x1] %vm8966, %v9013
      %9026 = vst.msk [vmem:[#allocation2 + $0x11a] sm:$0x1] %vm8966, %v9014
      %v9027 = vld [vmem:[#allocation2 + $0x11] sm:$0x1]
      %v9028 = vld [vmem:[#allocation2 + $0x29] sm:$0x1]
      %v9029 = vld [vmem:[#allocation2 + $0x41] sm:$0x1]
      %v9030 = vld [vmem:[#allocation2 + $0x59] sm:$0x1]
      %v9031 = vld [vmem:[#allocation2 + $0x71] sm:$0x1]
      %v9032 = vld [vmem:[#allocation2 + $0x89] sm:$0x1]
      %v9033 = vld [vmem:[#allocation2 + $0xa1] sm:$0x1]
      %v9034 = vld [vmem:[#allocation2 + $0xb9] sm:$0x1]
      %v9035 = vld [vmem:[#allocation2 + $0xd1] sm:$0x1]
      %v9036 = vld [vmem:[#allocation2 + $0xe9] sm:$0x1]
      %v9037 = vld [vmem:[#allocation2 + $0x101] sm:$0x1]
      %v9038 = vld [vmem:[#allocation2 + $0x119] sm:$0x1]
      %9039 = vst.msk [vmem:[#allocation2 + $0x13] sm:$0x1] %vm8966, %v9027
      %9040 = vst.msk [vmem:[#allocation2 + $0x2b] sm:$0x1] %vm8966, %v9028
      %9041 = vst.msk [vmem:[#allocation2 + $0x43] sm:$0x1] %vm8966, %v9029
      %9042 = vst.msk [vmem:[#allocation2 + $0x5b] sm:$0x1] %vm8966, %v9030
      %9043 = vst.msk [vmem:[#allocation2 + $0x73] sm:$0x1] %vm8966, %v9031
      %9044 = vst.msk [vmem:[#allocation2 + $0x8b] sm:$0x1] %vm8966, %v9032
      %9045 = vst.msk [vmem:[#allocation2 + $0xa3] sm:$0x1] %vm8966, %v9033
      %9046 = vst.msk [vmem:[#allocation2 + $0xbb] sm:$0x1] %vm8966, %v9034
      %9047 = vst.msk [vmem:[#allocation2 + $0xd3] sm:$0x1] %vm8966, %v9035
      %9048 = vst.msk [vmem:[#allocation2 + $0xeb] sm:$0x1] %vm8966, %v9036
      %9049 = vst.msk [vmem:[#allocation2 + $0x103] sm:$0x1] %vm8966, %v9037
      %9050 = vst.msk [vmem:[#allocation2 + $0x11b] sm:$0x1] %vm8966, %v9038
      %p9051 = scmp.eq.s32.totalorder %s23, 0
      // Predicated region
      $region49: #{srcnn_forward.1} parent=47 // pred_check
        %p9052 = pneg %p9051
      $region50: #{srcnn_forward.1} parent=47 // pred_check_branch
        %9054 = sbr.rel (%p9052) target = $region52
      $region51: #{srcnn_forward.1} parent=47 // pred_region
        %s9055 = scalar_lea.vmem [#allocation2], 48
        %v9056 = vld [vmem:[%s9055] sm:$0xff]
        %v9057 = vld [vmem:[%s9055 + $0x8] sm:$0xff]
        %v9058 = vld [vmem:[%s9055 + $0x10] sm:$0xf]
        %9059 = vst.msk [vmem:[#allocation2] sm:$0xff] %vm8929, %v9056
        %9060 = vst.msk [vmem:[#allocation2 + $0x8] sm:$0xff] %vm8929, %v9057
        %vm9061 = vcmask 257024
        %9062 = vst.msk [vmem:[#allocation2 + $0x10] sm:$0xf] %vm9061, %v9058
        %v9063 = vld [vmem:[%s9055] sm:$0xff]
        %v9064 = vld [vmem:[%s9055 + $0x8] sm:$0xff]
        %v9065 = vld [vmem:[%s9055 + $0x10] sm:$0xf]
        %s9066 = scalar_lea.vmem [#allocation2], 24
        %9067 = vst.msk [vmem:[%s9066] sm:$0xff] %vm8929, %v9063
        %9068 = vst.msk [vmem:[%s9066 + $0x8] sm:$0xff] %vm8929, %v9064
        %9069 = vst.msk [vmem:[%s9066 + $0x10] sm:$0xf] %vm9061, %v9065
      $region52: #{srcnn_forward.1} parent=47 // pred_fallthru
        _
      %p9070 = scmp.eq.s32.totalorder %s23, 1
      // Predicated region
      $region53: #{srcnn_forward.1} parent=47 // pred_check
        %p9071 = pneg %p9070
      $region54: #{srcnn_forward.1} parent=47 // pred_check_branch
        %9073 = sbr.rel (%p9071) target = $region56
      $region55: #{srcnn_forward.1} parent=47 // pred_region
        %s9074 = scalar_lea.vmem [#allocation2], 216
        %v9075 = vld [vmem:[%s9074] sm:$0xff]
        %v9076 = vld [vmem:[%s9074 + $0x8] sm:$0xff]
        %v9077 = vld [vmem:[%s9074 + $0x10] sm:$0xf]
        %s9078 = scalar_lea.vmem [#allocation2], 240
        %9079 = vst.msk [vmem:[%s9078] sm:$0xff] %vm8929, %v9075
        %9080 = vst.msk [vmem:[%s9078 + $0x8] sm:$0xff] %vm8929, %v9076
        %vm9081 = vcmask 257024
        %9082 = vst.msk [vmem:[%s9078 + $0x10] sm:$0xf] %vm9081, %v9077
        %v9083 = vld [vmem:[%s9074] sm:$0xff]
        %v9084 = vld [vmem:[%s9074 + $0x8] sm:$0xff]
        %v9085 = vld [vmem:[%s9074 + $0x10] sm:$0xf]
        %s9086 = scalar_lea.vmem [#allocation2], 264
        %9087 = vst.msk [vmem:[%s9086] sm:$0xff] %vm8929, %v9083
        %9088 = vst.msk [vmem:[%s9086 + $0x8] sm:$0xff] %vm8929, %v9084
        %9089 = vst.msk [vmem:[%s9086 + $0x10] sm:$0xf] %vm9081, %v9085
      $region56: #{srcnn_forward.1} parent=47 // pred_fallthru
        _
      %v9090 = vld [vmem:[#allocation2] sm:$0xff]
      %v9091 = vld [vmem:[#allocation2 + $0x8] sm:$0xff]
      %v9092 = vld [vmem:[#allocation2 + $0x18] sm:$0xff]
      %v9093 = vld [vmem:[#allocation2 + $0x20] sm:$0xff]
      %v9094 = vld [vmem:[#allocation2 + $0x30] sm:$0xff]
      %v9095 = vld [vmem:[#allocation2 + $0x38] sm:$0xff]
      %v9096 = vld [vmem:[#allocation2 + $0x48] sm:$0xff]
      %v9097 = vld [vmem:[#allocation2 + $0x50] sm:$0xff]
      %v9098 = vld [vmem:[#allocation2 + $0x60] sm:$0xff]
      %v9099 = vld [vmem:[#allocation2 + $0x68] sm:$0xff]
      %v9100 = vld [vmem:[#allocation2 + $0x78] sm:$0xff]
      %v9101 = vld [vmem:[#allocation2 + $0x80] sm:$0xff]
      %v9102 = vld [vmem:[#allocation2 + $0x90] sm:$0xff]
      %v9103 = vld [vmem:[#allocation2 + $0x98] sm:$0xff]
      %v9104 = vld [vmem:[#allocation2 + $0xa8] sm:$0xff]
      %v9105 = vld [vmem:[#allocation2 + $0xb0] sm:$0xff]
      %v9106 = vld [vmem:[#allocation2 + $0x1] sm:$0xff]
      %v9107 = vld [vmem:[#allocation2 + $0x9] sm:$0xff]
      %v9108 = vld [vmem:[#allocation2 + $0x19] sm:$0xff]
      %v9109 = vld [vmem:[#allocation2 + $0x21] sm:$0xff]
      %v9110 = vld [vmem:[#allocation2 + $0x31] sm:$0xff]
      %v9111 = vld [vmem:[#allocation2 + $0x39] sm:$0xff]
      %v9112 = vld [vmem:[#allocation2 + $0x49] sm:$0xff]
      %v9113 = vld [vmem:[#allocation2 + $0x51] sm:$0xff]
      %v9114 = vld [vmem:[#allocation2 + $0x61] sm:$0xff]
      %v9115 = vld [vmem:[#allocation2 + $0x69] sm:$0xff]
      %v9116 = vld [vmem:[#allocation2 + $0x79] sm:$0xff]
      %v9117 = vld [vmem:[#allocation2 + $0x81] sm:$0xff]
      %v9118 = vld [vmem:[#allocation2 + $0x91] sm:$0xff]
      %v9119 = vld [vmem:[#allocation2 + $0x99] sm:$0xff]
      %v9120 = vld [vmem:[#allocation2 + $0xa9] sm:$0xff]
      %v9121 = vld [vmem:[#allocation2 + $0xb1] sm:$0xff]
      %v9122 = vld [vmem:[#allocation2 + $0x2] sm:$0xff]
      %v9123 = vld [vmem:[#allocation2 + $0xa] sm:$0xff]
      %v9124 = vld [vmem:[#allocation2 + $0x1a] sm:$0xff]
      %v9125 = vld [vmem:[#allocation2 + $0x22] sm:$0xff]
      %v9126 = vld [vmem:[#allocation2 + $0x32] sm:$0xff]
      %v9127 = vld [vmem:[#allocation2 + $0x3a] sm:$0xff]
      %v9128 = vld [vmem:[#allocation2 + $0x4a] sm:$0xff]
      %v9129 = vld [vmem:[#allocation2 + $0x52] sm:$0xff]
      %v9130 = vld [vmem:[#allocation2 + $0x62] sm:$0xff]
      %v9131 = vld [vmem:[#allocation2 + $0x6a] sm:$0xff]
      %v9132 = vld [vmem:[#allocation2 + $0x7a] sm:$0xff]
      %v9133 = vld [vmem:[#allocation2 + $0x82] sm:$0xff]
      %v9134 = vld [vmem:[#allocation2 + $0x92] sm:$0xff]
      %v9135 = vld [vmem:[#allocation2 + $0x9a] sm:$0xff]
      %v9136 = vld [vmem:[#allocation2 + $0xaa] sm:$0xff]
      %v9137 = vld [vmem:[#allocation2 + $0xb2] sm:$0xff]
      %v9138 = vld [vmem:[#allocation2 + $0x3] sm:$0xff]
      %v9139 = vld [vmem:[#allocation2 + $0xb] sm:$0xff]
      %v9140 = vld [vmem:[#allocation2 + $0x1b] sm:$0xff]
      %v9141 = vld [vmem:[#allocation2 + $0x23] sm:$0xff]
      %v9142 = vld [vmem:[#allocation2 + $0x33] sm:$0xff]
      %v9143 = vld [vmem:[#allocation2 + $0x3b] sm:$0xff]
      %v9144 = vld [vmem:[#allocation2 + $0x4b] sm:$0xff]
      %v9145 = vld [vmem:[#allocation2 + $0x53] sm:$0xff]
      %v9146 = vld [vmem:[#allocation2 + $0x63] sm:$0xff]
      %v9147 = vld [vmem:[#allocation2 + $0x6b] sm:$0xff]
      %v9148 = vld [vmem:[#allocation2 + $0x7b] sm:$0xff]
      %v9149 = vld [vmem:[#allocation2 + $0x83] sm:$0xff]
      %v9150 = vld [vmem:[#allocation2 + $0x93] sm:$0xff]
      %v9151 = vld [vmem:[#allocation2 + $0x9b] sm:$0xff]
      %v9152 = vld [vmem:[#allocation2 + $0xab] sm:$0xff]
      %v9153 = vld [vmem:[#allocation2 + $0xb3] sm:$0xff]
      %v9154 = vld [vmem:[#allocation2 + $0x4] sm:$0xff]
      %v9155 = vld [vmem:[#allocation2 + $0xc] sm:$0xff]
      %v9156 = vld [vmem:[#allocation2 + $0x1c] sm:$0xff]
      %v9157 = vld [vmem:[#allocation2 + $0x24] sm:$0xff]
      %v9158 = vld [vmem:[#allocation2 + $0x34] sm:$0xff]
      %v9159 = vld [vmem:[#allocation2 + $0x3c] sm:$0xff]
      %v9160 = vld [vmem:[#allocation2 + $0x4c] sm:$0xff]
      %v9161 = vld [vmem:[#allocation2 + $0x54] sm:$0xff]
      %v9162 = vld [vmem:[#allocation2 + $0x64] sm:$0xff]
      %v9163 = vld [vmem:[#allocation2 + $0x6c] sm:$0xff]
      %v9164 = vld [vmem:[#allocation2 + $0x7c] sm:$0xff]
      %v9165 = vld [vmem:[#allocation2 + $0x84] sm:$0xff]
      %v9166 = vld [vmem:[#allocation2 + $0x94] sm:$0xff]
      %v9167 = vld [vmem:[#allocation2 + $0x9c] sm:$0xff]
      %v9168 = vld [vmem:[#allocation2 + $0xac] sm:$0xff]
      %v9169 = vld [vmem:[#allocation2 + $0xb4] sm:$0xff]
      %s9170 = scalar_lea.vmem [#allocation2], 24
      %v9171 = vld [vmem:[%s9170] sm:$0xff]
      %v9172 = vld [vmem:[%s9170 + $0x8] sm:$0xff]
      %v9173 = vld [vmem:[%s9170 + $0x18] sm:$0xff]
      %v9174 = vld [vmem:[%s9170 + $0x20] sm:$0xff]
      %v9175 = vld [vmem:[%s9170 + $0x30] sm:$0xff]
      %v9176 = vld [vmem:[%s9170 + $0x38] sm:$0xff]
      %v9177 = vld [vmem:[%s9170 + $0x48] sm:$0xff]
      %v9178 = vld [vmem:[%s9170 + $0x50] sm:$0xff]
      %v9179 = vld [vmem:[%s9170 + $0x60] sm:$0xff]
      %v9180 = vld [vmem:[%s9170 + $0x68] sm:$0xff]
      %v9181 = vld [vmem:[%s9170 + $0x78] sm:$0xff]
      %v9182 = vld [vmem:[%s9170 + $0x80] sm:$0xff]
      %v9183 = vld [vmem:[%s9170 + $0x90] sm:$0xff]
      %v9184 = vld [vmem:[%s9170 + $0x98] sm:$0xff]
      %v9185 = vld [vmem:[%s9170 + $0xa8] sm:$0xff]
      %v9186 = vld [vmem:[%s9170 + $0xb0] sm:$0xff]
      %v9187 = vld [vmem:[%s9170 + $0x1] sm:$0xff]
      %v9188 = vld [vmem:[%s9170 + $0x9] sm:$0xff]
      %v9189 = vld [vmem:[%s9170 + $0x19] sm:$0xff]
      %v9190 = vld [vmem:[%s9170 + $0x21] sm:$0xff]
      %v9191 = vld [vmem:[%s9170 + $0x31] sm:$0xff]
      %v9192 = vld [vmem:[%s9170 + $0x39] sm:$0xff]
      %v9193 = vld [vmem:[%s9170 + $0x49] sm:$0xff]
      %v9194 = vld [vmem:[%s9170 + $0x51] sm:$0xff]
      %v9195 = vld [vmem:[%s9170 + $0x61] sm:$0xff]
      %v9196 = vld [vmem:[%s9170 + $0x69] sm:$0xff]
      %v9197 = vld [vmem:[%s9170 + $0x79] sm:$0xff]
      %v9198 = vld [vmem:[%s9170 + $0x81] sm:$0xff]
      %v9199 = vld [vmem:[%s9170 + $0x91] sm:$0xff]
      %v9200 = vld [vmem:[%s9170 + $0x99] sm:$0xff]
      %v9201 = vld [vmem:[%s9170 + $0xa9] sm:$0xff]
      %v9202 = vld [vmem:[%s9170 + $0xb1] sm:$0xff]
      %v9203 = vld [vmem:[%s9170 + $0x2] sm:$0xff]
      %v9204 = vld [vmem:[%s9170 + $0xa] sm:$0xff]
      %v9205 = vld [vmem:[%s9170 + $0x1a] sm:$0xff]
      %v9206 = vld [vmem:[%s9170 + $0x22] sm:$0xff]
      %v9207 = vld [vmem:[%s9170 + $0x32] sm:$0xff]
      %v9208 = vld [vmem:[%s9170 + $0x3a] sm:$0xff]
      %v9209 = vld [vmem:[%s9170 + $0x4a] sm:$0xff]
      %v9210 = vld [vmem:[%s9170 + $0x52] sm:$0xff]
      %v9211 = vld [vmem:[%s9170 + $0x62] sm:$0xff]
      %v9212 = vld [vmem:[%s9170 + $0x6a] sm:$0xff]
      %v9213 = vld [vmem:[%s9170 + $0x7a] sm:$0xff]
      %v9214 = vld [vmem:[%s9170 + $0x82] sm:$0xff]
      %v9215 = vld [vmem:[%s9170 + $0x92] sm:$0xff]
      %v9216 = vld [vmem:[%s9170 + $0x9a] sm:$0xff]
      %v9217 = vld [vmem:[%s9170 + $0xaa] sm:$0xff]
      %v9218 = vld [vmem:[%s9170 + $0xb2] sm:$0xff]
      %v9219 = vld [vmem:[%s9170 + $0x3] sm:$0xff]
      %v9220 = vld [vmem:[%s9170 + $0xb] sm:$0xff]
      %v9221 = vld [vmem:[%s9170 + $0x1b] sm:$0xff]
      %v9222 = vld [vmem:[%s9170 + $0x23] sm:$0xff]
      %v9223 = vld [vmem:[%s9170 + $0x33] sm:$0xff]
      %v9224 = vld [vmem:[%s9170 + $0x3b] sm:$0xff]
      %v9225 = vld [vmem:[%s9170 + $0x4b] sm:$0xff]
      %v9226 = vld [vmem:[%s9170 + $0x53] sm:$0xff]
      %v9227 = vld [vmem:[%s9170 + $0x63] sm:$0xff]
      %v9228 = vld [vmem:[%s9170 + $0x6b] sm:$0xff]
      %v9229 = vld [vmem:[%s9170 + $0x7b] sm:$0xff]
      %v9230 = vld [vmem:[%s9170 + $0x83] sm:$0xff]
      %v9231 = vld [vmem:[%s9170 + $0x93] sm:$0xff]
      %v9232 = vld [vmem:[%s9170 + $0x9b] sm:$0xff]
      %v9233 = vld [vmem:[%s9170 + $0xab] sm:$0xff]
      %v9234 = vld [vmem:[%s9170 + $0xb3] sm:$0xff]
      %v9235 = vld [vmem:[%s9170 + $0x4] sm:$0xff]
      %v9236 = vld [vmem:[%s9170 + $0xc] sm:$0xff]
      %v9237 = vld [vmem:[%s9170 + $0x1c] sm:$0xff]
      %v9238 = vld [vmem:[%s9170 + $0x24] sm:$0xff]
      %v9239 = vld [vmem:[%s9170 + $0x34] sm:$0xff]
      %v9240 = vld [vmem:[%s9170 + $0x3c] sm:$0xff]
      %v9241 = vld [vmem:[%s9170 + $0x4c] sm:$0xff]
      %v9242 = vld [vmem:[%s9170 + $0x54] sm:$0xff]
      %v9243 = vld [vmem:[%s9170 + $0x64] sm:$0xff]
      %v9244 = vld [vmem:[%s9170 + $0x6c] sm:$0xff]
      %v9245 = vld [vmem:[%s9170 + $0x7c] sm:$0xff]
      %v9246 = vld [vmem:[%s9170 + $0x84] sm:$0xff]
      %v9247 = vld [vmem:[%s9170 + $0x94] sm:$0xff]
      %v9248 = vld [vmem:[%s9170 + $0x9c] sm:$0xff]
      %v9249 = vld [vmem:[%s9170 + $0xac] sm:$0xff]
      %v9250 = vld [vmem:[%s9170 + $0xb4] sm:$0xff]
      %s9251 = scalar_lea.vmem [#allocation2], 48
      %v9252 = vld [vmem:[%s9251] sm:$0xff]
      %v9253 = vld [vmem:[%s9251 + $0x8] sm:$0xff]
      %v9254 = vld [vmem:[%s9251 + $0x18] sm:$0xff]
      %v9255 = vld [vmem:[%s9251 + $0x20] sm:$0xff]
      %v9256 = vld [vmem:[%s9251 + $0x30] sm:$0xff]
      %v9257 = vld [vmem:[%s9251 + $0x38] sm:$0xff]
      %v9258 = vld [vmem:[%s9251 + $0x48] sm:$0xff]
      %v9259 = vld [vmem:[%s9251 + $0x50] sm:$0xff]
      %v9260 = vld [vmem:[%s9251 + $0x60] sm:$0xff]
      %v9261 = vld [vmem:[%s9251 + $0x68] sm:$0xff]
      %v9262 = vld [vmem:[%s9251 + $0x78] sm:$0xff]
      %v9263 = vld [vmem:[%s9251 + $0x80] sm:$0xff]
      %v9264 = vld [vmem:[%s9251 + $0x90] sm:$0xff]
      %v9265 = vld [vmem:[%s9251 + $0x98] sm:$0xff]
      %v9266 = vld [vmem:[%s9251 + $0xa8] sm:$0xff]
      %v9267 = vld [vmem:[%s9251 + $0xb0] sm:$0xff]
      %v9268 = vld [vmem:[%s9251 + $0x1] sm:$0xff]
      %v9269 = vld [vmem:[%s9251 + $0x9] sm:$0xff]
      %v9270 = vld [vmem:[%s9251 + $0x19] sm:$0xff]
      %v9271 = vld [vmem:[%s9251 + $0x21] sm:$0xff]
      %v9272 = vld [vmem:[%s9251 + $0x31] sm:$0xff]
      %v9273 = vld [vmem:[%s9251 + $0x39] sm:$0xff]
      %v9274 = vld [vmem:[%s9251 + $0x49] sm:$0xff]
      %v9275 = vld [vmem:[%s9251 + $0x51] sm:$0xff]
      %v9276 = vld [vmem:[%s9251 + $0x61] sm:$0xff]
      %v9277 = vld [vmem:[%s9251 + $0x69] sm:$0xff]
      %v9278 = vld [vmem:[%s9251 + $0x79] sm:$0xff]
      %v9279 = vld [vmem:[%s9251 + $0x81] sm:$0xff]
      %v9280 = vld [vmem:[%s9251 + $0x91] sm:$0xff]
      %v9281 = vld [vmem:[%s9251 + $0x99] sm:$0xff]
      %v9282 = vld [vmem:[%s9251 + $0xa9] sm:$0xff]
      %v9283 = vld [vmem:[%s9251 + $0xb1] sm:$0xff]
      %v9284 = vld [vmem:[%s9251 + $0x2] sm:$0xff]
      %v9285 = vld [vmem:[%s9251 + $0xa] sm:$0xff]
      %v9286 = vld [vmem:[%s9251 + $0x1a] sm:$0xff]
      %v9287 = vld [vmem:[%s9251 + $0x22] sm:$0xff]
      %v9288 = vld [vmem:[%s9251 + $0x32] sm:$0xff]
      %v9289 = vld [vmem:[%s9251 + $0x3a] sm:$0xff]
      %v9290 = vld [vmem:[%s9251 + $0x4a] sm:$0xff]
      %v9291 = vld [vmem:[%s9251 + $0x52] sm:$0xff]
      %v9292 = vld [vmem:[%s9251 + $0x62] sm:$0xff]
      %v9293 = vld [vmem:[%s9251 + $0x6a] sm:$0xff]
      %v9294 = vld [vmem:[%s9251 + $0x7a] sm:$0xff]
      %v9295 = vld [vmem:[%s9251 + $0x82] sm:$0xff]
      %v9296 = vld [vmem:[%s9251 + $0x92] sm:$0xff]
      %v9297 = vld [vmem:[%s9251 + $0x9a] sm:$0xff]
      %v9298 = vld [vmem:[%s9251 + $0xaa] sm:$0xff]
      %v9299 = vld [vmem:[%s9251 + $0xb2] sm:$0xff]
      %v9300 = vld [vmem:[%s9251 + $0x3] sm:$0xff]
      %v9301 = vld [vmem:[%s9251 + $0xb] sm:$0xff]
      %v9302 = vld [vmem:[%s9251 + $0x1b] sm:$0xff]
      %v9303 = vld [vmem:[%s9251 + $0x23] sm:$0xff]
      %v9304 = vld [vmem:[%s9251 + $0x33] sm:$0xff]
      %v9305 = vld [vmem:[%s9251 + $0x3b] sm:$0xff]
      %v9306 = vld [vmem:[%s9251 + $0x4b] sm:$0xff]
      %v9307 = vld [vmem:[%s9251 + $0x53] sm:$0xff]
      %v9308 = vld [vmem:[%s9251 + $0x63] sm:$0xff]
      %v9309 = vld [vmem:[%s9251 + $0x6b] sm:$0xff]
      %v9310 = vld [vmem:[%s9251 + $0x7b] sm:$0xff]
      %v9311 = vld [vmem:[%s9251 + $0x83] sm:$0xff]
      %v9312 = vld [vmem:[%s9251 + $0x93] sm:$0xff]
      %v9313 = vld [vmem:[%s9251 + $0x9b] sm:$0xff]
      %v9314 = vld [vmem:[%s9251 + $0xab] sm:$0xff]
      %v9315 = vld [vmem:[%s9251 + $0xb3] sm:$0xff]
      %v9316 = vld [vmem:[%s9251 + $0x4] sm:$0xff]
      %v9317 = vld [vmem:[%s9251 + $0xc] sm:$0xff]
      %v9318 = vld [vmem:[%s9251 + $0x1c] sm:$0xff]
      %v9319 = vld [vmem:[%s9251 + $0x24] sm:$0xff]
      %v9320 = vld [vmem:[%s9251 + $0x34] sm:$0xff]
      %v9321 = vld [vmem:[%s9251 + $0x3c] sm:$0xff]
      %v9322 = vld [vmem:[%s9251 + $0x4c] sm:$0xff]
      %v9323 = vld [vmem:[%s9251 + $0x54] sm:$0xff]
      %v9324 = vld [vmem:[%s9251 + $0x64] sm:$0xff]
      %v9325 = vld [vmem:[%s9251 + $0x6c] sm:$0xff]
      %v9326 = vld [vmem:[%s9251 + $0x7c] sm:$0xff]
      %v9327 = vld [vmem:[%s9251 + $0x84] sm:$0xff]
      %v9328 = vld [vmem:[%s9251 + $0x94] sm:$0xff]
      %v9329 = vld [vmem:[%s9251 + $0x9c] sm:$0xff]
      %v9330 = vld [vmem:[%s9251 + $0xac] sm:$0xff]
      %v9331 = vld [vmem:[%s9251 + $0xb4] sm:$0xff]
      %s9332 = scalar_lea.vmem [#allocation2], 72
      %v9333 = vld [vmem:[%s9332] sm:$0xff]
      %v9334 = vld [vmem:[%s9332 + $0x8] sm:$0xff]
      %v9335 = vld [vmem:[%s9332 + $0x18] sm:$0xff]
      %v9336 = vld [vmem:[%s9332 + $0x20] sm:$0xff]
      %v9337 = vld [vmem:[%s9332 + $0x30] sm:$0xff]
      %v9338 = vld [vmem:[%s9332 + $0x38] sm:$0xff]
      %v9339 = vld [vmem:[%s9332 + $0x48] sm:$0xff]
      %v9340 = vld [vmem:[%s9332 + $0x50] sm:$0xff]
      %v9341 = vld [vmem:[%s9332 + $0x60] sm:$0xff]
      %v9342 = vld [vmem:[%s9332 + $0x68] sm:$0xff]
      %v9343 = vld [vmem:[%s9332 + $0x78] sm:$0xff]
      %v9344 = vld [vmem:[%s9332 + $0x80] sm:$0xff]
      %v9345 = vld [vmem:[%s9332 + $0x90] sm:$0xff]
      %v9346 = vld [vmem:[%s9332 + $0x98] sm:$0xff]
      %v9347 = vld [vmem:[%s9332 + $0xa8] sm:$0xff]
      %v9348 = vld [vmem:[%s9332 + $0xb0] sm:$0xff]
      %v9349 = vld [vmem:[%s9332 + $0x1] sm:$0xff]
      %v9350 = vld [vmem:[%s9332 + $0x9] sm:$0xff]
      %v9351 = vld [vmem:[%s9332 + $0x19] sm:$0xff]
      %v9352 = vld [vmem:[%s9332 + $0x21] sm:$0xff]
      %v9353 = vld [vmem:[%s9332 + $0x31] sm:$0xff]
      %v9354 = vld [vmem:[%s9332 + $0x39] sm:$0xff]
      %v9355 = vld [vmem:[%s9332 + $0x49] sm:$0xff]
      %v9356 = vld [vmem:[%s9332 + $0x51] sm:$0xff]
      %v9357 = vld [vmem:[%s9332 + $0x61] sm:$0xff]
      %v9358 = vld [vmem:[%s9332 + $0x69] sm:$0xff]
      %v9359 = vld [vmem:[%s9332 + $0x79] sm:$0xff]
      %v9360 = vld [vmem:[%s9332 + $0x81] sm:$0xff]
      %v9361 = vld [vmem:[%s9332 + $0x91] sm:$0xff]
      %v9362 = vld [vmem:[%s9332 + $0x99] sm:$0xff]
      %v9363 = vld [vmem:[%s9332 + $0xa9] sm:$0xff]
      %v9364 = vld [vmem:[%s9332 + $0xb1] sm:$0xff]
      %v9365 = vld [vmem:[%s9332 + $0x2] sm:$0xff]
      %v9366 = vld [vmem:[%s9332 + $0xa] sm:$0xff]
      %v9367 = vld [vmem:[%s9332 + $0x1a] sm:$0xff]
      %v9368 = vld [vmem:[%s9332 + $0x22] sm:$0xff]
      %v9369 = vld [vmem:[%s9332 + $0x32] sm:$0xff]
      %v9370 = vld [vmem:[%s9332 + $0x3a] sm:$0xff]
      %v9371 = vld [vmem:[%s9332 + $0x4a] sm:$0xff]
      %v9372 = vld [vmem:[%s9332 + $0x52] sm:$0xff]
      %v9373 = vld [vmem:[%s9332 + $0x62] sm:$0xff]
      %v9374 = vld [vmem:[%s9332 + $0x6a] sm:$0xff]
      %v9375 = vld [vmem:[%s9332 + $0x7a] sm:$0xff]
      %v9376 = vld [vmem:[%s9332 + $0x82] sm:$0xff]
      %v9377 = vld [vmem:[%s9332 + $0x92] sm:$0xff]
      %v9378 = vld [vmem:[%s9332 + $0x9a] sm:$0xff]
      %v9379 = vld [vmem:[%s9332 + $0xaa] sm:$0xff]
      %v9380 = vld [vmem:[%s9332 + $0xb2] sm:$0xff]
      %v9381 = vld [vmem:[%s9332 + $0x3] sm:$0xff]
      %v9382 = vld [vmem:[%s9332 + $0xb] sm:$0xff]
      %v9383 = vld [vmem:[%s9332 + $0x1b] sm:$0xff]
      %v9384 = vld [vmem:[%s9332 + $0x23] sm:$0xff]
      %v9385 = vld [vmem:[%s9332 + $0x33] sm:$0xff]
      %v9386 = vld [vmem:[%s9332 + $0x3b] sm:$0xff]
      %v9387 = vld [vmem:[%s9332 + $0x4b] sm:$0xff]
      %v9388 = vld [vmem:[%s9332 + $0x53] sm:$0xff]
      %v9389 = vld [vmem:[%s9332 + $0x63] sm:$0xff]
      %v9390 = vld [vmem:[%s9332 + $0x6b] sm:$0xff]
      %v9391 = vld [vmem:[%s9332 + $0x7b] sm:$0xff]
      %v9392 = vld [vmem:[%s9332 + $0x83] sm:$0xff]
      %v9393 = vld [vmem:[%s9332 + $0x93] sm:$0xff]
      %v9394 = vld [vmem:[%s9332 + $0x9b] sm:$0xff]
      %v9395 = vld [vmem:[%s9332 + $0xab] sm:$0xff]
      %v9396 = vld [vmem:[%s9332 + $0xb3] sm:$0xff]
      %v9397 = vld [vmem:[%s9332 + $0x4] sm:$0xff]
      %v9398 = vld [vmem:[%s9332 + $0xc] sm:$0xff]
      %v9399 = vld [vmem:[%s9332 + $0x1c] sm:$0xff]
      %v9400 = vld [vmem:[%s9332 + $0x24] sm:$0xff]
      %v9401 = vld [vmem:[%s9332 + $0x34] sm:$0xff]
      %v9402 = vld [vmem:[%s9332 + $0x3c] sm:$0xff]
      %v9403 = vld [vmem:[%s9332 + $0x4c] sm:$0xff]
      %v9404 = vld [vmem:[%s9332 + $0x54] sm:$0xff]
      %v9405 = vld [vmem:[%s9332 + $0x64] sm:$0xff]
      %v9406 = vld [vmem:[%s9332 + $0x6c] sm:$0xff]
      %v9407 = vld [vmem:[%s9332 + $0x7c] sm:$0xff]
      %v9408 = vld [vmem:[%s9332 + $0x84] sm:$0xff]
      %v9409 = vld [vmem:[%s9332 + $0x94] sm:$0xff]
      %v9410 = vld [vmem:[%s9332 + $0x9c] sm:$0xff]
      %v9411 = vld [vmem:[%s9332 + $0xac] sm:$0xff]
      %v9412 = vld [vmem:[%s9332 + $0xb4] sm:$0xff]
      %s9413 = scalar_lea.vmem [#allocation2], 96
      %v9414 = vld [vmem:[%s9413] sm:$0xff]
      %v9415 = vld [vmem:[%s9413 + $0x8] sm:$0xff]
      %v9416 = vld [vmem:[%s9413 + $0x18] sm:$0xff]
      %v9417 = vld [vmem:[%s9413 + $0x20] sm:$0xff]
      %v9418 = vld [vmem:[%s9413 + $0x30] sm:$0xff]
      %v9419 = vld [vmem:[%s9413 + $0x38] sm:$0xff]
      %v9420 = vld [vmem:[%s9413 + $0x48] sm:$0xff]
      %v9421 = vld [vmem:[%s9413 + $0x50] sm:$0xff]
      %v9422 = vld [vmem:[%s9413 + $0x60] sm:$0xff]
      %v9423 = vld [vmem:[%s9413 + $0x68] sm:$0xff]
      %v9424 = vld [vmem:[%s9413 + $0x78] sm:$0xff]
      %v9425 = vld [vmem:[%s9413 + $0x80] sm:$0xff]
      %v9426 = vld [vmem:[%s9413 + $0x90] sm:$0xff]
      %v9427 = vld [vmem:[%s9413 + $0x98] sm:$0xff]
      %v9428 = vld [vmem:[%s9413 + $0xa8] sm:$0xff]
      %v9429 = vld [vmem:[%s9413 + $0xb0] sm:$0xff]
      %v9430 = vld [vmem:[%s9413 + $0x1] sm:$0xff]
      %v9431 = vld [vmem:[%s9413 + $0x9] sm:$0xff]
      %v9432 = vld [vmem:[%s9413 + $0x19] sm:$0xff]
      %v9433 = vld [vmem:[%s9413 + $0x21] sm:$0xff]
      %v9434 = vld [vmem:[%s9413 + $0x31] sm:$0xff]
      %v9435 = vld [vmem:[%s9413 + $0x39] sm:$0xff]
      %v9436 = vld [vmem:[%s9413 + $0x49] sm:$0xff]
      %v9437 = vld [vmem:[%s9413 + $0x51] sm:$0xff]
      %v9438 = vld [vmem:[%s9413 + $0x61] sm:$0xff]
      %v9439 = vld [vmem:[%s9413 + $0x69] sm:$0xff]
      %v9440 = vld [vmem:[%s9413 + $0x79] sm:$0xff]
      %v9441 = vld [vmem:[%s9413 + $0x81] sm:$0xff]
      %v9442 = vld [vmem:[%s9413 + $0x91] sm:$0xff]
      %v9443 = vld [vmem:[%s9413 + $0x99] sm:$0xff]
      %v9444 = vld [vmem:[%s9413 + $0xa9] sm:$0xff]
      %v9445 = vld [vmem:[%s9413 + $0xb1] sm:$0xff]
      %v9446 = vld [vmem:[%s9413 + $0x2] sm:$0xff]
      %v9447 = vld [vmem:[%s9413 + $0xa] sm:$0xff]
      %v9448 = vld [vmem:[%s9413 + $0x1a] sm:$0xff]
      %v9449 = vld [vmem:[%s9413 + $0x22] sm:$0xff]
      %v9450 = vld [vmem:[%s9413 + $0x32] sm:$0xff]
      %v9451 = vld [vmem:[%s9413 + $0x3a] sm:$0xff]
      %v9452 = vld [vmem:[%s9413 + $0x4a] sm:$0xff]
      %v9453 = vld [vmem:[%s9413 + $0x52] sm:$0xff]
      %v9454 = vld [vmem:[%s9413 + $0x62] sm:$0xff]
      %v9455 = vld [vmem:[%s9413 + $0x6a] sm:$0xff]
      %v9456 = vld [vmem:[%s9413 + $0x7a] sm:$0xff]
      %v9457 = vld [vmem:[%s9413 + $0x82] sm:$0xff]
      %v9458 = vld [vmem:[%s9413 + $0x92] sm:$0xff]
      %v9459 = vld [vmem:[%s9413 + $0x9a] sm:$0xff]
      %v9460 = vld [vmem:[%s9413 + $0xaa] sm:$0xff]
      %v9461 = vld [vmem:[%s9413 + $0xb2] sm:$0xff]
      %v9462 = vld [vmem:[%s9413 + $0x3] sm:$0xff]
      %v9463 = vld [vmem:[%s9413 + $0xb] sm:$0xff]
      %v9464 = vld [vmem:[%s9413 + $0x1b] sm:$0xff]
      %v9465 = vld [vmem:[%s9413 + $0x23] sm:$0xff]
      %v9466 = vld [vmem:[%s9413 + $0x33] sm:$0xff]
      %v9467 = vld [vmem:[%s9413 + $0x3b] sm:$0xff]
      %v9468 = vld [vmem:[%s9413 + $0x4b] sm:$0xff]
      %v9469 = vld [vmem:[%s9413 + $0x53] sm:$0xff]
      %v9470 = vld [vmem:[%s9413 + $0x63] sm:$0xff]
      %v9471 = vld [vmem:[%s9413 + $0x6b] sm:$0xff]
      %v9472 = vld [vmem:[%s9413 + $0x7b] sm:$0xff]
      %v9473 = vld [vmem:[%s9413 + $0x83] sm:$0xff]
      %v9474 = vld [vmem:[%s9413 + $0x93] sm:$0xff]
      %v9475 = vld [vmem:[%s9413 + $0x9b] sm:$0xff]
      %v9476 = vld [vmem:[%s9413 + $0xab] sm:$0xff]
      %v9477 = vld [vmem:[%s9413 + $0xb3] sm:$0xff]
      %v9478 = vld [vmem:[%s9413 + $0x4] sm:$0xff]
      %v9479 = vld [vmem:[%s9413 + $0xc] sm:$0xff]
      %v9480 = vld [vmem:[%s9413 + $0x1c] sm:$0xff]
      %v9481 = vld [vmem:[%s9413 + $0x24] sm:$0xff]
      %v9482 = vld [vmem:[%s9413 + $0x34] sm:$0xff]
      %v9483 = vld [vmem:[%s9413 + $0x3c] sm:$0xff]
      %v9484 = vld [vmem:[%s9413 + $0x4c] sm:$0xff]
      %v9485 = vld [vmem:[%s9413 + $0x54] sm:$0xff]
      %v9486 = vld [vmem:[%s9413 + $0x64] sm:$0xff]
      %v9487 = vld [vmem:[%s9413 + $0x6c] sm:$0xff]
      %v9488 = vld [vmem:[%s9413 + $0x7c] sm:$0xff]
      %v9489 = vld [vmem:[%s9413 + $0x84] sm:$0xff]
      %v9490 = vld [vmem:[%s9413 + $0x94] sm:$0xff]
      %v9491 = vld [vmem:[%s9413 + $0x9c] sm:$0xff]
      %v9492 = vld [vmem:[%s9413 + $0xac] sm:$0xff]
      %v9493 = vld [vmem:[%s9413 + $0xb4] sm:$0xff]
      %9510 = vrot.lane.b32.xlu0 %v9106, 32
      %v9511 = vpop.permute.xlu0 %9510
      %9512 = vrot.lane.b32.xlu0 %v9107, 32
      %v9513 = vpop.permute.xlu0 %9512
      %9514 = vrot.lane.b32.xlu0 %v9108, 32
      %v9515 = vpop.permute.xlu0 %9514
      %9516 = vrot.lane.b32.xlu0 %v9109, 32
      %v9517 = vpop.permute.xlu0 %9516
      %9518 = vrot.lane.b32.xlu0 %v9110, 32
      %v9519 = vpop.permute.xlu0 %9518
      %9520 = vrot.lane.b32.xlu0 %v9111, 32
      %v9521 = vpop.permute.xlu0 %9520
      %9522 = vrot.lane.b32.xlu0 %v9112, 32
      %v9523 = vpop.permute.xlu0 %9522
      %9524 = vrot.lane.b32.xlu0 %v9113, 32
      %v9525 = vpop.permute.xlu0 %9524
      %9526 = vrot.lane.b32.xlu0 %v9114, 32
      %v9527 = vpop.permute.xlu0 %9526
      %9528 = vrot.lane.b32.xlu0 %v9115, 32
      %v9529 = vpop.permute.xlu0 %9528
      %9530 = vrot.lane.b32.xlu0 %v9116, 32
      %v9531 = vpop.permute.xlu0 %9530
      %9532 = vrot.lane.b32.xlu0 %v9117, 32
      %v9533 = vpop.permute.xlu0 %9532
      %9534 = vrot.lane.b32.xlu0 %v9118, 32
      %v9535 = vpop.permute.xlu0 %9534
      %9536 = vrot.lane.b32.xlu0 %v9119, 32
      %v9537 = vpop.permute.xlu0 %9536
      %9538 = vrot.lane.b32.xlu0 %v9120, 32
      %v9539 = vpop.permute.xlu0 %9538
      %9540 = vrot.lane.b32.xlu0 %v9121, 32
      %v9541 = vpop.permute.xlu0 %9540
      %9574 = vrot.lane.b32.xlu0 %v9122, 64
      %v9575 = vpop.permute.xlu0 %9574
      %9576 = vrot.lane.b32.xlu0 %v9123, 64
      %v9577 = vpop.permute.xlu0 %9576
      %9578 = vrot.lane.b32.xlu0 %v9124, 64
      %v9579 = vpop.permute.xlu0 %9578
      %9580 = vrot.lane.b32.xlu0 %v9125, 64
      %v9581 = vpop.permute.xlu0 %9580
      %9582 = vrot.lane.b32.xlu0 %v9126, 64
      %v9583 = vpop.permute.xlu0 %9582
      %9584 = vrot.lane.b32.xlu0 %v9127, 64
      %v9585 = vpop.permute.xlu0 %9584
      %9586 = vrot.lane.b32.xlu0 %v9128, 64
      %v9587 = vpop.permute.xlu0 %9586
      %9588 = vrot.lane.b32.xlu0 %v9129, 64
      %v9589 = vpop.permute.xlu0 %9588
      %9590 = vrot.lane.b32.xlu0 %v9130, 64
      %v9591 = vpop.permute.xlu0 %9590
      %9592 = vrot.lane.b32.xlu0 %v9131, 64
      %v9593 = vpop.permute.xlu0 %9592
      %9594 = vrot.lane.b32.xlu0 %v9132, 64
      %v9595 = vpop.permute.xlu0 %9594
      %9596 = vrot.lane.b32.xlu0 %v9133, 64
      %v9597 = vpop.permute.xlu0 %9596
      %9598 = vrot.lane.b32.xlu0 %v9134, 64
      %v9599 = vpop.permute.xlu0 %9598
      %9600 = vrot.lane.b32.xlu0 %v9135, 64
      %v9601 = vpop.permute.xlu0 %9600
      %9602 = vrot.lane.b32.xlu0 %v9136, 64
      %v9603 = vpop.permute.xlu0 %9602
      %9604 = vrot.lane.b32.xlu0 %v9137, 64
      %v9605 = vpop.permute.xlu0 %9604
      %9638 = vrot.lane.b32.xlu0 %v9138, 96
      %v9639 = vpop.permute.xlu0 %9638
      %9640 = vrot.lane.b32.xlu0 %v9139, 96
      %v9641 = vpop.permute.xlu0 %9640
      %9642 = vrot.lane.b32.xlu0 %v9140, 96
      %v9643 = vpop.permute.xlu0 %9642
      %9644 = vrot.lane.b32.xlu0 %v9141, 96
      %v9645 = vpop.permute.xlu0 %9644
      %9646 = vrot.lane.b32.xlu0 %v9142, 96
      %v9647 = vpop.permute.xlu0 %9646
      %9648 = vrot.lane.b32.xlu0 %v9143, 96
      %v9649 = vpop.permute.xlu0 %9648
      %9650 = vrot.lane.b32.xlu0 %v9144, 96
      %v9651 = vpop.permute.xlu0 %9650
      %9652 = vrot.lane.b32.xlu0 %v9145, 96
      %v9653 = vpop.permute.xlu0 %9652
      %9654 = vrot.lane.b32.xlu0 %v9146, 96
      %v9655 = vpop.permute.xlu0 %9654
      %9656 = vrot.lane.b32.xlu0 %v9147, 96
      %v9657 = vpop.permute.xlu0 %9656
      %9658 = vrot.lane.b32.xlu0 %v9148, 96
      %v9659 = vpop.permute.xlu0 %9658
      %9660 = vrot.lane.b32.xlu0 %v9149, 96
      %v9661 = vpop.permute.xlu0 %9660
      %9662 = vrot.lane.b32.xlu0 %v9150, 96
      %v9663 = vpop.permute.xlu0 %9662
      %9664 = vrot.lane.b32.xlu0 %v9151, 96
      %v9665 = vpop.permute.xlu0 %9664
      %9666 = vrot.lane.b32.xlu0 %v9152, 96
      %v9667 = vpop.permute.xlu0 %9666
      %9668 = vrot.lane.b32.xlu0 %v9153, 96
      %v9669 = vpop.permute.xlu0 %9668
      %9702 = vrot.lane.b32.xlu0 %v9171, 32
      %v9703 = vpop.permute.xlu0 %9702
      %9704 = vrot.lane.b32.xlu0 %v9172, 32
      %v9705 = vpop.permute.xlu0 %9704
      %9706 = vrot.lane.b32.xlu0 %v9173, 32
      %v9707 = vpop.permute.xlu0 %9706
      %9708 = vrot.lane.b32.xlu0 %v9174, 32
      %v9709 = vpop.permute.xlu0 %9708
      %9710 = vrot.lane.b32.xlu0 %v9175, 32
      %v9711 = vpop.permute.xlu0 %9710
      %9712 = vrot.lane.b32.xlu0 %v9176, 32
      %v9713 = vpop.permute.xlu0 %9712
      %9714 = vrot.lane.b32.xlu0 %v9177, 32
      %v9715 = vpop.permute.xlu0 %9714
      %9716 = vrot.lane.b32.xlu0 %v9178, 32
      %v9717 = vpop.permute.xlu0 %9716
      %9718 = vrot.lane.b32.xlu0 %v9179, 32
      %v9719 = vpop.permute.xlu0 %9718
      %9720 = vrot.lane.b32.xlu0 %v9180, 32
      %v9721 = vpop.permute.xlu0 %9720
      %9722 = vrot.lane.b32.xlu0 %v9181, 32
      %v9723 = vpop.permute.xlu0 %9722
      %9724 = vrot.lane.b32.xlu0 %v9182, 32
      %v9725 = vpop.permute.xlu0 %9724
      %9726 = vrot.lane.b32.xlu0 %v9183, 32
      %v9727 = vpop.permute.xlu0 %9726
      %9728 = vrot.lane.b32.xlu0 %v9184, 32
      %v9729 = vpop.permute.xlu0 %9728
      %9730 = vrot.lane.b32.xlu0 %v9185, 32
      %v9731 = vpop.permute.xlu0 %9730
      %9732 = vrot.lane.b32.xlu0 %v9186, 32
      %v9733 = vpop.permute.xlu0 %9732
      %9766 = vrot.lane.b32.xlu0 %v9187, 64
      %v9767 = vpop.permute.xlu0 %9766
      %9768 = vrot.lane.b32.xlu0 %v9188, 64
      %v9769 = vpop.permute.xlu0 %9768
      %9770 = vrot.lane.b32.xlu0 %v9189, 64
      %v9771 = vpop.permute.xlu0 %9770
      %9772 = vrot.lane.b32.xlu0 %v9190, 64
      %v9773 = vpop.permute.xlu0 %9772
      %9774 = vrot.lane.b32.xlu0 %v9191, 64
      %v9775 = vpop.permute.xlu0 %9774
      %9776 = vrot.lane.b32.xlu0 %v9192, 64
      %v9777 = vpop.permute.xlu0 %9776
      %9778 = vrot.lane.b32.xlu0 %v9193, 64
      %v9779 = vpop.permute.xlu0 %9778
      %9780 = vrot.lane.b32.xlu0 %v9194, 64
      %v9781 = vpop.permute.xlu0 %9780
      %9782 = vrot.lane.b32.xlu0 %v9195, 64
      %v9783 = vpop.permute.xlu0 %9782
      %9784 = vrot.lane.b32.xlu0 %v9196, 64
      %v9785 = vpop.permute.xlu0 %9784
      %9786 = vrot.lane.b32.xlu0 %v9197, 64
      %v9787 = vpop.permute.xlu0 %9786
      %9788 = vrot.lane.b32.xlu0 %v9198, 64
      %v9789 = vpop.permute.xlu0 %9788
      %9790 = vrot.lane.b32.xlu0 %v9199, 64
      %v9791 = vpop.permute.xlu0 %9790
      %9792 = vrot.lane.b32.xlu0 %v9200, 64
      %v9793 = vpop.permute.xlu0 %9792
      %9794 = vrot.lane.b32.xlu0 %v9201, 64
      %v9795 = vpop.permute.xlu0 %9794
      %9796 = vrot.lane.b32.xlu0 %v9202, 64
      %v9797 = vpop.permute.xlu0 %9796
      %9830 = vrot.lane.b32.xlu0 %v9203, 96
      %v9831 = vpop.permute.xlu0 %9830
      %9832 = vrot.lane.b32.xlu0 %v9204, 96
      %v9833 = vpop.permute.xlu0 %9832
      %9834 = vrot.lane.b32.xlu0 %v9205, 96
      %v9835 = vpop.permute.xlu0 %9834
      %9836 = vrot.lane.b32.xlu0 %v9206, 96
      %v9837 = vpop.permute.xlu0 %9836
      %9838 = vrot.lane.b32.xlu0 %v9207, 96
      %v9839 = vpop.permute.xlu0 %9838
      %9840 = vrot.lane.b32.xlu0 %v9208, 96
      %v9841 = vpop.permute.xlu0 %9840
      %9842 = vrot.lane.b32.xlu0 %v9209, 96
      %v9843 = vpop.permute.xlu0 %9842
      %9844 = vrot.lane.b32.xlu0 %v9210, 96
      %v9845 = vpop.permute.xlu0 %9844
      %9846 = vrot.lane.b32.xlu0 %v9211, 96
      %v9847 = vpop.permute.xlu0 %9846
      %9848 = vrot.lane.b32.xlu0 %v9212, 96
      %v9849 = vpop.permute.xlu0 %9848
      %9850 = vrot.lane.b32.xlu0 %v9213, 96
      %v9851 = vpop.permute.xlu0 %9850
      %9852 = vrot.lane.b32.xlu0 %v9214, 96
      %v9853 = vpop.permute.xlu0 %9852
      %9854 = vrot.lane.b32.xlu0 %v9215, 96
      %v9855 = vpop.permute.xlu0 %9854
      %9856 = vrot.lane.b32.xlu0 %v9216, 96
      %v9857 = vpop.permute.xlu0 %9856
      %9858 = vrot.lane.b32.xlu0 %v9217, 96
      %v9859 = vpop.permute.xlu0 %9858
      %9860 = vrot.lane.b32.xlu0 %v9218, 96
      %v9861 = vpop.permute.xlu0 %9860
      %9894 = vrot.lane.b32.xlu0 %v9235, 32
      %v9895 = vpop.permute.xlu0 %9894
      %9896 = vrot.lane.b32.xlu0 %v9236, 32
      %v9897 = vpop.permute.xlu0 %9896
      %9898 = vrot.lane.b32.xlu0 %v9237, 32
      %v9899 = vpop.permute.xlu0 %9898
      %9900 = vrot.lane.b32.xlu0 %v9238, 32
      %v9901 = vpop.permute.xlu0 %9900
      %9902 = vrot.lane.b32.xlu0 %v9239, 32
      %v9903 = vpop.permute.xlu0 %9902
      %9904 = vrot.lane.b32.xlu0 %v9240, 32
      %v9905 = vpop.permute.xlu0 %9904
      %9906 = vrot.lane.b32.xlu0 %v9241, 32
      %v9907 = vpop.permute.xlu0 %9906
      %9908 = vrot.lane.b32.xlu0 %v9242, 32
      %v9909 = vpop.permute.xlu0 %9908
      %9910 = vrot.lane.b32.xlu0 %v9243, 32
      %v9911 = vpop.permute.xlu0 %9910
      %9912 = vrot.lane.b32.xlu0 %v9244, 32
      %v9913 = vpop.permute.xlu0 %9912
      %9914 = vrot.lane.b32.xlu0 %v9245, 32
      %v9915 = vpop.permute.xlu0 %9914
      %9916 = vrot.lane.b32.xlu0 %v9246, 32
      %v9917 = vpop.permute.xlu0 %9916
      %9918 = vrot.lane.b32.xlu0 %v9247, 32
      %v9919 = vpop.permute.xlu0 %9918
      %9920 = vrot.lane.b32.xlu0 %v9248, 32
      %v9921 = vpop.permute.xlu0 %9920
      %9922 = vrot.lane.b32.xlu0 %v9249, 32
      %v9923 = vpop.permute.xlu0 %9922
      %9924 = vrot.lane.b32.xlu0 %v9250, 32
      %v9925 = vpop.permute.xlu0 %9924
      %9958 = vrot.lane.b32.xlu0 %v9252, 64
      %v9959 = vpop.permute.xlu0 %9958
      %9960 = vrot.lane.b32.xlu0 %v9253, 64
      %v9961 = vpop.permute.xlu0 %9960
      %9962 = vrot.lane.b32.xlu0 %v9254, 64
      %v9963 = vpop.permute.xlu0 %9962
      %9964 = vrot.lane.b32.xlu0 %v9255, 64
      %v9965 = vpop.permute.xlu0 %9964
      %9966 = vrot.lane.b32.xlu0 %v9256, 64
      %v9967 = vpop.permute.xlu0 %9966
      %9968 = vrot.lane.b32.xlu0 %v9257, 64
      %v9969 = vpop.permute.xlu0 %9968
      %9970 = vrot.lane.b32.xlu0 %v9258, 64
      %v9971 = vpop.permute.xlu0 %9970
      %9972 = vrot.lane.b32.xlu0 %v9259, 64
      %v9973 = vpop.permute.xlu0 %9972
      %9974 = vrot.lane.b32.xlu0 %v9260, 64
      %v9975 = vpop.permute.xlu0 %9974
      %9976 = vrot.lane.b32.xlu0 %v9261, 64
      %v9977 = vpop.permute.xlu0 %9976
      %9978 = vrot.lane.b32.xlu0 %v9262, 64
      %v9979 = vpop.permute.xlu0 %9978
      %9980 = vrot.lane.b32.xlu0 %v9263, 64
      %v9981 = vpop.permute.xlu0 %9980
      %9982 = vrot.lane.b32.xlu0 %v9264, 64
      %v9983 = vpop.permute.xlu0 %9982
      %9984 = vrot.lane.b32.xlu0 %v9265, 64
      %v9985 = vpop.permute.xlu0 %9984
      %9986 = vrot.lane.b32.xlu0 %v9266, 64
      %v9987 = vpop.permute.xlu0 %9986
      %9988 = vrot.lane.b32.xlu0 %v9267, 64
      %v9989 = vpop.permute.xlu0 %9988
      %10022 = vrot.lane.b32.xlu0 %v9268, 96
      %v10023 = vpop.permute.xlu0 %10022
      %10024 = vrot.lane.b32.xlu0 %v9269, 96
      %v10025 = vpop.permute.xlu0 %10024
      %10026 = vrot.lane.b32.xlu0 %v9270, 96
      %v10027 = vpop.permute.xlu0 %10026
      %10028 = vrot.lane.b32.xlu0 %v9271, 96
      %v10029 = vpop.permute.xlu0 %10028
      %10030 = vrot.lane.b32.xlu0 %v9272, 96
      %v10031 = vpop.permute.xlu0 %10030
      %10032 = vrot.lane.b32.xlu0 %v9273, 96
      %v10033 = vpop.permute.xlu0 %10032
      %10034 = vrot.lane.b32.xlu0 %v9274, 96
      %v10035 = vpop.permute.xlu0 %10034
      %10036 = vrot.lane.b32.xlu0 %v9275, 96
      %v10037 = vpop.permute.xlu0 %10036
      %10038 = vrot.lane.b32.xlu0 %v9276, 96
      %v10039 = vpop.permute.xlu0 %10038
      %10040 = vrot.lane.b32.xlu0 %v9277, 96
      %v10041 = vpop.permute.xlu0 %10040
      %10042 = vrot.lane.b32.xlu0 %v9278, 96
      %v10043 = vpop.permute.xlu0 %10042
      %10044 = vrot.lane.b32.xlu0 %v9279, 96
      %v10045 = vpop.permute.xlu0 %10044
      %10046 = vrot.lane.b32.xlu0 %v9280, 96
      %v10047 = vpop.permute.xlu0 %10046
      %10048 = vrot.lane.b32.xlu0 %v9281, 96
      %v10049 = vpop.permute.xlu0 %10048
      %10050 = vrot.lane.b32.xlu0 %v9282, 96
      %v10051 = vpop.permute.xlu0 %10050
      %10052 = vrot.lane.b32.xlu0 %v9283, 96
      %v10053 = vpop.permute.xlu0 %10052
      %10086 = vrot.lane.b32.xlu0 %v9300, 32
      %v10087 = vpop.permute.xlu0 %10086
      %10088 = vrot.lane.b32.xlu0 %v9301, 32
      %v10089 = vpop.permute.xlu0 %10088
      %10090 = vrot.lane.b32.xlu0 %v9302, 32
      %v10091 = vpop.permute.xlu0 %10090
      %10092 = vrot.lane.b32.xlu0 %v9303, 32
      %v10093 = vpop.permute.xlu0 %10092
      %10094 = vrot.lane.b32.xlu0 %v9304, 32
      %v10095 = vpop.permute.xlu0 %10094
      %10096 = vrot.lane.b32.xlu0 %v9305, 32
      %v10097 = vpop.permute.xlu0 %10096
      %10098 = vrot.lane.b32.xlu0 %v9306, 32
      %v10099 = vpop.permute.xlu0 %10098
      %10100 = vrot.lane.b32.xlu0 %v9307, 32
      %v10101 = vpop.permute.xlu0 %10100
      %10102 = vrot.lane.b32.xlu0 %v9308, 32
      %v10103 = vpop.permute.xlu0 %10102
      %10104 = vrot.lane.b32.xlu0 %v9309, 32
      %v10105 = vpop.permute.xlu0 %10104
      %10106 = vrot.lane.b32.xlu0 %v9310, 32
      %v10107 = vpop.permute.xlu0 %10106
      %10108 = vrot.lane.b32.xlu0 %v9311, 32
      %v10109 = vpop.permute.xlu0 %10108
      %10110 = vrot.lane.b32.xlu0 %v9312, 32
      %v10111 = vpop.permute.xlu0 %10110
      %10112 = vrot.lane.b32.xlu0 %v9313, 32
      %v10113 = vpop.permute.xlu0 %10112
      %10114 = vrot.lane.b32.xlu0 %v9314, 32
      %v10115 = vpop.permute.xlu0 %10114
      %10116 = vrot.lane.b32.xlu0 %v9315, 32
      %v10117 = vpop.permute.xlu0 %10116
      %10150 = vrot.lane.b32.xlu0 %v9316, 64
      %v10151 = vpop.permute.xlu0 %10150
      %10152 = vrot.lane.b32.xlu0 %v9317, 64
      %v10153 = vpop.permute.xlu0 %10152
      %10154 = vrot.lane.b32.xlu0 %v9318, 64
      %v10155 = vpop.permute.xlu0 %10154
      %10156 = vrot.lane.b32.xlu0 %v9319, 64
      %v10157 = vpop.permute.xlu0 %10156
      %10158 = vrot.lane.b32.xlu0 %v9320, 64
      %v10159 = vpop.permute.xlu0 %10158
      %10160 = vrot.lane.b32.xlu0 %v9321, 64
      %v10161 = vpop.permute.xlu0 %10160
      %10162 = vrot.lane.b32.xlu0 %v9322, 64
      %v10163 = vpop.permute.xlu0 %10162
      %10164 = vrot.lane.b32.xlu0 %v9323, 64
      %v10165 = vpop.permute.xlu0 %10164
      %10166 = vrot.lane.b32.xlu0 %v9324, 64
      %v10167 = vpop.permute.xlu0 %10166
      %10168 = vrot.lane.b32.xlu0 %v9325, 64
      %v10169 = vpop.permute.xlu0 %10168
      %10170 = vrot.lane.b32.xlu0 %v9326, 64
      %v10171 = vpop.permute.xlu0 %10170
      %10172 = vrot.lane.b32.xlu0 %v9327, 64
      %v10173 = vpop.permute.xlu0 %10172
      %10174 = vrot.lane.b32.xlu0 %v9328, 64
      %v10175 = vpop.permute.xlu0 %10174
      %10176 = vrot.lane.b32.xlu0 %v9329, 64
      %v10177 = vpop.permute.xlu0 %10176
      %10178 = vrot.lane.b32.xlu0 %v9330, 64
      %v10179 = vpop.permute.xlu0 %10178
      %10180 = vrot.lane.b32.xlu0 %v9331, 64
      %v10181 = vpop.permute.xlu0 %10180
      %10214 = vrot.lane.b32.xlu0 %v9333, 96
      %v10215 = vpop.permute.xlu0 %10214
      %10216 = vrot.lane.b32.xlu0 %v9334, 96
      %v10217 = vpop.permute.xlu0 %10216
      %10218 = vrot.lane.b32.xlu0 %v9335, 96
      %v10219 = vpop.permute.xlu0 %10218
      %10220 = vrot.lane.b32.xlu0 %v9336, 96
      %v10221 = vpop.permute.xlu0 %10220
      %10222 = vrot.lane.b32.xlu0 %v9337, 96
      %v10223 = vpop.permute.xlu0 %10222
      %10224 = vrot.lane.b32.xlu0 %v9338, 96
      %v10225 = vpop.permute.xlu0 %10224
      %10226 = vrot.lane.b32.xlu0 %v9339, 96
      %v10227 = vpop.permute.xlu0 %10226
      %10228 = vrot.lane.b32.xlu0 %v9340, 96
      %v10229 = vpop.permute.xlu0 %10228
      %10230 = vrot.lane.b32.xlu0 %v9341, 96
      %v10231 = vpop.permute.xlu0 %10230
      %10232 = vrot.lane.b32.xlu0 %v9342, 96
      %v10233 = vpop.permute.xlu0 %10232
      %10234 = vrot.lane.b32.xlu0 %v9343, 96
      %v10235 = vpop.permute.xlu0 %10234
      %10236 = vrot.lane.b32.xlu0 %v9344, 96
      %v10237 = vpop.permute.xlu0 %10236
      %10238 = vrot.lane.b32.xlu0 %v9345, 96
      %v10239 = vpop.permute.xlu0 %10238
      %10240 = vrot.lane.b32.xlu0 %v9346, 96
      %v10241 = vpop.permute.xlu0 %10240
      %10242 = vrot.lane.b32.xlu0 %v9347, 96
      %v10243 = vpop.permute.xlu0 %10242
      %10244 = vrot.lane.b32.xlu0 %v9348, 96
      %v10245 = vpop.permute.xlu0 %10244
      %v10262 = vsel %vm8929, %v9090, %v9511
      %v10263 = vsel %vm8929, %v9091, %v9513
      %v10264 = vsel %vm8929, %v9092, %v9515
      %v10265 = vsel %vm8929, %v9093, %v9517
      %v10266 = vsel %vm8929, %v9094, %v9519
      %v10267 = vsel %vm8929, %v9095, %v9521
      %v10268 = vsel %vm8929, %v9096, %v9523
      %v10269 = vsel %vm8929, %v9097, %v9525
      %v10270 = vsel %vm8929, %v9098, %v9527
      %v10271 = vsel %vm8929, %v9099, %v9529
      %v10272 = vsel %vm8929, %v9100, %v9531
      %v10273 = vsel %vm8929, %v9101, %v9533
      %v10274 = vsel %vm8929, %v9102, %v9535
      %v10275 = vsel %vm8929, %v9103, %v9537
      %v10276 = vsel %vm8929, %v9104, %v9539
      %v10277 = vsel %vm8929, %v9105, %v9541
      %v10278 = vsel %vm8369, %v10262, %v9575
      %v10279 = vsel %vm8369, %v10263, %v9577
      %v10280 = vsel %vm8369, %v10264, %v9579
      %v10281 = vsel %vm8369, %v10265, %v9581
      %v10282 = vsel %vm8369, %v10266, %v9583
      %v10283 = vsel %vm8369, %v10267, %v9585
      %v10284 = vsel %vm8369, %v10268, %v9587
      %v10285 = vsel %vm8369, %v10269, %v9589
      %v10286 = vsel %vm8369, %v10270, %v9591
      %v10287 = vsel %vm8369, %v10271, %v9593
      %v10288 = vsel %vm8369, %v10272, %v9595
      %v10289 = vsel %vm8369, %v10273, %v9597
      %v10290 = vsel %vm8369, %v10274, %v9599
      %v10291 = vsel %vm8369, %v10275, %v9601
      %v10292 = vsel %vm8369, %v10276, %v9603
      %v10293 = vsel %vm8369, %v10277, %v9605
      %v10294 = vsel %vm8319, %v10278, %v9639
      %v10295 = vsel %vm8319, %v10279, %v9641
      %v10296 = vsel %vm8319, %v10280, %v9643
      %v10297 = vsel %vm8319, %v10281, %v9645
      %v10298 = vsel %vm8319, %v10282, %v9647
      %v10299 = vsel %vm8319, %v10283, %v9649
      %v10300 = vsel %vm8319, %v10284, %v9651
      %v10301 = vsel %vm8319, %v10285, %v9653
      %v10302 = vsel %vm8319, %v10286, %v9655
      %v10303 = vsel %vm8319, %v10287, %v9657
      %v10304 = vsel %vm8319, %v10288, %v9659
      %v10305 = vsel %vm8319, %v10289, %v9661
      %v10306 = vsel %vm8319, %v10290, %v9663
      %v10307 = vsel %vm8319, %v10291, %v9665
      %v10308 = vsel %vm8319, %v10292, %v9667
      %v10309 = vsel %vm8319, %v10293, %v9669
      %v10310 = vsel %vm8929, %v9154, %v9703
      %v10311 = vsel %vm8929, %v9155, %v9705
      %v10312 = vsel %vm8929, %v9156, %v9707
      %v10313 = vsel %vm8929, %v9157, %v9709
      %v10314 = vsel %vm8929, %v9158, %v9711
      %v10315 = vsel %vm8929, %v9159, %v9713
      %v10316 = vsel %vm8929, %v9160, %v9715
      %v10317 = vsel %vm8929, %v9161, %v9717
      %v10318 = vsel %vm8929, %v9162, %v9719
      %v10319 = vsel %vm8929, %v9163, %v9721
      %v10320 = vsel %vm8929, %v9164, %v9723
      %v10321 = vsel %vm8929, %v9165, %v9725
      %v10322 = vsel %vm8929, %v9166, %v9727
      %v10323 = vsel %vm8929, %v9167, %v9729
      %v10324 = vsel %vm8929, %v9168, %v9731
      %v10325 = vsel %vm8929, %v9169, %v9733
      %v10326 = vsel %vm8369, %v10310, %v9767
      %v10327 = vsel %vm8369, %v10311, %v9769
      %v10328 = vsel %vm8369, %v10312, %v9771
      %v10329 = vsel %vm8369, %v10313, %v9773
      %v10330 = vsel %vm8369, %v10314, %v9775
      %v10331 = vsel %vm8369, %v10315, %v9777
      %v10332 = vsel %vm8369, %v10316, %v9779
      %v10333 = vsel %vm8369, %v10317, %v9781
      %v10334 = vsel %vm8369, %v10318, %v9783
      %v10335 = vsel %vm8369, %v10319, %v9785
      %v10336 = vsel %vm8369, %v10320, %v9787
      %v10337 = vsel %vm8369, %v10321, %v9789
      %v10338 = vsel %vm8369, %v10322, %v9791
      %v10339 = vsel %vm8369, %v10323, %v9793
      %v10340 = vsel %vm8369, %v10324, %v9795
      %v10341 = vsel %vm8369, %v10325, %v9797
      %v10342 = vsel %vm8319, %v10326, %v9831
      %v10343 = vsel %vm8319, %v10327, %v9833
      %v10344 = vsel %vm8319, %v10328, %v9835
      %v10345 = vsel %vm8319, %v10329, %v9837
      %v10346 = vsel %vm8319, %v10330, %v9839
      %v10347 = vsel %vm8319, %v10331, %v9841
      %v10348 = vsel %vm8319, %v10332, %v9843
      %v10349 = vsel %vm8319, %v10333, %v9845
      %v10350 = vsel %vm8319, %v10334, %v9847
      %v10351 = vsel %vm8319, %v10335, %v9849
      %v10352 = vsel %vm8319, %v10336, %v9851
      %v10353 = vsel %vm8319, %v10337, %v9853
      %v10354 = vsel %vm8319, %v10338, %v9855
      %v10355 = vsel %vm8319, %v10339, %v9857
      %v10356 = vsel %vm8319, %v10340, %v9859
      %v10357 = vsel %vm8319, %v10341, %v9861
      %v10358 = vsel %vm8929, %v9219, %v9895
      %v10359 = vsel %vm8929, %v9220, %v9897
      %v10360 = vsel %vm8929, %v9221, %v9899
      %v10361 = vsel %vm8929, %v9222, %v9901
      %v10362 = vsel %vm8929, %v9223, %v9903
      %v10363 = vsel %vm8929, %v9224, %v9905
      %v10364 = vsel %vm8929, %v9225, %v9907
      %v10365 = vsel %vm8929, %v9226, %v9909
      %v10366 = vsel %vm8929, %v9227, %v9911
      %v10367 = vsel %vm8929, %v9228, %v9913
      %v10368 = vsel %vm8929, %v9229, %v9915
      %v10369 = vsel %vm8929, %v9230, %v9917
      %v10370 = vsel %vm8929, %v9231, %v9919
      %v10371 = vsel %vm8929, %v9232, %v9921
      %v10372 = vsel %vm8929, %v9233, %v9923
      %v10373 = vsel %vm8929, %v9234, %v9925
      %v10374 = vsel %vm8369, %v10358, %v9959
      %v10375 = vsel %vm8369, %v10359, %v9961
      %v10376 = vsel %vm8369, %v10360, %v9963
      %v10377 = vsel %vm8369, %v10361, %v9965
      %v10378 = vsel %vm8369, %v10362, %v9967
      %v10379 = vsel %vm8369, %v10363, %v9969
      %v10380 = vsel %vm8369, %v10364, %v9971
      %v10381 = vsel %vm8369, %v10365, %v9973
      %v10382 = vsel %vm8369, %v10366, %v9975
      %v10383 = vsel %vm8369, %v10367, %v9977
      %v10384 = vsel %vm8369, %v10368, %v9979
      %v10385 = vsel %vm8369, %v10369, %v9981
      %v10386 = vsel %vm8369, %v10370, %v9983
      %v10387 = vsel %vm8369, %v10371, %v9985
      %v10388 = vsel %vm8369, %v10372, %v9987
      %v10389 = vsel %vm8369, %v10373, %v9989
      %v10390 = vsel %vm8319, %v10374, %v10023
      %v10391 = vsel %vm8319, %v10375, %v10025
      %v10392 = vsel %vm8319, %v10376, %v10027
      %v10393 = vsel %vm8319, %v10377, %v10029
      %v10394 = vsel %vm8319, %v10378, %v10031
      %v10395 = vsel %vm8319, %v10379, %v10033
      %v10396 = vsel %vm8319, %v10380, %v10035
      %v10397 = vsel %vm8319, %v10381, %v10037
      %v10398 = vsel %vm8319, %v10382, %v10039
      %v10399 = vsel %vm8319, %v10383, %v10041
      %v10400 = vsel %vm8319, %v10384, %v10043
      %v10401 = vsel %vm8319, %v10385, %v10045
      %v10402 = vsel %vm8319, %v10386, %v10047
      %v10403 = vsel %vm8319, %v10387, %v10049
      %v10404 = vsel %vm8319, %v10388, %v10051
      %v10405 = vsel %vm8319, %v10389, %v10053
      %v10406 = vsel %vm8929, %v9284, %v10087
      %v10407 = vsel %vm8929, %v9285, %v10089
      %v10408 = vsel %vm8929, %v9286, %v10091
      %v10409 = vsel %vm8929, %v9287, %v10093
      %v10410 = vsel %vm8929, %v9288, %v10095
      %v10411 = vsel %vm8929, %v9289, %v10097
      %v10412 = vsel %vm8929, %v9290, %v10099
      %v10413 = vsel %vm8929, %v9291, %v10101
      %v10414 = vsel %vm8929, %v9292, %v10103
      %v10415 = vsel %vm8929, %v9293, %v10105
      %v10416 = vsel %vm8929, %v9294, %v10107
      %v10417 = vsel %vm8929, %v9295, %v10109
      %v10418 = vsel %vm8929, %v9296, %v10111
      %v10419 = vsel %vm8929, %v9297, %v10113
      %v10420 = vsel %vm8929, %v9298, %v10115
      %v10421 = vsel %vm8929, %v9299, %v10117
      %v10422 = vsel %vm8369, %v10406, %v10151
      %v10423 = vsel %vm8369, %v10407, %v10153
      %v10424 = vsel %vm8369, %v10408, %v10155
      %v10425 = vsel %vm8369, %v10409, %v10157
      %v10426 = vsel %vm8369, %v10410, %v10159
      %v10427 = vsel %vm8369, %v10411, %v10161
      %v10428 = vsel %vm8369, %v10412, %v10163
      %v10429 = vsel %vm8369, %v10413, %v10165
      %v10430 = vsel %vm8369, %v10414, %v10167
      %v10431 = vsel %vm8369, %v10415, %v10169
      %v10432 = vsel %vm8369, %v10416, %v10171
      %v10433 = vsel %vm8369, %v10417, %v10173
      %v10434 = vsel %vm8369, %v10418, %v10175
      %v10435 = vsel %vm8369, %v10419, %v10177
      %v10436 = vsel %vm8369, %v10420, %v10179
      %v10437 = vsel %vm8369, %v10421, %v10181
      %v10438 = vsel %vm8319, %v10422, %v10215
      %v10439 = vsel %vm8319, %v10423, %v10217
      %v10440 = vsel %vm8319, %v10424, %v10219
      %v10441 = vsel %vm8319, %v10425, %v10221
      %v10442 = vsel %vm8319, %v10426, %v10223
      %v10443 = vsel %vm8319, %v10427, %v10225
      %v10444 = vsel %vm8319, %v10428, %v10227
      %v10445 = vsel %vm8319, %v10429, %v10229
      %v10446 = vsel %vm8319, %v10430, %v10231
      %v10447 = vsel %vm8319, %v10431, %v10233
      %v10448 = vsel %vm8319, %v10432, %v10235
      %v10449 = vsel %vm8319, %v10433, %v10237
      %v10450 = vsel %vm8319, %v10434, %v10239
      %v10451 = vsel %vm8319, %v10435, %v10241
      %v10452 = vsel %vm8319, %v10436, %v10243
      %v10453 = vsel %vm8319, %v10437, %v10245
      %10470 = vrot.lane.b32.xlu0 %v9365, 32
      %v10471 = vpop.permute.xlu0 %10470
      %10472 = vrot.lane.b32.xlu0 %v9366, 32
      %v10473 = vpop.permute.xlu0 %10472
      %10474 = vrot.lane.b32.xlu0 %v9367, 32
      %v10475 = vpop.permute.xlu0 %10474
      %10476 = vrot.lane.b32.xlu0 %v9368, 32
      %v10477 = vpop.permute.xlu0 %10476
      %10478 = vrot.lane.b32.xlu0 %v9369, 32
      %v10479 = vpop.permute.xlu0 %10478
      %10480 = vrot.lane.b32.xlu0 %v9370, 32
      %v10481 = vpop.permute.xlu0 %10480
      %10482 = vrot.lane.b32.xlu0 %v9371, 32
      %v10483 = vpop.permute.xlu0 %10482
      %10484 = vrot.lane.b32.xlu0 %v9372, 32
      %v10485 = vpop.permute.xlu0 %10484
      %10486 = vrot.lane.b32.xlu0 %v9373, 32
      %v10487 = vpop.permute.xlu0 %10486
      %10488 = vrot.lane.b32.xlu0 %v9374, 32
      %v10489 = vpop.permute.xlu0 %10488
      %10490 = vrot.lane.b32.xlu0 %v9375, 32
      %v10491 = vpop.permute.xlu0 %10490
      %10492 = vrot.lane.b32.xlu0 %v9376, 32
      %v10493 = vpop.permute.xlu0 %10492
      %10494 = vrot.lane.b32.xlu0 %v9377, 32
      %v10495 = vpop.permute.xlu0 %10494
      %10496 = vrot.lane.b32.xlu0 %v9378, 32
      %v10497 = vpop.permute.xlu0 %10496
      %10498 = vrot.lane.b32.xlu0 %v9379, 32
      %v10499 = vpop.permute.xlu0 %10498
      %10500 = vrot.lane.b32.xlu0 %v9380, 32
      %v10501 = vpop.permute.xlu0 %10500
      %10534 = vrot.lane.b32.xlu0 %v9381, 64
      %v10535 = vpop.permute.xlu0 %10534
      %10536 = vrot.lane.b32.xlu0 %v9382, 64
      %v10537 = vpop.permute.xlu0 %10536
      %10538 = vrot.lane.b32.xlu0 %v9383, 64
      %v10539 = vpop.permute.xlu0 %10538
      %10540 = vrot.lane.b32.xlu0 %v9384, 64
      %v10541 = vpop.permute.xlu0 %10540
      %10542 = vrot.lane.b32.xlu0 %v9385, 64
      %v10543 = vpop.permute.xlu0 %10542
      %10544 = vrot.lane.b32.xlu0 %v9386, 64
      %v10545 = vpop.permute.xlu0 %10544
      %10546 = vrot.lane.b32.xlu0 %v9387, 64
      %v10547 = vpop.permute.xlu0 %10546
      %10548 = vrot.lane.b32.xlu0 %v9388, 64
      %v10549 = vpop.permute.xlu0 %10548
      %10550 = vrot.lane.b32.xlu0 %v9389, 64
      %v10551 = vpop.permute.xlu0 %10550
      %10552 = vrot.lane.b32.xlu0 %v9390, 64
      %v10553 = vpop.permute.xlu0 %10552
      %10554 = vrot.lane.b32.xlu0 %v9391, 64
      %v10555 = vpop.permute.xlu0 %10554
      %10556 = vrot.lane.b32.xlu0 %v9392, 64
      %v10557 = vpop.permute.xlu0 %10556
      %10558 = vrot.lane.b32.xlu0 %v9393, 64
      %v10559 = vpop.permute.xlu0 %10558
      %10560 = vrot.lane.b32.xlu0 %v9394, 64
      %v10561 = vpop.permute.xlu0 %10560
      %10562 = vrot.lane.b32.xlu0 %v9395, 64
      %v10563 = vpop.permute.xlu0 %10562
      %10564 = vrot.lane.b32.xlu0 %v9396, 64
      %v10565 = vpop.permute.xlu0 %10564
      %10598 = vrot.lane.b32.xlu0 %v9397, 96
      %v10599 = vpop.permute.xlu0 %10598
      %10600 = vrot.lane.b32.xlu0 %v9398, 96
      %v10601 = vpop.permute.xlu0 %10600
      %10602 = vrot.lane.b32.xlu0 %v9399, 96
      %v10603 = vpop.permute.xlu0 %10602
      %10604 = vrot.lane.b32.xlu0 %v9400, 96
      %v10605 = vpop.permute.xlu0 %10604
      %10606 = vrot.lane.b32.xlu0 %v9401, 96
      %v10607 = vpop.permute.xlu0 %10606
      %10608 = vrot.lane.b32.xlu0 %v9402, 96
      %v10609 = vpop.permute.xlu0 %10608
      %10610 = vrot.lane.b32.xlu0 %v9403, 96
      %v10611 = vpop.permute.xlu0 %10610
      %10612 = vrot.lane.b32.xlu0 %v9404, 96
      %v10613 = vpop.permute.xlu0 %10612
      %10614 = vrot.lane.b32.xlu0 %v9405, 96
      %v10615 = vpop.permute.xlu0 %10614
      %10616 = vrot.lane.b32.xlu0 %v9406, 96
      %v10617 = vpop.permute.xlu0 %10616
      %10618 = vrot.lane.b32.xlu0 %v9407, 96
      %v10619 = vpop.permute.xlu0 %10618
      %10620 = vrot.lane.b32.xlu0 %v9408, 96
      %v10621 = vpop.permute.xlu0 %10620
      %10622 = vrot.lane.b32.xlu0 %v9409, 96
      %v10623 = vpop.permute.xlu0 %10622
      %10624 = vrot.lane.b32.xlu0 %v9410, 96
      %v10625 = vpop.permute.xlu0 %10624
      %10626 = vrot.lane.b32.xlu0 %v9411, 96
      %v10627 = vpop.permute.xlu0 %10626
      %10628 = vrot.lane.b32.xlu0 %v9412, 96
      %v10629 = vpop.permute.xlu0 %10628
      %10662 = vrot.lane.b32.xlu0 %v9430, 32
      %v10663 = vpop.permute.xlu0 %10662
      %10664 = vrot.lane.b32.xlu0 %v9431, 32
      %v10665 = vpop.permute.xlu0 %10664
      %10666 = vrot.lane.b32.xlu0 %v9432, 32
      %v10667 = vpop.permute.xlu0 %10666
      %10668 = vrot.lane.b32.xlu0 %v9433, 32
      %v10669 = vpop.permute.xlu0 %10668
      %10670 = vrot.lane.b32.xlu0 %v9434, 32
      %v10671 = vpop.permute.xlu0 %10670
      %10672 = vrot.lane.b32.xlu0 %v9435, 32
      %v10673 = vpop.permute.xlu0 %10672
      %10674 = vrot.lane.b32.xlu0 %v9436, 32
      %v10675 = vpop.permute.xlu0 %10674
      %10676 = vrot.lane.b32.xlu0 %v9437, 32
      %v10677 = vpop.permute.xlu0 %10676
      %10678 = vrot.lane.b32.xlu0 %v9438, 32
      %v10679 = vpop.permute.xlu0 %10678
      %10680 = vrot.lane.b32.xlu0 %v9439, 32
      %v10681 = vpop.permute.xlu0 %10680
      %10682 = vrot.lane.b32.xlu0 %v9440, 32
      %v10683 = vpop.permute.xlu0 %10682
      %10684 = vrot.lane.b32.xlu0 %v9441, 32
      %v10685 = vpop.permute.xlu0 %10684
      %10686 = vrot.lane.b32.xlu0 %v9442, 32
      %v10687 = vpop.permute.xlu0 %10686
      %10688 = vrot.lane.b32.xlu0 %v9443, 32
      %v10689 = vpop.permute.xlu0 %10688
      %10690 = vrot.lane.b32.xlu0 %v9444, 32
      %v10691 = vpop.permute.xlu0 %10690
      %10692 = vrot.lane.b32.xlu0 %v9445, 32
      %v10693 = vpop.permute.xlu0 %10692
      %10726 = vrot.lane.b32.xlu0 %v9446, 64
      %v10727 = vpop.permute.xlu0 %10726
      %10728 = vrot.lane.b32.xlu0 %v9447, 64
      %v10729 = vpop.permute.xlu0 %10728
      %10730 = vrot.lane.b32.xlu0 %v9448, 64
      %v10731 = vpop.permute.xlu0 %10730
      %10732 = vrot.lane.b32.xlu0 %v9449, 64
      %v10733 = vpop.permute.xlu0 %10732
      %10734 = vrot.lane.b32.xlu0 %v9450, 64
      %v10735 = vpop.permute.xlu0 %10734
      %10736 = vrot.lane.b32.xlu0 %v9451, 64
      %v10737 = vpop.permute.xlu0 %10736
      %10738 = vrot.lane.b32.xlu0 %v9452, 64
      %v10739 = vpop.permute.xlu0 %10738
      %10740 = vrot.lane.b32.xlu0 %v9453, 64
      %v10741 = vpop.permute.xlu0 %10740
      %10742 = vrot.lane.b32.xlu0 %v9454, 64
      %v10743 = vpop.permute.xlu0 %10742
      %10744 = vrot.lane.b32.xlu0 %v9455, 64
      %v10745 = vpop.permute.xlu0 %10744
      %10746 = vrot.lane.b32.xlu0 %v9456, 64
      %v10747 = vpop.permute.xlu0 %10746
      %10748 = vrot.lane.b32.xlu0 %v9457, 64
      %v10749 = vpop.permute.xlu0 %10748
      %10750 = vrot.lane.b32.xlu0 %v9458, 64
      %v10751 = vpop.permute.xlu0 %10750
      %10752 = vrot.lane.b32.xlu0 %v9459, 64
      %v10753 = vpop.permute.xlu0 %10752
      %10754 = vrot.lane.b32.xlu0 %v9460, 64
      %v10755 = vpop.permute.xlu0 %10754
      %10756 = vrot.lane.b32.xlu0 %v9461, 64
      %v10757 = vpop.permute.xlu0 %10756
      %10790 = vrot.lane.b32.xlu0 %v9462, 96
      %v10791 = vpop.permute.xlu0 %10790
      %10792 = vrot.lane.b32.xlu0 %v9463, 96
      %v10793 = vpop.permute.xlu0 %10792
      %10794 = vrot.lane.b32.xlu0 %v9464, 96
      %v10795 = vpop.permute.xlu0 %10794
      %10796 = vrot.lane.b32.xlu0 %v9465, 96
      %v10797 = vpop.permute.xlu0 %10796
      %10798 = vrot.lane.b32.xlu0 %v9466, 96
      %v10799 = vpop.permute.xlu0 %10798
      %10800 = vrot.lane.b32.xlu0 %v9467, 96
      %v10801 = vpop.permute.xlu0 %10800
      %10802 = vrot.lane.b32.xlu0 %v9468, 96
      %v10803 = vpop.permute.xlu0 %10802
      %10804 = vrot.lane.b32.xlu0 %v9469, 96
      %v10805 = vpop.permute.xlu0 %10804
      %10806 = vrot.lane.b32.xlu0 %v9470, 96
      %v10807 = vpop.permute.xlu0 %10806
      %10808 = vrot.lane.b32.xlu0 %v9471, 96
      %v10809 = vpop.permute.xlu0 %10808
      %10810 = vrot.lane.b32.xlu0 %v9472, 96
      %v10811 = vpop.permute.xlu0 %10810
      %10812 = vrot.lane.b32.xlu0 %v9473, 96
      %v10813 = vpop.permute.xlu0 %10812
      %10814 = vrot.lane.b32.xlu0 %v9474, 96
      %v10815 = vpop.permute.xlu0 %10814
      %10816 = vrot.lane.b32.xlu0 %v9475, 96
      %v10817 = vpop.permute.xlu0 %10816
      %10818 = vrot.lane.b32.xlu0 %v9476, 96
      %v10819 = vpop.permute.xlu0 %10818
      %10820 = vrot.lane.b32.xlu0 %v9477, 96
      %v10821 = vpop.permute.xlu0 %10820
      %v10838 = vsel %vm8929, %v9349, %v10471
      %v10839 = vsel %vm8929, %v9350, %v10473
      %v10840 = vsel %vm8929, %v9351, %v10475
      %v10841 = vsel %vm8929, %v9352, %v10477
      %v10842 = vsel %vm8929, %v9353, %v10479
      %v10843 = vsel %vm8929, %v9354, %v10481
      %v10844 = vsel %vm8929, %v9355, %v10483
      %v10845 = vsel %vm8929, %v9356, %v10485
      %v10846 = vsel %vm8929, %v9357, %v10487
      %v10847 = vsel %vm8929, %v9358, %v10489
      %v10848 = vsel %vm8929, %v9359, %v10491
      %v10849 = vsel %vm8929, %v9360, %v10493
      %v10850 = vsel %vm8929, %v9361, %v10495
      %v10851 = vsel %vm8929, %v9362, %v10497
      %v10852 = vsel %vm8929, %v9363, %v10499
      %v10853 = vsel %vm8929, %v9364, %v10501
      %v10854 = vsel %vm8369, %v10838, %v10535
      %v10855 = vsel %vm8369, %v10839, %v10537
      %v10856 = vsel %vm8369, %v10840, %v10539
      %v10857 = vsel %vm8369, %v10841, %v10541
      %v10858 = vsel %vm8369, %v10842, %v10543
      %v10859 = vsel %vm8369, %v10843, %v10545
      %v10860 = vsel %vm8369, %v10844, %v10547
      %v10861 = vsel %vm8369, %v10845, %v10549
      %v10862 = vsel %vm8369, %v10846, %v10551
      %v10863 = vsel %vm8369, %v10847, %v10553
      %v10864 = vsel %vm8369, %v10848, %v10555
      %v10865 = vsel %vm8369, %v10849, %v10557
      %v10866 = vsel %vm8369, %v10850, %v10559
      %v10867 = vsel %vm8369, %v10851, %v10561
      %v10868 = vsel %vm8369, %v10852, %v10563
      %v10869 = vsel %vm8369, %v10853, %v10565
      %v10870 = vsel %vm8319, %v10854, %v10599
      %v10871 = vsel %vm8319, %v10855, %v10601
      %v10872 = vsel %vm8319, %v10856, %v10603
      %v10873 = vsel %vm8319, %v10857, %v10605
      %v10874 = vsel %vm8319, %v10858, %v10607
      %v10875 = vsel %vm8319, %v10859, %v10609
      %v10876 = vsel %vm8319, %v10860, %v10611
      %v10877 = vsel %vm8319, %v10861, %v10613
      %v10878 = vsel %vm8319, %v10862, %v10615
      %v10879 = vsel %vm8319, %v10863, %v10617
      %v10880 = vsel %vm8319, %v10864, %v10619
      %v10881 = vsel %vm8319, %v10865, %v10621
      %v10882 = vsel %vm8319, %v10866, %v10623
      %v10883 = vsel %vm8319, %v10867, %v10625
      %v10884 = vsel %vm8319, %v10868, %v10627
      %v10885 = vsel %vm8319, %v10869, %v10629
      %v10886 = vsel %vm8929, %v9414, %v10663
      %v10887 = vsel %vm8929, %v9415, %v10665
      %v10888 = vsel %vm8929, %v9416, %v10667
      %v10889 = vsel %vm8929, %v9417, %v10669
      %v10890 = vsel %vm8929, %v9418, %v10671
      %v10891 = vsel %vm8929, %v9419, %v10673
      %v10892 = vsel %vm8929, %v9420, %v10675
      %v10893 = vsel %vm8929, %v9421, %v10677
      %v10894 = vsel %vm8929, %v9422, %v10679
      %v10895 = vsel %vm8929, %v9423, %v10681
      %v10896 = vsel %vm8929, %v9424, %v10683
      %v10897 = vsel %vm8929, %v9425, %v10685
      %v10898 = vsel %vm8929, %v9426, %v10687
      %v10899 = vsel %vm8929, %v9427, %v10689
      %v10900 = vsel %vm8929, %v9428, %v10691
      %v10901 = vsel %vm8929, %v9429, %v10693
      %v10902 = vsel %vm8369, %v10886, %v10727
      %v10903 = vsel %vm8369, %v10887, %v10729
      %v10904 = vsel %vm8369, %v10888, %v10731
      %v10905 = vsel %vm8369, %v10889, %v10733
      %v10906 = vsel %vm8369, %v10890, %v10735
      %v10907 = vsel %vm8369, %v10891, %v10737
      %v10908 = vsel %vm8369, %v10892, %v10739
      %v10909 = vsel %vm8369, %v10893, %v10741
      %v10910 = vsel %vm8369, %v10894, %v10743
      %v10911 = vsel %vm8369, %v10895, %v10745
      %v10912 = vsel %vm8369, %v10896, %v10747
      %v10913 = vsel %vm8369, %v10897, %v10749
      %v10914 = vsel %vm8369, %v10898, %v10751
      %v10915 = vsel %vm8369, %v10899, %v10753
      %v10916 = vsel %vm8369, %v10900, %v10755
      %v10917 = vsel %vm8369, %v10901, %v10757
      %v10918 = vsel %vm8319, %v10902, %v10791
      %v10919 = vsel %vm8319, %v10903, %v10793
      %v10920 = vsel %vm8319, %v10904, %v10795
      %v10921 = vsel %vm8319, %v10905, %v10797
      %v10922 = vsel %vm8319, %v10906, %v10799
      %v10923 = vsel %vm8319, %v10907, %v10801
      %v10924 = vsel %vm8319, %v10908, %v10803
      %v10925 = vsel %vm8319, %v10909, %v10805
      %v10926 = vsel %vm8319, %v10910, %v10807
      %v10927 = vsel %vm8319, %v10911, %v10809
      %v10928 = vsel %vm8319, %v10912, %v10811
      %v10929 = vsel %vm8319, %v10913, %v10813
      %v10930 = vsel %vm8319, %v10914, %v10815
      %v10931 = vsel %vm8319, %v10915, %v10817
      %v10932 = vsel %vm8319, %v10916, %v10819
      %v10933 = vsel %vm8319, %v10917, %v10821
      %v10934 = vld [vmem:[%s5] sm:$0xff]
      %v10935 = vld [vmem:[%s5 + $0x8] sm:$0xff]
      %v10936 = vld [vmem:[%s5 + $0x10] sm:$0xff]
      %v10937 = vld [vmem:[%s5 + $0x18] sm:$0xff]
      %v10938 = vld [vmem:[%s5 + $0x20] sm:$0xff]
      %v10939 = vld [vmem:[%s5 + $0x28] sm:$0xff]
      %v10940 = vld [vmem:[%s5 + $0x30] sm:$0xff]
      %v10941 = vld [vmem:[%s5 + $0x38] sm:$0xff]
      %v10942 = vld [vmem:[%s5 + $0x40] sm:$0xff]
      %v10943 = vld [vmem:[%s5 + $0x48] sm:$0xff]
      %v10944 = vld [vmem:[%s5 + $0x50] sm:$0xff]
      %v10945 = vld [vmem:[%s5 + $0x58] sm:$0xff]
      %v10946 = vld [vmem:[%s5 + $0x60] sm:$0xff]
      %v10947 = vld [vmem:[%s5 + $0x68] sm:$0xff]
      %v10948 = vld [vmem:[%s5 + $0x70] sm:$0xff]
      %v10949 = vld [vmem:[%s5 + $0x78] sm:$0xff]
      %v10950 = vld [vmem:[%s5 + $0x80] sm:$0xff]
      %v10951 = vld [vmem:[%s5 + $0x88] sm:$0xff]
      %v10952 = vld [vmem:[%s5 + $0x90] sm:$0xff]
      %v10953 = vld [vmem:[%s5 + $0x98] sm:$0xff]
      %v10954 = vld [vmem:[%s5 + $0xa0] sm:$0xff]
      %v10955 = vld [vmem:[%s5 + $0xa8] sm:$0xff]
      %v10956 = vld [vmem:[%s5 + $0xb0] sm:$0xff]
      %v10957 = vld [vmem:[%s5 + $0xb8] sm:$0xff]
      %v10958 = vld [vmem:[%s5 + $0xc0] sm:$0xff]
      %v10959 = vld [vmem:[%s5 + $0xc8] sm:$0xff]
      %v10960 = vld [vmem:[%s5 + $0xd0] sm:$0xff]
      %v10961 = vld [vmem:[%s5 + $0xd8] sm:$0xff]
      %v10962 = vld [vmem:[%s5 + $0xe0] sm:$0xff]
      %v10963 = vld [vmem:[%s5 + $0xe8] sm:$0xff]
      %v10964 = vld [vmem:[%s5 + $0xf0] sm:$0xff]
      %v10965 = vld [vmem:[%s5 + $0xf8] sm:$0xff]
      %v10966 = vld [vmem:[%s5 + $0x100] sm:$0xff]
      %v10967 = vld [vmem:[%s5 + $0x108] sm:$0xff]
      %v10968 = vld [vmem:[%s5 + $0x110] sm:$0xff]
      %v10969 = vld [vmem:[%s5 + $0x118] sm:$0xff]
      %v10970 = vld [vmem:[%s5 + $0x120] sm:$0xff]
      %v10971 = vld [vmem:[%s5 + $0x128] sm:$0xff]
      %v10972 = vld [vmem:[%s5 + $0x130] sm:$0xff]
      %v10973 = vld [vmem:[%s5 + $0x138] sm:$0xff]
      %v10974 = vld [vmem:[%s5 + $0x140] sm:$0xff]
      %v10975 = vld [vmem:[%s5 + $0x148] sm:$0xff]
      %v10976 = vld [vmem:[%s5 + $0x150] sm:$0xff]
      %v10977 = vld [vmem:[%s5 + $0x158] sm:$0xff]
      %v10978 = vld [vmem:[%s5 + $0x160] sm:$0xff]
      %v10979 = vld [vmem:[%s5 + $0x168] sm:$0xff]
      %v10980 = vld [vmem:[%s5 + $0x170] sm:$0xff]
      %v10981 = vld [vmem:[%s5 + $0x178] sm:$0xff]
      %v10982 = vld [vmem:[%s5 + $0x180] sm:$0xff]
      %v10983 = vld [vmem:[%s5 + $0x188] sm:$0xff]
      %v10984 = vld [vmem:[%s5 + $0x190] sm:$0xff]
      %v10985 = vld [vmem:[%s5 + $0x198] sm:$0xff]
      %v10986 = vld [vmem:[%s5 + $0x1a0] sm:$0xff]
      %v10987 = vld [vmem:[%s5 + $0x1a8] sm:$0xff]
      %v10988 = vld [vmem:[%s5 + $0x1b0] sm:$0xff]
      %v10989 = vld [vmem:[%s5 + $0x1b8] sm:$0xff]
      %v10990 = vld [vmem:[%s5 + $0x1c0] sm:$0xff]
      %v10991 = vld [vmem:[%s5 + $0x1c8] sm:$0xff]
      %v10992 = vld [vmem:[%s5 + $0x1d0] sm:$0xff]
      %v10993 = vld [vmem:[%s5 + $0x1d8] sm:$0xff]
      %v10994 = vld [vmem:[%s5 + $0x1e0] sm:$0xff]
      %v10995 = vld [vmem:[%s5 + $0x1e8] sm:$0xff]
      %v10996 = vld [vmem:[%s5 + $0x1f0] sm:$0xff]
      %v10997 = vld [vmem:[%s5 + $0x1f8] sm:$0xff]
      %v10998 = vld [vmem:[%s5 + $0x200] sm:$0xff]
      %v10999 = vld [vmem:[%s5 + $0x208] sm:$0xff]
      %v11000 = vld [vmem:[%s5 + $0x210] sm:$0xff]
      %v11001 = vld [vmem:[%s5 + $0x218] sm:$0xff]
      %v11002 = vld [vmem:[%s5 + $0x220] sm:$0xff]
      %v11003 = vld [vmem:[%s5 + $0x228] sm:$0xff]
      %v11004 = vld [vmem:[%s5 + $0x230] sm:$0xff]
      %v11005 = vld [vmem:[%s5 + $0x238] sm:$0xff]
      %v11006 = vld [vmem:[%s5 + $0x240] sm:$0xff]
      %v11007 = vld [vmem:[%s5 + $0x248] sm:$0xff]
      %v11008 = vld [vmem:[%s5 + $0x250] sm:$0xff]
      %v11009 = vld [vmem:[%s5 + $0x258] sm:$0xff]
      %v11010 = vld [vmem:[%s5 + $0x260] sm:$0xff]
      %v11011 = vld [vmem:[%s5 + $0x268] sm:$0xff]
      %v11012 = vld [vmem:[%s5 + $0x270] sm:$0xff]
      %v11013 = vld [vmem:[%s5 + $0x278] sm:$0xff]
      %v11014 = vld [vmem:[%s5 + $0x280] sm:$0xff]
      %v11015 = vld [vmem:[%s5 + $0x288] sm:$0xff]
      %v11016 = vld [vmem:[%s5 + $0x290] sm:$0xff]
      %v11017 = vld [vmem:[%s5 + $0x298] sm:$0xff]
      %v11018 = vld [vmem:[%s5 + $0x2a0] sm:$0xff]
      %v11019 = vld [vmem:[%s5 + $0x2a8] sm:$0xff]
      %v11020 = vld [vmem:[%s5 + $0x2b0] sm:$0xff]
      %v11021 = vld [vmem:[%s5 + $0x2b8] sm:$0xff]
      %v11022 = vld [vmem:[%s5 + $0x2c0] sm:$0xff]
      %v11023 = vld [vmem:[%s5 + $0x2c8] sm:$0xff]
      %v11024 = vld [vmem:[%s5 + $0x2d0] sm:$0xff]
      %v11025 = vld [vmem:[%s5 + $0x2d8] sm:$0xff]
      %v11026 = vld [vmem:[%s5 + $0x2e0] sm:$0xff]
      %v11027 = vld [vmem:[%s5 + $0x2e8] sm:$0xff]
      %v11028 = vld [vmem:[%s5 + $0x2f0] sm:$0xff]
      %v11029 = vld [vmem:[%s5 + $0x2f8] sm:$0xff]
      %v11030 = vld [vmem:[%s5 + $0x300] sm:$0xff]
      %v11031 = vld [vmem:[%s5 + $0x308] sm:$0xff]
      %v11032 = vld [vmem:[%s5 + $0x310] sm:$0xff]
      %v11033 = vld [vmem:[%s5 + $0x318] sm:$0xff]
      %v11034 = vld [vmem:[%s6] sm:$0x1]
      %v11036 = vperm.slane %v11034, 0
      %v11039 = vsel %vm8929, %v9478, 0
      %v11042 = vsel %vm8929, %v9479, 0
      %v11045 = vsel %vm8929, %v9480, 0
      %v11048 = vsel %vm8929, %v9481, 0
      %v11051 = vsel %vm8929, %v9482, 0
      %v11054 = vsel %vm8929, %v9483, 0
      %v11057 = vsel %vm8929, %v9484, 0
      %v11060 = vsel %vm8929, %v9485, 0
      %v11063 = vsel %vm8929, %v9486, 0
      %v11066 = vsel %vm8929, %v9487, 0
      %v11069 = vsel %vm8929, %v9488, 0
      %v11072 = vsel %vm8929, %v9489, 0
      %v11075 = vsel %vm8929, %v9490, 0
      %v11078 = vsel %vm8929, %v9491, 0
      %v11081 = vsel %vm8929, %v9492, 0
      %v11084 = vsel %vm8929, %v9493, 0
      %11086 = vmatpush.msra.mxu0 %v10949
      %11087 = vmatpush.msra.mxu0 %v10948
      %11088 = vmatpush.msra.mxu0 %v10947
      %11089 = vmatpush.msra.mxu0 %v10946
      %11090 = vmatpush.msra.mxu0 %v10945
      %11091 = vmatpush.msra.mxu0 %v10944
      %11092 = vmatpush.msra.mxu0 %v10943
      %11093 = vmatpush.msra.mxu0 %v10942
      %11094 = vmatpush.msra.mxu0 %v10941
      %11095 = vmatpush.msra.mxu0 %v10940
      %11096 = vmatpush.msra.mxu0 %v10939
      %11097 = vmatpush.msra.mxu0 %v10938
      %11098 = vmatpush.msra.mxu0 %v10937
      %11099 = vmatpush.msra.mxu0 %v10936
      %11100 = vmatpush.msra.mxu0 %v10935
      %11101 = vmatpush.msra.mxu0 %v10934
      %11102 = vmatmul.f32.gmra.mxu0 %v10294
      %v11103 = vpop.f32.mrf.mxu0
      %v11104 = vadd.f32 %v11036, %v11103
      %11105 = vmatmul.f32.gmra.mxu0 %v10295
      %v11106 = vpop.f32.mrf.mxu0
      %v11107 = vadd.f32 %v11036, %v11106
      %11108 = vmatmul.f32.gmra.mxu0 %v10296
      %v11109 = vpop.f32.mrf.mxu0
      %v11110 = vadd.f32 %v11036, %v11109
      %11111 = vmatmul.f32.gmra.mxu0 %v10297
      %v11112 = vpop.f32.mrf.mxu0
      %v11113 = vadd.f32 %v11036, %v11112
      %11114 = vmatmul.f32.gmra.mxu0 %v10298
      %v11115 = vpop.f32.mrf.mxu0
      %v11116 = vadd.f32 %v11036, %v11115
      %11117 = vmatmul.f32.gmra.mxu0 %v10299
      %v11118 = vpop.f32.mrf.mxu0
      %v11119 = vadd.f32 %v11036, %v11118
      %11120 = vmatmul.f32.gmra.mxu0 %v10300
      %v11121 = vpop.f32.mrf.mxu0
      %v11122 = vadd.f32 %v11036, %v11121
      %11123 = vmatmul.f32.gmra.mxu0 %v10301
      %v11124 = vpop.f32.mrf.mxu0
      %v11125 = vadd.f32 %v11036, %v11124
      %11126 = vmatmul.f32.gmra.mxu0 %v10302
      %v11127 = vpop.f32.mrf.mxu0
      %v11128 = vadd.f32 %v11036, %v11127
      %11129 = vmatmul.f32.gmra.mxu0 %v10303
      %v11130 = vpop.f32.mrf.mxu0
      %v11131 = vadd.f32 %v11036, %v11130
      %11132 = vmatmul.f32.gmra.mxu0 %v10304
      %v11133 = vpop.f32.mrf.mxu0
      %v11134 = vadd.f32 %v11036, %v11133
      %11135 = vmatmul.f32.gmra.mxu0 %v10305
      %v11136 = vpop.f32.mrf.mxu0
      %v11137 = vadd.f32 %v11036, %v11136
      %11138 = vmatmul.f32.gmra.mxu0 %v10306
      %v11139 = vpop.f32.mrf.mxu0
      %v11140 = vadd.f32 %v11036, %v11139
      %11141 = vmatmul.f32.gmra.mxu0 %v10307
      %v11142 = vpop.f32.mrf.mxu0
      %v11143 = vadd.f32 %v11036, %v11142
      %11144 = vmatmul.f32.gmra.mxu0 %v10308
      %v11145 = vpop.f32.mrf.mxu0
      %v11146 = vadd.f32 %v11036, %v11145
      %11147 = vmatmul.f32.gmra.mxu0 %v10309
      %v11148 = vpop.f32.mrf.mxu0
      %v11149 = vadd.f32 %v11036, %v11148
      %11150 = vdwg.mxu0
      %11151 = vmatpush.msra.mxu0 %v10965
      %11152 = vmatpush.msra.mxu0 %v10964
      %11153 = vmatpush.msra.mxu0 %v10963
      %11154 = vmatpush.msra.mxu0 %v10962
      %11155 = vmatpush.msra.mxu0 %v10961
      %11156 = vmatpush.msra.mxu0 %v10960
      %11157 = vmatpush.msra.mxu0 %v10959
      %11158 = vmatpush.msra.mxu0 %v10958
      %11159 = vmatpush.msra.mxu0 %v10957
      %11160 = vmatpush.msra.mxu0 %v10956
      %11161 = vmatpush.msra.mxu0 %v10955
      %11162 = vmatpush.msra.mxu0 %v10954
      %11163 = vmatpush.msra.mxu0 %v10953
      %11164 = vmatpush.msra.mxu0 %v10952
      %11165 = vmatpush.msra.mxu0 %v10951
      %11166 = vmatpush.msra.mxu0 %v10950
      %11167 = vmatmul.f32.gmra.mxu0 %v10342
      %v11168 = vpop.f32.mrf.mxu0
      %v11169 = vadd.f32 %v11104, %v11168
      %11170 = vmatmul.f32.gmra.mxu0 %v10343
      %v11171 = vpop.f32.mrf.mxu0
      %v11172 = vadd.f32 %v11107, %v11171
      %11173 = vmatmul.f32.gmra.mxu0 %v10344
      %v11174 = vpop.f32.mrf.mxu0
      %v11175 = vadd.f32 %v11110, %v11174
      %11176 = vmatmul.f32.gmra.mxu0 %v10345
      %v11177 = vpop.f32.mrf.mxu0
      %v11178 = vadd.f32 %v11113, %v11177
      %11179 = vmatmul.f32.gmra.mxu0 %v10346
      %v11180 = vpop.f32.mrf.mxu0
      %v11181 = vadd.f32 %v11116, %v11180
      %11182 = vmatmul.f32.gmra.mxu0 %v10347
      %v11183 = vpop.f32.mrf.mxu0
      %v11184 = vadd.f32 %v11119, %v11183
      %11185 = vmatmul.f32.gmra.mxu0 %v10348
      %v11186 = vpop.f32.mrf.mxu0
      %v11187 = vadd.f32 %v11122, %v11186
      %11188 = vmatmul.f32.gmra.mxu0 %v10349
      %v11189 = vpop.f32.mrf.mxu0
      %v11190 = vadd.f32 %v11125, %v11189
      %11191 = vmatmul.f32.gmra.mxu0 %v10350
      %v11192 = vpop.f32.mrf.mxu0
      %v11193 = vadd.f32 %v11128, %v11192
      %11194 = vmatmul.f32.gmra.mxu0 %v10351
      %v11195 = vpop.f32.mrf.mxu0
      %v11196 = vadd.f32 %v11131, %v11195
      %11197 = vmatmul.f32.gmra.mxu0 %v10352
      %v11198 = vpop.f32.mrf.mxu0
      %v11199 = vadd.f32 %v11134, %v11198
      %11200 = vmatmul.f32.gmra.mxu0 %v10353
      %v11201 = vpop.f32.mrf.mxu0
      %v11202 = vadd.f32 %v11137, %v11201
      %11203 = vmatmul.f32.gmra.mxu0 %v10354
      %v11204 = vpop.f32.mrf.mxu0
      %v11205 = vadd.f32 %v11140, %v11204
      %11206 = vmatmul.f32.gmra.mxu0 %v10355
      %v11207 = vpop.f32.mrf.mxu0
      %v11208 = vadd.f32 %v11143, %v11207
      %11209 = vmatmul.f32.gmra.mxu0 %v10356
      %v11210 = vpop.f32.mrf.mxu0
      %v11211 = vadd.f32 %v11146, %v11210
      %11212 = vmatmul.f32.gmra.mxu0 %v10357
      %v11213 = vpop.f32.mrf.mxu0
      %v11214 = vadd.f32 %v11149, %v11213
      %11215 = vdwg.mxu0
      %11216 = vmatpush.msra.mxu0 %v10981
      %11217 = vmatpush.msra.mxu0 %v10980
      %11218 = vmatpush.msra.mxu0 %v10979
      %11219 = vmatpush.msra.mxu0 %v10978
      %11220 = vmatpush.msra.mxu0 %v10977
      %11221 = vmatpush.msra.mxu0 %v10976
      %11222 = vmatpush.msra.mxu0 %v10975
      %11223 = vmatpush.msra.mxu0 %v10974
      %11224 = vmatpush.msra.mxu0 %v10973
      %11225 = vmatpush.msra.mxu0 %v10972
      %11226 = vmatpush.msra.mxu0 %v10971
      %11227 = vmatpush.msra.mxu0 %v10970
      %11228 = vmatpush.msra.mxu0 %v10969
      %11229 = vmatpush.msra.mxu0 %v10968
      %11230 = vmatpush.msra.mxu0 %v10967
      %11231 = vmatpush.msra.mxu0 %v10966
      %11232 = vmatmul.f32.gmra.mxu0 %v10390
      %v11233 = vpop.f32.mrf.mxu0
      %v11234 = vadd.f32 %v11169, %v11233
      %11235 = vmatmul.f32.gmra.mxu0 %v10391
      %v11236 = vpop.f32.mrf.mxu0
      %v11237 = vadd.f32 %v11172, %v11236
      %11238 = vmatmul.f32.gmra.mxu0 %v10392
      %v11239 = vpop.f32.mrf.mxu0
      %v11240 = vadd.f32 %v11175, %v11239
      %11241 = vmatmul.f32.gmra.mxu0 %v10393
      %v11242 = vpop.f32.mrf.mxu0
      %v11243 = vadd.f32 %v11178, %v11242
      %11244 = vmatmul.f32.gmra.mxu0 %v10394
      %v11245 = vpop.f32.mrf.mxu0
      %v11246 = vadd.f32 %v11181, %v11245
      %11247 = vmatmul.f32.gmra.mxu0 %v10395
      %v11248 = vpop.f32.mrf.mxu0
      %v11249 = vadd.f32 %v11184, %v11248
      %11250 = vmatmul.f32.gmra.mxu0 %v10396
      %v11251 = vpop.f32.mrf.mxu0
      %v11252 = vadd.f32 %v11187, %v11251
      %11253 = vmatmul.f32.gmra.mxu0 %v10397
      %v11254 = vpop.f32.mrf.mxu0
      %v11255 = vadd.f32 %v11190, %v11254
      %11256 = vmatmul.f32.gmra.mxu0 %v10398
      %v11257 = vpop.f32.mrf.mxu0
      %v11258 = vadd.f32 %v11193, %v11257
      %11259 = vmatmul.f32.gmra.mxu0 %v10399
      %v11260 = vpop.f32.mrf.mxu0
      %v11261 = vadd.f32 %v11196, %v11260
      %11262 = vmatmul.f32.gmra.mxu0 %v10400
      %v11263 = vpop.f32.mrf.mxu0
      %v11264 = vadd.f32 %v11199, %v11263
      %11265 = vmatmul.f32.gmra.mxu0 %v10401
      %v11266 = vpop.f32.mrf.mxu0
      %v11267 = vadd.f32 %v11202, %v11266
      %11268 = vmatmul.f32.gmra.mxu0 %v10402
      %v11269 = vpop.f32.mrf.mxu0
      %v11270 = vadd.f32 %v11205, %v11269
      %11271 = vmatmul.f32.gmra.mxu0 %v10403
      %v11272 = vpop.f32.mrf.mxu0
      %v11273 = vadd.f32 %v11208, %v11272
      %11274 = vmatmul.f32.gmra.mxu0 %v10404
      %v11275 = vpop.f32.mrf.mxu0
      %v11276 = vadd.f32 %v11211, %v11275
      %11277 = vmatmul.f32.gmra.mxu0 %v10405
      %v11278 = vpop.f32.mrf.mxu0
      %v11279 = vadd.f32 %v11214, %v11278
      %11280 = vdwg.mxu0
      %11281 = vmatpush.msra.mxu0 %v10997
      %11282 = vmatpush.msra.mxu0 %v10996
      %11283 = vmatpush.msra.mxu0 %v10995
      %11284 = vmatpush.msra.mxu0 %v10994
      %11285 = vmatpush.msra.mxu0 %v10993
      %11286 = vmatpush.msra.mxu0 %v10992
      %11287 = vmatpush.msra.mxu0 %v10991
      %11288 = vmatpush.msra.mxu0 %v10990
      %11289 = vmatpush.msra.mxu0 %v10989
      %11290 = vmatpush.msra.mxu0 %v10988
      %11291 = vmatpush.msra.mxu0 %v10987
      %11292 = vmatpush.msra.mxu0 %v10986
      %11293 = vmatpush.msra.mxu0 %v10985
      %11294 = vmatpush.msra.mxu0 %v10984
      %11295 = vmatpush.msra.mxu0 %v10983
      %11296 = vmatpush.msra.mxu0 %v10982
      %11297 = vmatmul.f32.gmra.mxu0 %v10438
      %v11298 = vpop.f32.mrf.mxu0
      %v11299 = vadd.f32 %v11234, %v11298
      %11300 = vmatmul.f32.gmra.mxu0 %v10439
      %v11301 = vpop.f32.mrf.mxu0
      %v11302 = vadd.f32 %v11237, %v11301
      %11303 = vmatmul.f32.gmra.mxu0 %v10440
      %v11304 = vpop.f32.mrf.mxu0
      %v11305 = vadd.f32 %v11240, %v11304
      %11306 = vmatmul.f32.gmra.mxu0 %v10441
      %v11307 = vpop.f32.mrf.mxu0
      %v11308 = vadd.f32 %v11243, %v11307
      %11309 = vmatmul.f32.gmra.mxu0 %v10442
      %v11310 = vpop.f32.mrf.mxu0
      %v11311 = vadd.f32 %v11246, %v11310
      %11312 = vmatmul.f32.gmra.mxu0 %v10443
      %v11313 = vpop.f32.mrf.mxu0
      %v11314 = vadd.f32 %v11249, %v11313
      %11315 = vmatmul.f32.gmra.mxu0 %v10444
      %v11316 = vpop.f32.mrf.mxu0
      %v11317 = vadd.f32 %v11252, %v11316
      %11318 = vmatmul.f32.gmra.mxu0 %v10445
      %v11319 = vpop.f32.mrf.mxu0
      %v11320 = vadd.f32 %v11255, %v11319
      %11321 = vmatmul.f32.gmra.mxu0 %v10446
      %v11322 = vpop.f32.mrf.mxu0
      %v11323 = vadd.f32 %v11258, %v11322
      %11324 = vmatmul.f32.gmra.mxu0 %v10447
      %v11325 = vpop.f32.mrf.mxu0
      %v11326 = vadd.f32 %v11261, %v11325
      %11327 = vmatmul.f32.gmra.mxu0 %v10448
      %v11328 = vpop.f32.mrf.mxu0
      %v11329 = vadd.f32 %v11264, %v11328
      %11330 = vmatmul.f32.gmra.mxu0 %v10449
      %v11331 = vpop.f32.mrf.mxu0
      %v11332 = vadd.f32 %v11267, %v11331
      %11333 = vmatmul.f32.gmra.mxu0 %v10450
      %v11334 = vpop.f32.mrf.mxu0
      %v11335 = vadd.f32 %v11270, %v11334
      %11336 = vmatmul.f32.gmra.mxu0 %v10451
      %v11337 = vpop.f32.mrf.mxu0
      %v11338 = vadd.f32 %v11273, %v11337
      %11339 = vmatmul.f32.gmra.mxu0 %v10452
      %v11340 = vpop.f32.mrf.mxu0
      %v11341 = vadd.f32 %v11276, %v11340
      %11342 = vmatmul.f32.gmra.mxu0 %v10453
      %v11343 = vpop.f32.mrf.mxu0
      %v11344 = vadd.f32 %v11279, %v11343
      %11345 = vdwg.mxu0
      %11346 = vmatpush.msra.mxu0 %v11013
      %11347 = vmatpush.msra.mxu0 %v11012
      %11348 = vmatpush.msra.mxu0 %v11011
      %11349 = vmatpush.msra.mxu0 %v11010
      %11350 = vmatpush.msra.mxu0 %v11009
      %11351 = vmatpush.msra.mxu0 %v11008
      %11352 = vmatpush.msra.mxu0 %v11007
      %11353 = vmatpush.msra.mxu0 %v11006
      %11354 = vmatpush.msra.mxu0 %v11005
      %11355 = vmatpush.msra.mxu0 %v11004
      %11356 = vmatpush.msra.mxu0 %v11003
      %11357 = vmatpush.msra.mxu0 %v11002
      %11358 = vmatpush.msra.mxu0 %v11001
      %11359 = vmatpush.msra.mxu0 %v11000
      %11360 = vmatpush.msra.mxu0 %v10999
      %11361 = vmatpush.msra.mxu0 %v10998
      %11362 = vmatmul.f32.gmra.mxu0 %v10870
      %v11363 = vpop.f32.mrf.mxu0
      %v11364 = vadd.f32 %v11299, %v11363
      %11365 = vmatmul.f32.gmra.mxu0 %v10871
      %v11366 = vpop.f32.mrf.mxu0
      %v11367 = vadd.f32 %v11302, %v11366
      %11368 = vmatmul.f32.gmra.mxu0 %v10872
      %v11369 = vpop.f32.mrf.mxu0
      %v11370 = vadd.f32 %v11305, %v11369
      %11371 = vmatmul.f32.gmra.mxu0 %v10873
      %v11372 = vpop.f32.mrf.mxu0
      %v11373 = vadd.f32 %v11308, %v11372
      %11374 = vmatmul.f32.gmra.mxu0 %v10874
      %v11375 = vpop.f32.mrf.mxu0
      %v11376 = vadd.f32 %v11311, %v11375
      %11377 = vmatmul.f32.gmra.mxu0 %v10875
      %v11378 = vpop.f32.mrf.mxu0
      %v11379 = vadd.f32 %v11314, %v11378
      %11380 = vmatmul.f32.gmra.mxu0 %v10876
      %v11381 = vpop.f32.mrf.mxu0
      %v11382 = vadd.f32 %v11317, %v11381
      %11383 = vmatmul.f32.gmra.mxu0 %v10877
      %v11384 = vpop.f32.mrf.mxu0
      %v11385 = vadd.f32 %v11320, %v11384
      %11386 = vmatmul.f32.gmra.mxu0 %v10878
      %v11387 = vpop.f32.mrf.mxu0
      %v11388 = vadd.f32 %v11323, %v11387
      %11389 = vmatmul.f32.gmra.mxu0 %v10879
      %v11390 = vpop.f32.mrf.mxu0
      %v11391 = vadd.f32 %v11326, %v11390
      %11392 = vmatmul.f32.gmra.mxu0 %v10880
      %v11393 = vpop.f32.mrf.mxu0
      %v11394 = vadd.f32 %v11329, %v11393
      %11395 = vmatmul.f32.gmra.mxu0 %v10881
      %v11396 = vpop.f32.mrf.mxu0
      %v11397 = vadd.f32 %v11332, %v11396
      %11398 = vmatmul.f32.gmra.mxu0 %v10882
      %v11399 = vpop.f32.mrf.mxu0
      %v11400 = vadd.f32 %v11335, %v11399
      %11401 = vmatmul.f32.gmra.mxu0 %v10883
      %v11402 = vpop.f32.mrf.mxu0
      %v11403 = vadd.f32 %v11338, %v11402
      %11404 = vmatmul.f32.gmra.mxu0 %v10884
      %v11405 = vpop.f32.mrf.mxu0
      %v11406 = vadd.f32 %v11341, %v11405
      %11407 = vmatmul.f32.gmra.mxu0 %v10885
      %v11408 = vpop.f32.mrf.mxu0
      %v11409 = vadd.f32 %v11344, %v11408
      %11410 = vdwg.mxu0
      %11411 = vmatpush.msra.mxu0 %v11029
      %11412 = vmatpush.msra.mxu0 %v11028
      %11413 = vmatpush.msra.mxu0 %v11027
      %11414 = vmatpush.msra.mxu0 %v11026
      %11415 = vmatpush.msra.mxu0 %v11025
      %11416 = vmatpush.msra.mxu0 %v11024
      %11417 = vmatpush.msra.mxu0 %v11023
      %11418 = vmatpush.msra.mxu0 %v11022
      %11419 = vmatpush.msra.mxu0 %v11021
      %11420 = vmatpush.msra.mxu0 %v11020
      %11421 = vmatpush.msra.mxu0 %v11019
      %11422 = vmatpush.msra.mxu0 %v11018
      %11423 = vmatpush.msra.mxu0 %v11017
      %11424 = vmatpush.msra.mxu0 %v11016
      %11425 = vmatpush.msra.mxu0 %v11015
      %11426 = vmatpush.msra.mxu0 %v11014
      %11427 = vmatmul.f32.gmra.mxu0 %v10918
      %v11428 = vpop.f32.mrf.mxu0
      %v11429 = vadd.f32 %v11364, %v11428
      %11430 = vmatmul.f32.gmra.mxu0 %v10919
      %v11431 = vpop.f32.mrf.mxu0
      %v11432 = vadd.f32 %v11367, %v11431
      %11433 = vmatmul.f32.gmra.mxu0 %v10920
      %v11434 = vpop.f32.mrf.mxu0
      %v11435 = vadd.f32 %v11370, %v11434
      %11436 = vmatmul.f32.gmra.mxu0 %v10921
      %v11437 = vpop.f32.mrf.mxu0
      %v11438 = vadd.f32 %v11373, %v11437
      %11439 = vmatmul.f32.gmra.mxu0 %v10922
      %v11440 = vpop.f32.mrf.mxu0
      %v11441 = vadd.f32 %v11376, %v11440
      %11442 = vmatmul.f32.gmra.mxu0 %v10923
      %v11443 = vpop.f32.mrf.mxu0
      %v11444 = vadd.f32 %v11379, %v11443
      %11445 = vmatmul.f32.gmra.mxu0 %v10924
      %v11446 = vpop.f32.mrf.mxu0
      %v11447 = vadd.f32 %v11382, %v11446
      %11448 = vmatmul.f32.gmra.mxu0 %v10925
      %v11449 = vpop.f32.mrf.mxu0
      %v11450 = vadd.f32 %v11385, %v11449
      %11451 = vmatmul.f32.gmra.mxu0 %v10926
      %v11452 = vpop.f32.mrf.mxu0
      %v11453 = vadd.f32 %v11388, %v11452
      %11454 = vmatmul.f32.gmra.mxu0 %v10927
      %v11455 = vpop.f32.mrf.mxu0
      %v11456 = vadd.f32 %v11391, %v11455
      %11457 = vmatmul.f32.gmra.mxu0 %v10928
      %v11458 = vpop.f32.mrf.mxu0
      %v11459 = vadd.f32 %v11394, %v11458
      %11460 = vmatmul.f32.gmra.mxu0 %v10929
      %v11461 = vpop.f32.mrf.mxu0
      %v11462 = vadd.f32 %v11397, %v11461
      %11463 = vmatmul.f32.gmra.mxu0 %v10930
      %v11464 = vpop.f32.mrf.mxu0
      %v11465 = vadd.f32 %v11400, %v11464
      %11466 = vmatmul.f32.gmra.mxu0 %v10931
      %v11467 = vpop.f32.mrf.mxu0
      %v11468 = vadd.f32 %v11403, %v11467
      %11469 = vmatmul.f32.gmra.mxu0 %v10932
      %v11470 = vpop.f32.mrf.mxu0
      %v11471 = vadd.f32 %v11406, %v11470
      %11472 = vmatmul.f32.gmra.mxu0 %v10933
      %v11473 = vpop.f32.mrf.mxu0
      %v11474 = vadd.f32 %v11409, %v11473
      %11475 = vdwg.mxu0
      %11476 = vmatpush.msra.mxu0 0.0
      %11477 = vmatpush.msra.mxu0 0.0
      %11478 = vmatpush.msra.mxu0 0.0
      %11479 = vmatpush.msra.mxu0 0.0
      %11480 = vmatpush.msra.mxu0 0.0
      %11481 = vmatpush.msra.mxu0 0.0
      %11482 = vmatpush.msra.mxu0 0.0
      %11483 = vmatpush.msra.mxu0 0.0
      %11484 = vmatpush.msra.mxu0 0.0
      %11485 = vmatpush.msra.mxu0 0.0
      %11486 = vmatpush.msra.mxu0 0.0
      %11487 = vmatpush.msra.mxu0 0.0
      %11488 = vmatpush.msra.mxu0 %v11033
      %11489 = vmatpush.msra.mxu0 %v11032
      %11490 = vmatpush.msra.mxu0 %v11031
      %11491 = vmatpush.msra.mxu0 %v11030
      %11492 = vmatmul.f32.gmra.mxu0 %v11039
      %v11493 = vpop.f32.mrf.mxu0
      %v11494 = vadd.f32 %v11429, %v11493
      %11495 = vmatmul.f32.gmra.mxu0 %v11042
      %v11496 = vpop.f32.mrf.mxu0
      %v11497 = vadd.f32 %v11432, %v11496
      %11498 = vmatmul.f32.gmra.mxu0 %v11045
      %v11499 = vpop.f32.mrf.mxu0
      %v11500 = vadd.f32 %v11435, %v11499
      %11501 = vmatmul.f32.gmra.mxu0 %v11048
      %v11502 = vpop.f32.mrf.mxu0
      %v11503 = vadd.f32 %v11438, %v11502
      %11504 = vmatmul.f32.gmra.mxu0 %v11051
      %v11505 = vpop.f32.mrf.mxu0
      %v11506 = vadd.f32 %v11441, %v11505
      %11507 = vmatmul.f32.gmra.mxu0 %v11054
      %v11508 = vpop.f32.mrf.mxu0
      %v11509 = vadd.f32 %v11444, %v11508
      %11510 = vmatmul.f32.gmra.mxu0 %v11057
      %v11511 = vpop.f32.mrf.mxu0
      %v11512 = vadd.f32 %v11447, %v11511
      %11513 = vmatmul.f32.gmra.mxu0 %v11060
      %v11514 = vpop.f32.mrf.mxu0
      %v11515 = vadd.f32 %v11450, %v11514
      %11516 = vmatmul.f32.gmra.mxu0 %v11063
      %v11517 = vpop.f32.mrf.mxu0
      %v11518 = vadd.f32 %v11453, %v11517
      %11519 = vmatmul.f32.gmra.mxu0 %v11066
      %v11520 = vpop.f32.mrf.mxu0
      %v11521 = vadd.f32 %v11456, %v11520
      %11522 = vmatmul.f32.gmra.mxu0 %v11069
      %v11523 = vpop.f32.mrf.mxu0
      %v11524 = vadd.f32 %v11459, %v11523
      %11525 = vmatmul.f32.gmra.mxu0 %v11072
      %v11526 = vpop.f32.mrf.mxu0
      %v11527 = vadd.f32 %v11462, %v11526
      %11528 = vmatmul.f32.gmra.mxu0 %v11075
      %v11529 = vpop.f32.mrf.mxu0
      %v11530 = vadd.f32 %v11465, %v11529
      %11531 = vmatmul.f32.gmra.mxu0 %v11078
      %v11532 = vpop.f32.mrf.mxu0
      %v11533 = vadd.f32 %v11468, %v11532
      %11534 = vmatmul.f32.gmra.mxu0 %v11081
      %v11535 = vpop.f32.mrf.mxu0
      %v11536 = vadd.f32 %v11471, %v11535
      %11537 = vmatmul.f32.gmra.mxu0 %v11084
      %v11538 = vpop.f32.mrf.mxu0
      %v11539 = vadd.f32 %v11474, %v11538
      %11540 = vdwg.mxu0
      %v11541 = vmax.f32 %v11494, 0.0
      %v11542 = vmax.f32 %v11497, 0.0
      %v11543 = vmax.f32 %v11500, 0.0
      %v11544 = vmax.f32 %v11503, 0.0
      %v11545 = vmax.f32 %v11506, 0.0
      %v11546 = vmax.f32 %v11509, 0.0
      %v11547 = vmax.f32 %v11512, 0.0
      %v11548 = vmax.f32 %v11515, 0.0
      %v11549 = vmax.f32 %v11518, 0.0
      %v11550 = vmax.f32 %v11521, 0.0
      %v11551 = vmax.f32 %v11524, 0.0
      %v11552 = vmax.f32 %v11527, 0.0
      %v11553 = vmax.f32 %v11530, 0.0
      %v11554 = vmax.f32 %v11533, 0.0
      %v11555 = vmax.f32 %v11536, 0.0
      %v11556 = vmax.f32 %v11539, 0.0
      %11557 = vst.msk [vmem:[%s314] sm:$0xff] %vm1952, %v11541
      %11558 = vst.msk [vmem:[%s314 + $0x8] sm:$0xff] %vm1952, %v11542
      %11559 = vst.msk [vmem:[%s314 + $0x10] sm:$0xff] %vm1952, %v11543
      %11560 = vst.msk [vmem:[%s314 + $0x18] sm:$0xff] %vm1952, %v11544
      %11561 = vst.msk [vmem:[%s314 + $0x20] sm:$0xff] %vm1952, %v11545
      %11562 = vst.msk [vmem:[%s314 + $0x28] sm:$0xff] %vm1952, %v11546
      %11563 = vst.msk [vmem:[%s314 + $0x30] sm:$0xff] %vm1952, %v11547
      %11564 = vst.msk [vmem:[%s314 + $0x38] sm:$0xff] %vm1952, %v11548
      %11565 = vst.msk [vmem:[%s314 + $0x40] sm:$0xff] %vm1952, %v11549
      %11566 = vst.msk [vmem:[%s314 + $0x48] sm:$0xff] %vm1952, %v11550
      %11567 = vst.msk [vmem:[%s314 + $0x50] sm:$0xff] %vm1952, %v11551
      %11568 = vst.msk [vmem:[%s314 + $0x58] sm:$0xff] %vm1952, %v11552
      %11569 = vst.msk [vmem:[%s314 + $0x60] sm:$0xff] %vm1952, %v11553
      %11570 = vst.msk [vmem:[%s314 + $0x68] sm:$0xff] %vm1952, %v11554
      %11571 = vst.msk [vmem:[%s314 + $0x70] sm:$0xff] %vm1952, %v11555
      %11572 = vst.msk [vmem:[%s314 + $0x78] sm:$0xff] %vm1952, %v11556
      %s11573 = smul.u32 16, %s23
      %p11574 = scmp.lt.s32.totalorder %s22, 1
      %s11575 = scalar_select %p11574, %s22, 1
      %p11576 = scmp.lt.s32.totalorder %s11573, 31
      %s11577 = scalar_select %p11576, %s11573, 31
      %s11578 = smul.addr %s11575, 32
      %s11579 = sadd.s32 %s11577, %s11578
      %s11580 = smul.addr %s11579, 8
      %s11581 = scalar_lea.vmem %s7, %s11580
      // Predicated region
      $region57: #{srcnn_forward.1} parent=47 // pred_check
        %p11582 = pneg %p206
      $region58: #{srcnn_forward.1} parent=47 // pred_check_branch
        %11584 = sbr.rel (%p11582) target = $region60
      $region59: #{srcnn_forward.1} parent=47 // pred_region
        %s11585 = smul.u32 16, %s23
      $region60: #{srcnn_forward.1} parent=47 // pred_fallthru
        _
    $region48: #{srcnn_forward.1} parent=5 // pred_fallthru
      _
    %p11586 = scmp.le.s32.totalorder 2, %s13
    // Predicated region
    $region61: #{srcnn_forward.1} parent=5 // pred_check
      %p11587 = pneg %p11586
    $region62: #{srcnn_forward.1} parent=5 // pred_check_branch
      %11589 = sbr.rel (%p11587) target = $region64
    $region63: #{srcnn_forward.1} parent=5 // pred_region
      %s11590 = ssub.s32 %s13, 2
      // Predicated region
      $region65: #{srcnn_forward.1} parent=63 // pred_check
        %p11591 = pneg %p212
      $region66: #{srcnn_forward.1} parent=63 // pred_check_branch
        %11593 = sbr.rel (%p11591) target = $region68
      $region67: #{srcnn_forward.1} parent=63 // pred_region
        %s11594 = smul.u32 16, %s25
        %p11595 = scmp.lt.s32.totalorder %s24, 1
        %s11596 = scalar_select %p11595, %s24, 1
        %p11597 = scmp.lt.s32.totalorder %s11594, 31
        %s11598 = scalar_select %p11597, %s11594, 31
        %s11599 = smul.addr %s11596, 32
        %s11600 = sadd.s32 %s11598, %s11599
        %s11601 = smul.addr %s11600, 8
        %s11602 = scalar_lea.vmem %s7, %s11601
      $region68: #{srcnn_forward.1} parent=63 // pred_fallthru
        _
    $region64: #{srcnn_forward.1} parent=5 // pred_fallthru
      _
  $region6: #{srcnn_forward.1} parent=0 // loop_footer
    %s17 = sadd.s32 1, %s13
  $region7: #{srcnn_forward.1} parent=0 // loop_footer_branch
    %12 = sbr.rel target = $region3
  $region8: #{srcnn_forward.1} parent=0 // loop_exit
    _

</llo_original>
